<compile_context>
chip_gen: v6e
topology: v6e:2x2x1
jax: 0.10.0
libtpu: 0.0.40
codegen_flags: <defaults>
</compile_context>

<pallas_src>
import math

import jax
import jax.numpy as jnp
from jax.experimental import pallas as pl


# ----------------------------- helpers ------------------------------------- #

def _layer_norm(x, w, b, eps=1e-5):
    mu = jnp.mean(x, axis=-1, keepdims=True)
    xc = x - mu
    var = jnp.mean(xc * xc, axis=-1, keepdims=True)
    return xc * jax.lax.rsqrt(var + eps) * w + b


# --------------------------- fused Pallas kernel ---------------------------- #

def _fused_kernel(src_ref, pad_ref, glob_ref, emb_w_ref, cls_w_ref,
                  qkv_w_ref, wo_ref, lvec_ref, w1_ref, w2_ref, out_ref):
    f32 = jnp.float32
    B, S, _ = src_ref.shape
    L, H, _, three_dh = qkv_w_ref.shape
    dh = three_dh // 3
    E = emb_w_ref.shape[1]
    F = (emb_w_ref.shape[0] - 2) // 4
    C = out_ref.shape[-1]
    G = H * B                                   # fused (head, batch) axis
    scale = 1.0 / math.sqrt(dh)

    src = src_ref[...]                          # (B, S, 4)
    src2 = src.reshape(B * S, 4)                # leading-dim merge (tile aligned)
    pos = src2[:, 0:2]
    adc = src2[:, 2:4]

    # globals slab rows: 0 = freqs (2*pi pre-folded), 1 = emb bias, 2 = cls b1, 3 = cls b2
    freqs = glob_ref[0:1, 0:F]                  # (1, F)
    emb_b = glob_ref[1:2, 0:E]                  # (1, E)
    cb1 = glob_ref[2:3, 0:E]                    # (1, E)
    cb2 = glob_ref[3:4, 0:C]                    # (1, C)

    # ------------- embedding: one fused matmul with block-diagonal weight ------------- #
    ang = jnp.concatenate([pos[:, 0:1] * freqs, pos[:, 1:2] * freqs], axis=-1)   # (BS, 2F)
    fourier = jnp.concatenate([jnp.sin(ang), jnp.cos(ang)], axis=-1)             # (BS, 4F)
    emb_in = jnp.concatenate([adc, fourier], axis=-1)                            # (BS, 2+4F)
    x = jnp.dot(emb_in, emb_w_ref[...], preferred_element_type=f32) + emb_b      # (BS, E)

    # ------------- attention key bias, shared by all layers: (G, 1, S) ------------- #
    neg = pad_ref[...] * (-1e30)                                                  # (B, 1, S)
    key_bias = jnp.broadcast_to(neg[None], (H, B, 1, S)).reshape(G, 1, S)

    # ------------- encoder layers (post-norm, ReLU FFN, eval mode) ------------- #
    for l in range(L):                          # static unroll; weights resident in VMEM
        lv = lvec_ref[l]                        # (6, E): bo, b2, ln1w, ln1b, ln2w, ln2b
        wqkv_full = qkv_w_ref[l]                # (H, E+1, 3dh); last row = bias
        wqkv = wqkv_full[:, 0:E, :]             # (H, E, 3dh)
        bqkv = wqkv_full[:, E:E + 1, :]         # (H, 1, 3dh)

        # fold batch into the head-batch axis (g = h*B + b)
        xg = jnp.broadcast_to(x.reshape(1, B, S, E), (H, B, S, E)).reshape(G, S, E)
        wqkv_g = jnp.broadcast_to(wqkv[:, None], (H, B, E, 3 * dh)).reshape(G, E, 3 * dh)
        bqkv_g = jnp.broadcast_to(bqkv[:, None], (H, B, 1, 3 * dh)).reshape(G, 1, 3 * dh)

        qkv = jnp.einsum('gse,gef->gsf', xg, wqkv_g,
                         preferred_element_type=f32) + bqkv_g                    # (G, S, 3dh)
        q = qkv[:, :, 0:dh]
        k = qkv[:, :, dh:2 * dh]
        v = qkv[:, :, 2 * dh:3 * dh]

        sc = jnp.einsum('gqf,gkf->gqk', q, k,
                        preferred_element_type=f32) * scale + key_bias           # (G, S, S)
        sc = sc - jnp.max(sc, axis=-1, keepdims=True)
        p = jnp.exp(sc)
        p = p * pl.reciprocal(jnp.sum(p, axis=-1, keepdims=True), approx=True)

        o = jnp.einsum('gqk,gkf->gqf', p, v, preferred_element_type=f32)         # (G, S, dh)

        # per-head output projection on the MXU, then cheap leading-dim head sum.
        # NOTE: a single contraction over (h, f) is not reliably lowered by Mosaic's
        # dot_general rule, so the head-sum stays a leading-axis reduce (tiny here).
        wo_g = jnp.broadcast_to(wo_ref[l][:, None], (H, B, dh, E)).reshape(G, dh, E)
        attn_g = jnp.einsum('gqf,gfe->gqe', o, wo_g,
                            preferred_element_type=f32)                          # (G, S, E)
        attn = jnp.sum(attn_g.reshape(H, B * S, E), axis=0) + lv[0:1, :]          # (BS, E)

        y = _layer_norm(x + attn, lv[2:3, :], lv[3:4, :])

        w1_full = w1_ref[l]                     # (E+1, 4E); last row = bias
        hdn = jnp.dot(y, w1_full[0:E, :], preferred_element_type=f32) + w1_full[E:E + 1, :]
        hdn = jnp.maximum(hdn, 0.0)
        ff = jnp.dot(hdn, w2_ref[l], preferred_element_type=f32) + lv[1:2, :]

        x = _layer_norm(y + ff, lv[4:5, :], lv[5:6, :])

    # ------------- masked mean pool (mask derived in-kernel) + classifier ------------- #
    valid_col = jnp.where(src2[:, 0:1] == -1000.0, 0.0, 1.0)                      # (BS, 1)
    masked = x * valid_col
    pooled = jnp.sum(masked.reshape(B, S, E), axis=1)                             # (B, E)
    count = jnp.maximum(jnp.sum(valid_col.reshape(B, S, 1), axis=1), 1.0)         # (B, 1)
    pooled = pooled * pl.reciprocal(count, approx=True)

    cw = cls_w_ref[...]                                                           # (E, E+C)
    h = jnp.dot(pooled, cw[:, 0:E], preferred_element_type=f32) + cb1
    h = jnp.maximum(h, 0.0)
    out_ref[...] = jnp.dot(h, cw[:, E:E + C], preferred_element_type=f32) + cb2   # (B, C)


# ------------------------------ wrapper ------------------------------------- #

@jax.jit
def transformer_net_forward(src, params):
    B, S, _ = src.shape
    C = params["cls_w"].shape[1] - params["cls_w"].shape[0]
    # tiny (B,1,S) key-padding row (kept host-side: avoids an in-kernel
    # sublane->lane transpose); everything else is derived inside the kernel.
    pad = (src[:, :, 0] == -1000.0).astype(jnp.float32)[:, None, :]
    return pl.pallas_call(
        _fused_kernel,
        out_shape=jax.ShapeDtypeStruct((B, C), jnp.float32),
    )(src, pad, params["globals"], params["emb_w"], params["cls_w"],
      params["qkv_w"], params["wo"], params["lvec"], params["w1"], params["w2"])


# --------------------------- parameter init --------------------------------- #

def init_params(key, num_layers, emb, num_head, num_classes,
                num_fourier=10, max_freq=10.0):
    dh = emb // num_head
    half = emb // 2
    fdim = 4 * num_fourier
    keys = iter(jax.random.split(key, 12 * num_layers + 16))

    def dense(din, dout, scale=0.05):
        w = jax.random.normal(next(keys), (din, dout), jnp.float32) * scale
        b = jax.random.normal(next(keys), (1, dout), jnp.float32) * 0.01
        return w, b

    p = {}

    # 2*pi folded into the frequencies (kernel drops the per-token multiply)
    freqs = jnp.linspace(1.0, max_freq, num_fourier, dtype=jnp.float32) * (2.0 * math.pi)

    # --- fused embedding weight: block_diag(Wa (2,E/2), Wp' (4F,E/2)) -> (2+4F, E) --- #
    wa, ba = dense(2, half)            # adc_emb
    wp, bp = dense(fdim, half)         # pos_encoding
    # kernel Fourier layout is [sin_x, sin_y, cos_x, cos_y] (F each); torch layout is
    # [sin_x, cos_x, sin_y, cos_y] -> permute Wp rows so semantics match exactly.
    Fh = num_fourier
    perm = jnp.concatenate([jnp.arange(0, Fh), jnp.arange(2 * Fh, 3 * Fh),
                            jnp.arange(Fh, 2 * Fh), jnp.arange(3 * Fh, 4 * Fh)])
    wp_k = wp[perm]
    emb_w = jnp.zeros((2 + fdim, emb), jnp.float32)
    emb_w = emb_w.at[0:2, 0:half].set(wa)
    emb_w = emb_w.at[2:, half:emb].set(wp_k)
    p["emb_w"] = emb_w
    emb_b = jnp.concatenate([ba, bp], axis=-1)                       # (1, E)

    # --- classifier + globals slab --- #
    cw1, cb1 = dense(emb, emb)
    cw2, cb2 = dense(emb, num_classes)
    p["cls_w"] = jnp.concatenate([cw1, cw2], axis=1)                 # (E, E+C)

    gw = max(emb, num_fourier, num_classes)

    def padrow(v):
        v = v.reshape(1, -1)
        return jnp.pad(v, ((0, 0), (0, gw - v.shape[1])))

    p["globals"] = jnp.concatenate(
        [padrow(freqs), padrow(emb_b), padrow(cb1), padrow(cb2)], axis=0)   # (4, gw)

    # --- per-layer slabs --- #
    def head_split(w):    # (E, E) in->out  ->  (H, E, dh): output cols per head
        return w.reshape(emb, num_head, dh).transpose(1, 0, 2)

    def head_split_b(b):  # (1, E) -> (H, 1, dh)
        return b.reshape(num_head, dh)[:, None, :]

    qkv_w_l, wo_l, lvec_l, w1_l, w2_l = [], [], [], [], []
    for _ in range(num_layers):
        wq, bq = dense(emb, emb)
        wk, bk = dense(emb, emb)
        wv, bv = dense(emb, emb)
        wo, bo = dense(emb, emb)
        w1, b1 = dense(emb, 4 * emb)
        w2, b2 = dense(4 * emb, emb)

        wqkv = jnp.concatenate([head_split(wq), head_split(wk), head_split(wv)], axis=-1)
        bqkv = jnp.concatenate([head_split_b(bq), head_split_b(bk), head_split_b(bv)], axis=-1)
        qkv_w_l.append(jnp.concatenate([wqkv, bqkv], axis=1))        # (H, E+1, 3dh)

        wo_l.append(wo.reshape(num_head, dh, emb))                    # (H, dh, E)
        lvec_l.append(jnp.concatenate(
            [bo, b2,
             jnp.ones((1, emb), jnp.float32), jnp.zeros((1, emb), jnp.float32),
             jnp.ones((1, emb), jnp.float32), jnp.zeros((1, emb), jnp.float32)],
            axis=0))                                                  # (6, E)
        w1_l.append(jnp.concatenate([w1, b1], axis=0))                # (E+1, 4E)
        w2_l.append(w2)                                               # (4E, E)

    p["qkv_w"] = jnp.stack(qkv_w_l)
    p["wo"] = jnp.stack(wo_l)
    p["lvec"] = jnp.stack(lvec_l)
    p["w1"] = jnp.stack(w1_l)
    p["w2"] = jnp.stack(w2_l)
    return p


# ------------------------ pure-JAX reference (XLA) --------------------------- #

def reference_forward(src, params):
    """Pure-JAX reference of the PyTorch forward, consuming the same packed params."""
    E = params["cls_w"].shape[0]
    C = params["cls_w"].shape[1] - E
    L, H = params["qkv_w"].shape[0], params["qkv_w"].shape[1]
    dh = E // H
    F = (params["emb_w"].shape[0] - 2) // 4

    glob = params["globals"]
    freqs, emb_b = glob[0, :F], glob[1, :E]
    cb1, cb2 = glob[2, :E], glob[3, :C]

    pad = src[:, :, 0] == -1000.0
    pos, adc = src[:, :, 0:2], src[:, :, 2:4]
    ang = jnp.concatenate([pos[..., 0:1] * freqs, pos[..., 1:2] * freqs], axis=-1)
    fourier = jnp.concatenate([jnp.sin(ang), jnp.cos(ang)], axis=-1)
    x = jnp.concatenate([adc, fourier], axis=-1) @ params["emb_w"] + emb_b     # (B, S, E)

    neg = jnp.where(pad, -1e30, 0.0)[:, None, None, :]

    def ln(v, w, b):
        mu = v.mean(-1, keepdims=True)
        var = ((v - mu) ** 2).mean(-1, keepdims=True)
        return (v - mu) / jnp.sqrt(var + 1e-5) * w + b

    for l in range(L):
        wqkv = params["qkv_w"][l]
        w_qkv, b_qkv = wqkv[:, :E, :], wqkv[:, E, :]
        lv = params["lvec"][l]
        qkv = jnp.einsum('bse,hef->bhsf', x, w_qkv) + b_qkv[None, :, None, :]
        q, k, v = qkv[..., :dh], qkv[..., dh:2 * dh], qkv[..., 2 * dh:]
        sc = jnp.einsum('bhqf,bhkf->bhqk', q, k) / math.sqrt(dh) + neg
        p = jax.nn.softmax(sc, axis=-1)
        o = jnp.einsum('bhqk,bhkf->bhqf', p, v)
        attn = jnp.einsum('bhqf,hfe->bqe', o, params["wo"][l]) + lv[0]
        y = ln(x + attn, lv[2], lv[3])
        w1, b1 = params["w1"][l][:E, :], params["w1"][l][E, :]
        ff = jax.nn.relu(y @ w1 + b1) @ params["w2"][l] + lv[1]
        x = ln(y + ff, lv[4], lv[5])

    mask = (~pad)[..., None].astype(jnp.float32)
    pooled = (x * mask).sum(axis=1) / jnp.maximum(mask.sum(axis=1), 1.0)
    h = jax.nn.relu(pooled @ params["cls_w"][:, :E] + cb1)
    return h @ params["cls_w"][:, E:] + cb2


# ------------------------------- main --------------------------------------- #

if __name__ == "__main__":
    B, S = 2, 8
    EMB, HEADS, CLASSES, LAYERS, FOURIER = 32, 4, 5, 2, 10

    root = jax.random.PRNGKey(0)
    pkey, skey = jax.random.split(root)

    params = init_params(pkey, LAYERS, EMB, HEADS, CLASSES, num_fourier=FOURIER)

    src = jax.random.normal(skey, (B, S, 4), jnp.float32)
    # mark the last two tokens of each sequence as padding (src[:, :, 0] == -1000)
    src = src.at[:, S - 2:, 0].set(-1000.0)

    out = transformer_net_forward(src, params)
    out = jax.block_until_ready(out)

    assert out.shape == (B, CLASSES), out.shape
    assert bool(jnp.all(jnp.isfinite(out)))

    ref = reference_forward(src, params)
    # loose tolerance: kernel uses the approximate EUP reciprocal for softmax / pooling
    assert bool(jnp.allclose(out, ref, atol=3e-2, rtol=3e-2)), \
        float(jnp.max(jnp.abs(out - ref)))

    # TODO(synk): dropout inside nn.TransformerEncoderLayer is training-only;
    # this implements the deterministic eval-mode forward.
    print("KERNEL_OK")
</pallas_src>

<mosaic_0001>
module attributes {stable_mosaic.version = 11 : i64} {
  func.func @_fused_kernel(%arg0: memref<2x8x4xf32, #tpu.memory_space<vmem>>, %arg1: memref<2x1x8xf32, #tpu.memory_space<vmem>>, %arg2: memref<4x32xf32, #tpu.memory_space<vmem>>, %arg3: memref<42x32xf32, #tpu.memory_space<vmem>>, %arg4: memref<32x37xf32, #tpu.memory_space<vmem>>, %arg5: memref<2x4x33x24xf32, #tpu.memory_space<vmem>>, %arg6: memref<2x4x8x32xf32, #tpu.memory_space<vmem>>, %arg7: memref<2x6x32xf32, #tpu.memory_space<vmem>>, %arg8: memref<2x33x128xf32, #tpu.memory_space<vmem>>, %arg9: memref<2x128x32xf32, #tpu.memory_space<vmem>>, %arg10: memref<2x5xf32, #tpu.memory_space<vmem>>) attributes {dimension_semantics = [], scalar_prefetch = 0 : i64, scratch_operands = 0 : i64, tpu.core_type = #tpu.core_type<tc>} {
    %c0 = arith.constant 0 : index
    %c0_0 = arith.constant 0 : index
    %c0_1 = arith.constant 0 : index
    %0 = vector.load %arg0[%c0, %c0_0, %c0_1] : memref<2x8x4xf32, #tpu.memory_space<vmem>>, vector<2x8x4xf32>
    %1 = vector.shape_cast %0 : vector<2x8x4xf32> to vector<16x4xf32>
    %2 = vector.extract_strided_slice %1 {offsets = [0, 0], sizes = [16, 2], strides = [1, 1]} : vector<16x4xf32> to vector<16x2xf32>
    %3 = vector.extract_strided_slice %1 {offsets = [0, 2], sizes = [16, 2], strides = [1, 1]} : vector<16x4xf32> to vector<16x2xf32>
    %c0_2 = arith.constant 0 : index
    %c0_3 = arith.constant 0 : index
    %4 = vector.load %arg2[%c0_2, %c0_3] : memref<4x32xf32, #tpu.memory_space<vmem>>, vector<1x10xf32>
    %c1 = arith.constant 1 : index
    %c0_4 = arith.constant 0 : index
    %5 = vector.load %arg2[%c1, %c0_4] : memref<4x32xf32, #tpu.memory_space<vmem>>, vector<1x32xf32>
    %c2 = arith.constant 2 : index
    %c0_5 = arith.constant 0 : index
    %6 = vector.load %arg2[%c2, %c0_5] : memref<4x32xf32, #tpu.memory_space<vmem>>, vector<1x32xf32>
    %c3 = arith.constant 3 : index
    %c0_6 = arith.constant 0 : index
    %7 = vector.load %arg2[%c3, %c0_6] : memref<4x32xf32, #tpu.memory_space<vmem>>, vector<1x5xf32>
    %8 = vector.extract_strided_slice %2 {offsets = [0, 0], sizes = [16, 1], strides = [1, 1]} : vector<16x2xf32> to vector<16x1xf32>
    %9 = vector.broadcast %8 : vector<16x1xf32> to vector<16x10xf32>
    %10 = vector.broadcast %4 : vector<1x10xf32> to vector<16x10xf32>
    %11 = arith.mulf %9, %10 : vector<16x10xf32>
    %12 = vector.extract_strided_slice %2 {offsets = [0, 1], sizes = [16, 1], strides = [1, 1]} : vector<16x2xf32> to vector<16x1xf32>
    %13 = vector.broadcast %12 : vector<16x1xf32> to vector<16x10xf32>
    %14 = vector.broadcast %4 : vector<1x10xf32> to vector<16x10xf32>
    %15 = arith.mulf %13, %14 : vector<16x10xf32>
    %16 = tpu.concatenate %11, %15 in 1 : vector<16x10xf32>, vector<16x10xf32> -> vector<16x20xf32>
    %17 = math.sin %16 : vector<16x20xf32>
    %18 = math.cos %16 : vector<16x20xf32>
    %19 = tpu.concatenate %17, %18 in 1 : vector<16x20xf32>, vector<16x20xf32> -> vector<16x40xf32>
    %20 = tpu.concatenate %3, %19 in 1 : vector<16x2xf32>, vector<16x40xf32> -> vector<16x42xf32>
    %c0_7 = arith.constant 0 : index
    %c0_8 = arith.constant 0 : index
    %21 = vector.load %arg3[%c0_7, %c0_8] : memref<42x32xf32, #tpu.memory_space<vmem>>, vector<42x32xf32>
    %cst = arith.constant dense<0.000000e+00> : vector<16x32xf32>
    %22 = tpu.matmul %20, %21, %cst {dimension_numbers = #tpu.dot_dimension_numbers<[1], [0], [0], [1], [0, 0, 1, 1], [], []>} : vector<16x42xf32>, vector<42x32xf32>, vector<16x32xf32> -> vector<16x32xf32>
    %23 = vector.broadcast %5 : vector<1x32xf32> to vector<16x32xf32>
    %24 = arith.addf %22, %23 : vector<16x32xf32>
    %c0_9 = arith.constant 0 : index
    %c0_10 = arith.constant 0 : index
    %c0_11 = arith.constant 0 : index
    %25 = vector.load %arg1[%c0_9, %c0_10, %c0_11] : memref<2x1x8xf32, #tpu.memory_space<vmem>>, vector<2x1x8xf32>
    %cst_12 = arith.constant -1.000000e+30 : f32
    %26 = vector.broadcast %cst_12 : f32 to vector<2x1x8xf32>
    %27 = arith.mulf %25, %26 : vector<2x1x8xf32>
    %28 = vector.shape_cast %27 : vector<2x1x8xf32> to vector<1x2x1x8xf32>
    %29 = vector.shape_cast %28 : vector<1x2x1x8xf32> to vector<1x2x1x8xf32>
    %30 = vector.broadcast %29 : vector<1x2x1x8xf32> to vector<4x2x1x8xf32>
    %31 = vector.shape_cast %30 : vector<4x2x1x8xf32> to vector<8x1x8xf32>
    %c0_13 = arith.constant 0 : index
    %c0_14 = arith.constant 0 : index
    %c0_15 = arith.constant 0 : index
    %32 = vector.load %arg7[%c0_13, %c0_14, %c0_15] : memref<2x6x32xf32, #tpu.memory_space<vmem>>, vector<1x6x32xf32>
    %33 = vector.shape_cast %32 : vector<1x6x32xf32> to vector<6x32xf32>
    %c0_16 = arith.constant 0 : index
    %c0_17 = arith.constant 0 : index
    %c0_18 = arith.constant 0 : index
    %c0_19 = arith.constant 0 : index
    %34 = vector.load %arg5[%c0_16, %c0_17, %c0_18, %c0_19] : memref<2x4x33x24xf32, #tpu.memory_space<vmem>>, vector<1x4x33x24xf32>
    %35 = vector.shape_cast %34 : vector<1x4x33x24xf32> to vector<4x33x24xf32>
    %36 = vector.extract_strided_slice %35 {offsets = [0, 0, 0], sizes = [4, 32, 24], strides = [1, 1, 1]} : vector<4x33x24xf32> to vector<4x32x24xf32>
    %37 = vector.extract_strided_slice %35 {offsets = [0, 32, 0], sizes = [4, 1, 24], strides = [1, 1, 1]} : vector<4x33x24xf32> to vector<4x1x24xf32>
    %38 = vector.shape_cast %24 : vector<16x32xf32> to vector<1x2x8x32xf32>
    %39 = vector.shape_cast %38 : vector<1x2x8x32xf32> to vector<1x2x8x32xf32>
    %40 = vector.broadcast %39 : vector<1x2x8x32xf32> to vector<4x2x8x32xf32>
    %41 = vector.shape_cast %40 : vector<4x2x8x32xf32> to vector<8x8x32xf32>
    %42 = vector.shape_cast %36 : vector<4x32x24xf32> to vector<4x1x32x24xf32>
    %43 = vector.shape_cast %42 : vector<4x1x32x24xf32> to vector<4x1x32x24xf32>
    %44 = vector.broadcast %43 : vector<4x1x32x24xf32> to vector<4x2x32x24xf32>
    %45 = vector.shape_cast %44 : vector<4x2x32x24xf32> to vector<8x32x24xf32>
    %46 = vector.shape_cast %37 : vector<4x1x24xf32> to vector<4x1x1x24xf32>
    %47 = vector.shape_cast %46 : vector<4x1x1x24xf32> to vector<4x1x1x24xf32>
    %48 = vector.broadcast %47 : vector<4x1x1x24xf32> to vector<4x2x1x24xf32>
    %49 = vector.shape_cast %48 : vector<4x2x1x24xf32> to vector<8x1x24xf32>
    "tpu.trace_start"() <{level = 10 : i32, message = "gse,gef->gsf"}> : () -> ()
    %cst_20 = arith.constant dense<0.000000e+00> : vector<8x8x24xf32>
    %50 = tpu.matmul %41, %45, %cst_20 {dimension_numbers = #tpu.dot_dimension_numbers<[2], [1], [1], [2], [0, 0, 0, 1, 1, 2], [0], [0]>} : vector<8x8x32xf32>, vector<8x32x24xf32>, vector<8x8x24xf32> -> vector<8x8x24xf32>
    "tpu.trace_stop"() : () -> ()
    %51 = vector.broadcast %49 : vector<8x1x24xf32> to vector<8x8x24xf32>
    %52 = arith.addf %50, %51 : vector<8x8x24xf32>
    %53 = vector.extract_strided_slice %52 {offsets = [0, 0, 0], sizes = [8, 8, 8], strides = [1, 1, 1]} : vector<8x8x24xf32> to vector<8x8x8xf32>
    %54 = vector.extract_strided_slice %52 {offsets = [0, 0, 8], sizes = [8, 8, 8], strides = [1, 1, 1]} : vector<8x8x24xf32> to vector<8x8x8xf32>
    %55 = vector.extract_strided_slice %52 {offsets = [0, 0, 16], sizes = [8, 8, 8], strides = [1, 1, 1]} : vector<8x8x24xf32> to vector<8x8x8xf32>
    "tpu.trace_start"() <{level = 10 : i32, message = "gqf,gkf->gqk"}> : () -> ()
    %cst_21 = arith.constant dense<0.000000e+00> : vector<8x8x8xf32>
    %56 = tpu.matmul %53, %54, %cst_21 {dimension_numbers = #tpu.dot_dimension_numbers<[2], [2], [1], [1], [0, 0, 0, 1, 1, 1], [0], [0]>} : vector<8x8x8xf32>, vector<8x8x8xf32>, vector<8x8x8xf32> -> vector<8x8x8xf32>
    "tpu.trace_stop"() : () -> ()
    %cst_22 = arith.constant 0.353553385 : f32
    %57 = vector.broadcast %cst_22 : f32 to vector<8x8x8xf32>
    %58 = arith.mulf %56, %57 : vector<8x8x8xf32>
    %59 = vector.broadcast %31 : vector<8x1x8xf32> to vector<8x8x8xf32>
    %60 = arith.addf %58, %59 : vector<8x8x8xf32>
    %cst_23 = arith.constant dense<0xFF800000> : vector<8x8xf32>
    %61 = vector.multi_reduction <maximumf>, %60, %cst_23 [2] : vector<8x8x8xf32> to vector<8x8xf32>
    %62 = vector.shape_cast %61 : vector<8x8xf32> to vector<8x8x1xf32>
    %63 = vector.broadcast %62 : vector<8x8x1xf32> to vector<8x8x8xf32>
    %64 = arith.subf %60, %63 : vector<8x8x8xf32>
    %65 = math.exp %64 : vector<8x8x8xf32>
    %cst_24 = arith.constant dense<0.000000e+00> : vector<8x8xf32>
    %66 = vector.multi_reduction <add>, %65, %cst_24 [2] : vector<8x8x8xf32> to vector<8x8xf32>
    %67 = vector.shape_cast %66 : vector<8x8xf32> to vector<8x8x1xf32>
    %68 = tpu.reciprocal %67 {approx = true} : vector<8x8x1xf32> -> vector<8x8x1xf32>
    %69 = vector.broadcast %68 : vector<8x8x1xf32> to vector<8x8x8xf32>
    %70 = arith.mulf %65, %69 : vector<8x8x8xf32>
    "tpu.trace_start"() <{level = 10 : i32, message = "gqk,gkf->gqf"}> : () -> ()
    %cst_25 = arith.constant dense<0.000000e+00> : vector<8x8x8xf32>
    %71 = tpu.matmul %70, %55, %cst_25 {dimension_numbers = #tpu.dot_dimension_numbers<[2], [1], [1], [2], [0, 0, 0, 1, 1, 2], [0], [0]>} : vector<8x8x8xf32>, vector<8x8x8xf32>, vector<8x8x8xf32> -> vector<8x8x8xf32>
    "tpu.trace_stop"() : () -> ()
    %c0_26 = arith.constant 0 : index
    %c0_27 = arith.constant 0 : index
    %c0_28 = arith.constant 0 : index
    %c0_29 = arith.constant 0 : index
    %72 = vector.load %arg6[%c0_26, %c0_27, %c0_28, %c0_29] : memref<2x4x8x32xf32, #tpu.memory_space<vmem>>, vector<1x4x8x32xf32>
    %73 = vector.shape_cast %72 : vector<1x4x8x32xf32> to vector<4x8x32xf32>
    %74 = vector.shape_cast %73 : vector<4x8x32xf32> to vector<4x1x8x32xf32>
    %75 = vector.shape_cast %74 : vector<4x1x8x32xf32> to vector<4x1x8x32xf32>
    %76 = vector.broadcast %75 : vector<4x1x8x32xf32> to vector<4x2x8x32xf32>
    %77 = vector.shape_cast %76 : vector<4x2x8x32xf32> to vector<8x8x32xf32>
    "tpu.trace_start"() <{level = 10 : i32, message = "gqf,gfe->gqe"}> : () -> ()
    %cst_30 = arith.constant dense<0.000000e+00> : vector<8x8x32xf32>
    %78 = tpu.matmul %71, %77, %cst_30 {dimension_numbers = #tpu.dot_dimension_numbers<[2], [1], [1], [2], [0, 0, 0, 1, 1, 2], [0], [0]>} : vector<8x8x8xf32>, vector<8x8x32xf32>, vector<8x8x32xf32> -> vector<8x8x32xf32>
    "tpu.trace_stop"() : () -> ()
    %79 = vector.shape_cast %78 : vector<8x8x32xf32> to vector<4x16x32xf32>
    %cst_31 = arith.constant dense<0.000000e+00> : vector<16x32xf32>
    %80 = vector.multi_reduction <add>, %79, %cst_31 [0] : vector<4x16x32xf32> to vector<16x32xf32>
    %81 = vector.extract_strided_slice %33 {offsets = [0, 0], sizes = [1, 32], strides = [1, 1]} : vector<6x32xf32> to vector<1x32xf32>
    %82 = vector.broadcast %81 : vector<1x32xf32> to vector<16x32xf32>
    %83 = arith.addf %80, %82 : vector<16x32xf32>
    %84 = arith.addf %24, %83 : vector<16x32xf32>
    %85 = vector.extract_strided_slice %33 {offsets = [2, 0], sizes = [1, 32], strides = [1, 1]} : vector<6x32xf32> to vector<1x32xf32>
    %86 = vector.extract_strided_slice %33 {offsets = [3, 0], sizes = [1, 32], strides = [1, 1]} : vector<6x32xf32> to vector<1x32xf32>
    %cst_32 = arith.constant dense<0.000000e+00> : vector<16xf32>
    %87 = vector.multi_reduction <add>, %84, %cst_32 [1] : vector<16x32xf32> to vector<16xf32>
    %88 = vector.shape_cast %87 : vector<16xf32> to vector<16x1xf32>
    %cst_33 = arith.constant 3.200000e+01 : f32
    %89 = vector.broadcast %cst_33 : f32 to vector<16x1xf32>
    %90 = arith.divf %88, %89 : vector<16x1xf32>
    %91 = vector.broadcast %90 : vector<16x1xf32> to vector<16x32xf32>
    %92 = arith.subf %84, %91 : vector<16x32xf32>
    %93 = arith.mulf %92, %92 : vector<16x32xf32>
    %cst_34 = arith.constant dense<0.000000e+00> : vector<16xf32>
    %94 = vector.multi_reduction <add>, %93, %cst_34 [1] : vector<16x32xf32> to vector<16xf32>
    %95 = vector.shape_cast %94 : vector<16xf32> to vector<16x1xf32>
    %cst_35 = arith.constant 3.200000e+01 : f32
    %96 = vector.broadcast %cst_35 : f32 to vector<16x1xf32>
    %97 = arith.divf %95, %96 : vector<16x1xf32>
    %cst_36 = arith.constant 9.99999974E-6 : f32
    %98 = vector.broadcast %cst_36 : f32 to vector<16x1xf32>
    %99 = arith.addf %97, %98 : vector<16x1xf32>
    %100 = math.rsqrt %99 : vector<16x1xf32>
    %101 = vector.broadcast %100 : vector<16x1xf32> to vector<16x32xf32>
    %102 = arith.mulf %92, %101 : vector<16x32xf32>
    %103 = vector.broadcast %85 : vector<1x32xf32> to vector<16x32xf32>
    %104 = arith.mulf %102, %103 : vector<16x32xf32>
    %105 = vector.broadcast %86 : vector<1x32xf32> to vector<16x32xf32>
    %106 = arith.addf %104, %105 : vector<16x32xf32>
    %c0_37 = arith.constant 0 : index
    %c0_38 = arith.constant 0 : index
    %c0_39 = arith.constant 0 : index
    %107 = vector.load %arg8[%c0_37, %c0_38, %c0_39] : memref<2x33x128xf32, #tpu.memory_space<vmem>>, vector<1x33x128xf32>
    %108 = vector.shape_cast %107 : vector<1x33x128xf32> to vector<33x128xf32>
    %109 = vector.extract_strided_slice %108 {offsets = [0, 0], sizes = [32, 128], strides = [1, 1]} : vector<33x128xf32> to vector<32x128xf32>
    %cst_40 = arith.constant dense<0.000000e+00> : vector<16x128xf32>
    %110 = tpu.matmul %106, %109, %cst_40 {dimension_numbers = #tpu.dot_dimension_numbers<[1], [0], [0], [1], [0, 0, 1, 1], [], []>} : vector<16x32xf32>, vector<32x128xf32>, vector<16x128xf32> -> vector<16x128xf32>
    %111 = vector.extract_strided_slice %108 {offsets = [32, 0], sizes = [1, 128], strides = [1, 1]} : vector<33x128xf32> to vector<1x128xf32>
    %112 = vector.broadcast %111 : vector<1x128xf32> to vector<16x128xf32>
    %113 = arith.addf %110, %112 : vector<16x128xf32>
    %cst_41 = arith.constant 0.000000e+00 : f32
    %114 = vector.broadcast %cst_41 : f32 to vector<16x128xf32>
    %115 = arith.maximumf %113, %114 : vector<16x128xf32>
    %c0_42 = arith.constant 0 : index
    %c0_43 = arith.constant 0 : index
    %c0_44 = arith.constant 0 : index
    %116 = vector.load %arg9[%c0_42, %c0_43, %c0_44] : memref<2x128x32xf32, #tpu.memory_space<vmem>>, vector<1x128x32xf32>
    %117 = vector.shape_cast %116 : vector<1x128x32xf32> to vector<128x32xf32>
    %cst_45 = arith.constant dense<0.000000e+00> : vector<16x32xf32>
    %118 = tpu.matmul %115, %117, %cst_45 {dimension_numbers = #tpu.dot_dimension_numbers<[1], [0], [0], [1], [0, 0, 1, 1], [], []>} : vector<16x128xf32>, vector<128x32xf32>, vector<16x32xf32> -> vector<16x32xf32>
    %119 = vector.extract_strided_slice %33 {offsets = [1, 0], sizes = [1, 32], strides = [1, 1]} : vector<6x32xf32> to vector<1x32xf32>
    %120 = vector.broadcast %119 : vector<1x32xf32> to vector<16x32xf32>
    %121 = arith.addf %118, %120 : vector<16x32xf32>
    %122 = arith.addf %106, %121 : vector<16x32xf32>
    %123 = vector.extract_strided_slice %33 {offsets = [4, 0], sizes = [1, 32], strides = [1, 1]} : vector<6x32xf32> to vector<1x32xf32>
    %124 = vector.extract_strided_slice %33 {offsets = [5, 0], sizes = [1, 32], strides = [1, 1]} : vector<6x32xf32> to vector<1x32xf32>
    %cst_46 = arith.constant dense<0.000000e+00> : vector<16xf32>
    %125 = vector.multi_reduction <add>, %122, %cst_46 [1] : vector<16x32xf32> to vector<16xf32>
    %126 = vector.shape_cast %125 : vector<16xf32> to vector<16x1xf32>
    %cst_47 = arith.constant 3.200000e+01 : f32
    %127 = vector.broadcast %cst_47 : f32 to vector<16x1xf32>
    %128 = arith.divf %126, %127 : vector<16x1xf32>
    %129 = vector.broadcast %128 : vector<16x1xf32> to vector<16x32xf32>
    %130 = arith.subf %122, %129 : vector<16x32xf32>
    %131 = arith.mulf %130, %130 : vector<16x32xf32>
    %cst_48 = arith.constant dense<0.000000e+00> : vector<16xf32>
    %132 = vector.multi_reduction <add>, %131, %cst_48 [1] : vector<16x32xf32> to vector<16xf32>
    %133 = vector.shape_cast %132 : vector<16xf32> to vector<16x1xf32>
    %cst_49 = arith.constant 3.200000e+01 : f32
    %134 = vector.broadcast %cst_49 : f32 to vector<16x1xf32>
    %135 = arith.divf %133, %134 : vector<16x1xf32>
    %cst_50 = arith.constant 9.99999974E-6 : f32
    %136 = vector.broadcast %cst_50 : f32 to vector<16x1xf32>
    %137 = arith.addf %135, %136 : vector<16x1xf32>
    %138 = math.rsqrt %137 : vector<16x1xf32>
    %139 = vector.broadcast %138 : vector<16x1xf32> to vector<16x32xf32>
    %140 = arith.mulf %130, %139 : vector<16x32xf32>
    %141 = vector.broadcast %123 : vector<1x32xf32> to vector<16x32xf32>
    %142 = arith.mulf %140, %141 : vector<16x32xf32>
    %143 = vector.broadcast %124 : vector<1x32xf32> to vector<16x32xf32>
    %144 = arith.addf %142, %143 : vector<16x32xf32>
    %c1_51 = arith.constant 1 : index
    %c0_52 = arith.constant 0 : index
    %c0_53 = arith.constant 0 : index
    %145 = vector.load %arg7[%c1_51, %c0_52, %c0_53] : memref<2x6x32xf32, #tpu.memory_space<vmem>>, vector<1x6x32xf32>
    %146 = vector.shape_cast %145 : vector<1x6x32xf32> to vector<6x32xf32>
    %c1_54 = arith.constant 1 : index
    %c0_55 = arith.constant 0 : index
    %c0_56 = arith.constant 0 : index
    %c0_57 = arith.constant 0 : index
    %147 = vector.load %arg5[%c1_54, %c0_55, %c0_56, %c0_57] : memref<2x4x33x24xf32, #tpu.memory_space<vmem>>, vector<1x4x33x24xf32>
    %148 = vector.shape_cast %147 : vector<1x4x33x24xf32> to vector<4x33x24xf32>
    %149 = vector.extract_strided_slice %148 {offsets = [0, 0, 0], sizes = [4, 32, 24], strides = [1, 1, 1]} : vector<4x33x24xf32> to vector<4x32x24xf32>
    %150 = vector.extract_strided_slice %148 {offsets = [0, 32, 0], sizes = [4, 1, 24], strides = [1, 1, 1]} : vector<4x33x24xf32> to vector<4x1x24xf32>
    %151 = vector.shape_cast %144 : vector<16x32xf32> to vector<1x2x8x32xf32>
    %152 = vector.shape_cast %151 : vector<1x2x8x32xf32> to vector<1x2x8x32xf32>
    %153 = vector.broadcast %152 : vector<1x2x8x32xf32> to vector<4x2x8x32xf32>
    %154 = vector.shape_cast %153 : vector<4x2x8x32xf32> to vector<8x8x32xf32>
    %155 = vector.shape_cast %149 : vector<4x32x24xf32> to vector<4x1x32x24xf32>
    %156 = vector.shape_cast %155 : vector<4x1x32x24xf32> to vector<4x1x32x24xf32>
    %157 = vector.broadcast %156 : vector<4x1x32x24xf32> to vector<4x2x32x24xf32>
    %158 = vector.shape_cast %157 : vector<4x2x32x24xf32> to vector<8x32x24xf32>
    %159 = vector.shape_cast %150 : vector<4x1x24xf32> to vector<4x1x1x24xf32>
    %160 = vector.shape_cast %159 : vector<4x1x1x24xf32> to vector<4x1x1x24xf32>
    %161 = vector.broadcast %160 : vector<4x1x1x24xf32> to vector<4x2x1x24xf32>
    %162 = vector.shape_cast %161 : vector<4x2x1x24xf32> to vector<8x1x24xf32>
    "tpu.trace_start"() <{level = 10 : i32, message = "gse,gef->gsf"}> : () -> ()
    %cst_58 = arith.constant dense<0.000000e+00> : vector<8x8x24xf32>
    %163 = tpu.matmul %154, %158, %cst_58 {dimension_numbers = #tpu.dot_dimension_numbers<[2], [1], [1], [2], [0, 0, 0, 1, 1, 2], [0], [0]>} : vector<8x8x32xf32>, vector<8x32x24xf32>, vector<8x8x24xf32> -> vector<8x8x24xf32>
    "tpu.trace_stop"() : () -> ()
    %164 = vector.broadcast %162 : vector<8x1x24xf32> to vector<8x8x24xf32>
    %165 = arith.addf %163, %164 : vector<8x8x24xf32>
    %166 = vector.extract_strided_slice %165 {offsets = [0, 0, 0], sizes = [8, 8, 8], strides = [1, 1, 1]} : vector<8x8x24xf32> to vector<8x8x8xf32>
    %167 = vector.extract_strided_slice %165 {offsets = [0, 0, 8], sizes = [8, 8, 8], strides = [1, 1, 1]} : vector<8x8x24xf32> to vector<8x8x8xf32>
    %168 = vector.extract_strided_slice %165 {offsets = [0, 0, 16], sizes = [8, 8, 8], strides = [1, 1, 1]} : vector<8x8x24xf32> to vector<8x8x8xf32>
    "tpu.trace_start"() <{level = 10 : i32, message = "gqf,gkf->gqk"}> : () -> ()
    %cst_59 = arith.constant dense<0.000000e+00> : vector<8x8x8xf32>
    %169 = tpu.matmul %166, %167, %cst_59 {dimension_numbers = #tpu.dot_dimension_numbers<[2], [2], [1], [1], [0, 0, 0, 1, 1, 1], [0], [0]>} : vector<8x8x8xf32>, vector<8x8x8xf32>, vector<8x8x8xf32> -> vector<8x8x8xf32>
    "tpu.trace_stop"() : () -> ()
    %cst_60 = arith.constant 0.353553385 : f32
    %170 = vector.broadcast %cst_60 : f32 to vector<8x8x8xf32>
    %171 = arith.mulf %169, %170 : vector<8x8x8xf32>
    %172 = vector.broadcast %31 : vector<8x1x8xf32> to vector<8x8x8xf32>
    %173 = arith.addf %171, %172 : vector<8x8x8xf32>
    %cst_61 = arith.constant dense<0xFF800000> : vector<8x8xf32>
    %174 = vector.multi_reduction <maximumf>, %173, %cst_61 [2] : vector<8x8x8xf32> to vector<8x8xf32>
    %175 = vector.shape_cast %174 : vector<8x8xf32> to vector<8x8x1xf32>
    %176 = vector.broadcast %175 : vector<8x8x1xf32> to vector<8x8x8xf32>
    %177 = arith.subf %173, %176 : vector<8x8x8xf32>
    %178 = math.exp %177 : vector<8x8x8xf32>
    %cst_62 = arith.constant dense<0.000000e+00> : vector<8x8xf32>
    %179 = vector.multi_reduction <add>, %178, %cst_62 [2] : vector<8x8x8xf32> to vector<8x8xf32>
    %180 = vector.shape_cast %179 : vector<8x8xf32> to vector<8x8x1xf32>
    %181 = tpu.reciprocal %180 {approx = true} : vector<8x8x1xf32> -> vector<8x8x1xf32>
    %182 = vector.broadcast %181 : vector<8x8x1xf32> to vector<8x8x8xf32>
    %183 = arith.mulf %178, %182 : vector<8x8x8xf32>
    "tpu.trace_start"() <{level = 10 : i32, message = "gqk,gkf->gqf"}> : () -> ()
    %cst_63 = arith.constant dense<0.000000e+00> : vector<8x8x8xf32>
    %184 = tpu.matmul %183, %168, %cst_63 {dimension_numbers = #tpu.dot_dimension_numbers<[2], [1], [1], [2], [0, 0, 0, 1, 1, 2], [0], [0]>} : vector<8x8x8xf32>, vector<8x8x8xf32>, vector<8x8x8xf32> -> vector<8x8x8xf32>
    "tpu.trace_stop"() : () -> ()
    %c1_64 = arith.constant 1 : index
    %c0_65 = arith.constant 0 : index
    %c0_66 = arith.constant 0 : index
    %c0_67 = arith.constant 0 : index
    %185 = vector.load %arg6[%c1_64, %c0_65, %c0_66, %c0_67] : memref<2x4x8x32xf32, #tpu.memory_space<vmem>>, vector<1x4x8x32xf32>
    %186 = vector.shape_cast %185 : vector<1x4x8x32xf32> to vector<4x8x32xf32>
    %187 = vector.shape_cast %186 : vector<4x8x32xf32> to vector<4x1x8x32xf32>
    %188 = vector.shape_cast %187 : vector<4x1x8x32xf32> to vector<4x1x8x32xf32>
    %189 = vector.broadcast %188 : vector<4x1x8x32xf32> to vector<4x2x8x32xf32>
    %190 = vector.shape_cast %189 : vector<4x2x8x32xf32> to vector<8x8x32xf32>
    "tpu.trace_start"() <{level = 10 : i32, message = "gqf,gfe->gqe"}> : () -> ()
    %cst_68 = arith.constant dense<0.000000e+00> : vector<8x8x32xf32>
    %191 = tpu.matmul %184, %190, %cst_68 {dimension_numbers = #tpu.dot_dimension_numbers<[2], [1], [1], [2], [0, 0, 0, 1, 1, 2], [0], [0]>} : vector<8x8x8xf32>, vector<8x8x32xf32>, vector<8x8x32xf32> -> vector<8x8x32xf32>
    "tpu.trace_stop"() : () -> ()
    %192 = vector.shape_cast %191 : vector<8x8x32xf32> to vector<4x16x32xf32>
    %cst_69 = arith.constant dense<0.000000e+00> : vector<16x32xf32>
    %193 = vector.multi_reduction <add>, %192, %cst_69 [0] : vector<4x16x32xf32> to vector<16x32xf32>
    %194 = vector.extract_strided_slice %146 {offsets = [0, 0], sizes = [1, 32], strides = [1, 1]} : vector<6x32xf32> to vector<1x32xf32>
    %195 = vector.broadcast %194 : vector<1x32xf32> to vector<16x32xf32>
    %196 = arith.addf %193, %195 : vector<16x32xf32>
    %197 = arith.addf %144, %196 : vector<16x32xf32>
    %198 = vector.extract_strided_slice %146 {offsets = [2, 0], sizes = [1, 32], strides = [1, 1]} : vector<6x32xf32> to vector<1x32xf32>
    %199 = vector.extract_strided_slice %146 {offsets = [3, 0], sizes = [1, 32], strides = [1, 1]} : vector<6x32xf32> to vector<1x32xf32>
    %cst_70 = arith.constant dense<0.000000e+00> : vector<16xf32>
    %200 = vector.multi_reduction <add>, %197, %cst_70 [1] : vector<16x32xf32> to vector<16xf32>
    %201 = vector.shape_cast %200 : vector<16xf32> to vector<16x1xf32>
    %cst_71 = arith.constant 3.200000e+01 : f32
    %202 = vector.broadcast %cst_71 : f32 to vector<16x1xf32>
    %203 = arith.divf %201, %202 : vector<16x1xf32>
    %204 = vector.broadcast %203 : vector<16x1xf32> to vector<16x32xf32>
    %205 = arith.subf %197, %204 : vector<16x32xf32>
    %206 = arith.mulf %205, %205 : vector<16x32xf32>
    %cst_72 = arith.constant dense<0.000000e+00> : vector<16xf32>
    %207 = vector.multi_reduction <add>, %206, %cst_72 [1] : vector<16x32xf32> to vector<16xf32>
    %208 = vector.shape_cast %207 : vector<16xf32> to vector<16x1xf32>
    %cst_73 = arith.constant 3.200000e+01 : f32
    %209 = vector.broadcast %cst_73 : f32 to vector<16x1xf32>
    %210 = arith.divf %208, %209 : vector<16x1xf32>
    %cst_74 = arith.constant 9.99999974E-6 : f32
    %211 = vector.broadcast %cst_74 : f32 to vector<16x1xf32>
    %212 = arith.addf %210, %211 : vector<16x1xf32>
    %213 = math.rsqrt %212 : vector<16x1xf32>
    %214 = vector.broadcast %213 : vector<16x1xf32> to vector<16x32xf32>
    %215 = arith.mulf %205, %214 : vector<16x32xf32>
    %216 = vector.broadcast %198 : vector<1x32xf32> to vector<16x32xf32>
    %217 = arith.mulf %215, %216 : vector<16x32xf32>
    %218 = vector.broadcast %199 : vector<1x32xf32> to vector<16x32xf32>
    %219 = arith.addf %217, %218 : vector<16x32xf32>
    %c1_75 = arith.constant 1 : index
    %c0_76 = arith.constant 0 : index
    %c0_77 = arith.constant 0 : index
    %220 = vector.load %arg8[%c1_75, %c0_76, %c0_77] : memref<2x33x128xf32, #tpu.memory_space<vmem>>, vector<1x33x128xf32>
    %221 = vector.shape_cast %220 : vector<1x33x128xf32> to vector<33x128xf32>
    %222 = vector.extract_strided_slice %221 {offsets = [0, 0], sizes = [32, 128], strides = [1, 1]} : vector<33x128xf32> to vector<32x128xf32>
    %cst_78 = arith.constant dense<0.000000e+00> : vector<16x128xf32>
    %223 = tpu.matmul %219, %222, %cst_78 {dimension_numbers = #tpu.dot_dimension_numbers<[1], [0], [0], [1], [0, 0, 1, 1], [], []>} : vector<16x32xf32>, vector<32x128xf32>, vector<16x128xf32> -> vector<16x128xf32>
    %224 = vector.extract_strided_slice %221 {offsets = [32, 0], sizes = [1, 128], strides = [1, 1]} : vector<33x128xf32> to vector<1x128xf32>
    %225 = vector.broadcast %224 : vector<1x128xf32> to vector<16x128xf32>
    %226 = arith.addf %223, %225 : vector<16x128xf32>
    %cst_79 = arith.constant 0.000000e+00 : f32
    %227 = vector.broadcast %cst_79 : f32 to vector<16x128xf32>
    %228 = arith.maximumf %226, %227 : vector<16x128xf32>
    %c1_80 = arith.constant 1 : index
    %c0_81 = arith.constant 0 : index
    %c0_82 = arith.constant 0 : index
    %229 = vector.load %arg9[%c1_80, %c0_81, %c0_82] : memref<2x128x32xf32, #tpu.memory_space<vmem>>, vector<1x128x32xf32>
    %230 = vector.shape_cast %229 : vector<1x128x32xf32> to vector<128x32xf32>
    %cst_83 = arith.constant dense<0.000000e+00> : vector<16x32xf32>
    %231 = tpu.matmul %228, %230, %cst_83 {dimension_numbers = #tpu.dot_dimension_numbers<[1], [0], [0], [1], [0, 0, 1, 1], [], []>} : vector<16x128xf32>, vector<128x32xf32>, vector<16x32xf32> -> vector<16x32xf32>
    %232 = vector.extract_strided_slice %146 {offsets = [1, 0], sizes = [1, 32], strides = [1, 1]} : vector<6x32xf32> to vector<1x32xf32>
    %233 = vector.broadcast %232 : vector<1x32xf32> to vector<16x32xf32>
    %234 = arith.addf %231, %233 : vector<16x32xf32>
    %235 = arith.addf %219, %234 : vector<16x32xf32>
    %236 = vector.extract_strided_slice %146 {offsets = [4, 0], sizes = [1, 32], strides = [1, 1]} : vector<6x32xf32> to vector<1x32xf32>
    %237 = vector.extract_strided_slice %146 {offsets = [5, 0], sizes = [1, 32], strides = [1, 1]} : vector<6x32xf32> to vector<1x32xf32>
    %cst_84 = arith.constant dense<0.000000e+00> : vector<16xf32>
    %238 = vector.multi_reduction <add>, %235, %cst_84 [1] : vector<16x32xf32> to vector<16xf32>
    %239 = vector.shape_cast %238 : vector<16xf32> to vector<16x1xf32>
    %cst_85 = arith.constant 3.200000e+01 : f32
    %240 = vector.broadcast %cst_85 : f32 to vector<16x1xf32>
    %241 = arith.divf %239, %240 : vector<16x1xf32>
    %242 = vector.broadcast %241 : vector<16x1xf32> to vector<16x32xf32>
    %243 = arith.subf %235, %242 : vector<16x32xf32>
    %244 = arith.mulf %243, %243 : vector<16x32xf32>
    %cst_86 = arith.constant dense<0.000000e+00> : vector<16xf32>
    %245 = vector.multi_reduction <add>, %244, %cst_86 [1] : vector<16x32xf32> to vector<16xf32>
    %246 = vector.shape_cast %245 : vector<16xf32> to vector<16x1xf32>
    %cst_87 = arith.constant 3.200000e+01 : f32
    %247 = vector.broadcast %cst_87 : f32 to vector<16x1xf32>
    %248 = arith.divf %246, %247 : vector<16x1xf32>
    %cst_88 = arith.constant 9.99999974E-6 : f32
    %249 = vector.broadcast %cst_88 : f32 to vector<16x1xf32>
    %250 = arith.addf %248, %249 : vector<16x1xf32>
    %251 = math.rsqrt %250 : vector<16x1xf32>
    %252 = vector.broadcast %251 : vector<16x1xf32> to vector<16x32xf32>
    %253 = arith.mulf %243, %252 : vector<16x32xf32>
    %254 = vector.broadcast %236 : vector<1x32xf32> to vector<16x32xf32>
    %255 = arith.mulf %253, %254 : vector<16x32xf32>
    %256 = vector.broadcast %237 : vector<1x32xf32> to vector<16x32xf32>
    %257 = arith.addf %255, %256 : vector<16x32xf32>
    %258 = vector.extract_strided_slice %1 {offsets = [0, 0], sizes = [16, 1], strides = [1, 1]} : vector<16x4xf32> to vector<16x1xf32>
    %cst_89 = arith.constant -1.000000e+03 : f32
    %259 = vector.broadcast %cst_89 : f32 to vector<16x1xf32>
    %260 = arith.cmpf oeq, %258, %259 : vector<16x1xf32>
    %cst_90 = arith.constant 0.000000e+00 : f32
    %cst_91 = arith.constant 1.000000e+00 : f32
    %261 = vector.broadcast %cst_90 : f32 to vector<16x1xf32>
    %262 = vector.broadcast %cst_91 : f32 to vector<16x1xf32>
    %263 = arith.select %260, %261, %262 : vector<16x1xi1>, vector<16x1xf32>
    %264 = vector.broadcast %263 : vector<16x1xf32> to vector<16x32xf32>
    %265 = arith.mulf %257, %264 : vector<16x32xf32>
    %266 = vector.shape_cast %265 : vector<16x32xf32> to vector<2x8x32xf32>
    %cst_92 = arith.constant dense<0.000000e+00> : vector<2x32xf32>
    %267 = vector.multi_reduction <add>, %266, %cst_92 [1] : vector<2x8x32xf32> to vector<2x32xf32>
    %268 = vector.shape_cast %263 : vector<16x1xf32> to vector<2x8x1xf32>
    %cst_93 = arith.constant dense<0.000000e+00> : vector<2x1xf32>
    %269 = vector.multi_reduction <add>, %268, %cst_93 [1] : vector<2x8x1xf32> to vector<2x1xf32>
    %cst_94 = arith.constant 1.000000e+00 : f32
    %270 = vector.broadcast %cst_94 : f32 to vector<2x1xf32>
    %271 = arith.maximumf %269, %270 : vector<2x1xf32>
    %272 = tpu.reciprocal %271 {approx = true} : vector<2x1xf32> -> vector<2x1xf32>
    %273 = vector.broadcast %272 : vector<2x1xf32> to vector<2x32xf32>
    %274 = arith.mulf %267, %273 : vector<2x32xf32>
    %c0_95 = arith.constant 0 : index
    %c0_96 = arith.constant 0 : index
    %275 = vector.load %arg4[%c0_95, %c0_96] : memref<32x37xf32, #tpu.memory_space<vmem>>, vector<32x37xf32>
    %276 = vector.extract_strided_slice %275 {offsets = [0, 0], sizes = [32, 32], strides = [1, 1]} : vector<32x37xf32> to vector<32x32xf32>
    %cst_97 = arith.constant dense<0.000000e+00> : vector<2x32xf32>
    %277 = tpu.matmul %274, %276, %cst_97 {dimension_numbers = #tpu.dot_dimension_numbers<[1], [0], [0], [1], [0, 0, 1, 1], [], []>} : vector<2x32xf32>, vector<32x32xf32>, vector<2x32xf32> -> vector<2x32xf32>
    %278 = vector.broadcast %6 : vector<1x32xf32> to vector<2x32xf32>
    %279 = arith.addf %277, %278 : vector<2x32xf32>
    %cst_98 = arith.constant 0.000000e+00 : f32
    %280 = vector.broadcast %cst_98 : f32 to vector<2x32xf32>
    %281 = arith.maximumf %279, %280 : vector<2x32xf32>
    %282 = vector.extract_strided_slice %275 {offsets = [0, 32], sizes = [32, 5], strides = [1, 1]} : vector<32x37xf32> to vector<32x5xf32>
    %cst_99 = arith.constant dense<0.000000e+00> : vector<2x5xf32>
    %283 = tpu.matmul %281, %282, %cst_99 {dimension_numbers = #tpu.dot_dimension_numbers<[1], [0], [0], [1], [0, 0, 1, 1], [], []>} : vector<2x32xf32>, vector<32x5xf32>, vector<2x5xf32> -> vector<2x5xf32>
    %284 = vector.broadcast %7 : vector<1x5xf32> to vector<2x5xf32>
    %285 = arith.addf %283, %284 : vector<2x5xf32>
    %c0_100 = arith.constant 0 : index
    %c0_101 = arith.constant 0 : index
    %286 = vector.load %arg10[%c0_100, %c0_101] : memref<2x5xf32, #tpu.memory_space<vmem>>, vector<2x5xf32>
    tpu.vector_store %arg10[%c0_100, %c0_101], %285 {strides = array<i32>} : memref<2x5xf32, #tpu.memory_space<vmem>>, vector<2x5xf32>,
    return
  }
}

</mosaic_0001>

<llo_original>
// kernel: transformer_net_forward.1
$region0: #{transformer_net_forward.1}
  #allocation0 [shape = 'u32[]', space=smem, size = 0x4, offset = 0x4, fixed_abs, tag = 'smem constant byte address 0x4 - core index']
  #allocation1 [shape = 'u32[144,128]{1,0:T(1,128)}', space=vmem, size = 0x12000, scoped, tag = 'internal scratch']
  %s0 = inlined_call_operand.vmem [shape: f32[2,8,4], index: 0, kind: input, shape index: {}]
  %s1 = inlined_call_operand.vmem [shape: f32[2,1,8], index: 1, kind: input, shape index: {}]
  %s2 = inlined_call_operand.vmem [shape: f32[4,32], index: 2, kind: input, shape index: {}]
  %s3 = inlined_call_operand.vmem [shape: f32[42,32], index: 3, kind: input, shape index: {}]
  %s4 = inlined_call_operand.vmem [shape: f32[32,37], index: 4, kind: input, shape index: {}]
  %s5 = inlined_call_operand.vmem [shape: f32[2,4,33,24], index: 5, kind: input, shape index: {}]
  %s6 = inlined_call_operand.vmem [shape: f32[2,4,8,32], index: 6, kind: input, shape index: {}]
  %s7 = inlined_call_operand.vmem [shape: f32[2,6,32], index: 7, kind: input, shape index: {}]
  %s8 = inlined_call_operand.vmem [shape: f32[2,33,128], index: 8, kind: input, shape index: {}]
  %s9 = inlined_call_operand.vmem [shape: f32[2,128,32], index: 9, kind: input, shape index: {}]
  %s10 = inlined_call_operand.hbm [shape: f32[2,5], index: 10, kind: output, shape index: {}]
  %s11 = sld [smem:[#allocation0]]
  $region50: #{transformer_net_forward.1} parent=0
    _
  %s13 = ssub.s32 1, %s11
  %s14 = scalar_select 0, %s13, %s11
  $region1: #{transformer_net_forward.1} parent=0
    #allocation2 [shape = 'u8[1024]{0}', space=vmem, size = 0x400, scoped, tag = 'output window, operand 0, single buffered']
    #allocation3 [shape = 's32[1]{0}', space=sflag, size = 0x4, scoped, tag = 'scoped memory for transformer_net_forward.1']
    %15 = vsyncpa [#allocation3], 0
    // Predicated region
    $region2: #{transformer_net_forward.1} parent=1 // pred_check
      _
    $region3: #{transformer_net_forward.1} parent=1 // pred_check_branch
      %17 = sbr.rel (0) target = $region5
    $region4: #{transformer_net_forward.1} parent=1 // pred_region
      _
    $region5: #{transformer_net_forward.1} parent=1 // pred_fallthru
      _
    // Predicated region
    $region6: #{transformer_net_forward.1} parent=1 // pred_check
      _
    $region7: #{transformer_net_forward.1} parent=1 // pred_check_branch
      %19 = sbr.rel (0) target = $region9
    $region8: #{transformer_net_forward.1} parent=1 // pred_region
      _
    $region9: #{transformer_net_forward.1} parent=1 // pred_fallthru
      _
    // Predicated region
    $region10: #{transformer_net_forward.1} parent=1 // pred_check
      _
    $region11: #{transformer_net_forward.1} parent=1 // pred_check_branch
      %21 = sbr.rel (0) target = $region13
    $region12: #{transformer_net_forward.1} parent=1 // pred_region
      _
    $region13: #{transformer_net_forward.1} parent=1 // pred_fallthru
      _
    // Predicated region
    $region14: #{transformer_net_forward.1} parent=1 // pred_check
      _
    $region15: #{transformer_net_forward.1} parent=1 // pred_check_branch
      %23 = sbr.rel (0) target = $region17
    $region16: #{transformer_net_forward.1} parent=1 // pred_region
      _
    $region17: #{transformer_net_forward.1} parent=1 // pred_fallthru
      _
    // Predicated region
    $region18: #{transformer_net_forward.1} parent=1 // pred_check
      _
    $region19: #{transformer_net_forward.1} parent=1 // pred_check_branch
      %25 = sbr.rel (0) target = $region21
    $region20: #{transformer_net_forward.1} parent=1 // pred_region
      _
    $region21: #{transformer_net_forward.1} parent=1 // pred_fallthru
      _
    // Predicated region
    $region22: #{transformer_net_forward.1} parent=1 // pred_check
      _
    $region23: #{transformer_net_forward.1} parent=1 // pred_check_branch
      %27 = sbr.rel (0) target = $region25
    $region24: #{transformer_net_forward.1} parent=1 // pred_region
      _
    $region25: #{transformer_net_forward.1} parent=1 // pred_fallthru
      _
    // Predicated region
    $region26: #{transformer_net_forward.1} parent=1 // pred_check
      _
    $region27: #{transformer_net_forward.1} parent=1 // pred_check_branch
      %29 = sbr.rel (0) target = $region29
    $region28: #{transformer_net_forward.1} parent=1 // pred_region
      _
    $region29: #{transformer_net_forward.1} parent=1 // pred_fallthru
      _
    // Predicated region
    $region30: #{transformer_net_forward.1} parent=1 // pred_check
      _
    $region31: #{transformer_net_forward.1} parent=1 // pred_check_branch
      %31 = sbr.rel (0) target = $region33
    $region32: #{transformer_net_forward.1} parent=1 // pred_region
      _
    $region33: #{transformer_net_forward.1} parent=1 // pred_fallthru
      _
    // Predicated region
    $region34: #{transformer_net_forward.1} parent=1 // pred_check
      _
    $region35: #{transformer_net_forward.1} parent=1 // pred_check_branch
      %33 = sbr.rel (0) target = $region37
    $region36: #{transformer_net_forward.1} parent=1 // pred_region
      _
    $region37: #{transformer_net_forward.1} parent=1 // pred_fallthru
      _
    // Predicated region
    $region38: #{transformer_net_forward.1} parent=1 // pred_check
      _
    $region39: #{transformer_net_forward.1} parent=1 // pred_check_branch
      %35 = sbr.rel (0) target = $region41
    $region40: #{transformer_net_forward.1} parent=1 // pred_region
      _
    $region41: #{transformer_net_forward.1} parent=1 // pred_fallthru
      _
    %v36 = vld [vmem:[%s0] sm:$0xff]
    %v37 = vld [vmem:[%s0 + $0x8] sm:$0xff]
    %v38 = vld [vmem:[%s2] sm:$0x1]
    %v39 = vld [vmem:[%s2 + $0x1] sm:$0x1]
    %v40 = vld [vmem:[%s2 + $0x2] sm:$0x1]
    %v41 = vld [vmem:[%s2 + $0x3] sm:$0x1]
    %43 = vset.pattern.permute.xlu0 0
    %44 = vperm.xlu0 %43, %v36
    %v45 = vpop.permute.xlu0 %44
    %48 = vset.pattern.permute.xlu0 0
    %49 = vperm.xlu0 %48, %v37
    %v50 = vpop.permute.xlu0 %49
    %v52 = vlaneseq
    %v53 = vshrl.u32 %v52, 7
    %v54 = vsub.s32 0, %v53
    %v55 = vrot.slane %v38, %v54
    %v56 = vmul.f32 %v45, %v55
    %v57 = vmul.f32 %v50, %v55
    %58 = vset.pattern.permute.xlu0 1
    %59 = vperm.xlu0 %58, %v36
    %v60 = vpop.permute.xlu0 %59
    %62 = vset.pattern.permute.xlu0 1
    %63 = vperm.xlu0 %62, %v37
    %v64 = vpop.permute.xlu0 %63
    %v66 = vmul.f32 %v60, %v55
    %v67 = vmul.f32 %v64, %v55
    %70 = vrot.lane.b32.xlu0 %v66, 10
    %v71 = vpop.permute.xlu0 %70
    %72 = vrot.lane.b32.xlu0 %v67, 10
    %v73 = vpop.permute.xlu0 %72
    %vm76 = vcmask 80896
    %v77 = vsel %vm76, %v56, %v71
    %v78 = vsel %vm76, %v57, %v73
    %v79 = vand.u32 2147483647, %v77
    %vm80 = vcmp.le.f32.partialorder %v79, 0.7853982
    %vm81 = vcmp.lt.s32.totalorder %v77, 0
    %v82 = vand.u32 %v77, 2139095040
    %v83 = vshrl.u32 %v82, 23
    %v84 = vsub.s32 %v83, 127
    %v85 = vand.u32 2147483647, %v77
    %v86 = vand.u32 %v85, 8388607
    %v87 = vor.u32 %v86, 8388608
    %v88 = vsub.s32 0, %v87
    %v89 = vadd.s32 %v84, 1
    %vm90 = vcmp.gt.s32.totalorder %v89, 0
    %v91 = vsel %vm90, %v89, 0
    %v92 = vshrl.u32 %v91, 5
    %v93 = vand.u32 %v91, 31
    %v94 = vsub.s32 32, %v93
    %v95 = vshrl.u32 683565275, %v94
    %v96 = vshll.u32 683565275, %v93
    %v97 = vshrl.u32 2475754826, %v94
    %v98 = vor.u32 %v96, %v97
    %v99 = vshll.u32 2475754826, %v93
    %v100 = vshrl.u32 2131351028, %v94
    %v101 = vor.u32 %v99, %v100
    %v102 = vshll.u32 2131351028, %v93
    %v103 = vshrl.u32 2102212464, %v94
    %v104 = vor.u32 %v102, %v103
    %v105 = vshll.u32 2102212464, %v93
    %v106 = vshrl.u32 920167782, %v94
    %v107 = vor.u32 %v105, %v106
    %v108 = vshll.u32 920167782, %v93
    %v109 = vshrl.u32 1326507024, %v94
    %v110 = vor.u32 %v108, %v109
    %vm111 = vcmp.lt.s32.totalorder %v92, 1
    %vm112 = vcmp.lt.s32.totalorder %v92, 2
    %vm113 = vcmp.lt.s32.totalorder %v92, 3
    %vm114 = vcmp.lt.s32.totalorder %v92, 4
    %v115 = vsel %vm111, %v95, %v98
    %v116 = vsel %vm114, %v104, 2102212464
    %v117 = vsel %vm113, %v101, %v116
    %v118 = vsel %vm112, %v115, %v117
    %v119 = vsel %vm111, %v98, %v101
    %v120 = vsel %vm114, %v107, 920167782
    %v121 = vsel %vm113, %v104, %v120
    %v122 = vsel %vm112, %v119, %v121
    %v123 = vsel %vm111, %v101, %v104
    %v124 = vsel %vm114, %v110, 1326507024
    %v125 = vsel %vm113, %v107, %v124
    %v126 = vsel %vm112, %v123, %v125
    %v127 = vshll.u32 %v87, 8
    %v128 = vmul.u32.u64.compose %v127, %v126
    %v129 = vextract.low.u32 %v128
    %v130 = vextract.high.u32 %v128
    %v131 = vmul.u32.u64.compose %v127, %v122
    %v132 = vextract.low.u32 %v131
    %v133 = vextract.high.u32 %v131
    %v134 = vmul.u32 %v127, %v118
    %v135 = vadd.s32 %v130, %v132
    %vm136 = vc.u32 %v130, %v132
    %v137 = vadd.s32 %v133, 1
    %v138 = vsel %vm136, %v137, %v133
    %v139 = vadd.s32 %v134, %v138
    %v140 = vadd.s32 %v139, 536870912
    %v141 = vshrl.u32 %v140, 30
    %v142 = vshll.u32 %v141, 30
    %v143 = vsub.s32 %v139, %v142
    %vm144 = vcmp.lt.s32.totalorder %v143, 0
    %v145 = vsub.s32 0, %v143
    %v146 = vsel %vm144, %v145, %v143
    %v147 = vclz %v146
    %v148 = vsub.s32 %v147, 2
    %vm149 = vcmp.gt.s32.totalorder 0, %v148
    %v150 = vsel %vm149, 0, %v148
    %v151 = vsub.s32 32, %v150
    %v152 = vshll.u32 %v143, %v150
    %v153 = vshrl.u32 %v135, %v151
    %v154 = vor.u32 %v152, %v153
    %v155 = vsub.s32 4294967266, %v150
    %v156 = vadd.s32 %v155, 127
    %v157 = vshll.u32 %v156, 23
    %v158 = vor.u32 4788187, %v157
    %v159 = vand.u32 2147483647, %v158
    %v161 = vcvt.s32.f32 %v154
    %v162 = vmul.f32 %v161, %v159
    %v163 = vxor.u32 %v162, 2147483648
    %v164 = vsel %vm81, %v163, %v162
    %v165 = vsub.s32 4, %v141
    %v166 = vsel %vm81, %v165, %v141
    %v167 = vsel %vm80, %v77, %v164
    %v168 = vsel %vm80, 0, %v166
    %v169 = vcosq.f32.pop %v167
    %v170 = vsinq.f32.pop %v167
    %vm171 = vweird.f32 %v77
    %v172 = vadd.s32 %v168, 3
    %v173 = vand.u32 %v172, 3
    %vm174 = vcmp.lt.s32.totalorder %v173, 2
    %vm175 = vcmp.eq.s32.totalorder %v173, 0
    %v176 = vxor.u32 %v170, 2147483648
    %v177 = vsel %vm175, %v169, %v176
    %vm178 = vcmp.eq.s32.totalorder %v173, 2
    %v179 = vxor.u32 %v169, 2147483648
    %v180 = vsel %vm178, %v179, %v170
    %v181 = vsel %vm174, %v177, %v180
    %v182 = vsel %vm171, nan, %v181
    %v183 = vand.u32 2147483647, %v78
    %vm184 = vcmp.le.f32.partialorder %v183, 0.7853982
    %vm185 = vcmp.lt.s32.totalorder %v78, 0
    %v186 = vand.u32 %v78, 2139095040
    %v187 = vshrl.u32 %v186, 23
    %v188 = vsub.s32 %v187, 127
    %v189 = vand.u32 2147483647, %v78
    %v190 = vand.u32 %v189, 8388607
    %v191 = vor.u32 %v190, 8388608
    %v192 = vsub.s32 0, %v191
    %v193 = vadd.s32 %v188, 1
    %vm194 = vcmp.gt.s32.totalorder %v193, 0
    %v195 = vsel %vm194, %v193, 0
    %v196 = vshrl.u32 %v195, 5
    %v197 = vand.u32 %v195, 31
    %v198 = vsub.s32 32, %v197
    %v199 = vshrl.u32 683565275, %v198
    %v200 = vshll.u32 683565275, %v197
    %v201 = vshrl.u32 2475754826, %v198
    %v202 = vor.u32 %v200, %v201
    %v203 = vshll.u32 2475754826, %v197
    %v204 = vshrl.u32 2131351028, %v198
    %v205 = vor.u32 %v203, %v204
    %v206 = vshll.u32 2131351028, %v197
    %v207 = vshrl.u32 2102212464, %v198
    %v208 = vor.u32 %v206, %v207
    %v209 = vshll.u32 2102212464, %v197
    %v210 = vshrl.u32 920167782, %v198
    %v211 = vor.u32 %v209, %v210
    %v212 = vshll.u32 920167782, %v197
    %v213 = vshrl.u32 1326507024, %v198
    %v214 = vor.u32 %v212, %v213
    %vm215 = vcmp.lt.s32.totalorder %v196, 1
    %vm216 = vcmp.lt.s32.totalorder %v196, 2
    %vm217 = vcmp.lt.s32.totalorder %v196, 3
    %vm218 = vcmp.lt.s32.totalorder %v196, 4
    %v219 = vsel %vm215, %v199, %v202
    %v220 = vsel %vm218, %v208, 2102212464
    %v221 = vsel %vm217, %v205, %v220
    %v222 = vsel %vm216, %v219, %v221
    %v223 = vsel %vm215, %v202, %v205
    %v224 = vsel %vm218, %v211, 920167782
    %v225 = vsel %vm217, %v208, %v224
    %v226 = vsel %vm216, %v223, %v225
    %v227 = vsel %vm215, %v205, %v208
    %v228 = vsel %vm218, %v214, 1326507024
    %v229 = vsel %vm217, %v211, %v228
    %v230 = vsel %vm216, %v227, %v229
    %v231 = vshll.u32 %v191, 8
    %v232 = vmul.u32.u64.compose %v231, %v230
    %v233 = vextract.low.u32 %v232
    %v234 = vextract.high.u32 %v232
    %v235 = vmul.u32.u64.compose %v231, %v226
    %v236 = vextract.low.u32 %v235
    %v237 = vextract.high.u32 %v235
    %v238 = vmul.u32 %v231, %v222
    %v239 = vadd.s32 %v234, %v236
    %vm240 = vc.u32 %v234, %v236
    %v241 = vadd.s32 %v237, 1
    %v242 = vsel %vm240, %v241, %v237
    %v243 = vadd.s32 %v238, %v242
    %v244 = vadd.s32 %v243, 536870912
    %v245 = vshrl.u32 %v244, 30
    %v246 = vshll.u32 %v245, 30
    %v247 = vsub.s32 %v243, %v246
    %vm248 = vcmp.lt.s32.totalorder %v247, 0
    %v249 = vsub.s32 0, %v247
    %v250 = vsel %vm248, %v249, %v247
    %v251 = vclz %v250
    %v252 = vsub.s32 %v251, 2
    %vm253 = vcmp.gt.s32.totalorder 0, %v252
    %v254 = vsel %vm253, 0, %v252
    %v255 = vsub.s32 32, %v254
    %v256 = vshll.u32 %v247, %v254
    %v257 = vshrl.u32 %v239, %v255
    %v258 = vor.u32 %v256, %v257
    %v259 = vsub.s32 4294967266, %v254
    %v260 = vadd.s32 %v259, 127
    %v261 = vshll.u32 %v260, 23
    %v262 = vor.u32 4788187, %v261
    %v263 = vand.u32 2147483647, %v262
    %v265 = vcvt.s32.f32 %v258
    %v266 = vmul.f32 %v265, %v263
    %v267 = vxor.u32 %v266, 2147483648
    %v268 = vsel %vm185, %v267, %v266
    %v269 = vsub.s32 4, %v245
    %v270 = vsel %vm185, %v269, %v245
    %v271 = vsel %vm184, %v78, %v268
    %v272 = vsel %vm184, 0, %v270
    %v273 = vcosq.f32.pop %v271
    %v274 = vsinq.f32.pop %v271
    %vm275 = vweird.f32 %v78
    %v276 = vadd.s32 %v272, 3
    %v277 = vand.u32 %v276, 3
    %vm278 = vcmp.lt.s32.totalorder %v277, 2
    %vm279 = vcmp.eq.s32.totalorder %v277, 0
    %v280 = vxor.u32 %v274, 2147483648
    %v281 = vsel %vm279, %v273, %v280
    %vm282 = vcmp.eq.s32.totalorder %v277, 2
    %v283 = vxor.u32 %v273, 2147483648
    %v284 = vsel %vm282, %v283, %v274
    %v285 = vsel %vm278, %v281, %v284
    %v286 = vsel %vm275, nan, %v285
    %v287 = vand.u32 2147483647, %v77
    %vm288 = vcmp.le.f32.partialorder %v287, 0.7853982
    %vm289 = vcmp.lt.s32.totalorder %v77, 0
    %v290 = vand.u32 %v77, 2139095040
    %v291 = vshrl.u32 %v290, 23
    %v292 = vsub.s32 %v291, 127
    %v293 = vand.u32 2147483647, %v77
    %v294 = vand.u32 %v293, 8388607
    %v295 = vor.u32 %v294, 8388608
    %v296 = vsub.s32 0, %v295
    %v297 = vadd.s32 %v292, 1
    %vm298 = vcmp.gt.s32.totalorder %v297, 0
    %v299 = vsel %vm298, %v297, 0
    %v300 = vshrl.u32 %v299, 5
    %v301 = vand.u32 %v299, 31
    %v302 = vsub.s32 32, %v301
    %v303 = vshrl.u32 683565275, %v302
    %v304 = vshll.u32 683565275, %v301
    %v305 = vshrl.u32 2475754826, %v302
    %v306 = vor.u32 %v304, %v305
    %v307 = vshll.u32 2475754826, %v301
    %v308 = vshrl.u32 2131351028, %v302
    %v309 = vor.u32 %v307, %v308
    %v310 = vshll.u32 2131351028, %v301
    %v311 = vshrl.u32 2102212464, %v302
    %v312 = vor.u32 %v310, %v311
    %v313 = vshll.u32 2102212464, %v301
    %v314 = vshrl.u32 920167782, %v302
    %v315 = vor.u32 %v313, %v314
    %v316 = vshll.u32 920167782, %v301
    %v317 = vshrl.u32 1326507024, %v302
    %v318 = vor.u32 %v316, %v317
    %vm319 = vcmp.lt.s32.totalorder %v300, 1
    %vm320 = vcmp.lt.s32.totalorder %v300, 2
    %vm321 = vcmp.lt.s32.totalorder %v300, 3
    %vm322 = vcmp.lt.s32.totalorder %v300, 4
    %v323 = vsel %vm319, %v303, %v306
    %v324 = vsel %vm322, %v312, 2102212464
    %v325 = vsel %vm321, %v309, %v324
    %v326 = vsel %vm320, %v323, %v325
    %v327 = vsel %vm319, %v306, %v309
    %v328 = vsel %vm322, %v315, 920167782
    %v329 = vsel %vm321, %v312, %v328
    %v330 = vsel %vm320, %v327, %v329
    %v331 = vsel %vm319, %v309, %v312
    %v332 = vsel %vm322, %v318, 1326507024
    %v333 = vsel %vm321, %v315, %v332
    %v334 = vsel %vm320, %v331, %v333
    %v335 = vshll.u32 %v295, 8
    %v336 = vmul.u32.u64.compose %v335, %v334
    %v337 = vextract.low.u32 %v336
    %v338 = vextract.high.u32 %v336
    %v339 = vmul.u32.u64.compose %v335, %v330
    %v340 = vextract.low.u32 %v339
    %v341 = vextract.high.u32 %v339
    %v342 = vmul.u32 %v335, %v326
    %v343 = vadd.s32 %v338, %v340
    %vm344 = vc.u32 %v338, %v340
    %v345 = vadd.s32 %v341, 1
    %v346 = vsel %vm344, %v345, %v341
    %v347 = vadd.s32 %v342, %v346
    %v348 = vadd.s32 %v347, 536870912
    %v349 = vshrl.u32 %v348, 30
    %v350 = vshll.u32 %v349, 30
    %v351 = vsub.s32 %v347, %v350
    %vm352 = vcmp.lt.s32.totalorder %v351, 0
    %v353 = vsub.s32 0, %v351
    %v354 = vsel %vm352, %v353, %v351
    %v355 = vclz %v354
    %v356 = vsub.s32 %v355, 2
    %vm357 = vcmp.gt.s32.totalorder 0, %v356
    %v358 = vsel %vm357, 0, %v356
    %v359 = vsub.s32 32, %v358
    %v360 = vshll.u32 %v351, %v358
    %v361 = vshrl.u32 %v343, %v359
    %v362 = vor.u32 %v360, %v361
    %v363 = vsub.s32 4294967266, %v358
    %v364 = vadd.s32 %v363, 127
    %v365 = vshll.u32 %v364, 23
    %v366 = vor.u32 4788187, %v365
    %v367 = vand.u32 2147483647, %v366
    %v369 = vcvt.s32.f32 %v362
    %v370 = vmul.f32 %v369, %v367
    %v371 = vxor.u32 %v370, 2147483648
    %v372 = vsel %vm289, %v371, %v370
    %v373 = vsub.s32 4, %v349
    %v374 = vsel %vm289, %v373, %v349
    %v375 = vsel %vm288, %v77, %v372
    %v376 = vsel %vm288, 0, %v374
    %v377 = vcosq.f32.pop %v375
    %v378 = vsinq.f32.pop %v375
    %vm379 = vweird.f32 %v77
    %v380 = vand.u32 %v376, 3
    %vm381 = vcmp.lt.s32.totalorder %v380, 2
    %vm382 = vcmp.eq.s32.totalorder %v380, 0
    %v383 = vxor.u32 %v378, 2147483648
    %v384 = vsel %vm382, %v377, %v383
    %vm385 = vcmp.eq.s32.totalorder %v380, 2
    %v386 = vxor.u32 %v377, 2147483648
    %v387 = vsel %vm385, %v386, %v378
    %v388 = vsel %vm381, %v384, %v387
    %v389 = vsel %vm379, nan, %v388
    %v390 = vand.u32 2147483647, %v78
    %vm391 = vcmp.le.f32.partialorder %v390, 0.7853982
    %vm392 = vcmp.lt.s32.totalorder %v78, 0
    %v393 = vand.u32 %v78, 2139095040
    %v394 = vshrl.u32 %v393, 23
    %v395 = vsub.s32 %v394, 127
    %v396 = vand.u32 2147483647, %v78
    %v397 = vand.u32 %v396, 8388607
    %v398 = vor.u32 %v397, 8388608
    %v399 = vsub.s32 0, %v398
    %v400 = vadd.s32 %v395, 1
    %vm401 = vcmp.gt.s32.totalorder %v400, 0
    %v402 = vsel %vm401, %v400, 0
    %v403 = vshrl.u32 %v402, 5
    %v404 = vand.u32 %v402, 31
    %v405 = vsub.s32 32, %v404
    %v406 = vshrl.u32 683565275, %v405
    %v407 = vshll.u32 683565275, %v404
    %v408 = vshrl.u32 2475754826, %v405
    %v409 = vor.u32 %v407, %v408
    %v410 = vshll.u32 2475754826, %v404
    %v411 = vshrl.u32 2131351028, %v405
    %v412 = vor.u32 %v410, %v411
    %v413 = vshll.u32 2131351028, %v404
    %v414 = vshrl.u32 2102212464, %v405
    %v415 = vor.u32 %v413, %v414
    %v416 = vshll.u32 2102212464, %v404
    %v417 = vshrl.u32 920167782, %v405
    %v418 = vor.u32 %v416, %v417
    %v419 = vshll.u32 920167782, %v404
    %v420 = vshrl.u32 1326507024, %v405
    %v421 = vor.u32 %v419, %v420
    %vm422 = vcmp.lt.s32.totalorder %v403, 1
    %vm423 = vcmp.lt.s32.totalorder %v403, 2
    %vm424 = vcmp.lt.s32.totalorder %v403, 3
    %vm425 = vcmp.lt.s32.totalorder %v403, 4
    %v426 = vsel %vm422, %v406, %v409
    %v427 = vsel %vm425, %v415, 2102212464
    %v428 = vsel %vm424, %v412, %v427
    %v429 = vsel %vm423, %v426, %v428
    %v430 = vsel %vm422, %v409, %v412
    %v431 = vsel %vm425, %v418, 920167782
    %v432 = vsel %vm424, %v415, %v431
    %v433 = vsel %vm423, %v430, %v432
    %v434 = vsel %vm422, %v412, %v415
    %v435 = vsel %vm425, %v421, 1326507024
    %v436 = vsel %vm424, %v418, %v435
    %v437 = vsel %vm423, %v434, %v436
    %v438 = vshll.u32 %v398, 8
    %v439 = vmul.u32.u64.compose %v438, %v437
    %v440 = vextract.low.u32 %v439
    %v441 = vextract.high.u32 %v439
    %v442 = vmul.u32.u64.compose %v438, %v433
    %v443 = vextract.low.u32 %v442
    %v444 = vextract.high.u32 %v442
    %v445 = vmul.u32 %v438, %v429
    %v446 = vadd.s32 %v441, %v443
    %vm447 = vc.u32 %v441, %v443
    %v448 = vadd.s32 %v444, 1
    %v449 = vsel %vm447, %v448, %v444
    %v450 = vadd.s32 %v445, %v449
    %v451 = vadd.s32 %v450, 536870912
    %v452 = vshrl.u32 %v451, 30
    %v453 = vshll.u32 %v452, 30
    %v454 = vsub.s32 %v450, %v453
    %vm455 = vcmp.lt.s32.totalorder %v454, 0
    %v456 = vsub.s32 0, %v454
    %v457 = vsel %vm455, %v456, %v454
    %v458 = vclz %v457
    %v459 = vsub.s32 %v458, 2
    %vm460 = vcmp.gt.s32.totalorder 0, %v459
    %v461 = vsel %vm460, 0, %v459
    %v462 = vsub.s32 32, %v461
    %v463 = vshll.u32 %v454, %v461
    %v464 = vshrl.u32 %v446, %v462
    %v465 = vor.u32 %v463, %v464
    %v466 = vsub.s32 4294967266, %v461
    %v467 = vadd.s32 %v466, 127
    %v468 = vshll.u32 %v467, 23
    %v469 = vor.u32 4788187, %v468
    %v470 = vand.u32 2147483647, %v469
    %v472 = vcvt.s32.f32 %v465
    %v473 = vmul.f32 %v472, %v470
    %v474 = vxor.u32 %v473, 2147483648
    %v475 = vsel %vm392, %v474, %v473
    %v476 = vsub.s32 4, %v452
    %v477 = vsel %vm392, %v476, %v452
    %v478 = vsel %vm391, %v78, %v475
    %v479 = vsel %vm391, 0, %v477
    %v480 = vcosq.f32.pop %v478
    %v481 = vsinq.f32.pop %v478
    %vm482 = vweird.f32 %v78
    %v483 = vand.u32 %v479, 3
    %vm484 = vcmp.lt.s32.totalorder %v483, 2
    %vm485 = vcmp.eq.s32.totalorder %v483, 0
    %v486 = vxor.u32 %v481, 2147483648
    %v487 = vsel %vm485, %v480, %v486
    %vm488 = vcmp.eq.s32.totalorder %v483, 2
    %v489 = vxor.u32 %v480, 2147483648
    %v490 = vsel %vm488, %v489, %v481
    %v491 = vsel %vm484, %v487, %v490
    %v492 = vsel %vm482, nan, %v491
    %495 = vrot.lane.b32.xlu0 %v389, 20
    %v496 = vpop.permute.xlu0 %495
    %497 = vrot.lane.b32.xlu0 %v492, 20
    %v498 = vpop.permute.xlu0 %497
    %vm501 = vcmask 162816
    %v502 = vsel %vm501, %v182, %v496
    %v503 = vsel %vm501, %v286, %v498
    %504 = vrot.lane.b32.xlu0 %v36, 126
    %v505 = vpop.permute.xlu0 %504
    %506 = vrot.lane.b32.xlu0 %v37, 126
    %v507 = vpop.permute.xlu0 %506
    %512 = vrot.lane.b32.xlu0 %v502, 2
    %v513 = vpop.permute.xlu0 %512
    %514 = vrot.lane.b32.xlu0 %v503, 2
    %v515 = vpop.permute.xlu0 %514
    %vm518 = vcmask 15360
    %v519 = vsel %vm518, %v505, %v513
    %v520 = vsel %vm518, %v507, %v515
    %v521 = vld [vmem:[%s3] sm:$0xff]
    %v522 = vld [vmem:[%s3 + $0x8] sm:$0xff]
    %v523 = vld [vmem:[%s3 + $0x10] sm:$0xff]
    %v524 = vld [vmem:[%s3 + $0x18] sm:$0xff]
    %v525 = vld [vmem:[%s3 + $0x20] sm:$0xff]
    %v526 = vld [vmem:[%s3 + $0x28] sm:$0x3]
    %v527 = vlaneseq
    %v528 = vshrl.u32 %v527, 7
    %v529 = vsub.s32 0, %v528
    %v530 = vrot.slane %v39, %v529
    %vm531 = vcmask 343040
    %v533 = vsel %vm531, %v519, 0
    %v536 = vsel %vm531, %v520, 0
    %vm538 = vcmask 1041408
    %v540 = vsel %vm538, %v526, 0
    %542 = vmatprep.subr.mxu0 0.0
    %543 = vmatpush1.msra.mxu0 0.0
    %544 = vmatprep.subr.mxu0 0.0
    %545 = vmatpush1.msra.mxu0 0.0
    %546 = vmatprep.subr.mxu0 0.0
    %547 = vmatpush1.msra.mxu0 0.0
    %548 = vmatprep.subr.mxu0 0.0
    %549 = vmatpush1.msra.mxu0 0.0
    %550 = vmatprep.subr.mxu0 0.0
    %551 = vmatpush1.msra.mxu0 0.0
    %552 = vmatprep.subr.mxu0 0.0
    %553 = vmatpush1.msra.mxu0 0.0
    %554 = vmatprep.subr.mxu0 0.0
    %555 = vmatpush1.msra.mxu0 0.0
    %556 = vmatprep.subr.mxu0 0.0
    %557 = vmatpush1.msra.mxu0 0.0
    %558 = vmatprep.subr.mxu0 0.0
    %559 = vmatpush1.msra.mxu0 0.0
    %560 = vmatprep.subr.mxu0 0.0
    %561 = vmatpush1.msra.mxu0 0.0
    %562 = vmatprep.subr.mxu0 0.0
    %563 = vmatpush1.msra.mxu0 %v540
    %564 = vmatprep.subr.mxu0 0.0
    %565 = vmatpush1.msra.mxu0 %v525
    %566 = vmatprep.subr.mxu0 0.0
    %567 = vmatpush1.msra.mxu0 %v524
    %568 = vmatprep.subr.mxu0 0.0
    %569 = vmatpush1.msra.mxu0 %v523
    %570 = vmatprep.subr.mxu0 0.0
    %571 = vmatpush1.msra.mxu0 %v522
    %572 = vmatprep.subr.mxu0 0.0
    %573 = vmatpush1.msra.mxu0 %v521
    %574 = vmatprep.subr.mxu0 0.0
    %575 = vmatpush2.msra.mxu0 0.0
    %576 = vmatprep.subr.mxu0 0.0
    %577 = vmatpush2.msra.mxu0 0.0
    %578 = vmatprep.subr.mxu0 0.0
    %579 = vmatpush2.msra.mxu0 0.0
    %580 = vmatprep.subr.mxu0 0.0
    %581 = vmatpush2.msra.mxu0 0.0
    %582 = vmatprep.subr.mxu0 0.0
    %583 = vmatpush2.msra.mxu0 0.0
    %584 = vmatprep.subr.mxu0 0.0
    %585 = vmatpush2.msra.mxu0 0.0
    %586 = vmatprep.subr.mxu0 0.0
    %587 = vmatpush2.msra.mxu0 0.0
    %588 = vmatprep.subr.mxu0 0.0
    %589 = vmatpush2.msra.mxu0 0.0
    %590 = vmatprep.subr.mxu0 0.0
    %591 = vmatpush2.msra.mxu0 0.0
    %592 = vmatprep.subr.mxu0 0.0
    %593 = vmatpush2.msra.mxu0 0.0
    %594 = vmatprep.subr.mxu0 0.0
    %595 = vmatpush2.msra.mxu0 0.0
    %596 = vmatprep.subr.mxu0 0.0
    %597 = vmatpush2.msra.mxu0 0.0
    %598 = vmatprep.subr.mxu0 0.0
    %599 = vmatpush2.msra.mxu0 0.0
    %600 = vmatprep.subr.mxu0 0.0
    %601 = vmatpush2.msra.mxu0 0.0
    %602 = vmatprep.subr.mxu0 0.0
    %603 = vmatpush2.msra.mxu0 0.0
    %604 = vmatprep.subr.mxu0 0.0
    %605 = vmatpush2.msra.mxu0 0.0
    %606 = vmatprep.mubr.f32.mxu0 0.0
    %607 = vmatmul.mubr.f32.gmra.mxu0 %v533
    %v608 = vpop.f32.mrf.mxu0
    %v609 = vadd.f32 %v530, %v608
    %v610 = vpop.f32.mrf.mxu0
    %611 = vmatprep.mubr.f32.mxu0 0.0
    %612 = vmatmul.mubr.f32.gmra.mxu0 %v536
    %v613 = vpop.f32.mrf.mxu0
    %v614 = vadd.f32 %v530, %v613
    %v615 = vpop.f32.mrf.mxu0
    %616 = vdwg.mxu0
    %v617 = vld [vmem:[%s1] sm:$0x1]
    %v618 = vld [vmem:[%s1 + $0x1] sm:$0x1]
    %v619 = vmul.f32 %v617, -1e+30
    %v620 = vmul.f32 %v618, -1e+30
    %v621 = vld [vmem:[%s7] sm:$0x3f]
    %v622 = vld [vmem:[%s5] sm:$0xff]
    %v623 = vld [vmem:[%s5 + $0x8] sm:$0xff]
    %v624 = vld [vmem:[%s5 + $0x10] sm:$0xff]
    %v625 = vld [vmem:[%s5 + $0x18] sm:$0xff]
    %v626 = vld [vmem:[%s5 + $0x20] sm:$0x1]
    %v627 = vld [vmem:[%s5 + $0x28] sm:$0xff]
    %v628 = vld [vmem:[%s5 + $0x30] sm:$0xff]
    %v629 = vld [vmem:[%s5 + $0x38] sm:$0xff]
    %v630 = vld [vmem:[%s5 + $0x40] sm:$0xff]
    %v631 = vld [vmem:[%s5 + $0x48] sm:$0x1]
    %v632 = vld [vmem:[%s5 + $0x50] sm:$0xff]
    %v633 = vld [vmem:[%s5 + $0x58] sm:$0xff]
    %v634 = vld [vmem:[%s5 + $0x60] sm:$0xff]
    %v635 = vld [vmem:[%s5 + $0x68] sm:$0xff]
    %v636 = vld [vmem:[%s5 + $0x70] sm:$0x1]
    %v637 = vld [vmem:[%s5 + $0x78] sm:$0xff]
    %v638 = vld [vmem:[%s5 + $0x80] sm:$0xff]
    %v639 = vld [vmem:[%s5 + $0x88] sm:$0xff]
    %v640 = vld [vmem:[%s5 + $0x90] sm:$0xff]
    %v641 = vld [vmem:[%s5 + $0x98] sm:$0x1]
    %v642 = vlaneseq
    %v643 = vshrl.u32 %v642, 7
    %v644 = vsub.s32 0, %v643
    %v645 = vrot.slane %v626, %v644
    %v646 = vlaneseq
    %v647 = vshrl.u32 %v646, 7
    %v648 = vsub.s32 0, %v647
    %v649 = vrot.slane %v631, %v648
    %v650 = vlaneseq
    %v651 = vshrl.u32 %v650, 7
    %v652 = vsub.s32 0, %v651
    %v653 = vrot.slane %v636, %v652
    %v654 = vlaneseq
    %v655 = vshrl.u32 %v654, 7
    %v656 = vsub.s32 0, %v655
    %v657 = vrot.slane %v641, %v656
    %vm658 = vcmask 261120
    %v660 = vsel %vm658, %v609, 0
    %662 = vmatprep.subr.mxu0 0.0
    %663 = vmatpush1.msra.mxu0 0.0
    %664 = vmatprep.subr.mxu0 0.0
    %665 = vmatpush1.msra.mxu0 0.0
    %666 = vmatprep.subr.mxu0 0.0
    %667 = vmatpush1.msra.mxu0 0.0
    %668 = vmatprep.subr.mxu0 0.0
    %669 = vmatpush1.msra.mxu0 0.0
    %670 = vmatprep.subr.mxu0 0.0
    %671 = vmatpush1.msra.mxu0 0.0
    %672 = vmatprep.subr.mxu0 0.0
    %673 = vmatpush1.msra.mxu0 0.0
    %674 = vmatprep.subr.mxu0 0.0
    %675 = vmatpush1.msra.mxu0 0.0
    %676 = vmatprep.subr.mxu0 0.0
    %677 = vmatpush1.msra.mxu0 0.0
    %678 = vmatprep.subr.mxu0 0.0
    %679 = vmatpush1.msra.mxu0 0.0
    %680 = vmatprep.subr.mxu0 0.0
    %681 = vmatpush1.msra.mxu0 0.0
    %682 = vmatprep.subr.mxu0 0.0
    %683 = vmatpush1.msra.mxu0 0.0
    %684 = vmatprep.subr.mxu0 0.0
    %685 = vmatpush1.msra.mxu0 0.0
    %686 = vmatprep.subr.mxu0 0.0
    %687 = vmatpush1.msra.mxu0 %v625
    %688 = vmatprep.subr.mxu0 0.0
    %689 = vmatpush1.msra.mxu0 %v624
    %690 = vmatprep.subr.mxu0 0.0
    %691 = vmatpush1.msra.mxu0 %v623
    %692 = vmatprep.subr.mxu0 0.0
    %693 = vmatpush1.msra.mxu0 %v622
    %694 = vmatprep.subr.mxu0 0.0
    %695 = vmatpush2.msra.mxu0 0.0
    %696 = vmatprep.subr.mxu0 0.0
    %697 = vmatpush2.msra.mxu0 0.0
    %698 = vmatprep.subr.mxu0 0.0
    %699 = vmatpush2.msra.mxu0 0.0
    %700 = vmatprep.subr.mxu0 0.0
    %701 = vmatpush2.msra.mxu0 0.0
    %702 = vmatprep.subr.mxu0 0.0
    %703 = vmatpush2.msra.mxu0 0.0
    %704 = vmatprep.subr.mxu0 0.0
    %705 = vmatpush2.msra.mxu0 0.0
    %706 = vmatprep.subr.mxu0 0.0
    %707 = vmatpush2.msra.mxu0 0.0
    %708 = vmatprep.subr.mxu0 0.0
    %709 = vmatpush2.msra.mxu0 0.0
    %710 = vmatprep.subr.mxu0 0.0
    %711 = vmatpush2.msra.mxu0 0.0
    %712 = vmatprep.subr.mxu0 0.0
    %713 = vmatpush2.msra.mxu0 0.0
    %714 = vmatprep.subr.mxu0 0.0
    %715 = vmatpush2.msra.mxu0 0.0
    %716 = vmatprep.subr.mxu0 0.0
    %717 = vmatpush2.msra.mxu0 0.0
    %718 = vmatprep.subr.mxu0 0.0
    %719 = vmatpush2.msra.mxu0 0.0
    %720 = vmatprep.subr.mxu0 0.0
    %721 = vmatpush2.msra.mxu0 0.0
    %722 = vmatprep.subr.mxu0 0.0
    %723 = vmatpush2.msra.mxu0 0.0
    %724 = vmatprep.subr.mxu0 0.0
    %725 = vmatpush2.msra.mxu0 0.0
    %726 = vmatprep.mubr.f32.mxu0 0.0
    %727 = vmatmul.mubr.f32.gmra.mxu0 %v660
    %v728 = vpop.f32.mrf.mxu0
    %v729 = vadd.f32 %v645, %v728
    %v730 = vpop.f32.mrf.mxu0
    %731 = vdwg.mxu0
    %v733 = vsel %vm658, %v614, 0
    %735 = vmatprep.subr.mxu0 0.0
    %736 = vmatpush1.msra.mxu0 0.0
    %737 = vmatprep.subr.mxu0 0.0
    %738 = vmatpush1.msra.mxu0 0.0
    %739 = vmatprep.subr.mxu0 0.0
    %740 = vmatpush1.msra.mxu0 0.0
    %741 = vmatprep.subr.mxu0 0.0
    %742 = vmatpush1.msra.mxu0 0.0
    %743 = vmatprep.subr.mxu0 0.0
    %744 = vmatpush1.msra.mxu0 0.0
    %745 = vmatprep.subr.mxu0 0.0
    %746 = vmatpush1.msra.mxu0 0.0
    %747 = vmatprep.subr.mxu0 0.0
    %748 = vmatpush1.msra.mxu0 0.0
    %749 = vmatprep.subr.mxu0 0.0
    %750 = vmatpush1.msra.mxu0 0.0
    %751 = vmatprep.subr.mxu0 0.0
    %752 = vmatpush1.msra.mxu0 0.0
    %753 = vmatprep.subr.mxu0 0.0
    %754 = vmatpush1.msra.mxu0 0.0
    %755 = vmatprep.subr.mxu0 0.0
    %756 = vmatpush1.msra.mxu0 0.0
    %757 = vmatprep.subr.mxu0 0.0
    %758 = vmatpush1.msra.mxu0 0.0
    %759 = vmatprep.subr.mxu0 0.0
    %760 = vmatpush1.msra.mxu0 %v625
    %761 = vmatprep.subr.mxu0 0.0
    %762 = vmatpush1.msra.mxu0 %v624
    %763 = vmatprep.subr.mxu0 0.0
    %764 = vmatpush1.msra.mxu0 %v623
    %765 = vmatprep.subr.mxu0 0.0
    %766 = vmatpush1.msra.mxu0 %v622
    %767 = vmatprep.subr.mxu0 0.0
    %768 = vmatpush2.msra.mxu0 0.0
    %769 = vmatprep.subr.mxu0 0.0
    %770 = vmatpush2.msra.mxu0 0.0
    %771 = vmatprep.subr.mxu0 0.0
    %772 = vmatpush2.msra.mxu0 0.0
    %773 = vmatprep.subr.mxu0 0.0
    %774 = vmatpush2.msra.mxu0 0.0
    %775 = vmatprep.subr.mxu0 0.0
    %776 = vmatpush2.msra.mxu0 0.0
    %777 = vmatprep.subr.mxu0 0.0
    %778 = vmatpush2.msra.mxu0 0.0
    %779 = vmatprep.subr.mxu0 0.0
    %780 = vmatpush2.msra.mxu0 0.0
    %781 = vmatprep.subr.mxu0 0.0
    %782 = vmatpush2.msra.mxu0 0.0
    %783 = vmatprep.subr.mxu0 0.0
    %784 = vmatpush2.msra.mxu0 0.0
    %785 = vmatprep.subr.mxu0 0.0
    %786 = vmatpush2.msra.mxu0 0.0
    %787 = vmatprep.subr.mxu0 0.0
    %788 = vmatpush2.msra.mxu0 0.0
    %789 = vmatprep.subr.mxu0 0.0
    %790 = vmatpush2.msra.mxu0 0.0
    %791 = vmatprep.subr.mxu0 0.0
    %792 = vmatpush2.msra.mxu0 0.0
    %793 = vmatprep.subr.mxu0 0.0
    %794 = vmatpush2.msra.mxu0 0.0
    %795 = vmatprep.subr.mxu0 0.0
    %796 = vmatpush2.msra.mxu0 0.0
    %797 = vmatprep.subr.mxu0 0.0
    %798 = vmatpush2.msra.mxu0 0.0
    %799 = vmatprep.mubr.f32.mxu0 0.0
    %800 = vmatmul.mubr.f32.gmra.mxu0 %v733
    %v801 = vpop.f32.mrf.mxu0
    %v802 = vadd.f32 %v645, %v801
    %v803 = vpop.f32.mrf.mxu0
    %804 = vdwg.mxu0
    %805 = vmatprep.subr.mxu0 0.0
    %806 = vmatpush1.msra.mxu0 0.0
    %807 = vmatprep.subr.mxu0 0.0
    %808 = vmatpush1.msra.mxu0 0.0
    %809 = vmatprep.subr.mxu0 0.0
    %810 = vmatpush1.msra.mxu0 0.0
    %811 = vmatprep.subr.mxu0 0.0
    %812 = vmatpush1.msra.mxu0 0.0
    %813 = vmatprep.subr.mxu0 0.0
    %814 = vmatpush1.msra.mxu0 0.0
    %815 = vmatprep.subr.mxu0 0.0
    %816 = vmatpush1.msra.mxu0 0.0
    %817 = vmatprep.subr.mxu0 0.0
    %818 = vmatpush1.msra.mxu0 0.0
    %819 = vmatprep.subr.mxu0 0.0
    %820 = vmatpush1.msra.mxu0 0.0
    %821 = vmatprep.subr.mxu0 0.0
    %822 = vmatpush1.msra.mxu0 0.0
    %823 = vmatprep.subr.mxu0 0.0
    %824 = vmatpush1.msra.mxu0 0.0
    %825 = vmatprep.subr.mxu0 0.0
    %826 = vmatpush1.msra.mxu0 0.0
    %827 = vmatprep.subr.mxu0 0.0
    %828 = vmatpush1.msra.mxu0 0.0
    %829 = vmatprep.subr.mxu0 0.0
    %830 = vmatpush1.msra.mxu0 %v630
    %831 = vmatprep.subr.mxu0 0.0
    %832 = vmatpush1.msra.mxu0 %v629
    %833 = vmatprep.subr.mxu0 0.0
    %834 = vmatpush1.msra.mxu0 %v628
    %835 = vmatprep.subr.mxu0 0.0
    %836 = vmatpush1.msra.mxu0 %v627
    %837 = vmatprep.subr.mxu0 0.0
    %838 = vmatpush2.msra.mxu0 0.0
    %839 = vmatprep.subr.mxu0 0.0
    %840 = vmatpush2.msra.mxu0 0.0
    %841 = vmatprep.subr.mxu0 0.0
    %842 = vmatpush2.msra.mxu0 0.0
    %843 = vmatprep.subr.mxu0 0.0
    %844 = vmatpush2.msra.mxu0 0.0
    %845 = vmatprep.subr.mxu0 0.0
    %846 = vmatpush2.msra.mxu0 0.0
    %847 = vmatprep.subr.mxu0 0.0
    %848 = vmatpush2.msra.mxu0 0.0
    %849 = vmatprep.subr.mxu0 0.0
    %850 = vmatpush2.msra.mxu0 0.0
    %851 = vmatprep.subr.mxu0 0.0
    %852 = vmatpush2.msra.mxu0 0.0
    %853 = vmatprep.subr.mxu0 0.0
    %854 = vmatpush2.msra.mxu0 0.0
    %855 = vmatprep.subr.mxu0 0.0
    %856 = vmatpush2.msra.mxu0 0.0
    %857 = vmatprep.subr.mxu0 0.0
    %858 = vmatpush2.msra.mxu0 0.0
    %859 = vmatprep.subr.mxu0 0.0
    %860 = vmatpush2.msra.mxu0 0.0
    %861 = vmatprep.subr.mxu0 0.0
    %862 = vmatpush2.msra.mxu0 0.0
    %863 = vmatprep.subr.mxu0 0.0
    %864 = vmatpush2.msra.mxu0 0.0
    %865 = vmatprep.subr.mxu0 0.0
    %866 = vmatpush2.msra.mxu0 0.0
    %867 = vmatprep.subr.mxu0 0.0
    %868 = vmatpush2.msra.mxu0 0.0
    %869 = vmatprep.mubr.f32.mxu0 0.0
    %870 = vmatmul.mubr.f32.gmra.mxu0 %v660
    %v871 = vpop.f32.mrf.mxu0
    %v872 = vadd.f32 %v649, %v871
    %v873 = vpop.f32.mrf.mxu0
    %874 = vdwg.mxu0
    %875 = vmatprep.subr.mxu0 0.0
    %876 = vmatpush1.msra.mxu0 0.0
    %877 = vmatprep.subr.mxu0 0.0
    %878 = vmatpush1.msra.mxu0 0.0
    %879 = vmatprep.subr.mxu0 0.0
    %880 = vmatpush1.msra.mxu0 0.0
    %881 = vmatprep.subr.mxu0 0.0
    %882 = vmatpush1.msra.mxu0 0.0
    %883 = vmatprep.subr.mxu0 0.0
    %884 = vmatpush1.msra.mxu0 0.0
    %885 = vmatprep.subr.mxu0 0.0
    %886 = vmatpush1.msra.mxu0 0.0
    %887 = vmatprep.subr.mxu0 0.0
    %888 = vmatpush1.msra.mxu0 0.0
    %889 = vmatprep.subr.mxu0 0.0
    %890 = vmatpush1.msra.mxu0 0.0
    %891 = vmatprep.subr.mxu0 0.0
    %892 = vmatpush1.msra.mxu0 0.0
    %893 = vmatprep.subr.mxu0 0.0
    %894 = vmatpush1.msra.mxu0 0.0
    %895 = vmatprep.subr.mxu0 0.0
    %896 = vmatpush1.msra.mxu0 0.0
    %897 = vmatprep.subr.mxu0 0.0
    %898 = vmatpush1.msra.mxu0 0.0
    %899 = vmatprep.subr.mxu0 0.0
    %900 = vmatpush1.msra.mxu0 %v630
    %901 = vmatprep.subr.mxu0 0.0
    %902 = vmatpush1.msra.mxu0 %v629
    %903 = vmatprep.subr.mxu0 0.0
    %904 = vmatpush1.msra.mxu0 %v628
    %905 = vmatprep.subr.mxu0 0.0
    %906 = vmatpush1.msra.mxu0 %v627
    %907 = vmatprep.subr.mxu0 0.0
    %908 = vmatpush2.msra.mxu0 0.0
    %909 = vmatprep.subr.mxu0 0.0
    %910 = vmatpush2.msra.mxu0 0.0
    %911 = vmatprep.subr.mxu0 0.0
    %912 = vmatpush2.msra.mxu0 0.0
    %913 = vmatprep.subr.mxu0 0.0
    %914 = vmatpush2.msra.mxu0 0.0
    %915 = vmatprep.subr.mxu0 0.0
    %916 = vmatpush2.msra.mxu0 0.0
    %917 = vmatprep.subr.mxu0 0.0
    %918 = vmatpush2.msra.mxu0 0.0
    %919 = vmatprep.subr.mxu0 0.0
    %920 = vmatpush2.msra.mxu0 0.0
    %921 = vmatprep.subr.mxu0 0.0
    %922 = vmatpush2.msra.mxu0 0.0
    %923 = vmatprep.subr.mxu0 0.0
    %924 = vmatpush2.msra.mxu0 0.0
    %925 = vmatprep.subr.mxu0 0.0
    %926 = vmatpush2.msra.mxu0 0.0
    %927 = vmatprep.subr.mxu0 0.0
    %928 = vmatpush2.msra.mxu0 0.0
    %929 = vmatprep.subr.mxu0 0.0
    %930 = vmatpush2.msra.mxu0 0.0
    %931 = vmatprep.subr.mxu0 0.0
    %932 = vmatpush2.msra.mxu0 0.0
    %933 = vmatprep.subr.mxu0 0.0
    %934 = vmatpush2.msra.mxu0 0.0
    %935 = vmatprep.subr.mxu0 0.0
    %936 = vmatpush2.msra.mxu0 0.0
    %937 = vmatprep.subr.mxu0 0.0
    %938 = vmatpush2.msra.mxu0 0.0
    %939 = vmatprep.mubr.f32.mxu0 0.0
    %940 = vmatmul.mubr.f32.gmra.mxu0 %v733
    %v941 = vpop.f32.mrf.mxu0
    %v942 = vadd.f32 %v649, %v941
    %v943 = vpop.f32.mrf.mxu0
    %944 = vdwg.mxu0
    %945 = vmatprep.subr.mxu0 0.0
    %946 = vmatpush1.msra.mxu0 0.0
    %947 = vmatprep.subr.mxu0 0.0
    %948 = vmatpush1.msra.mxu0 0.0
    %949 = vmatprep.subr.mxu0 0.0
    %950 = vmatpush1.msra.mxu0 0.0
    %951 = vmatprep.subr.mxu0 0.0
    %952 = vmatpush1.msra.mxu0 0.0
    %953 = vmatprep.subr.mxu0 0.0
    %954 = vmatpush1.msra.mxu0 0.0
    %955 = vmatprep.subr.mxu0 0.0
    %956 = vmatpush1.msra.mxu0 0.0
    %957 = vmatprep.subr.mxu0 0.0
    %958 = vmatpush1.msra.mxu0 0.0
    %959 = vmatprep.subr.mxu0 0.0
    %960 = vmatpush1.msra.mxu0 0.0
    %961 = vmatprep.subr.mxu0 0.0
    %962 = vmatpush1.msra.mxu0 0.0
    %963 = vmatprep.subr.mxu0 0.0
    %964 = vmatpush1.msra.mxu0 0.0
    %965 = vmatprep.subr.mxu0 0.0
    %966 = vmatpush1.msra.mxu0 0.0
    %967 = vmatprep.subr.mxu0 0.0
    %968 = vmatpush1.msra.mxu0 0.0
    %969 = vmatprep.subr.mxu0 0.0
    %970 = vmatpush1.msra.mxu0 %v635
    %971 = vmatprep.subr.mxu0 0.0
    %972 = vmatpush1.msra.mxu0 %v634
    %973 = vmatprep.subr.mxu0 0.0
    %974 = vmatpush1.msra.mxu0 %v633
    %975 = vmatprep.subr.mxu0 0.0
    %976 = vmatpush1.msra.mxu0 %v632
    %977 = vmatprep.subr.mxu0 0.0
    %978 = vmatpush2.msra.mxu0 0.0
    %979 = vmatprep.subr.mxu0 0.0
    %980 = vmatpush2.msra.mxu0 0.0
    %981 = vmatprep.subr.mxu0 0.0
    %982 = vmatpush2.msra.mxu0 0.0
    %983 = vmatprep.subr.mxu0 0.0
    %984 = vmatpush2.msra.mxu0 0.0
    %985 = vmatprep.subr.mxu0 0.0
    %986 = vmatpush2.msra.mxu0 0.0
    %987 = vmatprep.subr.mxu0 0.0
    %988 = vmatpush2.msra.mxu0 0.0
    %989 = vmatprep.subr.mxu0 0.0
    %990 = vmatpush2.msra.mxu0 0.0
    %991 = vmatprep.subr.mxu0 0.0
    %992 = vmatpush2.msra.mxu0 0.0
    %993 = vmatprep.subr.mxu0 0.0
    %994 = vmatpush2.msra.mxu0 0.0
    %995 = vmatprep.subr.mxu0 0.0
    %996 = vmatpush2.msra.mxu0 0.0
    %997 = vmatprep.subr.mxu0 0.0
    %998 = vmatpush2.msra.mxu0 0.0
    %999 = vmatprep.subr.mxu0 0.0
    %1000 = vmatpush2.msra.mxu0 0.0
    %1001 = vmatprep.subr.mxu0 0.0
    %1002 = vmatpush2.msra.mxu0 0.0
    %1003 = vmatprep.subr.mxu0 0.0
    %1004 = vmatpush2.msra.mxu0 0.0
    %1005 = vmatprep.subr.mxu0 0.0
    %1006 = vmatpush2.msra.mxu0 0.0
    %1007 = vmatprep.subr.mxu0 0.0
    %1008 = vmatpush2.msra.mxu0 0.0
    %1009 = vmatprep.mubr.f32.mxu0 0.0
    %1010 = vmatmul.mubr.f32.gmra.mxu0 %v660
    %v1011 = vpop.f32.mrf.mxu0
    %v1012 = vadd.f32 %v653, %v1011
    %v1013 = vpop.f32.mrf.mxu0
    %1014 = vdwg.mxu0
    %1015 = vmatprep.subr.mxu0 0.0
    %1016 = vmatpush1.msra.mxu0 0.0
    %1017 = vmatprep.subr.mxu0 0.0
    %1018 = vmatpush1.msra.mxu0 0.0
    %1019 = vmatprep.subr.mxu0 0.0
    %1020 = vmatpush1.msra.mxu0 0.0
    %1021 = vmatprep.subr.mxu0 0.0
    %1022 = vmatpush1.msra.mxu0 0.0
    %1023 = vmatprep.subr.mxu0 0.0
    %1024 = vmatpush1.msra.mxu0 0.0
    %1025 = vmatprep.subr.mxu0 0.0
    %1026 = vmatpush1.msra.mxu0 0.0
    %1027 = vmatprep.subr.mxu0 0.0
    %1028 = vmatpush1.msra.mxu0 0.0
    %1029 = vmatprep.subr.mxu0 0.0
    %1030 = vmatpush1.msra.mxu0 0.0
    %1031 = vmatprep.subr.mxu0 0.0
    %1032 = vmatpush1.msra.mxu0 0.0
    %1033 = vmatprep.subr.mxu0 0.0
    %1034 = vmatpush1.msra.mxu0 0.0
    %1035 = vmatprep.subr.mxu0 0.0
    %1036 = vmatpush1.msra.mxu0 0.0
    %1037 = vmatprep.subr.mxu0 0.0
    %1038 = vmatpush1.msra.mxu0 0.0
    %1039 = vmatprep.subr.mxu0 0.0
    %1040 = vmatpush1.msra.mxu0 %v635
    %1041 = vmatprep.subr.mxu0 0.0
    %1042 = vmatpush1.msra.mxu0 %v634
    %1043 = vmatprep.subr.mxu0 0.0
    %1044 = vmatpush1.msra.mxu0 %v633
    %1045 = vmatprep.subr.mxu0 0.0
    %1046 = vmatpush1.msra.mxu0 %v632
    %1047 = vmatprep.subr.mxu0 0.0
    %1048 = vmatpush2.msra.mxu0 0.0
    %1049 = vmatprep.subr.mxu0 0.0
    %1050 = vmatpush2.msra.mxu0 0.0
    %1051 = vmatprep.subr.mxu0 0.0
    %1052 = vmatpush2.msra.mxu0 0.0
    %1053 = vmatprep.subr.mxu0 0.0
    %1054 = vmatpush2.msra.mxu0 0.0
    %1055 = vmatprep.subr.mxu0 0.0
    %1056 = vmatpush2.msra.mxu0 0.0
    %1057 = vmatprep.subr.mxu0 0.0
    %1058 = vmatpush2.msra.mxu0 0.0
    %1059 = vmatprep.subr.mxu0 0.0
    %1060 = vmatpush2.msra.mxu0 0.0
    %1061 = vmatprep.subr.mxu0 0.0
    %1062 = vmatpush2.msra.mxu0 0.0
    %1063 = vmatprep.subr.mxu0 0.0
    %1064 = vmatpush2.msra.mxu0 0.0
    %1065 = vmatprep.subr.mxu0 0.0
    %1066 = vmatpush2.msra.mxu0 0.0
    %1067 = vmatprep.subr.mxu0 0.0
    %1068 = vmatpush2.msra.mxu0 0.0
    %1069 = vmatprep.subr.mxu0 0.0
    %1070 = vmatpush2.msra.mxu0 0.0
    %1071 = vmatprep.subr.mxu0 0.0
    %1072 = vmatpush2.msra.mxu0 0.0
    %1073 = vmatprep.subr.mxu0 0.0
    %1074 = vmatpush2.msra.mxu0 0.0
    %1075 = vmatprep.subr.mxu0 0.0
    %1076 = vmatpush2.msra.mxu0 0.0
    %1077 = vmatprep.subr.mxu0 0.0
    %1078 = vmatpush2.msra.mxu0 0.0
    %1079 = vmatprep.mubr.f32.mxu0 0.0
    %1080 = vmatmul.mubr.f32.gmra.mxu0 %v733
    %v1081 = vpop.f32.mrf.mxu0
    %v1082 = vadd.f32 %v653, %v1081
    %v1083 = vpop.f32.mrf.mxu0
    %1084 = vdwg.mxu0
    %1085 = vmatprep.subr.mxu0 0.0
    %1086 = vmatpush1.msra.mxu0 0.0
    %1087 = vmatprep.subr.mxu0 0.0
    %1088 = vmatpush1.msra.mxu0 0.0
    %1089 = vmatprep.subr.mxu0 0.0
    %1090 = vmatpush1.msra.mxu0 0.0
    %1091 = vmatprep.subr.mxu0 0.0
    %1092 = vmatpush1.msra.mxu0 0.0
    %1093 = vmatprep.subr.mxu0 0.0
    %1094 = vmatpush1.msra.mxu0 0.0
    %1095 = vmatprep.subr.mxu0 0.0
    %1096 = vmatpush1.msra.mxu0 0.0
    %1097 = vmatprep.subr.mxu0 0.0
    %1098 = vmatpush1.msra.mxu0 0.0
    %1099 = vmatprep.subr.mxu0 0.0
    %1100 = vmatpush1.msra.mxu0 0.0
    %1101 = vmatprep.subr.mxu0 0.0
    %1102 = vmatpush1.msra.mxu0 0.0
    %1103 = vmatprep.subr.mxu0 0.0
    %1104 = vmatpush1.msra.mxu0 0.0
    %1105 = vmatprep.subr.mxu0 0.0
    %1106 = vmatpush1.msra.mxu0 0.0
    %1107 = vmatprep.subr.mxu0 0.0
    %1108 = vmatpush1.msra.mxu0 0.0
    %1109 = vmatprep.subr.mxu0 0.0
    %1110 = vmatpush1.msra.mxu0 %v640
    %1111 = vmatprep.subr.mxu0 0.0
    %1112 = vmatpush1.msra.mxu0 %v639
    %1113 = vmatprep.subr.mxu0 0.0
    %1114 = vmatpush1.msra.mxu0 %v638
    %1115 = vmatprep.subr.mxu0 0.0
    %1116 = vmatpush1.msra.mxu0 %v637
    %1117 = vmatprep.subr.mxu0 0.0
    %1118 = vmatpush2.msra.mxu0 0.0
    %1119 = vmatprep.subr.mxu0 0.0
    %1120 = vmatpush2.msra.mxu0 0.0
    %1121 = vmatprep.subr.mxu0 0.0
    %1122 = vmatpush2.msra.mxu0 0.0
    %1123 = vmatprep.subr.mxu0 0.0
    %1124 = vmatpush2.msra.mxu0 0.0
    %1125 = vmatprep.subr.mxu0 0.0
    %1126 = vmatpush2.msra.mxu0 0.0
    %1127 = vmatprep.subr.mxu0 0.0
    %1128 = vmatpush2.msra.mxu0 0.0
    %1129 = vmatprep.subr.mxu0 0.0
    %1130 = vmatpush2.msra.mxu0 0.0
    %1131 = vmatprep.subr.mxu0 0.0
    %1132 = vmatpush2.msra.mxu0 0.0
    %1133 = vmatprep.subr.mxu0 0.0
    %1134 = vmatpush2.msra.mxu0 0.0
    %1135 = vmatprep.subr.mxu0 0.0
    %1136 = vmatpush2.msra.mxu0 0.0
    %1137 = vmatprep.subr.mxu0 0.0
    %1138 = vmatpush2.msra.mxu0 0.0
    %1139 = vmatprep.subr.mxu0 0.0
    %1140 = vmatpush2.msra.mxu0 0.0
    %1141 = vmatprep.subr.mxu0 0.0
    %1142 = vmatpush2.msra.mxu0 0.0
    %1143 = vmatprep.subr.mxu0 0.0
    %1144 = vmatpush2.msra.mxu0 0.0
    %1145 = vmatprep.subr.mxu0 0.0
    %1146 = vmatpush2.msra.mxu0 0.0
    %1147 = vmatprep.subr.mxu0 0.0
    %1148 = vmatpush2.msra.mxu0 0.0
    %1149 = vmatprep.mubr.f32.mxu0 0.0
    %1150 = vmatmul.mubr.f32.gmra.mxu0 %v660
    %v1151 = vpop.f32.mrf.mxu0
    %v1152 = vadd.f32 %v657, %v1151
    %v1153 = vpop.f32.mrf.mxu0
    %1154 = vdwg.mxu0
    %1155 = vmatprep.subr.mxu0 0.0
    %1156 = vmatpush1.msra.mxu0 0.0
    %1157 = vmatprep.subr.mxu0 0.0
    %1158 = vmatpush1.msra.mxu0 0.0
    %1159 = vmatprep.subr.mxu0 0.0
    %1160 = vmatpush1.msra.mxu0 0.0
    %1161 = vmatprep.subr.mxu0 0.0
    %1162 = vmatpush1.msra.mxu0 0.0
    %1163 = vmatprep.subr.mxu0 0.0
    %1164 = vmatpush1.msra.mxu0 0.0
    %1165 = vmatprep.subr.mxu0 0.0
    %1166 = vmatpush1.msra.mxu0 0.0
    %1167 = vmatprep.subr.mxu0 0.0
    %1168 = vmatpush1.msra.mxu0 0.0
    %1169 = vmatprep.subr.mxu0 0.0
    %1170 = vmatpush1.msra.mxu0 0.0
    %1171 = vmatprep.subr.mxu0 0.0
    %1172 = vmatpush1.msra.mxu0 0.0
    %1173 = vmatprep.subr.mxu0 0.0
    %1174 = vmatpush1.msra.mxu0 0.0
    %1175 = vmatprep.subr.mxu0 0.0
    %1176 = vmatpush1.msra.mxu0 0.0
    %1177 = vmatprep.subr.mxu0 0.0
    %1178 = vmatpush1.msra.mxu0 0.0
    %1179 = vmatprep.subr.mxu0 0.0
    %1180 = vmatpush1.msra.mxu0 %v640
    %1181 = vmatprep.subr.mxu0 0.0
    %1182 = vmatpush1.msra.mxu0 %v639
    %1183 = vmatprep.subr.mxu0 0.0
    %1184 = vmatpush1.msra.mxu0 %v638
    %1185 = vmatprep.subr.mxu0 0.0
    %1186 = vmatpush1.msra.mxu0 %v637
    %1187 = vmatprep.subr.mxu0 0.0
    %1188 = vmatpush2.msra.mxu0 0.0
    %1189 = vmatprep.subr.mxu0 0.0
    %1190 = vmatpush2.msra.mxu0 0.0
    %1191 = vmatprep.subr.mxu0 0.0
    %1192 = vmatpush2.msra.mxu0 0.0
    %1193 = vmatprep.subr.mxu0 0.0
    %1194 = vmatpush2.msra.mxu0 0.0
    %1195 = vmatprep.subr.mxu0 0.0
    %1196 = vmatpush2.msra.mxu0 0.0
    %1197 = vmatprep.subr.mxu0 0.0
    %1198 = vmatpush2.msra.mxu0 0.0
    %1199 = vmatprep.subr.mxu0 0.0
    %1200 = vmatpush2.msra.mxu0 0.0
    %1201 = vmatprep.subr.mxu0 0.0
    %1202 = vmatpush2.msra.mxu0 0.0
    %1203 = vmatprep.subr.mxu0 0.0
    %1204 = vmatpush2.msra.mxu0 0.0
    %1205 = vmatprep.subr.mxu0 0.0
    %1206 = vmatpush2.msra.mxu0 0.0
    %1207 = vmatprep.subr.mxu0 0.0
    %1208 = vmatpush2.msra.mxu0 0.0
    %1209 = vmatprep.subr.mxu0 0.0
    %1210 = vmatpush2.msra.mxu0 0.0
    %1211 = vmatprep.subr.mxu0 0.0
    %1212 = vmatpush2.msra.mxu0 0.0
    %1213 = vmatprep.subr.mxu0 0.0
    %1214 = vmatpush2.msra.mxu0 0.0
    %1215 = vmatprep.subr.mxu0 0.0
    %1216 = vmatpush2.msra.mxu0 0.0
    %1217 = vmatprep.subr.mxu0 0.0
    %1218 = vmatpush2.msra.mxu0 0.0
    %1219 = vmatprep.mubr.f32.mxu0 0.0
    %1220 = vmatmul.mubr.f32.gmra.mxu0 %v733
    %v1221 = vpop.f32.mrf.mxu0
    %v1222 = vadd.f32 %v657, %v1221
    %v1223 = vpop.f32.mrf.mxu0
    %1224 = vdwg.mxu0
    %1226 = vrot.lane.b32.xlu0 %v729, 120
    %v1227 = vpop.permute.xlu0 %1226
    %vm1228 = vcmask 64512
    %v1229 = vsel %vm1228, %v729, 0
    %v1231 = vsel %vm1228, %v1227, 0
    %1233 = vmatprep.subr.mxu0 0.0
    %1234 = vmatpush1.xpose.msra.mxu0 0.0
    %1235 = vmatprep.subr.mxu0 0.0
    %1236 = vmatpush1.xpose.msra.mxu0 0.0
    %1237 = vmatprep.subr.mxu0 0.0
    %1238 = vmatpush1.xpose.msra.mxu0 0.0
    %1239 = vmatprep.subr.mxu0 0.0
    %1240 = vmatpush1.xpose.msra.mxu0 0.0
    %1241 = vmatprep.subr.mxu0 0.0
    %1242 = vmatpush1.xpose.msra.mxu0 0.0
    %1243 = vmatprep.subr.mxu0 0.0
    %1244 = vmatpush1.xpose.msra.mxu0 0.0
    %1245 = vmatprep.subr.mxu0 0.0
    %1246 = vmatpush1.xpose.msra.mxu0 0.0
    %1247 = vmatprep.subr.mxu0 0.0
    %1248 = vmatpush1.xpose.msra.mxu0 0.0
    %1249 = vmatprep.subr.mxu0 0.0
    %1250 = vmatpush1.xpose.msra.mxu0 0.0
    %1251 = vmatprep.subr.mxu0 0.0
    %1252 = vmatpush1.xpose.msra.mxu0 0.0
    %1253 = vmatprep.subr.mxu0 0.0
    %1254 = vmatpush1.xpose.msra.mxu0 0.0
    %1255 = vmatprep.subr.mxu0 0.0
    %1256 = vmatpush1.xpose.msra.mxu0 0.0
    %1257 = vmatprep.subr.mxu0 0.0
    %1258 = vmatpush1.xpose.msra.mxu0 0.0
    %1259 = vmatprep.subr.mxu0 0.0
    %1260 = vmatpush1.xpose.msra.mxu0 0.0
    %1261 = vmatprep.subr.mxu0 0.0
    %1262 = vmatpush1.xpose.msra.mxu0 0.0
    %1263 = vmatprep.subr.mxu0 0.0
    %1264 = vmatpush1.xpose.msra.mxu0 %v1231
    %1265 = vmatprep.subr.mxu0 0.0
    %1266 = vmatpush2.xpose.msra.mxu0 0.0
    %1267 = vmatprep.subr.mxu0 0.0
    %1268 = vmatpush2.xpose.msra.mxu0 0.0
    %1269 = vmatprep.subr.mxu0 0.0
    %1270 = vmatpush2.xpose.msra.mxu0 0.0
    %1271 = vmatprep.subr.mxu0 0.0
    %1272 = vmatpush2.xpose.msra.mxu0 0.0
    %1273 = vmatprep.subr.mxu0 0.0
    %1274 = vmatpush2.xpose.msra.mxu0 0.0
    %1275 = vmatprep.subr.mxu0 0.0
    %1276 = vmatpush2.xpose.msra.mxu0 0.0
    %1277 = vmatprep.subr.mxu0 0.0
    %1278 = vmatpush2.xpose.msra.mxu0 0.0
    %1279 = vmatprep.subr.mxu0 0.0
    %1280 = vmatpush2.xpose.msra.mxu0 0.0
    %1281 = vmatprep.subr.mxu0 0.0
    %1282 = vmatpush2.xpose.msra.mxu0 0.0
    %1283 = vmatprep.subr.mxu0 0.0
    %1284 = vmatpush2.xpose.msra.mxu0 0.0
    %1285 = vmatprep.subr.mxu0 0.0
    %1286 = vmatpush2.xpose.msra.mxu0 0.0
    %1287 = vmatprep.subr.mxu0 0.0
    %1288 = vmatpush2.xpose.msra.mxu0 0.0
    %1289 = vmatprep.subr.mxu0 0.0
    %1290 = vmatpush2.xpose.msra.mxu0 0.0
    %1291 = vmatprep.subr.mxu0 0.0
    %1292 = vmatpush2.xpose.msra.mxu0 0.0
    %1293 = vmatprep.subr.mxu0 0.0
    %1294 = vmatpush2.xpose.msra.mxu0 0.0
    %1295 = vmatprep.subr.mxu0 0.0
    %1296 = vmatpush2.xpose.msra.mxu0 0.0
    %1297 = vmatprep.mubr.f32.mxu0 0.0
    %1298 = vmatmul.mubr.f32.gmra.mxu0 %v1229
    %v1299 = vpop.f32.mrf.mxu0
    %v1300 = vadd.f32 0.0, %v1299
    %v1301 = vpop.f32.mrf.mxu0
    %1302 = vdwg.mxu0
    %1304 = vrot.lane.b32.xlu0 %v802, 120
    %v1305 = vpop.permute.xlu0 %1304
    %v1306 = vsel %vm1228, %v802, 0
    %v1308 = vsel %vm1228, %v1305, 0
    %1310 = vmatprep.subr.mxu0 0.0
    %1311 = vmatpush1.xpose.msra.mxu0 0.0
    %1312 = vmatprep.subr.mxu0 0.0
    %1313 = vmatpush1.xpose.msra.mxu0 0.0
    %1314 = vmatprep.subr.mxu0 0.0
    %1315 = vmatpush1.xpose.msra.mxu0 0.0
    %1316 = vmatprep.subr.mxu0 0.0
    %1317 = vmatpush1.xpose.msra.mxu0 0.0
    %1318 = vmatprep.subr.mxu0 0.0
    %1319 = vmatpush1.xpose.msra.mxu0 0.0
    %1320 = vmatprep.subr.mxu0 0.0
    %1321 = vmatpush1.xpose.msra.mxu0 0.0
    %1322 = vmatprep.subr.mxu0 0.0
    %1323 = vmatpush1.xpose.msra.mxu0 0.0
    %1324 = vmatprep.subr.mxu0 0.0
    %1325 = vmatpush1.xpose.msra.mxu0 0.0
    %1326 = vmatprep.subr.mxu0 0.0
    %1327 = vmatpush1.xpose.msra.mxu0 0.0
    %1328 = vmatprep.subr.mxu0 0.0
    %1329 = vmatpush1.xpose.msra.mxu0 0.0
    %1330 = vmatprep.subr.mxu0 0.0
    %1331 = vmatpush1.xpose.msra.mxu0 0.0
    %1332 = vmatprep.subr.mxu0 0.0
    %1333 = vmatpush1.xpose.msra.mxu0 0.0
    %1334 = vmatprep.subr.mxu0 0.0
    %1335 = vmatpush1.xpose.msra.mxu0 0.0
    %1336 = vmatprep.subr.mxu0 0.0
    %1337 = vmatpush1.xpose.msra.mxu0 0.0
    %1338 = vmatprep.subr.mxu0 0.0
    %1339 = vmatpush1.xpose.msra.mxu0 0.0
    %1340 = vmatprep.subr.mxu0 0.0
    %1341 = vmatpush1.xpose.msra.mxu0 %v1308
    %1342 = vmatprep.subr.mxu0 0.0
    %1343 = vmatpush2.xpose.msra.mxu0 0.0
    %1344 = vmatprep.subr.mxu0 0.0
    %1345 = vmatpush2.xpose.msra.mxu0 0.0
    %1346 = vmatprep.subr.mxu0 0.0
    %1347 = vmatpush2.xpose.msra.mxu0 0.0
    %1348 = vmatprep.subr.mxu0 0.0
    %1349 = vmatpush2.xpose.msra.mxu0 0.0
    %1350 = vmatprep.subr.mxu0 0.0
    %1351 = vmatpush2.xpose.msra.mxu0 0.0
    %1352 = vmatprep.subr.mxu0 0.0
    %1353 = vmatpush2.xpose.msra.mxu0 0.0
    %1354 = vmatprep.subr.mxu0 0.0
    %1355 = vmatpush2.xpose.msra.mxu0 0.0
    %1356 = vmatprep.subr.mxu0 0.0
    %1357 = vmatpush2.xpose.msra.mxu0 0.0
    %1358 = vmatprep.subr.mxu0 0.0
    %1359 = vmatpush2.xpose.msra.mxu0 0.0
    %1360 = vmatprep.subr.mxu0 0.0
    %1361 = vmatpush2.xpose.msra.mxu0 0.0
    %1362 = vmatprep.subr.mxu0 0.0
    %1363 = vmatpush2.xpose.msra.mxu0 0.0
    %1364 = vmatprep.subr.mxu0 0.0
    %1365 = vmatpush2.xpose.msra.mxu0 0.0
    %1366 = vmatprep.subr.mxu0 0.0
    %1367 = vmatpush2.xpose.msra.mxu0 0.0
    %1368 = vmatprep.subr.mxu0 0.0
    %1369 = vmatpush2.xpose.msra.mxu0 0.0
    %1370 = vmatprep.subr.mxu0 0.0
    %1371 = vmatpush2.xpose.msra.mxu0 0.0
    %1372 = vmatprep.subr.mxu0 0.0
    %1373 = vmatpush2.xpose.msra.mxu0 0.0
    %1374 = vmatprep.mubr.f32.mxu0 0.0
    %1375 = vmatmul.mubr.f32.gmra.mxu0 %v1306
    %v1376 = vpop.f32.mrf.mxu0
    %v1377 = vadd.f32 0.0, %v1376
    %v1378 = vpop.f32.mrf.mxu0
    %1379 = vdwg.mxu0
    %1381 = vrot.lane.b32.xlu0 %v872, 120
    %v1382 = vpop.permute.xlu0 %1381
    %v1383 = vsel %vm1228, %v872, 0
    %v1385 = vsel %vm1228, %v1382, 0
    %1387 = vmatprep.subr.mxu0 0.0
    %1388 = vmatpush1.xpose.msra.mxu0 0.0
    %1389 = vmatprep.subr.mxu0 0.0
    %1390 = vmatpush1.xpose.msra.mxu0 0.0
    %1391 = vmatprep.subr.mxu0 0.0
    %1392 = vmatpush1.xpose.msra.mxu0 0.0
    %1393 = vmatprep.subr.mxu0 0.0
    %1394 = vmatpush1.xpose.msra.mxu0 0.0
    %1395 = vmatprep.subr.mxu0 0.0
    %1396 = vmatpush1.xpose.msra.mxu0 0.0
    %1397 = vmatprep.subr.mxu0 0.0
    %1398 = vmatpush1.xpose.msra.mxu0 0.0
    %1399 = vmatprep.subr.mxu0 0.0
    %1400 = vmatpush1.xpose.msra.mxu0 0.0
    %1401 = vmatprep.subr.mxu0 0.0
    %1402 = vmatpush1.xpose.msra.mxu0 0.0
    %1403 = vmatprep.subr.mxu0 0.0
    %1404 = vmatpush1.xpose.msra.mxu0 0.0
    %1405 = vmatprep.subr.mxu0 0.0
    %1406 = vmatpush1.xpose.msra.mxu0 0.0
    %1407 = vmatprep.subr.mxu0 0.0
    %1408 = vmatpush1.xpose.msra.mxu0 0.0
    %1409 = vmatprep.subr.mxu0 0.0
    %1410 = vmatpush1.xpose.msra.mxu0 0.0
    %1411 = vmatprep.subr.mxu0 0.0
    %1412 = vmatpush1.xpose.msra.mxu0 0.0
    %1413 = vmatprep.subr.mxu0 0.0
    %1414 = vmatpush1.xpose.msra.mxu0 0.0
    %1415 = vmatprep.subr.mxu0 0.0
    %1416 = vmatpush1.xpose.msra.mxu0 0.0
    %1417 = vmatprep.subr.mxu0 0.0
    %1418 = vmatpush1.xpose.msra.mxu0 %v1385
    %1419 = vmatprep.subr.mxu0 0.0
    %1420 = vmatpush2.xpose.msra.mxu0 0.0
    %1421 = vmatprep.subr.mxu0 0.0
    %1422 = vmatpush2.xpose.msra.mxu0 0.0
    %1423 = vmatprep.subr.mxu0 0.0
    %1424 = vmatpush2.xpose.msra.mxu0 0.0
    %1425 = vmatprep.subr.mxu0 0.0
    %1426 = vmatpush2.xpose.msra.mxu0 0.0
    %1427 = vmatprep.subr.mxu0 0.0
    %1428 = vmatpush2.xpose.msra.mxu0 0.0
    %1429 = vmatprep.subr.mxu0 0.0
    %1430 = vmatpush2.xpose.msra.mxu0 0.0
    %1431 = vmatprep.subr.mxu0 0.0
    %1432 = vmatpush2.xpose.msra.mxu0 0.0
    %1433 = vmatprep.subr.mxu0 0.0
    %1434 = vmatpush2.xpose.msra.mxu0 0.0
    %1435 = vmatprep.subr.mxu0 0.0
    %1436 = vmatpush2.xpose.msra.mxu0 0.0
    %1437 = vmatprep.subr.mxu0 0.0
    %1438 = vmatpush2.xpose.msra.mxu0 0.0
    %1439 = vmatprep.subr.mxu0 0.0
    %1440 = vmatpush2.xpose.msra.mxu0 0.0
    %1441 = vmatprep.subr.mxu0 0.0
    %1442 = vmatpush2.xpose.msra.mxu0 0.0
    %1443 = vmatprep.subr.mxu0 0.0
    %1444 = vmatpush2.xpose.msra.mxu0 0.0
    %1445 = vmatprep.subr.mxu0 0.0
    %1446 = vmatpush2.xpose.msra.mxu0 0.0
    %1447 = vmatprep.subr.mxu0 0.0
    %1448 = vmatpush2.xpose.msra.mxu0 0.0
    %1449 = vmatprep.subr.mxu0 0.0
    %1450 = vmatpush2.xpose.msra.mxu0 0.0
    %1451 = vmatprep.mubr.f32.mxu0 0.0
    %1452 = vmatmul.mubr.f32.gmra.mxu0 %v1383
    %v1453 = vpop.f32.mrf.mxu0
    %v1454 = vadd.f32 0.0, %v1453
    %v1455 = vpop.f32.mrf.mxu0
    %1456 = vdwg.mxu0
    %1458 = vrot.lane.b32.xlu0 %v942, 120
    %v1459 = vpop.permute.xlu0 %1458
    %v1460 = vsel %vm1228, %v942, 0
    %v1462 = vsel %vm1228, %v1459, 0
    %1464 = vmatprep.subr.mxu0 0.0
    %1465 = vmatpush1.xpose.msra.mxu0 0.0
    %1466 = vmatprep.subr.mxu0 0.0
    %1467 = vmatpush1.xpose.msra.mxu0 0.0
    %1468 = vmatprep.subr.mxu0 0.0
    %1469 = vmatpush1.xpose.msra.mxu0 0.0
    %1470 = vmatprep.subr.mxu0 0.0
    %1471 = vmatpush1.xpose.msra.mxu0 0.0
    %1472 = vmatprep.subr.mxu0 0.0
    %1473 = vmatpush1.xpose.msra.mxu0 0.0
    %1474 = vmatprep.subr.mxu0 0.0
    %1475 = vmatpush1.xpose.msra.mxu0 0.0
    %1476 = vmatprep.subr.mxu0 0.0
    %1477 = vmatpush1.xpose.msra.mxu0 0.0
    %1478 = vmatprep.subr.mxu0 0.0
    %1479 = vmatpush1.xpose.msra.mxu0 0.0
    %1480 = vmatprep.subr.mxu0 0.0
    %1481 = vmatpush1.xpose.msra.mxu0 0.0
    %1482 = vmatprep.subr.mxu0 0.0
    %1483 = vmatpush1.xpose.msra.mxu0 0.0
    %1484 = vmatprep.subr.mxu0 0.0
    %1485 = vmatpush1.xpose.msra.mxu0 0.0
    %1486 = vmatprep.subr.mxu0 0.0
    %1487 = vmatpush1.xpose.msra.mxu0 0.0
    %1488 = vmatprep.subr.mxu0 0.0
    %1489 = vmatpush1.xpose.msra.mxu0 0.0
    %1490 = vmatprep.subr.mxu0 0.0
    %1491 = vmatpush1.xpose.msra.mxu0 0.0
    %1492 = vmatprep.subr.mxu0 0.0
    %1493 = vmatpush1.xpose.msra.mxu0 0.0
    %1494 = vmatprep.subr.mxu0 0.0
    %1495 = vmatpush1.xpose.msra.mxu0 %v1462
    %1496 = vmatprep.subr.mxu0 0.0
    %1497 = vmatpush2.xpose.msra.mxu0 0.0
    %1498 = vmatprep.subr.mxu0 0.0
    %1499 = vmatpush2.xpose.msra.mxu0 0.0
    %1500 = vmatprep.subr.mxu0 0.0
    %1501 = vmatpush2.xpose.msra.mxu0 0.0
    %1502 = vmatprep.subr.mxu0 0.0
    %1503 = vmatpush2.xpose.msra.mxu0 0.0
    %1504 = vmatprep.subr.mxu0 0.0
    %1505 = vmatpush2.xpose.msra.mxu0 0.0
    %1506 = vmatprep.subr.mxu0 0.0
    %1507 = vmatpush2.xpose.msra.mxu0 0.0
    %1508 = vmatprep.subr.mxu0 0.0
    %1509 = vmatpush2.xpose.msra.mxu0 0.0
    %1510 = vmatprep.subr.mxu0 0.0
    %1511 = vmatpush2.xpose.msra.mxu0 0.0
    %1512 = vmatprep.subr.mxu0 0.0
    %1513 = vmatpush2.xpose.msra.mxu0 0.0
    %1514 = vmatprep.subr.mxu0 0.0
    %1515 = vmatpush2.xpose.msra.mxu0 0.0
    %1516 = vmatprep.subr.mxu0 0.0
    %1517 = vmatpush2.xpose.msra.mxu0 0.0
    %1518 = vmatprep.subr.mxu0 0.0
    %1519 = vmatpush2.xpose.msra.mxu0 0.0
    %1520 = vmatprep.subr.mxu0 0.0
    %1521 = vmatpush2.xpose.msra.mxu0 0.0
    %1522 = vmatprep.subr.mxu0 0.0
    %1523 = vmatpush2.xpose.msra.mxu0 0.0
    %1524 = vmatprep.subr.mxu0 0.0
    %1525 = vmatpush2.xpose.msra.mxu0 0.0
    %1526 = vmatprep.subr.mxu0 0.0
    %1527 = vmatpush2.xpose.msra.mxu0 0.0
    %1528 = vmatprep.mubr.f32.mxu0 0.0
    %1529 = vmatmul.mubr.f32.gmra.mxu0 %v1460
    %v1530 = vpop.f32.mrf.mxu0
    %v1531 = vadd.f32 0.0, %v1530
    %v1532 = vpop.f32.mrf.mxu0
    %1533 = vdwg.mxu0
    %1535 = vrot.lane.b32.xlu0 %v1012, 120
    %v1536 = vpop.permute.xlu0 %1535
    %v1537 = vsel %vm1228, %v1012, 0
    %v1539 = vsel %vm1228, %v1536, 0
    %1541 = vmatprep.subr.mxu0 0.0
    %1542 = vmatpush1.xpose.msra.mxu0 0.0
    %1543 = vmatprep.subr.mxu0 0.0
    %1544 = vmatpush1.xpose.msra.mxu0 0.0
    %1545 = vmatprep.subr.mxu0 0.0
    %1546 = vmatpush1.xpose.msra.mxu0 0.0
    %1547 = vmatprep.subr.mxu0 0.0
    %1548 = vmatpush1.xpose.msra.mxu0 0.0
    %1549 = vmatprep.subr.mxu0 0.0
    %1550 = vmatpush1.xpose.msra.mxu0 0.0
    %1551 = vmatprep.subr.mxu0 0.0
    %1552 = vmatpush1.xpose.msra.mxu0 0.0
    %1553 = vmatprep.subr.mxu0 0.0
    %1554 = vmatpush1.xpose.msra.mxu0 0.0
    %1555 = vmatprep.subr.mxu0 0.0
    %1556 = vmatpush1.xpose.msra.mxu0 0.0
    %1557 = vmatprep.subr.mxu0 0.0
    %1558 = vmatpush1.xpose.msra.mxu0 0.0
    %1559 = vmatprep.subr.mxu0 0.0
    %1560 = vmatpush1.xpose.msra.mxu0 0.0
    %1561 = vmatprep.subr.mxu0 0.0
    %1562 = vmatpush1.xpose.msra.mxu0 0.0
    %1563 = vmatprep.subr.mxu0 0.0
    %1564 = vmatpush1.xpose.msra.mxu0 0.0
    %1565 = vmatprep.subr.mxu0 0.0
    %1566 = vmatpush1.xpose.msra.mxu0 0.0
    %1567 = vmatprep.subr.mxu0 0.0
    %1568 = vmatpush1.xpose.msra.mxu0 0.0
    %1569 = vmatprep.subr.mxu0 0.0
    %1570 = vmatpush1.xpose.msra.mxu0 0.0
    %1571 = vmatprep.subr.mxu0 0.0
    %1572 = vmatpush1.xpose.msra.mxu0 %v1539
    %1573 = vmatprep.subr.mxu0 0.0
    %1574 = vmatpush2.xpose.msra.mxu0 0.0
    %1575 = vmatprep.subr.mxu0 0.0
    %1576 = vmatpush2.xpose.msra.mxu0 0.0
    %1577 = vmatprep.subr.mxu0 0.0
    %1578 = vmatpush2.xpose.msra.mxu0 0.0
    %1579 = vmatprep.subr.mxu0 0.0
    %1580 = vmatpush2.xpose.msra.mxu0 0.0
    %1581 = vmatprep.subr.mxu0 0.0
    %1582 = vmatpush2.xpose.msra.mxu0 0.0
    %1583 = vmatprep.subr.mxu0 0.0
    %1584 = vmatpush2.xpose.msra.mxu0 0.0
    %1585 = vmatprep.subr.mxu0 0.0
    %1586 = vmatpush2.xpose.msra.mxu0 0.0
    %1587 = vmatprep.subr.mxu0 0.0
    %1588 = vmatpush2.xpose.msra.mxu0 0.0
    %1589 = vmatprep.subr.mxu0 0.0
    %1590 = vmatpush2.xpose.msra.mxu0 0.0
    %1591 = vmatprep.subr.mxu0 0.0
    %1592 = vmatpush2.xpose.msra.mxu0 0.0
    %1593 = vmatprep.subr.mxu0 0.0
    %1594 = vmatpush2.xpose.msra.mxu0 0.0
    %1595 = vmatprep.subr.mxu0 0.0
    %1596 = vmatpush2.xpose.msra.mxu0 0.0
    %1597 = vmatprep.subr.mxu0 0.0
    %1598 = vmatpush2.xpose.msra.mxu0 0.0
    %1599 = vmatprep.subr.mxu0 0.0
    %1600 = vmatpush2.xpose.msra.mxu0 0.0
    %1601 = vmatprep.subr.mxu0 0.0
    %1602 = vmatpush2.xpose.msra.mxu0 0.0
    %1603 = vmatprep.subr.mxu0 0.0
    %1604 = vmatpush2.xpose.msra.mxu0 0.0
    %1605 = vmatprep.mubr.f32.mxu0 0.0
    %1606 = vmatmul.mubr.f32.gmra.mxu0 %v1537
    %v1607 = vpop.f32.mrf.mxu0
    %v1608 = vadd.f32 0.0, %v1607
    %v1609 = vpop.f32.mrf.mxu0
    %1610 = vdwg.mxu0
    %1612 = vrot.lane.b32.xlu0 %v1082, 120
    %v1613 = vpop.permute.xlu0 %1612
    %v1614 = vsel %vm1228, %v1082, 0
    %v1616 = vsel %vm1228, %v1613, 0
    %1618 = vmatprep.subr.mxu0 0.0
    %1619 = vmatpush1.xpose.msra.mxu0 0.0
    %1620 = vmatprep.subr.mxu0 0.0
    %1621 = vmatpush1.xpose.msra.mxu0 0.0
    %1622 = vmatprep.subr.mxu0 0.0
    %1623 = vmatpush1.xpose.msra.mxu0 0.0
    %1624 = vmatprep.subr.mxu0 0.0
    %1625 = vmatpush1.xpose.msra.mxu0 0.0
    %1626 = vmatprep.subr.mxu0 0.0
    %1627 = vmatpush1.xpose.msra.mxu0 0.0
    %1628 = vmatprep.subr.mxu0 0.0
    %1629 = vmatpush1.xpose.msra.mxu0 0.0
    %1630 = vmatprep.subr.mxu0 0.0
    %1631 = vmatpush1.xpose.msra.mxu0 0.0
    %1632 = vmatprep.subr.mxu0 0.0
    %1633 = vmatpush1.xpose.msra.mxu0 0.0
    %1634 = vmatprep.subr.mxu0 0.0
    %1635 = vmatpush1.xpose.msra.mxu0 0.0
    %1636 = vmatprep.subr.mxu0 0.0
    %1637 = vmatpush1.xpose.msra.mxu0 0.0
    %1638 = vmatprep.subr.mxu0 0.0
    %1639 = vmatpush1.xpose.msra.mxu0 0.0
    %1640 = vmatprep.subr.mxu0 0.0
    %1641 = vmatpush1.xpose.msra.mxu0 0.0
    %1642 = vmatprep.subr.mxu0 0.0
    %1643 = vmatpush1.xpose.msra.mxu0 0.0
    %1644 = vmatprep.subr.mxu0 0.0
    %1645 = vmatpush1.xpose.msra.mxu0 0.0
    %1646 = vmatprep.subr.mxu0 0.0
    %1647 = vmatpush1.xpose.msra.mxu0 0.0
    %1648 = vmatprep.subr.mxu0 0.0
    %1649 = vmatpush1.xpose.msra.mxu0 %v1616
    %1650 = vmatprep.subr.mxu0 0.0
    %1651 = vmatpush2.xpose.msra.mxu0 0.0
    %1652 = vmatprep.subr.mxu0 0.0
    %1653 = vmatpush2.xpose.msra.mxu0 0.0
    %1654 = vmatprep.subr.mxu0 0.0
    %1655 = vmatpush2.xpose.msra.mxu0 0.0
    %1656 = vmatprep.subr.mxu0 0.0
    %1657 = vmatpush2.xpose.msra.mxu0 0.0
    %1658 = vmatprep.subr.mxu0 0.0
    %1659 = vmatpush2.xpose.msra.mxu0 0.0
    %1660 = vmatprep.subr.mxu0 0.0
    %1661 = vmatpush2.xpose.msra.mxu0 0.0
    %1662 = vmatprep.subr.mxu0 0.0
    %1663 = vmatpush2.xpose.msra.mxu0 0.0
    %1664 = vmatprep.subr.mxu0 0.0
    %1665 = vmatpush2.xpose.msra.mxu0 0.0
    %1666 = vmatprep.subr.mxu0 0.0
    %1667 = vmatpush2.xpose.msra.mxu0 0.0
    %1668 = vmatprep.subr.mxu0 0.0
    %1669 = vmatpush2.xpose.msra.mxu0 0.0
    %1670 = vmatprep.subr.mxu0 0.0
    %1671 = vmatpush2.xpose.msra.mxu0 0.0
    %1672 = vmatprep.subr.mxu0 0.0
    %1673 = vmatpush2.xpose.msra.mxu0 0.0
    %1674 = vmatprep.subr.mxu0 0.0
    %1675 = vmatpush2.xpose.msra.mxu0 0.0
    %1676 = vmatprep.subr.mxu0 0.0
    %1677 = vmatpush2.xpose.msra.mxu0 0.0
    %1678 = vmatprep.subr.mxu0 0.0
    %1679 = vmatpush2.xpose.msra.mxu0 0.0
    %1680 = vmatprep.subr.mxu0 0.0
    %1681 = vmatpush2.xpose.msra.mxu0 0.0
    %1682 = vmatprep.mubr.f32.mxu0 0.0
    %1683 = vmatmul.mubr.f32.gmra.mxu0 %v1614
    %v1684 = vpop.f32.mrf.mxu0
    %v1685 = vadd.f32 0.0, %v1684
    %v1686 = vpop.f32.mrf.mxu0
    %1687 = vdwg.mxu0
    %1689 = vrot.lane.b32.xlu0 %v1152, 120
    %v1690 = vpop.permute.xlu0 %1689
    %v1691 = vsel %vm1228, %v1152, 0
    %v1693 = vsel %vm1228, %v1690, 0
    %1695 = vmatprep.subr.mxu0 0.0
    %1696 = vmatpush1.xpose.msra.mxu0 0.0
    %1697 = vmatprep.subr.mxu0 0.0
    %1698 = vmatpush1.xpose.msra.mxu0 0.0
    %1699 = vmatprep.subr.mxu0 0.0
    %1700 = vmatpush1.xpose.msra.mxu0 0.0
    %1701 = vmatprep.subr.mxu0 0.0
    %1702 = vmatpush1.xpose.msra.mxu0 0.0
    %1703 = vmatprep.subr.mxu0 0.0
    %1704 = vmatpush1.xpose.msra.mxu0 0.0
    %1705 = vmatprep.subr.mxu0 0.0
    %1706 = vmatpush1.xpose.msra.mxu0 0.0
    %1707 = vmatprep.subr.mxu0 0.0
    %1708 = vmatpush1.xpose.msra.mxu0 0.0
    %1709 = vmatprep.subr.mxu0 0.0
    %1710 = vmatpush1.xpose.msra.mxu0 0.0
    %1711 = vmatprep.subr.mxu0 0.0
    %1712 = vmatpush1.xpose.msra.mxu0 0.0
    %1713 = vmatprep.subr.mxu0 0.0
    %1714 = vmatpush1.xpose.msra.mxu0 0.0
    %1715 = vmatprep.subr.mxu0 0.0
    %1716 = vmatpush1.xpose.msra.mxu0 0.0
    %1717 = vmatprep.subr.mxu0 0.0
    %1718 = vmatpush1.xpose.msra.mxu0 0.0
    %1719 = vmatprep.subr.mxu0 0.0
    %1720 = vmatpush1.xpose.msra.mxu0 0.0
    %1721 = vmatprep.subr.mxu0 0.0
    %1722 = vmatpush1.xpose.msra.mxu0 0.0
    %1723 = vmatprep.subr.mxu0 0.0
    %1724 = vmatpush1.xpose.msra.mxu0 0.0
    %1725 = vmatprep.subr.mxu0 0.0
    %1726 = vmatpush1.xpose.msra.mxu0 %v1693
    %1727 = vmatprep.subr.mxu0 0.0
    %1728 = vmatpush2.xpose.msra.mxu0 0.0
    %1729 = vmatprep.subr.mxu0 0.0
    %1730 = vmatpush2.xpose.msra.mxu0 0.0
    %1731 = vmatprep.subr.mxu0 0.0
    %1732 = vmatpush2.xpose.msra.mxu0 0.0
    %1733 = vmatprep.subr.mxu0 0.0
    %1734 = vmatpush2.xpose.msra.mxu0 0.0
    %1735 = vmatprep.subr.mxu0 0.0
    %1736 = vmatpush2.xpose.msra.mxu0 0.0
    %1737 = vmatprep.subr.mxu0 0.0
    %1738 = vmatpush2.xpose.msra.mxu0 0.0
    %1739 = vmatprep.subr.mxu0 0.0
    %1740 = vmatpush2.xpose.msra.mxu0 0.0
    %1741 = vmatprep.subr.mxu0 0.0
    %1742 = vmatpush2.xpose.msra.mxu0 0.0
    %1743 = vmatprep.subr.mxu0 0.0
    %1744 = vmatpush2.xpose.msra.mxu0 0.0
    %1745 = vmatprep.subr.mxu0 0.0
    %1746 = vmatpush2.xpose.msra.mxu0 0.0
    %1747 = vmatprep.subr.mxu0 0.0
    %1748 = vmatpush2.xpose.msra.mxu0 0.0
    %1749 = vmatprep.subr.mxu0 0.0
    %1750 = vmatpush2.xpose.msra.mxu0 0.0
    %1751 = vmatprep.subr.mxu0 0.0
    %1752 = vmatpush2.xpose.msra.mxu0 0.0
    %1753 = vmatprep.subr.mxu0 0.0
    %1754 = vmatpush2.xpose.msra.mxu0 0.0
    %1755 = vmatprep.subr.mxu0 0.0
    %1756 = vmatpush2.xpose.msra.mxu0 0.0
    %1757 = vmatprep.subr.mxu0 0.0
    %1758 = vmatpush2.xpose.msra.mxu0 0.0
    %1759 = vmatprep.mubr.f32.mxu0 0.0
    %1760 = vmatmul.mubr.f32.gmra.mxu0 %v1691
    %v1761 = vpop.f32.mrf.mxu0
    %v1762 = vadd.f32 0.0, %v1761
    %v1763 = vpop.f32.mrf.mxu0
    %1764 = vdwg.mxu0
    %1766 = vrot.lane.b32.xlu0 %v1222, 120
    %v1767 = vpop.permute.xlu0 %1766
    %v1768 = vsel %vm1228, %v1222, 0
    %v1770 = vsel %vm1228, %v1767, 0
    %1772 = vmatprep.subr.mxu0 0.0
    %1773 = vmatpush1.xpose.msra.mxu0 0.0
    %1774 = vmatprep.subr.mxu0 0.0
    %1775 = vmatpush1.xpose.msra.mxu0 0.0
    %1776 = vmatprep.subr.mxu0 0.0
    %1777 = vmatpush1.xpose.msra.mxu0 0.0
    %1778 = vmatprep.subr.mxu0 0.0
    %1779 = vmatpush1.xpose.msra.mxu0 0.0
    %1780 = vmatprep.subr.mxu0 0.0
    %1781 = vmatpush1.xpose.msra.mxu0 0.0
    %1782 = vmatprep.subr.mxu0 0.0
    %1783 = vmatpush1.xpose.msra.mxu0 0.0
    %1784 = vmatprep.subr.mxu0 0.0
    %1785 = vmatpush1.xpose.msra.mxu0 0.0
    %1786 = vmatprep.subr.mxu0 0.0
    %1787 = vmatpush1.xpose.msra.mxu0 0.0
    %1788 = vmatprep.subr.mxu0 0.0
    %1789 = vmatpush1.xpose.msra.mxu0 0.0
    %1790 = vmatprep.subr.mxu0 0.0
    %1791 = vmatpush1.xpose.msra.mxu0 0.0
    %1792 = vmatprep.subr.mxu0 0.0
    %1793 = vmatpush1.xpose.msra.mxu0 0.0
    %1794 = vmatprep.subr.mxu0 0.0
    %1795 = vmatpush1.xpose.msra.mxu0 0.0
    %1796 = vmatprep.subr.mxu0 0.0
    %1797 = vmatpush1.xpose.msra.mxu0 0.0
    %1798 = vmatprep.subr.mxu0 0.0
    %1799 = vmatpush1.xpose.msra.mxu0 0.0
    %1800 = vmatprep.subr.mxu0 0.0
    %1801 = vmatpush1.xpose.msra.mxu0 0.0
    %1802 = vmatprep.subr.mxu0 0.0
    %1803 = vmatpush1.xpose.msra.mxu0 %v1770
    %1804 = vmatprep.subr.mxu0 0.0
    %1805 = vmatpush2.xpose.msra.mxu0 0.0
    %1806 = vmatprep.subr.mxu0 0.0
    %1807 = vmatpush2.xpose.msra.mxu0 0.0
    %1808 = vmatprep.subr.mxu0 0.0
    %1809 = vmatpush2.xpose.msra.mxu0 0.0
    %1810 = vmatprep.subr.mxu0 0.0
    %1811 = vmatpush2.xpose.msra.mxu0 0.0
    %1812 = vmatprep.subr.mxu0 0.0
    %1813 = vmatpush2.xpose.msra.mxu0 0.0
    %1814 = vmatprep.subr.mxu0 0.0
    %1815 = vmatpush2.xpose.msra.mxu0 0.0
    %1816 = vmatprep.subr.mxu0 0.0
    %1817 = vmatpush2.xpose.msra.mxu0 0.0
    %1818 = vmatprep.subr.mxu0 0.0
    %1819 = vmatpush2.xpose.msra.mxu0 0.0
    %1820 = vmatprep.subr.mxu0 0.0
    %1821 = vmatpush2.xpose.msra.mxu0 0.0
    %1822 = vmatprep.subr.mxu0 0.0
    %1823 = vmatpush2.xpose.msra.mxu0 0.0
    %1824 = vmatprep.subr.mxu0 0.0
    %1825 = vmatpush2.xpose.msra.mxu0 0.0
    %1826 = vmatprep.subr.mxu0 0.0
    %1827 = vmatpush2.xpose.msra.mxu0 0.0
    %1828 = vmatprep.subr.mxu0 0.0
    %1829 = vmatpush2.xpose.msra.mxu0 0.0
    %1830 = vmatprep.subr.mxu0 0.0
    %1831 = vmatpush2.xpose.msra.mxu0 0.0
    %1832 = vmatprep.subr.mxu0 0.0
    %1833 = vmatpush2.xpose.msra.mxu0 0.0
    %1834 = vmatprep.subr.mxu0 0.0
    %1835 = vmatpush2.xpose.msra.mxu0 0.0
    %1836 = vmatprep.mubr.f32.mxu0 0.0
    %1837 = vmatmul.mubr.f32.gmra.mxu0 %v1768
    %v1838 = vpop.f32.mrf.mxu0
    %v1839 = vadd.f32 0.0, %v1838
    %v1840 = vpop.f32.mrf.mxu0
    %1841 = vdwg.mxu0
    %v1842 = vmul.f32 %v1300, 0.35355338
    %v1843 = vmul.f32 %v1377, 0.35355338
    %v1844 = vmul.f32 %v1454, 0.35355338
    %v1845 = vmul.f32 %v1531, 0.35355338
    %v1846 = vmul.f32 %v1608, 0.35355338
    %v1847 = vmul.f32 %v1685, 0.35355338
    %v1848 = vmul.f32 %v1762, 0.35355338
    %v1849 = vmul.f32 %v1839, 0.35355338
    %v1852 = vlaneseq
    %v1853 = vshrl.u32 %v1852, 7
    %v1854 = vsub.s32 0, %v1853
    %v1855 = vrot.slane %v619, %v1854
    %v1856 = vlaneseq
    %v1857 = vshrl.u32 %v1856, 7
    %v1858 = vsub.s32 0, %v1857
    %v1859 = vrot.slane %v620, %v1858
    %v1862 = vadd.f32 %v1842, %v1855
    %v1863 = vadd.f32 %v1843, %v1859
    %v1864 = vadd.f32 %v1844, %v1855
    %v1865 = vadd.f32 %v1845, %v1859
    %v1866 = vadd.f32 %v1846, %v1855
    %v1867 = vadd.f32 %v1847, %v1859
    %v1868 = vadd.f32 %v1848, %v1855
    %v1869 = vadd.f32 %v1849, %v1859
    %v1870 = vsel %vm1228, %v1862, -inf
    %1871 = vmax.xlane.f32.xlu0 %v1870
    %v1872 = vpop.xlane.xlu0 %1871
    %v1873 = vsel %vm1228, %v1863, -inf
    %1874 = vmax.xlane.f32.xlu0 %v1873
    %v1875 = vpop.xlane.xlu0 %1874
    %v1876 = vsel %vm1228, %v1864, -inf
    %1877 = vmax.xlane.f32.xlu0 %v1876
    %v1878 = vpop.xlane.xlu0 %1877
    %v1879 = vsel %vm1228, %v1865, -inf
    %1880 = vmax.xlane.f32.xlu0 %v1879
    %v1881 = vpop.xlane.xlu0 %1880
    %v1882 = vsel %vm1228, %v1866, -inf
    %1883 = vmax.xlane.f32.xlu0 %v1882
    %v1884 = vpop.xlane.xlu0 %1883
    %v1885 = vsel %vm1228, %v1867, -inf
    %1886 = vmax.xlane.f32.xlu0 %v1885
    %v1887 = vpop.xlane.xlu0 %1886
    %v1888 = vsel %vm1228, %v1868, -inf
    %1889 = vmax.xlane.f32.xlu0 %v1888
    %v1890 = vpop.xlane.xlu0 %1889
    %v1891 = vsel %vm1228, %v1869, -inf
    %1892 = vmax.xlane.f32.xlu0 %v1891
    %v1893 = vpop.xlane.xlu0 %1892
    %v1894 = vsub.f32 %v1862, %v1872
    %v1895 = vsub.f32 %v1863, %v1875
    %v1896 = vsub.f32 %v1864, %v1878
    %v1897 = vsub.f32 %v1865, %v1881
    %v1898 = vsub.f32 %v1866, %v1884
    %v1899 = vsub.f32 %v1867, %v1887
    %v1900 = vsub.f32 %v1868, %v1890
    %v1901 = vsub.f32 %v1869, %v1893
    %v1902 = vmul.f32 %v1894, 1.442695
    %v1903 = vpow.pop %v1902
    %v1904 = vmul.f32 %v1895, 1.442695
    %v1905 = vpow.pop %v1904
    %v1906 = vmul.f32 %v1896, 1.442695
    %v1907 = vpow.pop %v1906
    %v1908 = vmul.f32 %v1897, 1.442695
    %v1909 = vpow.pop %v1908
    %v1910 = vmul.f32 %v1898, 1.442695
    %v1911 = vpow.pop %v1910
    %v1912 = vmul.f32 %v1899, 1.442695
    %v1913 = vpow.pop %v1912
    %v1914 = vmul.f32 %v1900, 1.442695
    %v1915 = vpow.pop %v1914
    %v1916 = vmul.f32 %v1901, 1.442695
    %v1917 = vpow.pop %v1916
    %v1918 = vsel %vm1228, %v1903, 0.0
    %1919 = vadd.xlane.f32.xlu0 %v1918
    %v1920 = vpop.xlane.xlu0 %1919
    %v1921 = vsel %vm1228, %v1905, 0.0
    %1922 = vadd.xlane.f32.xlu0 %v1921
    %v1923 = vpop.xlane.xlu0 %1922
    %v1924 = vsel %vm1228, %v1907, 0.0
    %1925 = vadd.xlane.f32.xlu0 %v1924
    %v1926 = vpop.xlane.xlu0 %1925
    %v1927 = vsel %vm1228, %v1909, 0.0
    %1928 = vadd.xlane.f32.xlu0 %v1927
    %v1929 = vpop.xlane.xlu0 %1928
    %v1930 = vsel %vm1228, %v1911, 0.0
    %1931 = vadd.xlane.f32.xlu0 %v1930
    %v1932 = vpop.xlane.xlu0 %1931
    %v1933 = vsel %vm1228, %v1913, 0.0
    %1934 = vadd.xlane.f32.xlu0 %v1933
    %v1935 = vpop.xlane.xlu0 %1934
    %v1936 = vsel %vm1228, %v1915, 0.0
    %1937 = vadd.xlane.f32.xlu0 %v1936
    %v1938 = vpop.xlane.xlu0 %1937
    %v1939 = vsel %vm1228, %v1917, 0.0
    %1940 = vadd.xlane.f32.xlu0 %v1939
    %v1941 = vpop.xlane.xlu0 %1940
    %v1942 = vrcp.pop %v1920
    %v1943 = vrcp.pop %v1923
    %v1944 = vrcp.pop %v1926
    %v1945 = vrcp.pop %v1929
    %v1946 = vrcp.pop %v1932
    %v1947 = vrcp.pop %v1935
    %v1948 = vrcp.pop %v1938
    %v1949 = vrcp.pop %v1941
    %v1950 = vmul.f32 %v1903, %v1942
    %v1951 = vmul.f32 %v1905, %v1943
    %v1952 = vmul.f32 %v1907, %v1944
    %v1953 = vmul.f32 %v1909, %v1945
    %v1954 = vmul.f32 %v1911, %v1946
    %v1955 = vmul.f32 %v1913, %v1947
    %v1956 = vmul.f32 %v1915, %v1948
    %v1957 = vmul.f32 %v1917, %v1949
    %1958 = vrot.lane.b32.xlu0 %v729, 112
    %v1959 = vpop.permute.xlu0 %1958
    %v1962 = vsel %vm1228, %v1950, 0
    %1964 = vmatprep.subr.mxu0 0.0
    %1965 = vmatpush1.msra.mxu0 0.0
    %1966 = vmatprep.subr.mxu0 0.0
    %1967 = vmatpush1.msra.mxu0 0.0
    %1968 = vmatprep.subr.mxu0 0.0
    %1969 = vmatpush1.msra.mxu0 0.0
    %1970 = vmatprep.subr.mxu0 0.0
    %1971 = vmatpush1.msra.mxu0 0.0
    %1972 = vmatprep.subr.mxu0 0.0
    %1973 = vmatpush1.msra.mxu0 0.0
    %1974 = vmatprep.subr.mxu0 0.0
    %1975 = vmatpush1.msra.mxu0 0.0
    %1976 = vmatprep.subr.mxu0 0.0
    %1977 = vmatpush1.msra.mxu0 0.0
    %1978 = vmatprep.subr.mxu0 0.0
    %1979 = vmatpush1.msra.mxu0 0.0
    %1980 = vmatprep.subr.mxu0 0.0
    %1981 = vmatpush1.msra.mxu0 0.0
    %1982 = vmatprep.subr.mxu0 0.0
    %1983 = vmatpush1.msra.mxu0 0.0
    %1984 = vmatprep.subr.mxu0 0.0
    %1985 = vmatpush1.msra.mxu0 0.0
    %1986 = vmatprep.subr.mxu0 0.0
    %1987 = vmatpush1.msra.mxu0 0.0
    %1988 = vmatprep.subr.mxu0 0.0
    %1989 = vmatpush1.msra.mxu0 0.0
    %1990 = vmatprep.subr.mxu0 0.0
    %1991 = vmatpush1.msra.mxu0 0.0
    %1992 = vmatprep.subr.mxu0 0.0
    %1993 = vmatpush1.msra.mxu0 0.0
    %1994 = vmatprep.subr.mxu0 0.0
    %1995 = vmatpush1.msra.mxu0 %v1959
    %1996 = vmatprep.subr.mxu0 0.0
    %1997 = vmatpush2.msra.mxu0 0.0
    %1998 = vmatprep.subr.mxu0 0.0
    %1999 = vmatpush2.msra.mxu0 0.0
    %2000 = vmatprep.subr.mxu0 0.0
    %2001 = vmatpush2.msra.mxu0 0.0
    %2002 = vmatprep.subr.mxu0 0.0
    %2003 = vmatpush2.msra.mxu0 0.0
    %2004 = vmatprep.subr.mxu0 0.0
    %2005 = vmatpush2.msra.mxu0 0.0
    %2006 = vmatprep.subr.mxu0 0.0
    %2007 = vmatpush2.msra.mxu0 0.0
    %2008 = vmatprep.subr.mxu0 0.0
    %2009 = vmatpush2.msra.mxu0 0.0
    %2010 = vmatprep.subr.mxu0 0.0
    %2011 = vmatpush2.msra.mxu0 0.0
    %2012 = vmatprep.subr.mxu0 0.0
    %2013 = vmatpush2.msra.mxu0 0.0
    %2014 = vmatprep.subr.mxu0 0.0
    %2015 = vmatpush2.msra.mxu0 0.0
    %2016 = vmatprep.subr.mxu0 0.0
    %2017 = vmatpush2.msra.mxu0 0.0
    %2018 = vmatprep.subr.mxu0 0.0
    %2019 = vmatpush2.msra.mxu0 0.0
    %2020 = vmatprep.subr.mxu0 0.0
    %2021 = vmatpush2.msra.mxu0 0.0
    %2022 = vmatprep.subr.mxu0 0.0
    %2023 = vmatpush2.msra.mxu0 0.0
    %2024 = vmatprep.subr.mxu0 0.0
    %2025 = vmatpush2.msra.mxu0 0.0
    %2026 = vmatprep.subr.mxu0 0.0
    %2027 = vmatpush2.msra.mxu0 0.0
    %2028 = vmatprep.mubr.f32.mxu0 0.0
    %2029 = vmatmul.mubr.f32.gmra.mxu0 %v1962
    %v2030 = vpop.f32.mrf.mxu0
    %v2031 = vadd.f32 0.0, %v2030
    %v2032 = vpop.f32.mrf.mxu0
    %2033 = vdwg.mxu0
    %2034 = vrot.lane.b32.xlu0 %v802, 112
    %v2035 = vpop.permute.xlu0 %2034
    %v2038 = vsel %vm1228, %v1951, 0
    %2040 = vmatprep.subr.mxu0 0.0
    %2041 = vmatpush1.msra.mxu0 0.0
    %2042 = vmatprep.subr.mxu0 0.0
    %2043 = vmatpush1.msra.mxu0 0.0
    %2044 = vmatprep.subr.mxu0 0.0
    %2045 = vmatpush1.msra.mxu0 0.0
    %2046 = vmatprep.subr.mxu0 0.0
    %2047 = vmatpush1.msra.mxu0 0.0
    %2048 = vmatprep.subr.mxu0 0.0
    %2049 = vmatpush1.msra.mxu0 0.0
    %2050 = vmatprep.subr.mxu0 0.0
    %2051 = vmatpush1.msra.mxu0 0.0
    %2052 = vmatprep.subr.mxu0 0.0
    %2053 = vmatpush1.msra.mxu0 0.0
    %2054 = vmatprep.subr.mxu0 0.0
    %2055 = vmatpush1.msra.mxu0 0.0
    %2056 = vmatprep.subr.mxu0 0.0
    %2057 = vmatpush1.msra.mxu0 0.0
    %2058 = vmatprep.subr.mxu0 0.0
    %2059 = vmatpush1.msra.mxu0 0.0
    %2060 = vmatprep.subr.mxu0 0.0
    %2061 = vmatpush1.msra.mxu0 0.0
    %2062 = vmatprep.subr.mxu0 0.0
    %2063 = vmatpush1.msra.mxu0 0.0
    %2064 = vmatprep.subr.mxu0 0.0
    %2065 = vmatpush1.msra.mxu0 0.0
    %2066 = vmatprep.subr.mxu0 0.0
    %2067 = vmatpush1.msra.mxu0 0.0
    %2068 = vmatprep.subr.mxu0 0.0
    %2069 = vmatpush1.msra.mxu0 0.0
    %2070 = vmatprep.subr.mxu0 0.0
    %2071 = vmatpush1.msra.mxu0 %v2035
    %2072 = vmatprep.subr.mxu0 0.0
    %2073 = vmatpush2.msra.mxu0 0.0
    %2074 = vmatprep.subr.mxu0 0.0
    %2075 = vmatpush2.msra.mxu0 0.0
    %2076 = vmatprep.subr.mxu0 0.0
    %2077 = vmatpush2.msra.mxu0 0.0
    %2078 = vmatprep.subr.mxu0 0.0
    %2079 = vmatpush2.msra.mxu0 0.0
    %2080 = vmatprep.subr.mxu0 0.0
    %2081 = vmatpush2.msra.mxu0 0.0
    %2082 = vmatprep.subr.mxu0 0.0
    %2083 = vmatpush2.msra.mxu0 0.0
    %2084 = vmatprep.subr.mxu0 0.0
    %2085 = vmatpush2.msra.mxu0 0.0
    %2086 = vmatprep.subr.mxu0 0.0
    %2087 = vmatpush2.msra.mxu0 0.0
    %2088 = vmatprep.subr.mxu0 0.0
    %2089 = vmatpush2.msra.mxu0 0.0
    %2090 = vmatprep.subr.mxu0 0.0
    %2091 = vmatpush2.msra.mxu0 0.0
    %2092 = vmatprep.subr.mxu0 0.0
    %2093 = vmatpush2.msra.mxu0 0.0
    %2094 = vmatprep.subr.mxu0 0.0
    %2095 = vmatpush2.msra.mxu0 0.0
    %2096 = vmatprep.subr.mxu0 0.0
    %2097 = vmatpush2.msra.mxu0 0.0
    %2098 = vmatprep.subr.mxu0 0.0
    %2099 = vmatpush2.msra.mxu0 0.0
    %2100 = vmatprep.subr.mxu0 0.0
    %2101 = vmatpush2.msra.mxu0 0.0
    %2102 = vmatprep.subr.mxu0 0.0
    %2103 = vmatpush2.msra.mxu0 0.0
    %2104 = vmatprep.mubr.f32.mxu0 0.0
    %2105 = vmatmul.mubr.f32.gmra.mxu0 %v2038
    %v2106 = vpop.f32.mrf.mxu0
    %v2107 = vadd.f32 0.0, %v2106
    %v2108 = vpop.f32.mrf.mxu0
    %2109 = vdwg.mxu0
    %2110 = vrot.lane.b32.xlu0 %v872, 112
    %v2111 = vpop.permute.xlu0 %2110
    %v2114 = vsel %vm1228, %v1952, 0
    %2116 = vmatprep.subr.mxu0 0.0
    %2117 = vmatpush1.msra.mxu0 0.0
    %2118 = vmatprep.subr.mxu0 0.0
    %2119 = vmatpush1.msra.mxu0 0.0
    %2120 = vmatprep.subr.mxu0 0.0
    %2121 = vmatpush1.msra.mxu0 0.0
    %2122 = vmatprep.subr.mxu0 0.0
    %2123 = vmatpush1.msra.mxu0 0.0
    %2124 = vmatprep.subr.mxu0 0.0
    %2125 = vmatpush1.msra.mxu0 0.0
    %2126 = vmatprep.subr.mxu0 0.0
    %2127 = vmatpush1.msra.mxu0 0.0
    %2128 = vmatprep.subr.mxu0 0.0
    %2129 = vmatpush1.msra.mxu0 0.0
    %2130 = vmatprep.subr.mxu0 0.0
    %2131 = vmatpush1.msra.mxu0 0.0
    %2132 = vmatprep.subr.mxu0 0.0
    %2133 = vmatpush1.msra.mxu0 0.0
    %2134 = vmatprep.subr.mxu0 0.0
    %2135 = vmatpush1.msra.mxu0 0.0
    %2136 = vmatprep.subr.mxu0 0.0
    %2137 = vmatpush1.msra.mxu0 0.0
    %2138 = vmatprep.subr.mxu0 0.0
    %2139 = vmatpush1.msra.mxu0 0.0
    %2140 = vmatprep.subr.mxu0 0.0
    %2141 = vmatpush1.msra.mxu0 0.0
    %2142 = vmatprep.subr.mxu0 0.0
    %2143 = vmatpush1.msra.mxu0 0.0
    %2144 = vmatprep.subr.mxu0 0.0
    %2145 = vmatpush1.msra.mxu0 0.0
    %2146 = vmatprep.subr.mxu0 0.0
    %2147 = vmatpush1.msra.mxu0 %v2111
    %2148 = vmatprep.subr.mxu0 0.0
    %2149 = vmatpush2.msra.mxu0 0.0
    %2150 = vmatprep.subr.mxu0 0.0
    %2151 = vmatpush2.msra.mxu0 0.0
    %2152 = vmatprep.subr.mxu0 0.0
    %2153 = vmatpush2.msra.mxu0 0.0
    %2154 = vmatprep.subr.mxu0 0.0
    %2155 = vmatpush2.msra.mxu0 0.0
    %2156 = vmatprep.subr.mxu0 0.0
    %2157 = vmatpush2.msra.mxu0 0.0
    %2158 = vmatprep.subr.mxu0 0.0
    %2159 = vmatpush2.msra.mxu0 0.0
    %2160 = vmatprep.subr.mxu0 0.0
    %2161 = vmatpush2.msra.mxu0 0.0
    %2162 = vmatprep.subr.mxu0 0.0
    %2163 = vmatpush2.msra.mxu0 0.0
    %2164 = vmatprep.subr.mxu0 0.0
    %2165 = vmatpush2.msra.mxu0 0.0
    %2166 = vmatprep.subr.mxu0 0.0
    %2167 = vmatpush2.msra.mxu0 0.0
    %2168 = vmatprep.subr.mxu0 0.0
    %2169 = vmatpush2.msra.mxu0 0.0
    %2170 = vmatprep.subr.mxu0 0.0
    %2171 = vmatpush2.msra.mxu0 0.0
    %2172 = vmatprep.subr.mxu0 0.0
    %2173 = vmatpush2.msra.mxu0 0.0
    %2174 = vmatprep.subr.mxu0 0.0
    %2175 = vmatpush2.msra.mxu0 0.0
    %2176 = vmatprep.subr.mxu0 0.0
    %2177 = vmatpush2.msra.mxu0 0.0
    %2178 = vmatprep.subr.mxu0 0.0
    %2179 = vmatpush2.msra.mxu0 0.0
    %2180 = vmatprep.mubr.f32.mxu0 0.0
    %2181 = vmatmul.mubr.f32.gmra.mxu0 %v2114
    %v2182 = vpop.f32.mrf.mxu0
    %v2183 = vadd.f32 0.0, %v2182
    %v2184 = vpop.f32.mrf.mxu0
    %2185 = vdwg.mxu0
    %2186 = vrot.lane.b32.xlu0 %v942, 112
    %v2187 = vpop.permute.xlu0 %2186
    %v2190 = vsel %vm1228, %v1953, 0
    %2192 = vmatprep.subr.mxu0 0.0
    %2193 = vmatpush1.msra.mxu0 0.0
    %2194 = vmatprep.subr.mxu0 0.0
    %2195 = vmatpush1.msra.mxu0 0.0
    %2196 = vmatprep.subr.mxu0 0.0
    %2197 = vmatpush1.msra.mxu0 0.0
    %2198 = vmatprep.subr.mxu0 0.0
    %2199 = vmatpush1.msra.mxu0 0.0
    %2200 = vmatprep.subr.mxu0 0.0
    %2201 = vmatpush1.msra.mxu0 0.0
    %2202 = vmatprep.subr.mxu0 0.0
    %2203 = vmatpush1.msra.mxu0 0.0
    %2204 = vmatprep.subr.mxu0 0.0
    %2205 = vmatpush1.msra.mxu0 0.0
    %2206 = vmatprep.subr.mxu0 0.0
    %2207 = vmatpush1.msra.mxu0 0.0
    %2208 = vmatprep.subr.mxu0 0.0
    %2209 = vmatpush1.msra.mxu0 0.0
    %2210 = vmatprep.subr.mxu0 0.0
    %2211 = vmatpush1.msra.mxu0 0.0
    %2212 = vmatprep.subr.mxu0 0.0
    %2213 = vmatpush1.msra.mxu0 0.0
    %2214 = vmatprep.subr.mxu0 0.0
    %2215 = vmatpush1.msra.mxu0 0.0
    %2216 = vmatprep.subr.mxu0 0.0
    %2217 = vmatpush1.msra.mxu0 0.0
    %2218 = vmatprep.subr.mxu0 0.0
    %2219 = vmatpush1.msra.mxu0 0.0
    %2220 = vmatprep.subr.mxu0 0.0
    %2221 = vmatpush1.msra.mxu0 0.0
    %2222 = vmatprep.subr.mxu0 0.0
    %2223 = vmatpush1.msra.mxu0 %v2187
    %2224 = vmatprep.subr.mxu0 0.0
    %2225 = vmatpush2.msra.mxu0 0.0
    %2226 = vmatprep.subr.mxu0 0.0
    %2227 = vmatpush2.msra.mxu0 0.0
    %2228 = vmatprep.subr.mxu0 0.0
    %2229 = vmatpush2.msra.mxu0 0.0
    %2230 = vmatprep.subr.mxu0 0.0
    %2231 = vmatpush2.msra.mxu0 0.0
    %2232 = vmatprep.subr.mxu0 0.0
    %2233 = vmatpush2.msra.mxu0 0.0
    %2234 = vmatprep.subr.mxu0 0.0
    %2235 = vmatpush2.msra.mxu0 0.0
    %2236 = vmatprep.subr.mxu0 0.0
    %2237 = vmatpush2.msra.mxu0 0.0
    %2238 = vmatprep.subr.mxu0 0.0
    %2239 = vmatpush2.msra.mxu0 0.0
    %2240 = vmatprep.subr.mxu0 0.0
    %2241 = vmatpush2.msra.mxu0 0.0
    %2242 = vmatprep.subr.mxu0 0.0
    %2243 = vmatpush2.msra.mxu0 0.0
    %2244 = vmatprep.subr.mxu0 0.0
    %2245 = vmatpush2.msra.mxu0 0.0
    %2246 = vmatprep.subr.mxu0 0.0
    %2247 = vmatpush2.msra.mxu0 0.0
    %2248 = vmatprep.subr.mxu0 0.0
    %2249 = vmatpush2.msra.mxu0 0.0
    %2250 = vmatprep.subr.mxu0 0.0
    %2251 = vmatpush2.msra.mxu0 0.0
    %2252 = vmatprep.subr.mxu0 0.0
    %2253 = vmatpush2.msra.mxu0 0.0
    %2254 = vmatprep.subr.mxu0 0.0
    %2255 = vmatpush2.msra.mxu0 0.0
    %2256 = vmatprep.mubr.f32.mxu0 0.0
    %2257 = vmatmul.mubr.f32.gmra.mxu0 %v2190
    %v2258 = vpop.f32.mrf.mxu0
    %v2259 = vadd.f32 0.0, %v2258
    %v2260 = vpop.f32.mrf.mxu0
    %2261 = vdwg.mxu0
    %2262 = vrot.lane.b32.xlu0 %v1012, 112
    %v2263 = vpop.permute.xlu0 %2262
    %v2266 = vsel %vm1228, %v1954, 0
    %2268 = vmatprep.subr.mxu0 0.0
    %2269 = vmatpush1.msra.mxu0 0.0
    %2270 = vmatprep.subr.mxu0 0.0
    %2271 = vmatpush1.msra.mxu0 0.0
    %2272 = vmatprep.subr.mxu0 0.0
    %2273 = vmatpush1.msra.mxu0 0.0
    %2274 = vmatprep.subr.mxu0 0.0
    %2275 = vmatpush1.msra.mxu0 0.0
    %2276 = vmatprep.subr.mxu0 0.0
    %2277 = vmatpush1.msra.mxu0 0.0
    %2278 = vmatprep.subr.mxu0 0.0
    %2279 = vmatpush1.msra.mxu0 0.0
    %2280 = vmatprep.subr.mxu0 0.0
    %2281 = vmatpush1.msra.mxu0 0.0
    %2282 = vmatprep.subr.mxu0 0.0
    %2283 = vmatpush1.msra.mxu0 0.0
    %2284 = vmatprep.subr.mxu0 0.0
    %2285 = vmatpush1.msra.mxu0 0.0
    %2286 = vmatprep.subr.mxu0 0.0
    %2287 = vmatpush1.msra.mxu0 0.0
    %2288 = vmatprep.subr.mxu0 0.0
    %2289 = vmatpush1.msra.mxu0 0.0
    %2290 = vmatprep.subr.mxu0 0.0
    %2291 = vmatpush1.msra.mxu0 0.0
    %2292 = vmatprep.subr.mxu0 0.0
    %2293 = vmatpush1.msra.mxu0 0.0
    %2294 = vmatprep.subr.mxu0 0.0
    %2295 = vmatpush1.msra.mxu0 0.0
    %2296 = vmatprep.subr.mxu0 0.0
    %2297 = vmatpush1.msra.mxu0 0.0
    %2298 = vmatprep.subr.mxu0 0.0
    %2299 = vmatpush1.msra.mxu0 %v2263
    %2300 = vmatprep.subr.mxu0 0.0
    %2301 = vmatpush2.msra.mxu0 0.0
    %2302 = vmatprep.subr.mxu0 0.0
    %2303 = vmatpush2.msra.mxu0 0.0
    %2304 = vmatprep.subr.mxu0 0.0
    %2305 = vmatpush2.msra.mxu0 0.0
    %2306 = vmatprep.subr.mxu0 0.0
    %2307 = vmatpush2.msra.mxu0 0.0
    %2308 = vmatprep.subr.mxu0 0.0
    %2309 = vmatpush2.msra.mxu0 0.0
    %2310 = vmatprep.subr.mxu0 0.0
    %2311 = vmatpush2.msra.mxu0 0.0
    %2312 = vmatprep.subr.mxu0 0.0
    %2313 = vmatpush2.msra.mxu0 0.0
    %2314 = vmatprep.subr.mxu0 0.0
    %2315 = vmatpush2.msra.mxu0 0.0
    %2316 = vmatprep.subr.mxu0 0.0
    %2317 = vmatpush2.msra.mxu0 0.0
    %2318 = vmatprep.subr.mxu0 0.0
    %2319 = vmatpush2.msra.mxu0 0.0
    %2320 = vmatprep.subr.mxu0 0.0
    %2321 = vmatpush2.msra.mxu0 0.0
    %2322 = vmatprep.subr.mxu0 0.0
    %2323 = vmatpush2.msra.mxu0 0.0
    %2324 = vmatprep.subr.mxu0 0.0
    %2325 = vmatpush2.msra.mxu0 0.0
    %2326 = vmatprep.subr.mxu0 0.0
    %2327 = vmatpush2.msra.mxu0 0.0
    %2328 = vmatprep.subr.mxu0 0.0
    %2329 = vmatpush2.msra.mxu0 0.0
    %2330 = vmatprep.subr.mxu0 0.0
    %2331 = vmatpush2.msra.mxu0 0.0
    %2332 = vmatprep.mubr.f32.mxu0 0.0
    %2333 = vmatmul.mubr.f32.gmra.mxu0 %v2266
    %v2334 = vpop.f32.mrf.mxu0
    %v2335 = vadd.f32 0.0, %v2334
    %v2336 = vpop.f32.mrf.mxu0
    %2337 = vdwg.mxu0
    %2338 = vrot.lane.b32.xlu0 %v1082, 112
    %v2339 = vpop.permute.xlu0 %2338
    %v2342 = vsel %vm1228, %v1955, 0
    %2344 = vmatprep.subr.mxu0 0.0
    %2345 = vmatpush1.msra.mxu0 0.0
    %2346 = vmatprep.subr.mxu0 0.0
    %2347 = vmatpush1.msra.mxu0 0.0
    %2348 = vmatprep.subr.mxu0 0.0
    %2349 = vmatpush1.msra.mxu0 0.0
    %2350 = vmatprep.subr.mxu0 0.0
    %2351 = vmatpush1.msra.mxu0 0.0
    %2352 = vmatprep.subr.mxu0 0.0
    %2353 = vmatpush1.msra.mxu0 0.0
    %2354 = vmatprep.subr.mxu0 0.0
    %2355 = vmatpush1.msra.mxu0 0.0
    %2356 = vmatprep.subr.mxu0 0.0
    %2357 = vmatpush1.msra.mxu0 0.0
    %2358 = vmatprep.subr.mxu0 0.0
    %2359 = vmatpush1.msra.mxu0 0.0
    %2360 = vmatprep.subr.mxu0 0.0
    %2361 = vmatpush1.msra.mxu0 0.0
    %2362 = vmatprep.subr.mxu0 0.0
    %2363 = vmatpush1.msra.mxu0 0.0
    %2364 = vmatprep.subr.mxu0 0.0
    %2365 = vmatpush1.msra.mxu0 0.0
    %2366 = vmatprep.subr.mxu0 0.0
    %2367 = vmatpush1.msra.mxu0 0.0
    %2368 = vmatprep.subr.mxu0 0.0
    %2369 = vmatpush1.msra.mxu0 0.0
    %2370 = vmatprep.subr.mxu0 0.0
    %2371 = vmatpush1.msra.mxu0 0.0
    %2372 = vmatprep.subr.mxu0 0.0
    %2373 = vmatpush1.msra.mxu0 0.0
    %2374 = vmatprep.subr.mxu0 0.0
    %2375 = vmatpush1.msra.mxu0 %v2339
    %2376 = vmatprep.subr.mxu0 0.0
    %2377 = vmatpush2.msra.mxu0 0.0
    %2378 = vmatprep.subr.mxu0 0.0
    %2379 = vmatpush2.msra.mxu0 0.0
    %2380 = vmatprep.subr.mxu0 0.0
    %2381 = vmatpush2.msra.mxu0 0.0
    %2382 = vmatprep.subr.mxu0 0.0
    %2383 = vmatpush2.msra.mxu0 0.0
    %2384 = vmatprep.subr.mxu0 0.0
    %2385 = vmatpush2.msra.mxu0 0.0
    %2386 = vmatprep.subr.mxu0 0.0
    %2387 = vmatpush2.msra.mxu0 0.0
    %2388 = vmatprep.subr.mxu0 0.0
    %2389 = vmatpush2.msra.mxu0 0.0
    %2390 = vmatprep.subr.mxu0 0.0
    %2391 = vmatpush2.msra.mxu0 0.0
    %2392 = vmatprep.subr.mxu0 0.0
    %2393 = vmatpush2.msra.mxu0 0.0
    %2394 = vmatprep.subr.mxu0 0.0
    %2395 = vmatpush2.msra.mxu0 0.0
    %2396 = vmatprep.subr.mxu0 0.0
    %2397 = vmatpush2.msra.mxu0 0.0
    %2398 = vmatprep.subr.mxu0 0.0
    %2399 = vmatpush2.msra.mxu0 0.0
    %2400 = vmatprep.subr.mxu0 0.0
    %2401 = vmatpush2.msra.mxu0 0.0
    %2402 = vmatprep.subr.mxu0 0.0
    %2403 = vmatpush2.msra.mxu0 0.0
    %2404 = vmatprep.subr.mxu0 0.0
    %2405 = vmatpush2.msra.mxu0 0.0
    %2406 = vmatprep.subr.mxu0 0.0
    %2407 = vmatpush2.msra.mxu0 0.0
    %2408 = vmatprep.mubr.f32.mxu0 0.0
    %2409 = vmatmul.mubr.f32.gmra.mxu0 %v2342
    %v2410 = vpop.f32.mrf.mxu0
    %v2411 = vadd.f32 0.0, %v2410
    %v2412 = vpop.f32.mrf.mxu0
    %2413 = vdwg.mxu0
    %2414 = vrot.lane.b32.xlu0 %v1152, 112
    %v2415 = vpop.permute.xlu0 %2414
    %v2418 = vsel %vm1228, %v1956, 0
    %2420 = vmatprep.subr.mxu0 0.0
    %2421 = vmatpush1.msra.mxu0 0.0
    %2422 = vmatprep.subr.mxu0 0.0
    %2423 = vmatpush1.msra.mxu0 0.0
    %2424 = vmatprep.subr.mxu0 0.0
    %2425 = vmatpush1.msra.mxu0 0.0
    %2426 = vmatprep.subr.mxu0 0.0
    %2427 = vmatpush1.msra.mxu0 0.0
    %2428 = vmatprep.subr.mxu0 0.0
    %2429 = vmatpush1.msra.mxu0 0.0
    %2430 = vmatprep.subr.mxu0 0.0
    %2431 = vmatpush1.msra.mxu0 0.0
    %2432 = vmatprep.subr.mxu0 0.0
    %2433 = vmatpush1.msra.mxu0 0.0
    %2434 = vmatprep.subr.mxu0 0.0
    %2435 = vmatpush1.msra.mxu0 0.0
    %2436 = vmatprep.subr.mxu0 0.0
    %2437 = vmatpush1.msra.mxu0 0.0
    %2438 = vmatprep.subr.mxu0 0.0
    %2439 = vmatpush1.msra.mxu0 0.0
    %2440 = vmatprep.subr.mxu0 0.0
    %2441 = vmatpush1.msra.mxu0 0.0
    %2442 = vmatprep.subr.mxu0 0.0
    %2443 = vmatpush1.msra.mxu0 0.0
    %2444 = vmatprep.subr.mxu0 0.0
    %2445 = vmatpush1.msra.mxu0 0.0
    %2446 = vmatprep.subr.mxu0 0.0
    %2447 = vmatpush1.msra.mxu0 0.0
    %2448 = vmatprep.subr.mxu0 0.0
    %2449 = vmatpush1.msra.mxu0 0.0
    %2450 = vmatprep.subr.mxu0 0.0
    %2451 = vmatpush1.msra.mxu0 %v2415
    %2452 = vmatprep.subr.mxu0 0.0
    %2453 = vmatpush2.msra.mxu0 0.0
    %2454 = vmatprep.subr.mxu0 0.0
    %2455 = vmatpush2.msra.mxu0 0.0
    %2456 = vmatprep.subr.mxu0 0.0
    %2457 = vmatpush2.msra.mxu0 0.0
    %2458 = vmatprep.subr.mxu0 0.0
    %2459 = vmatpush2.msra.mxu0 0.0
    %2460 = vmatprep.subr.mxu0 0.0
    %2461 = vmatpush2.msra.mxu0 0.0
    %2462 = vmatprep.subr.mxu0 0.0
    %2463 = vmatpush2.msra.mxu0 0.0
    %2464 = vmatprep.subr.mxu0 0.0
    %2465 = vmatpush2.msra.mxu0 0.0
    %2466 = vmatprep.subr.mxu0 0.0
    %2467 = vmatpush2.msra.mxu0 0.0
    %2468 = vmatprep.subr.mxu0 0.0
    %2469 = vmatpush2.msra.mxu0 0.0
    %2470 = vmatprep.subr.mxu0 0.0
    %2471 = vmatpush2.msra.mxu0 0.0
    %2472 = vmatprep.subr.mxu0 0.0
    %2473 = vmatpush2.msra.mxu0 0.0
    %2474 = vmatprep.subr.mxu0 0.0
    %2475 = vmatpush2.msra.mxu0 0.0
    %2476 = vmatprep.subr.mxu0 0.0
    %2477 = vmatpush2.msra.mxu0 0.0
    %2478 = vmatprep.subr.mxu0 0.0
    %2479 = vmatpush2.msra.mxu0 0.0
    %2480 = vmatprep.subr.mxu0 0.0
    %2481 = vmatpush2.msra.mxu0 0.0
    %2482 = vmatprep.subr.mxu0 0.0
    %2483 = vmatpush2.msra.mxu0 0.0
    %2484 = vmatprep.mubr.f32.mxu0 0.0
    %2485 = vmatmul.mubr.f32.gmra.mxu0 %v2418
    %v2486 = vpop.f32.mrf.mxu0
    %v2487 = vadd.f32 0.0, %v2486
    %v2488 = vpop.f32.mrf.mxu0
    %2489 = vdwg.mxu0
    %2490 = vrot.lane.b32.xlu0 %v1222, 112
    %v2491 = vpop.permute.xlu0 %2490
    %v2494 = vsel %vm1228, %v1957, 0
    %2496 = vmatprep.subr.mxu0 0.0
    %2497 = vmatpush1.msra.mxu0 0.0
    %2498 = vmatprep.subr.mxu0 0.0
    %2499 = vmatpush1.msra.mxu0 0.0
    %2500 = vmatprep.subr.mxu0 0.0
    %2501 = vmatpush1.msra.mxu0 0.0
    %2502 = vmatprep.subr.mxu0 0.0
    %2503 = vmatpush1.msra.mxu0 0.0
    %2504 = vmatprep.subr.mxu0 0.0
    %2505 = vmatpush1.msra.mxu0 0.0
    %2506 = vmatprep.subr.mxu0 0.0
    %2507 = vmatpush1.msra.mxu0 0.0
    %2508 = vmatprep.subr.mxu0 0.0
    %2509 = vmatpush1.msra.mxu0 0.0
    %2510 = vmatprep.subr.mxu0 0.0
    %2511 = vmatpush1.msra.mxu0 0.0
    %2512 = vmatprep.subr.mxu0 0.0
    %2513 = vmatpush1.msra.mxu0 0.0
    %2514 = vmatprep.subr.mxu0 0.0
    %2515 = vmatpush1.msra.mxu0 0.0
    %2516 = vmatprep.subr.mxu0 0.0
    %2517 = vmatpush1.msra.mxu0 0.0
    %2518 = vmatprep.subr.mxu0 0.0
    %2519 = vmatpush1.msra.mxu0 0.0
    %2520 = vmatprep.subr.mxu0 0.0
    %2521 = vmatpush1.msra.mxu0 0.0
    %2522 = vmatprep.subr.mxu0 0.0
    %2523 = vmatpush1.msra.mxu0 0.0
    %2524 = vmatprep.subr.mxu0 0.0
    %2525 = vmatpush1.msra.mxu0 0.0
    %2526 = vmatprep.subr.mxu0 0.0
    %2527 = vmatpush1.msra.mxu0 %v2491
    %2528 = vmatprep.subr.mxu0 0.0
    %2529 = vmatpush2.msra.mxu0 0.0
    %2530 = vmatprep.subr.mxu0 0.0
    %2531 = vmatpush2.msra.mxu0 0.0
    %2532 = vmatprep.subr.mxu0 0.0
    %2533 = vmatpush2.msra.mxu0 0.0
    %2534 = vmatprep.subr.mxu0 0.0
    %2535 = vmatpush2.msra.mxu0 0.0
    %2536 = vmatprep.subr.mxu0 0.0
    %2537 = vmatpush2.msra.mxu0 0.0
    %2538 = vmatprep.subr.mxu0 0.0
    %2539 = vmatpush2.msra.mxu0 0.0
    %2540 = vmatprep.subr.mxu0 0.0
    %2541 = vmatpush2.msra.mxu0 0.0
    %2542 = vmatprep.subr.mxu0 0.0
    %2543 = vmatpush2.msra.mxu0 0.0
    %2544 = vmatprep.subr.mxu0 0.0
    %2545 = vmatpush2.msra.mxu0 0.0
    %2546 = vmatprep.subr.mxu0 0.0
    %2547 = vmatpush2.msra.mxu0 0.0
    %2548 = vmatprep.subr.mxu0 0.0
    %2549 = vmatpush2.msra.mxu0 0.0
    %2550 = vmatprep.subr.mxu0 0.0
    %2551 = vmatpush2.msra.mxu0 0.0
    %2552 = vmatprep.subr.mxu0 0.0
    %2553 = vmatpush2.msra.mxu0 0.0
    %2554 = vmatprep.subr.mxu0 0.0
    %2555 = vmatpush2.msra.mxu0 0.0
    %2556 = vmatprep.subr.mxu0 0.0
    %2557 = vmatpush2.msra.mxu0 0.0
    %2558 = vmatprep.subr.mxu0 0.0
    %2559 = vmatpush2.msra.mxu0 0.0
    %2560 = vmatprep.mubr.f32.mxu0 0.0
    %2561 = vmatmul.mubr.f32.gmra.mxu0 %v2494
    %v2562 = vpop.f32.mrf.mxu0
    %v2563 = vadd.f32 0.0, %v2562
    %v2564 = vpop.f32.mrf.mxu0
    %2565 = vdwg.mxu0
    %v2566 = vld [vmem:[%s6] sm:$0xff]
    %v2567 = vld [vmem:[%s6 + $0x8] sm:$0xff]
    %v2568 = vld [vmem:[%s6 + $0x10] sm:$0xff]
    %v2569 = vld [vmem:[%s6 + $0x18] sm:$0xff]
    %v2571 = vsel %vm1228, %v2031, 0
    %2573 = vmatprep.subr.mxu0 0.0
    %2574 = vmatpush1.msra.mxu0 0.0
    %2575 = vmatprep.subr.mxu0 0.0
    %2576 = vmatpush1.msra.mxu0 0.0
    %2577 = vmatprep.subr.mxu0 0.0
    %2578 = vmatpush1.msra.mxu0 0.0
    %2579 = vmatprep.subr.mxu0 0.0
    %2580 = vmatpush1.msra.mxu0 0.0
    %2581 = vmatprep.subr.mxu0 0.0
    %2582 = vmatpush1.msra.mxu0 0.0
    %2583 = vmatprep.subr.mxu0 0.0
    %2584 = vmatpush1.msra.mxu0 0.0
    %2585 = vmatprep.subr.mxu0 0.0
    %2586 = vmatpush1.msra.mxu0 0.0
    %2587 = vmatprep.subr.mxu0 0.0
    %2588 = vmatpush1.msra.mxu0 0.0
    %2589 = vmatprep.subr.mxu0 0.0
    %2590 = vmatpush1.msra.mxu0 0.0
    %2591 = vmatprep.subr.mxu0 0.0
    %2592 = vmatpush1.msra.mxu0 0.0
    %2593 = vmatprep.subr.mxu0 0.0
    %2594 = vmatpush1.msra.mxu0 0.0
    %2595 = vmatprep.subr.mxu0 0.0
    %2596 = vmatpush1.msra.mxu0 0.0
    %2597 = vmatprep.subr.mxu0 0.0
    %2598 = vmatpush1.msra.mxu0 0.0
    %2599 = vmatprep.subr.mxu0 0.0
    %2600 = vmatpush1.msra.mxu0 0.0
    %2601 = vmatprep.subr.mxu0 0.0
    %2602 = vmatpush1.msra.mxu0 0.0
    %2603 = vmatprep.subr.mxu0 0.0
    %2604 = vmatpush1.msra.mxu0 %v2566
    %2605 = vmatprep.subr.mxu0 0.0
    %2606 = vmatpush2.msra.mxu0 0.0
    %2607 = vmatprep.subr.mxu0 0.0
    %2608 = vmatpush2.msra.mxu0 0.0
    %2609 = vmatprep.subr.mxu0 0.0
    %2610 = vmatpush2.msra.mxu0 0.0
    %2611 = vmatprep.subr.mxu0 0.0
    %2612 = vmatpush2.msra.mxu0 0.0
    %2613 = vmatprep.subr.mxu0 0.0
    %2614 = vmatpush2.msra.mxu0 0.0
    %2615 = vmatprep.subr.mxu0 0.0
    %2616 = vmatpush2.msra.mxu0 0.0
    %2617 = vmatprep.subr.mxu0 0.0
    %2618 = vmatpush2.msra.mxu0 0.0
    %2619 = vmatprep.subr.mxu0 0.0
    %2620 = vmatpush2.msra.mxu0 0.0
    %2621 = vmatprep.subr.mxu0 0.0
    %2622 = vmatpush2.msra.mxu0 0.0
    %2623 = vmatprep.subr.mxu0 0.0
    %2624 = vmatpush2.msra.mxu0 0.0
    %2625 = vmatprep.subr.mxu0 0.0
    %2626 = vmatpush2.msra.mxu0 0.0
    %2627 = vmatprep.subr.mxu0 0.0
    %2628 = vmatpush2.msra.mxu0 0.0
    %2629 = vmatprep.subr.mxu0 0.0
    %2630 = vmatpush2.msra.mxu0 0.0
    %2631 = vmatprep.subr.mxu0 0.0
    %2632 = vmatpush2.msra.mxu0 0.0
    %2633 = vmatprep.subr.mxu0 0.0
    %2634 = vmatpush2.msra.mxu0 0.0
    %2635 = vmatprep.subr.mxu0 0.0
    %2636 = vmatpush2.msra.mxu0 0.0
    %2637 = vmatprep.mubr.f32.mxu0 0.0
    %2638 = vmatmul.mubr.f32.gmra.mxu0 %v2571
    %v2639 = vpop.f32.mrf.mxu0
    %v2640 = vadd.f32 0.0, %v2639
    %v2641 = vpop.f32.mrf.mxu0
    %2642 = vdwg.mxu0
    %v2644 = vsel %vm1228, %v2107, 0
    %2646 = vmatprep.subr.mxu0 0.0
    %2647 = vmatpush1.msra.mxu0 0.0
    %2648 = vmatprep.subr.mxu0 0.0
    %2649 = vmatpush1.msra.mxu0 0.0
    %2650 = vmatprep.subr.mxu0 0.0
    %2651 = vmatpush1.msra.mxu0 0.0
    %2652 = vmatprep.subr.mxu0 0.0
    %2653 = vmatpush1.msra.mxu0 0.0
    %2654 = vmatprep.subr.mxu0 0.0
    %2655 = vmatpush1.msra.mxu0 0.0
    %2656 = vmatprep.subr.mxu0 0.0
    %2657 = vmatpush1.msra.mxu0 0.0
    %2658 = vmatprep.subr.mxu0 0.0
    %2659 = vmatpush1.msra.mxu0 0.0
    %2660 = vmatprep.subr.mxu0 0.0
    %2661 = vmatpush1.msra.mxu0 0.0
    %2662 = vmatprep.subr.mxu0 0.0
    %2663 = vmatpush1.msra.mxu0 0.0
    %2664 = vmatprep.subr.mxu0 0.0
    %2665 = vmatpush1.msra.mxu0 0.0
    %2666 = vmatprep.subr.mxu0 0.0
    %2667 = vmatpush1.msra.mxu0 0.0
    %2668 = vmatprep.subr.mxu0 0.0
    %2669 = vmatpush1.msra.mxu0 0.0
    %2670 = vmatprep.subr.mxu0 0.0
    %2671 = vmatpush1.msra.mxu0 0.0
    %2672 = vmatprep.subr.mxu0 0.0
    %2673 = vmatpush1.msra.mxu0 0.0
    %2674 = vmatprep.subr.mxu0 0.0
    %2675 = vmatpush1.msra.mxu0 0.0
    %2676 = vmatprep.subr.mxu0 0.0
    %2677 = vmatpush1.msra.mxu0 %v2566
    %2678 = vmatprep.subr.mxu0 0.0
    %2679 = vmatpush2.msra.mxu0 0.0
    %2680 = vmatprep.subr.mxu0 0.0
    %2681 = vmatpush2.msra.mxu0 0.0
    %2682 = vmatprep.subr.mxu0 0.0
    %2683 = vmatpush2.msra.mxu0 0.0
    %2684 = vmatprep.subr.mxu0 0.0
    %2685 = vmatpush2.msra.mxu0 0.0
    %2686 = vmatprep.subr.mxu0 0.0
    %2687 = vmatpush2.msra.mxu0 0.0
    %2688 = vmatprep.subr.mxu0 0.0
    %2689 = vmatpush2.msra.mxu0 0.0
    %2690 = vmatprep.subr.mxu0 0.0
    %2691 = vmatpush2.msra.mxu0 0.0
    %2692 = vmatprep.subr.mxu0 0.0
    %2693 = vmatpush2.msra.mxu0 0.0
    %2694 = vmatprep.subr.mxu0 0.0
    %2695 = vmatpush2.msra.mxu0 0.0
    %2696 = vmatprep.subr.mxu0 0.0
    %2697 = vmatpush2.msra.mxu0 0.0
    %2698 = vmatprep.subr.mxu0 0.0
    %2699 = vmatpush2.msra.mxu0 0.0
    %2700 = vmatprep.subr.mxu0 0.0
    %2701 = vmatpush2.msra.mxu0 0.0
    %2702 = vmatprep.subr.mxu0 0.0
    %2703 = vmatpush2.msra.mxu0 0.0
    %2704 = vmatprep.subr.mxu0 0.0
    %2705 = vmatpush2.msra.mxu0 0.0
    %2706 = vmatprep.subr.mxu0 0.0
    %2707 = vmatpush2.msra.mxu0 0.0
    %2708 = vmatprep.subr.mxu0 0.0
    %2709 = vmatpush2.msra.mxu0 0.0
    %2710 = vmatprep.mubr.f32.mxu0 0.0
    %2711 = vmatmul.mubr.f32.gmra.mxu0 %v2644
    %v2712 = vpop.f32.mrf.mxu0
    %v2713 = vadd.f32 0.0, %v2712
    %v2714 = vpop.f32.mrf.mxu0
    %2715 = vdwg.mxu0
    %v2717 = vsel %vm1228, %v2183, 0
    %2719 = vmatprep.subr.mxu0 0.0
    %2720 = vmatpush1.msra.mxu0 0.0
    %2721 = vmatprep.subr.mxu0 0.0
    %2722 = vmatpush1.msra.mxu0 0.0
    %2723 = vmatprep.subr.mxu0 0.0
    %2724 = vmatpush1.msra.mxu0 0.0
    %2725 = vmatprep.subr.mxu0 0.0
    %2726 = vmatpush1.msra.mxu0 0.0
    %2727 = vmatprep.subr.mxu0 0.0
    %2728 = vmatpush1.msra.mxu0 0.0
    %2729 = vmatprep.subr.mxu0 0.0
    %2730 = vmatpush1.msra.mxu0 0.0
    %2731 = vmatprep.subr.mxu0 0.0
    %2732 = vmatpush1.msra.mxu0 0.0
    %2733 = vmatprep.subr.mxu0 0.0
    %2734 = vmatpush1.msra.mxu0 0.0
    %2735 = vmatprep.subr.mxu0 0.0
    %2736 = vmatpush1.msra.mxu0 0.0
    %2737 = vmatprep.subr.mxu0 0.0
    %2738 = vmatpush1.msra.mxu0 0.0
    %2739 = vmatprep.subr.mxu0 0.0
    %2740 = vmatpush1.msra.mxu0 0.0
    %2741 = vmatprep.subr.mxu0 0.0
    %2742 = vmatpush1.msra.mxu0 0.0
    %2743 = vmatprep.subr.mxu0 0.0
    %2744 = vmatpush1.msra.mxu0 0.0
    %2745 = vmatprep.subr.mxu0 0.0
    %2746 = vmatpush1.msra.mxu0 0.0
    %2747 = vmatprep.subr.mxu0 0.0
    %2748 = vmatpush1.msra.mxu0 0.0
    %2749 = vmatprep.subr.mxu0 0.0
    %2750 = vmatpush1.msra.mxu0 %v2567
    %2751 = vmatprep.subr.mxu0 0.0
    %2752 = vmatpush2.msra.mxu0 0.0
    %2753 = vmatprep.subr.mxu0 0.0
    %2754 = vmatpush2.msra.mxu0 0.0
    %2755 = vmatprep.subr.mxu0 0.0
    %2756 = vmatpush2.msra.mxu0 0.0
    %2757 = vmatprep.subr.mxu0 0.0
    %2758 = vmatpush2.msra.mxu0 0.0
    %2759 = vmatprep.subr.mxu0 0.0
    %2760 = vmatpush2.msra.mxu0 0.0
    %2761 = vmatprep.subr.mxu0 0.0
    %2762 = vmatpush2.msra.mxu0 0.0
    %2763 = vmatprep.subr.mxu0 0.0
    %2764 = vmatpush2.msra.mxu0 0.0
    %2765 = vmatprep.subr.mxu0 0.0
    %2766 = vmatpush2.msra.mxu0 0.0
    %2767 = vmatprep.subr.mxu0 0.0
    %2768 = vmatpush2.msra.mxu0 0.0
    %2769 = vmatprep.subr.mxu0 0.0
    %2770 = vmatpush2.msra.mxu0 0.0
    %2771 = vmatprep.subr.mxu0 0.0
    %2772 = vmatpush2.msra.mxu0 0.0
    %2773 = vmatprep.subr.mxu0 0.0
    %2774 = vmatpush2.msra.mxu0 0.0
    %2775 = vmatprep.subr.mxu0 0.0
    %2776 = vmatpush2.msra.mxu0 0.0
    %2777 = vmatprep.subr.mxu0 0.0
    %2778 = vmatpush2.msra.mxu0 0.0
    %2779 = vmatprep.subr.mxu0 0.0
    %2780 = vmatpush2.msra.mxu0 0.0
    %2781 = vmatprep.subr.mxu0 0.0
    %2782 = vmatpush2.msra.mxu0 0.0
    %2783 = vmatprep.mubr.f32.mxu0 0.0
    %2784 = vmatmul.mubr.f32.gmra.mxu0 %v2717
    %v2785 = vpop.f32.mrf.mxu0
    %v2786 = vadd.f32 0.0, %v2785
    %v2787 = vpop.f32.mrf.mxu0
    %2788 = vdwg.mxu0
    %v2790 = vsel %vm1228, %v2259, 0
    %2792 = vmatprep.subr.mxu0 0.0
    %2793 = vmatpush1.msra.mxu0 0.0
    %2794 = vmatprep.subr.mxu0 0.0
    %2795 = vmatpush1.msra.mxu0 0.0
    %2796 = vmatprep.subr.mxu0 0.0
    %2797 = vmatpush1.msra.mxu0 0.0
    %2798 = vmatprep.subr.mxu0 0.0
    %2799 = vmatpush1.msra.mxu0 0.0
    %2800 = vmatprep.subr.mxu0 0.0
    %2801 = vmatpush1.msra.mxu0 0.0
    %2802 = vmatprep.subr.mxu0 0.0
    %2803 = vmatpush1.msra.mxu0 0.0
    %2804 = vmatprep.subr.mxu0 0.0
    %2805 = vmatpush1.msra.mxu0 0.0
    %2806 = vmatprep.subr.mxu0 0.0
    %2807 = vmatpush1.msra.mxu0 0.0
    %2808 = vmatprep.subr.mxu0 0.0
    %2809 = vmatpush1.msra.mxu0 0.0
    %2810 = vmatprep.subr.mxu0 0.0
    %2811 = vmatpush1.msra.mxu0 0.0
    %2812 = vmatprep.subr.mxu0 0.0
    %2813 = vmatpush1.msra.mxu0 0.0
    %2814 = vmatprep.subr.mxu0 0.0
    %2815 = vmatpush1.msra.mxu0 0.0
    %2816 = vmatprep.subr.mxu0 0.0
    %2817 = vmatpush1.msra.mxu0 0.0
    %2818 = vmatprep.subr.mxu0 0.0
    %2819 = vmatpush1.msra.mxu0 0.0
    %2820 = vmatprep.subr.mxu0 0.0
    %2821 = vmatpush1.msra.mxu0 0.0
    %2822 = vmatprep.subr.mxu0 0.0
    %2823 = vmatpush1.msra.mxu0 %v2567
    %2824 = vmatprep.subr.mxu0 0.0
    %2825 = vmatpush2.msra.mxu0 0.0
    %2826 = vmatprep.subr.mxu0 0.0
    %2827 = vmatpush2.msra.mxu0 0.0
    %2828 = vmatprep.subr.mxu0 0.0
    %2829 = vmatpush2.msra.mxu0 0.0
    %2830 = vmatprep.subr.mxu0 0.0
    %2831 = vmatpush2.msra.mxu0 0.0
    %2832 = vmatprep.subr.mxu0 0.0
    %2833 = vmatpush2.msra.mxu0 0.0
    %2834 = vmatprep.subr.mxu0 0.0
    %2835 = vmatpush2.msra.mxu0 0.0
    %2836 = vmatprep.subr.mxu0 0.0
    %2837 = vmatpush2.msra.mxu0 0.0
    %2838 = vmatprep.subr.mxu0 0.0
    %2839 = vmatpush2.msra.mxu0 0.0
    %2840 = vmatprep.subr.mxu0 0.0
    %2841 = vmatpush2.msra.mxu0 0.0
    %2842 = vmatprep.subr.mxu0 0.0
    %2843 = vmatpush2.msra.mxu0 0.0
    %2844 = vmatprep.subr.mxu0 0.0
    %2845 = vmatpush2.msra.mxu0 0.0
    %2846 = vmatprep.subr.mxu0 0.0
    %2847 = vmatpush2.msra.mxu0 0.0
    %2848 = vmatprep.subr.mxu0 0.0
    %2849 = vmatpush2.msra.mxu0 0.0
    %2850 = vmatprep.subr.mxu0 0.0
    %2851 = vmatpush2.msra.mxu0 0.0
    %2852 = vmatprep.subr.mxu0 0.0
    %2853 = vmatpush2.msra.mxu0 0.0
    %2854 = vmatprep.subr.mxu0 0.0
    %2855 = vmatpush2.msra.mxu0 0.0
    %2856 = vmatprep.mubr.f32.mxu0 0.0
    %2857 = vmatmul.mubr.f32.gmra.mxu0 %v2790
    %v2858 = vpop.f32.mrf.mxu0
    %v2859 = vadd.f32 0.0, %v2858
    %v2860 = vpop.f32.mrf.mxu0
    %2861 = vdwg.mxu0
    %v2863 = vsel %vm1228, %v2335, 0
    %2865 = vmatprep.subr.mxu0 0.0
    %2866 = vmatpush1.msra.mxu0 0.0
    %2867 = vmatprep.subr.mxu0 0.0
    %2868 = vmatpush1.msra.mxu0 0.0
    %2869 = vmatprep.subr.mxu0 0.0
    %2870 = vmatpush1.msra.mxu0 0.0
    %2871 = vmatprep.subr.mxu0 0.0
    %2872 = vmatpush1.msra.mxu0 0.0
    %2873 = vmatprep.subr.mxu0 0.0
    %2874 = vmatpush1.msra.mxu0 0.0
    %2875 = vmatprep.subr.mxu0 0.0
    %2876 = vmatpush1.msra.mxu0 0.0
    %2877 = vmatprep.subr.mxu0 0.0
    %2878 = vmatpush1.msra.mxu0 0.0
    %2879 = vmatprep.subr.mxu0 0.0
    %2880 = vmatpush1.msra.mxu0 0.0
    %2881 = vmatprep.subr.mxu0 0.0
    %2882 = vmatpush1.msra.mxu0 0.0
    %2883 = vmatprep.subr.mxu0 0.0
    %2884 = vmatpush1.msra.mxu0 0.0
    %2885 = vmatprep.subr.mxu0 0.0
    %2886 = vmatpush1.msra.mxu0 0.0
    %2887 = vmatprep.subr.mxu0 0.0
    %2888 = vmatpush1.msra.mxu0 0.0
    %2889 = vmatprep.subr.mxu0 0.0
    %2890 = vmatpush1.msra.mxu0 0.0
    %2891 = vmatprep.subr.mxu0 0.0
    %2892 = vmatpush1.msra.mxu0 0.0
    %2893 = vmatprep.subr.mxu0 0.0
    %2894 = vmatpush1.msra.mxu0 0.0
    %2895 = vmatprep.subr.mxu0 0.0
    %2896 = vmatpush1.msra.mxu0 %v2568
    %2897 = vmatprep.subr.mxu0 0.0
    %2898 = vmatpush2.msra.mxu0 0.0
    %2899 = vmatprep.subr.mxu0 0.0
    %2900 = vmatpush2.msra.mxu0 0.0
    %2901 = vmatprep.subr.mxu0 0.0
    %2902 = vmatpush2.msra.mxu0 0.0
    %2903 = vmatprep.subr.mxu0 0.0
    %2904 = vmatpush2.msra.mxu0 0.0
    %2905 = vmatprep.subr.mxu0 0.0
    %2906 = vmatpush2.msra.mxu0 0.0
    %2907 = vmatprep.subr.mxu0 0.0
    %2908 = vmatpush2.msra.mxu0 0.0
    %2909 = vmatprep.subr.mxu0 0.0
    %2910 = vmatpush2.msra.mxu0 0.0
    %2911 = vmatprep.subr.mxu0 0.0
    %2912 = vmatpush2.msra.mxu0 0.0
    %2913 = vmatprep.subr.mxu0 0.0
    %2914 = vmatpush2.msra.mxu0 0.0
    %2915 = vmatprep.subr.mxu0 0.0
    %2916 = vmatpush2.msra.mxu0 0.0
    %2917 = vmatprep.subr.mxu0 0.0
    %2918 = vmatpush2.msra.mxu0 0.0
    %2919 = vmatprep.subr.mxu0 0.0
    %2920 = vmatpush2.msra.mxu0 0.0
    %2921 = vmatprep.subr.mxu0 0.0
    %2922 = vmatpush2.msra.mxu0 0.0
    %2923 = vmatprep.subr.mxu0 0.0
    %2924 = vmatpush2.msra.mxu0 0.0
    %2925 = vmatprep.subr.mxu0 0.0
    %2926 = vmatpush2.msra.mxu0 0.0
    %2927 = vmatprep.subr.mxu0 0.0
    %2928 = vmatpush2.msra.mxu0 0.0
    %2929 = vmatprep.mubr.f32.mxu0 0.0
    %2930 = vmatmul.mubr.f32.gmra.mxu0 %v2863
    %v2931 = vpop.f32.mrf.mxu0
    %v2932 = vadd.f32 0.0, %v2931
    %v2933 = vpop.f32.mrf.mxu0
    %2934 = vdwg.mxu0
    %v2936 = vsel %vm1228, %v2411, 0
    %2938 = vmatprep.subr.mxu0 0.0
    %2939 = vmatpush1.msra.mxu0 0.0
    %2940 = vmatprep.subr.mxu0 0.0
    %2941 = vmatpush1.msra.mxu0 0.0
    %2942 = vmatprep.subr.mxu0 0.0
    %2943 = vmatpush1.msra.mxu0 0.0
    %2944 = vmatprep.subr.mxu0 0.0
    %2945 = vmatpush1.msra.mxu0 0.0
    %2946 = vmatprep.subr.mxu0 0.0
    %2947 = vmatpush1.msra.mxu0 0.0
    %2948 = vmatprep.subr.mxu0 0.0
    %2949 = vmatpush1.msra.mxu0 0.0
    %2950 = vmatprep.subr.mxu0 0.0
    %2951 = vmatpush1.msra.mxu0 0.0
    %2952 = vmatprep.subr.mxu0 0.0
    %2953 = vmatpush1.msra.mxu0 0.0
    %2954 = vmatprep.subr.mxu0 0.0
    %2955 = vmatpush1.msra.mxu0 0.0
    %2956 = vmatprep.subr.mxu0 0.0
    %2957 = vmatpush1.msra.mxu0 0.0
    %2958 = vmatprep.subr.mxu0 0.0
    %2959 = vmatpush1.msra.mxu0 0.0
    %2960 = vmatprep.subr.mxu0 0.0
    %2961 = vmatpush1.msra.mxu0 0.0
    %2962 = vmatprep.subr.mxu0 0.0
    %2963 = vmatpush1.msra.mxu0 0.0
    %2964 = vmatprep.subr.mxu0 0.0
    %2965 = vmatpush1.msra.mxu0 0.0
    %2966 = vmatprep.subr.mxu0 0.0
    %2967 = vmatpush1.msra.mxu0 0.0
    %2968 = vmatprep.subr.mxu0 0.0
    %2969 = vmatpush1.msra.mxu0 %v2568
    %2970 = vmatprep.subr.mxu0 0.0
    %2971 = vmatpush2.msra.mxu0 0.0
    %2972 = vmatprep.subr.mxu0 0.0
    %2973 = vmatpush2.msra.mxu0 0.0
    %2974 = vmatprep.subr.mxu0 0.0
    %2975 = vmatpush2.msra.mxu0 0.0
    %2976 = vmatprep.subr.mxu0 0.0
    %2977 = vmatpush2.msra.mxu0 0.0
    %2978 = vmatprep.subr.mxu0 0.0
    %2979 = vmatpush2.msra.mxu0 0.0
    %2980 = vmatprep.subr.mxu0 0.0
    %2981 = vmatpush2.msra.mxu0 0.0
    %2982 = vmatprep.subr.mxu0 0.0
    %2983 = vmatpush2.msra.mxu0 0.0
    %2984 = vmatprep.subr.mxu0 0.0
    %2985 = vmatpush2.msra.mxu0 0.0
    %2986 = vmatprep.subr.mxu0 0.0
    %2987 = vmatpush2.msra.mxu0 0.0
    %2988 = vmatprep.subr.mxu0 0.0
    %2989 = vmatpush2.msra.mxu0 0.0
    %2990 = vmatprep.subr.mxu0 0.0
    %2991 = vmatpush2.msra.mxu0 0.0
    %2992 = vmatprep.subr.mxu0 0.0
    %2993 = vmatpush2.msra.mxu0 0.0
    %2994 = vmatprep.subr.mxu0 0.0
    %2995 = vmatpush2.msra.mxu0 0.0
    %2996 = vmatprep.subr.mxu0 0.0
    %2997 = vmatpush2.msra.mxu0 0.0
    %2998 = vmatprep.subr.mxu0 0.0
    %2999 = vmatpush2.msra.mxu0 0.0
    %3000 = vmatprep.subr.mxu0 0.0
    %3001 = vmatpush2.msra.mxu0 0.0
    %3002 = vmatprep.mubr.f32.mxu0 0.0
    %3003 = vmatmul.mubr.f32.gmra.mxu0 %v2936
    %v3004 = vpop.f32.mrf.mxu0
    %v3005 = vadd.f32 0.0, %v3004
    %v3006 = vpop.f32.mrf.mxu0
    %3007 = vdwg.mxu0
    %v3009 = vsel %vm1228, %v2487, 0
    %3011 = vmatprep.subr.mxu0 0.0
    %3012 = vmatpush1.msra.mxu0 0.0
    %3013 = vmatprep.subr.mxu0 0.0
    %3014 = vmatpush1.msra.mxu0 0.0
    %3015 = vmatprep.subr.mxu0 0.0
    %3016 = vmatpush1.msra.mxu0 0.0
    %3017 = vmatprep.subr.mxu0 0.0
    %3018 = vmatpush1.msra.mxu0 0.0
    %3019 = vmatprep.subr.mxu0 0.0
    %3020 = vmatpush1.msra.mxu0 0.0
    %3021 = vmatprep.subr.mxu0 0.0
    %3022 = vmatpush1.msra.mxu0 0.0
    %3023 = vmatprep.subr.mxu0 0.0
    %3024 = vmatpush1.msra.mxu0 0.0
    %3025 = vmatprep.subr.mxu0 0.0
    %3026 = vmatpush1.msra.mxu0 0.0
    %3027 = vmatprep.subr.mxu0 0.0
    %3028 = vmatpush1.msra.mxu0 0.0
    %3029 = vmatprep.subr.mxu0 0.0
    %3030 = vmatpush1.msra.mxu0 0.0
    %3031 = vmatprep.subr.mxu0 0.0
    %3032 = vmatpush1.msra.mxu0 0.0
    %3033 = vmatprep.subr.mxu0 0.0
    %3034 = vmatpush1.msra.mxu0 0.0
    %3035 = vmatprep.subr.mxu0 0.0
    %3036 = vmatpush1.msra.mxu0 0.0
    %3037 = vmatprep.subr.mxu0 0.0
    %3038 = vmatpush1.msra.mxu0 0.0
    %3039 = vmatprep.subr.mxu0 0.0
    %3040 = vmatpush1.msra.mxu0 0.0
    %3041 = vmatprep.subr.mxu0 0.0
    %3042 = vmatpush1.msra.mxu0 %v2569
    %3043 = vmatprep.subr.mxu0 0.0
    %3044 = vmatpush2.msra.mxu0 0.0
    %3045 = vmatprep.subr.mxu0 0.0
    %3046 = vmatpush2.msra.mxu0 0.0
    %3047 = vmatprep.subr.mxu0 0.0
    %3048 = vmatpush2.msra.mxu0 0.0
    %3049 = vmatprep.subr.mxu0 0.0
    %3050 = vmatpush2.msra.mxu0 0.0
    %3051 = vmatprep.subr.mxu0 0.0
    %3052 = vmatpush2.msra.mxu0 0.0
    %3053 = vmatprep.subr.mxu0 0.0
    %3054 = vmatpush2.msra.mxu0 0.0
    %3055 = vmatprep.subr.mxu0 0.0
    %3056 = vmatpush2.msra.mxu0 0.0
    %3057 = vmatprep.subr.mxu0 0.0
    %3058 = vmatpush2.msra.mxu0 0.0
    %3059 = vmatprep.subr.mxu0 0.0
    %3060 = vmatpush2.msra.mxu0 0.0
    %3061 = vmatprep.subr.mxu0 0.0
    %3062 = vmatpush2.msra.mxu0 0.0
    %3063 = vmatprep.subr.mxu0 0.0
    %3064 = vmatpush2.msra.mxu0 0.0
    %3065 = vmatprep.subr.mxu0 0.0
    %3066 = vmatpush2.msra.mxu0 0.0
    %3067 = vmatprep.subr.mxu0 0.0
    %3068 = vmatpush2.msra.mxu0 0.0
    %3069 = vmatprep.subr.mxu0 0.0
    %3070 = vmatpush2.msra.mxu0 0.0
    %3071 = vmatprep.subr.mxu0 0.0
    %3072 = vmatpush2.msra.mxu0 0.0
    %3073 = vmatprep.subr.mxu0 0.0
    %3074 = vmatpush2.msra.mxu0 0.0
    %3075 = vmatprep.mubr.f32.mxu0 0.0
    %3076 = vmatmul.mubr.f32.gmra.mxu0 %v3009
    %v3077 = vpop.f32.mrf.mxu0
    %v3078 = vadd.f32 0.0, %v3077
    %v3079 = vpop.f32.mrf.mxu0
    %3080 = vdwg.mxu0
    %v3082 = vsel %vm1228, %v2563, 0
    %3084 = vmatprep.subr.mxu0 0.0
    %3085 = vmatpush1.msra.mxu0 0.0
    %3086 = vmatprep.subr.mxu0 0.0
    %3087 = vmatpush1.msra.mxu0 0.0
    %3088 = vmatprep.subr.mxu0 0.0
    %3089 = vmatpush1.msra.mxu0 0.0
    %3090 = vmatprep.subr.mxu0 0.0
    %3091 = vmatpush1.msra.mxu0 0.0
    %3092 = vmatprep.subr.mxu0 0.0
    %3093 = vmatpush1.msra.mxu0 0.0
    %3094 = vmatprep.subr.mxu0 0.0
    %3095 = vmatpush1.msra.mxu0 0.0
    %3096 = vmatprep.subr.mxu0 0.0
    %3097 = vmatpush1.msra.mxu0 0.0
    %3098 = vmatprep.subr.mxu0 0.0
    %3099 = vmatpush1.msra.mxu0 0.0
    %3100 = vmatprep.subr.mxu0 0.0
    %3101 = vmatpush1.msra.mxu0 0.0
    %3102 = vmatprep.subr.mxu0 0.0
    %3103 = vmatpush1.msra.mxu0 0.0
    %3104 = vmatprep.subr.mxu0 0.0
    %3105 = vmatpush1.msra.mxu0 0.0
    %3106 = vmatprep.subr.mxu0 0.0
    %3107 = vmatpush1.msra.mxu0 0.0
    %3108 = vmatprep.subr.mxu0 0.0
    %3109 = vmatpush1.msra.mxu0 0.0
    %3110 = vmatprep.subr.mxu0 0.0
    %3111 = vmatpush1.msra.mxu0 0.0
    %3112 = vmatprep.subr.mxu0 0.0
    %3113 = vmatpush1.msra.mxu0 0.0
    %3114 = vmatprep.subr.mxu0 0.0
    %3115 = vmatpush1.msra.mxu0 %v2569
    %3116 = vmatprep.subr.mxu0 0.0
    %3117 = vmatpush2.msra.mxu0 0.0
    %3118 = vmatprep.subr.mxu0 0.0
    %3119 = vmatpush2.msra.mxu0 0.0
    %3120 = vmatprep.subr.mxu0 0.0
    %3121 = vmatpush2.msra.mxu0 0.0
    %3122 = vmatprep.subr.mxu0 0.0
    %3123 = vmatpush2.msra.mxu0 0.0
    %3124 = vmatprep.subr.mxu0 0.0
    %3125 = vmatpush2.msra.mxu0 0.0
    %3126 = vmatprep.subr.mxu0 0.0
    %3127 = vmatpush2.msra.mxu0 0.0
    %3128 = vmatprep.subr.mxu0 0.0
    %3129 = vmatpush2.msra.mxu0 0.0
    %3130 = vmatprep.subr.mxu0 0.0
    %3131 = vmatpush2.msra.mxu0 0.0
    %3132 = vmatprep.subr.mxu0 0.0
    %3133 = vmatpush2.msra.mxu0 0.0
    %3134 = vmatprep.subr.mxu0 0.0
    %3135 = vmatpush2.msra.mxu0 0.0
    %3136 = vmatprep.subr.mxu0 0.0
    %3137 = vmatpush2.msra.mxu0 0.0
    %3138 = vmatprep.subr.mxu0 0.0
    %3139 = vmatpush2.msra.mxu0 0.0
    %3140 = vmatprep.subr.mxu0 0.0
    %3141 = vmatpush2.msra.mxu0 0.0
    %3142 = vmatprep.subr.mxu0 0.0
    %3143 = vmatpush2.msra.mxu0 0.0
    %3144 = vmatprep.subr.mxu0 0.0
    %3145 = vmatpush2.msra.mxu0 0.0
    %3146 = vmatprep.subr.mxu0 0.0
    %3147 = vmatpush2.msra.mxu0 0.0
    %3148 = vmatprep.mubr.f32.mxu0 0.0
    %3149 = vmatmul.mubr.f32.gmra.mxu0 %v3082
    %v3150 = vpop.f32.mrf.mxu0
    %v3151 = vadd.f32 0.0, %v3150
    %v3152 = vpop.f32.mrf.mxu0
    %3153 = vdwg.mxu0
    %v3154 = vsel %vm658, %v2640, 0.0
    %v3155 = vsel %vm658, %v2786, 0.0
    %v3156 = vadd.f32 %v3154, %v3155
    %v3157 = vsel %vm658, %v2932, 0.0
    %v3158 = vadd.f32 %v3156, %v3157
    %v3159 = vsel %vm658, %v3078, 0.0
    %v3160 = vadd.f32 %v3158, %v3159
    %v3161 = vsel %vm658, %v2713, 0.0
    %v3162 = vsel %vm658, %v2859, 0.0
    %v3163 = vadd.f32 %v3161, %v3162
    %v3164 = vsel %vm658, %v3005, 0.0
    %v3165 = vadd.f32 %v3163, %v3164
    %v3166 = vsel %vm658, %v3151, 0.0
    %v3167 = vadd.f32 %v3165, %v3166
    %v3168 = vlaneseq
    %v3169 = vshrl.u32 %v3168, 7
    %v3170 = vsub.s32 0, %v3169
    %v3171 = vrot.slane %v621, %v3170
    %v3172 = vadd.f32 %v3160, %v3171
    %v3173 = vadd.f32 %v3167, %v3171
    %v3174 = vadd.f32 %v609, %v3172
    %v3175 = vadd.f32 %v614, %v3173
    %v3176 = vsel %vm658, %v3174, 0.0
    %3177 = vadd.xlane.f32.xlu0 %v3176
    %v3178 = vpop.xlane.xlu0 %3177
    %v3179 = vsel %vm658, %v3175, 0.0
    %3180 = vadd.xlane.f32.xlu0 %v3179
    %v3181 = vpop.xlane.xlu0 %3180
    %v3182 = vrcp.pop 32.0
    %v3183 = vmul.f32 %v3178, %v3182
    %v3184 = vmul.f32 %v3181, %v3182
    %v3185 = vsub.f32 %v3174, %v3183
    %v3186 = vsub.f32 %v3175, %v3184
    %v3187 = vmul.f32 %v3185, %v3185
    %v3188 = vmul.f32 %v3186, %v3186
    %v3189 = vsel %vm658, %v3187, 0.0
    %3190 = vadd.xlane.f32.xlu0 %v3189
    %v3191 = vpop.xlane.xlu0 %3190
    %v3192 = vsel %vm658, %v3188, 0.0
    %3193 = vadd.xlane.f32.xlu0 %v3192
    %v3194 = vpop.xlane.xlu0 %3193
    %v3195 = vmul.f32 %v3191, %v3182
    %v3196 = vmul.f32 %v3194, %v3182
    %v3197 = vadd.f32 %v3195, 1e-05
    %v3198 = vadd.f32 %v3196, 1e-05
    %v3199 = vrsqrt.pop %v3197
    %v3200 = vrsqrt.pop %v3198
    %v3201 = vmul.f32 %v3185, %v3199
    %v3202 = vmul.f32 %v3186, %v3200
    %v3203 = vlaneseq
    %v3204 = vshrl.u32 %v3203, 7
    %v3205 = vsub.s32 2, %v3204
    %v3206 = vrot.slane %v621, %v3205
    %v3207 = vmul.f32 %v3201, %v3206
    %v3208 = vmul.f32 %v3202, %v3206
    %v3209 = vlaneseq
    %v3210 = vshrl.u32 %v3209, 7
    %v3211 = vsub.s32 3, %v3210
    %v3212 = vrot.slane %v621, %v3211
    %v3213 = vadd.f32 %v3207, %v3212
    %v3214 = vadd.f32 %v3208, %v3212
    %v3215 = vld [vmem:[%s8] sm:$0xff]
    %v3216 = vld [vmem:[%s8 + $0x8] sm:$0xff]
    %v3217 = vld [vmem:[%s8 + $0x10] sm:$0xff]
    %v3218 = vld [vmem:[%s8 + $0x18] sm:$0xff]
    %v3219 = vld [vmem:[%s8 + $0x20] sm:$0x1]
    %v3220 = vlaneseq
    %v3221 = vshrl.u32 %v3220, 7
    %v3222 = vsub.s32 0, %v3221
    %v3223 = vrot.slane %v3219, %v3222
    %v3225 = vsel %vm658, %v3213, 0
    %v3228 = vsel %vm658, %v3214, 0
    %3230 = vmatprep.subr.mxu0 0.0
    %3231 = vmatpush1.msra.mxu0 0.0
    %3232 = vmatprep.subr.mxu0 0.0
    %3233 = vmatpush1.msra.mxu0 0.0
    %3234 = vmatprep.subr.mxu0 0.0
    %3235 = vmatpush1.msra.mxu0 0.0
    %3236 = vmatprep.subr.mxu0 0.0
    %3237 = vmatpush1.msra.mxu0 0.0
    %3238 = vmatprep.subr.mxu0 0.0
    %3239 = vmatpush1.msra.mxu0 0.0
    %3240 = vmatprep.subr.mxu0 0.0
    %3241 = vmatpush1.msra.mxu0 0.0
    %3242 = vmatprep.subr.mxu0 0.0
    %3243 = vmatpush1.msra.mxu0 0.0
    %3244 = vmatprep.subr.mxu0 0.0
    %3245 = vmatpush1.msra.mxu0 0.0
    %3246 = vmatprep.subr.mxu0 0.0
    %3247 = vmatpush1.msra.mxu0 0.0
    %3248 = vmatprep.subr.mxu0 0.0
    %3249 = vmatpush1.msra.mxu0 0.0
    %3250 = vmatprep.subr.mxu0 0.0
    %3251 = vmatpush1.msra.mxu0 0.0
    %3252 = vmatprep.subr.mxu0 0.0
    %3253 = vmatpush1.msra.mxu0 0.0
    %3254 = vmatprep.subr.mxu0 0.0
    %3255 = vmatpush1.msra.mxu0 %v3218
    %3256 = vmatprep.subr.mxu0 0.0
    %3257 = vmatpush1.msra.mxu0 %v3217
    %3258 = vmatprep.subr.mxu0 0.0
    %3259 = vmatpush1.msra.mxu0 %v3216
    %3260 = vmatprep.subr.mxu0 0.0
    %3261 = vmatpush1.msra.mxu0 %v3215
    %3262 = vmatprep.subr.mxu0 0.0
    %3263 = vmatpush2.msra.mxu0 0.0
    %3264 = vmatprep.subr.mxu0 0.0
    %3265 = vmatpush2.msra.mxu0 0.0
    %3266 = vmatprep.subr.mxu0 0.0
    %3267 = vmatpush2.msra.mxu0 0.0
    %3268 = vmatprep.subr.mxu0 0.0
    %3269 = vmatpush2.msra.mxu0 0.0
    %3270 = vmatprep.subr.mxu0 0.0
    %3271 = vmatpush2.msra.mxu0 0.0
    %3272 = vmatprep.subr.mxu0 0.0
    %3273 = vmatpush2.msra.mxu0 0.0
    %3274 = vmatprep.subr.mxu0 0.0
    %3275 = vmatpush2.msra.mxu0 0.0
    %3276 = vmatprep.subr.mxu0 0.0
    %3277 = vmatpush2.msra.mxu0 0.0
    %3278 = vmatprep.subr.mxu0 0.0
    %3279 = vmatpush2.msra.mxu0 0.0
    %3280 = vmatprep.subr.mxu0 0.0
    %3281 = vmatpush2.msra.mxu0 0.0
    %3282 = vmatprep.subr.mxu0 0.0
    %3283 = vmatpush2.msra.mxu0 0.0
    %3284 = vmatprep.subr.mxu0 0.0
    %3285 = vmatpush2.msra.mxu0 0.0
    %3286 = vmatprep.subr.mxu0 0.0
    %3287 = vmatpush2.msra.mxu0 0.0
    %3288 = vmatprep.subr.mxu0 0.0
    %3289 = vmatpush2.msra.mxu0 0.0
    %3290 = vmatprep.subr.mxu0 0.0
    %3291 = vmatpush2.msra.mxu0 0.0
    %3292 = vmatprep.subr.mxu0 0.0
    %3293 = vmatpush2.msra.mxu0 0.0
    %3294 = vmatprep.mubr.f32.mxu0 0.0
    %3295 = vmatmul.mubr.f32.gmra.mxu0 %v3225
    %v3296 = vpop.f32.mrf.mxu0
    %v3297 = vadd.f32 %v3223, %v3296
    %v3298 = vpop.f32.mrf.mxu0
    %3299 = vmatprep.mubr.f32.mxu0 0.0
    %3300 = vmatmul.mubr.f32.gmra.mxu0 %v3228
    %v3301 = vpop.f32.mrf.mxu0
    %v3302 = vadd.f32 %v3223, %v3301
    %v3303 = vpop.f32.mrf.mxu0
    %3304 = vdwg.mxu0
    %v3305 = vmax.f32 %v3297, 0.0
    %v3306 = vmax.f32 %v3302, 0.0
    %v3307 = vld [vmem:[%s9] sm:$0xff]
    %v3308 = vld [vmem:[%s9 + $0x8] sm:$0xff]
    %v3309 = vld [vmem:[%s9 + $0x10] sm:$0xff]
    %v3310 = vld [vmem:[%s9 + $0x18] sm:$0xff]
    %v3311 = vld [vmem:[%s9 + $0x20] sm:$0xff]
    %v3312 = vld [vmem:[%s9 + $0x28] sm:$0xff]
    %v3313 = vld [vmem:[%s9 + $0x30] sm:$0xff]
    %v3314 = vld [vmem:[%s9 + $0x38] sm:$0xff]
    %v3315 = vld [vmem:[%s9 + $0x40] sm:$0xff]
    %v3316 = vld [vmem:[%s9 + $0x48] sm:$0xff]
    %v3317 = vld [vmem:[%s9 + $0x50] sm:$0xff]
    %v3318 = vld [vmem:[%s9 + $0x58] sm:$0xff]
    %v3319 = vld [vmem:[%s9 + $0x60] sm:$0xff]
    %v3320 = vld [vmem:[%s9 + $0x68] sm:$0xff]
    %v3321 = vld [vmem:[%s9 + $0x70] sm:$0xff]
    %v3322 = vld [vmem:[%s9 + $0x78] sm:$0xff]
    %v3323 = vlaneseq
    %v3324 = vshrl.u32 %v3323, 7
    %v3325 = vsub.s32 1, %v3324
    %v3326 = vrot.slane %v621, %v3325
    %3327 = vmatprep.subr.mxu0 0.0
    %3328 = vmatpush1.msra.mxu0 %v3322
    %3329 = vmatprep.subr.mxu0 0.0
    %3330 = vmatpush1.msra.mxu0 %v3321
    %3331 = vmatprep.subr.mxu0 0.0
    %3332 = vmatpush1.msra.mxu0 %v3320
    %3333 = vmatprep.subr.mxu0 0.0
    %3334 = vmatpush1.msra.mxu0 %v3319
    %3335 = vmatprep.subr.mxu0 0.0
    %3336 = vmatpush1.msra.mxu0 %v3318
    %3337 = vmatprep.subr.mxu0 0.0
    %3338 = vmatpush1.msra.mxu0 %v3317
    %3339 = vmatprep.subr.mxu0 0.0
    %3340 = vmatpush1.msra.mxu0 %v3316
    %3341 = vmatprep.subr.mxu0 0.0
    %3342 = vmatpush1.msra.mxu0 %v3315
    %3343 = vmatprep.subr.mxu0 0.0
    %3344 = vmatpush1.msra.mxu0 %v3314
    %3345 = vmatprep.subr.mxu0 0.0
    %3346 = vmatpush1.msra.mxu0 %v3313
    %3347 = vmatprep.subr.mxu0 0.0
    %3348 = vmatpush1.msra.mxu0 %v3312
    %3349 = vmatprep.subr.mxu0 0.0
    %3350 = vmatpush1.msra.mxu0 %v3311
    %3351 = vmatprep.subr.mxu0 0.0
    %3352 = vmatpush1.msra.mxu0 %v3310
    %3353 = vmatprep.subr.mxu0 0.0
    %3354 = vmatpush1.msra.mxu0 %v3309
    %3355 = vmatprep.subr.mxu0 0.0
    %3356 = vmatpush1.msra.mxu0 %v3308
    %3357 = vmatprep.subr.mxu0 0.0
    %3358 = vmatpush1.msra.mxu0 %v3307
    %3359 = vmatprep.subr.mxu0 0.0
    %3360 = vmatpush2.msra.mxu0 0.0
    %3361 = vmatprep.subr.mxu0 0.0
    %3362 = vmatpush2.msra.mxu0 0.0
    %3363 = vmatprep.subr.mxu0 0.0
    %3364 = vmatpush2.msra.mxu0 0.0
    %3365 = vmatprep.subr.mxu0 0.0
    %3366 = vmatpush2.msra.mxu0 0.0
    %3367 = vmatprep.subr.mxu0 0.0
    %3368 = vmatpush2.msra.mxu0 0.0
    %3369 = vmatprep.subr.mxu0 0.0
    %3370 = vmatpush2.msra.mxu0 0.0
    %3371 = vmatprep.subr.mxu0 0.0
    %3372 = vmatpush2.msra.mxu0 0.0
    %3373 = vmatprep.subr.mxu0 0.0
    %3374 = vmatpush2.msra.mxu0 0.0
    %3375 = vmatprep.subr.mxu0 0.0
    %3376 = vmatpush2.msra.mxu0 0.0
    %3377 = vmatprep.subr.mxu0 0.0
    %3378 = vmatpush2.msra.mxu0 0.0
    %3379 = vmatprep.subr.mxu0 0.0
    %3380 = vmatpush2.msra.mxu0 0.0
    %3381 = vmatprep.subr.mxu0 0.0
    %3382 = vmatpush2.msra.mxu0 0.0
    %3383 = vmatprep.subr.mxu0 0.0
    %3384 = vmatpush2.msra.mxu0 0.0
    %3385 = vmatprep.subr.mxu0 0.0
    %3386 = vmatpush2.msra.mxu0 0.0
    %3387 = vmatprep.subr.mxu0 0.0
    %3388 = vmatpush2.msra.mxu0 0.0
    %3389 = vmatprep.subr.mxu0 0.0
    %3390 = vmatpush2.msra.mxu0 0.0
    %3391 = vmatprep.mubr.f32.mxu0 0.0
    %3392 = vmatmul.mubr.f32.gmra.mxu0 %v3305
    %v3393 = vpop.f32.mrf.mxu0
    %v3394 = vadd.f32 %v3326, %v3393
    %v3395 = vpop.f32.mrf.mxu0
    %3396 = vmatprep.mubr.f32.mxu0 0.0
    %3397 = vmatmul.mubr.f32.gmra.mxu0 %v3306
    %v3398 = vpop.f32.mrf.mxu0
    %v3399 = vadd.f32 %v3326, %v3398
    %v3400 = vpop.f32.mrf.mxu0
    %3401 = vdwg.mxu0
    %v3402 = vadd.f32 %v3213, %v3394
    %v3403 = vadd.f32 %v3214, %v3399
    %v3404 = vsel %vm658, %v3402, 0.0
    %3405 = vadd.xlane.f32.xlu0 %v3404
    %v3406 = vpop.xlane.xlu0 %3405
    %v3407 = vsel %vm658, %v3403, 0.0
    %3408 = vadd.xlane.f32.xlu0 %v3407
    %v3409 = vpop.xlane.xlu0 %3408
    %v3410 = vmul.f32 %v3406, %v3182
    %v3411 = vmul.f32 %v3409, %v3182
    %v3412 = vsub.f32 %v3402, %v3410
    %v3413 = vsub.f32 %v3403, %v3411
    %v3414 = vmul.f32 %v3412, %v3412
    %v3415 = vmul.f32 %v3413, %v3413
    %v3416 = vsel %vm658, %v3414, 0.0
    %3417 = vadd.xlane.f32.xlu0 %v3416
    %v3418 = vpop.xlane.xlu0 %3417
    %v3419 = vsel %vm658, %v3415, 0.0
    %3420 = vadd.xlane.f32.xlu0 %v3419
    %v3421 = vpop.xlane.xlu0 %3420
    %v3422 = vmul.f32 %v3418, %v3182
    %v3423 = vmul.f32 %v3421, %v3182
    %v3424 = vadd.f32 %v3422, 1e-05
    %v3425 = vadd.f32 %v3423, 1e-05
    %v3426 = vrsqrt.pop %v3424
    %v3427 = vrsqrt.pop %v3425
    %v3428 = vmul.f32 %v3412, %v3426
    %v3429 = vmul.f32 %v3413, %v3427
    %v3430 = vlaneseq
    %v3431 = vshrl.u32 %v3430, 7
    %v3432 = vsub.s32 4, %v3431
    %v3433 = vrot.slane %v621, %v3432
    %v3434 = vmul.f32 %v3428, %v3433
    %v3435 = vmul.f32 %v3429, %v3433
    %v3436 = vlaneseq
    %v3437 = vshrl.u32 %v3436, 7
    %v3438 = vsub.s32 5, %v3437
    %v3439 = vrot.slane %v621, %v3438
    %v3440 = vadd.f32 %v3434, %v3439
    %v3441 = vadd.f32 %v3435, %v3439
    %s3442 = scalar_lea.vmem %s7, 8
    %v3443 = vld [vmem:[%s3442] sm:$0x3f]
    %s3444 = scalar_lea.vmem %s5, 160
    %v3445 = vld [vmem:[%s3444] sm:$0xff]
    %v3446 = vld [vmem:[%s3444 + $0x8] sm:$0xff]
    %v3447 = vld [vmem:[%s3444 + $0x10] sm:$0xff]
    %v3448 = vld [vmem:[%s3444 + $0x18] sm:$0xff]
    %v3449 = vld [vmem:[%s3444 + $0x20] sm:$0x1]
    %v3450 = vld [vmem:[%s3444 + $0x28] sm:$0xff]
    %v3451 = vld [vmem:[%s3444 + $0x30] sm:$0xff]
    %v3452 = vld [vmem:[%s3444 + $0x38] sm:$0xff]
    %v3453 = vld [vmem:[%s3444 + $0x40] sm:$0xff]
    %v3454 = vld [vmem:[%s3444 + $0x48] sm:$0x1]
    %v3455 = vld [vmem:[%s3444 + $0x50] sm:$0xff]
    %v3456 = vld [vmem:[%s3444 + $0x58] sm:$0xff]
    %v3457 = vld [vmem:[%s3444 + $0x60] sm:$0xff]
    %v3458 = vld [vmem:[%s3444 + $0x68] sm:$0xff]
    %v3459 = vld [vmem:[%s3444 + $0x70] sm:$0x1]
    %v3460 = vld [vmem:[%s3444 + $0x78] sm:$0xff]
    %v3461 = vld [vmem:[%s3444 + $0x80] sm:$0xff]
    %v3462 = vld [vmem:[%s3444 + $0x88] sm:$0xff]
    %v3463 = vld [vmem:[%s3444 + $0x90] sm:$0xff]
    %v3464 = vld [vmem:[%s3444 + $0x98] sm:$0x1]
    %v3465 = vlaneseq
    %v3466 = vshrl.u32 %v3465, 7
    %v3467 = vsub.s32 0, %v3466
    %v3468 = vrot.slane %v3449, %v3467
    %v3469 = vlaneseq
    %v3470 = vshrl.u32 %v3469, 7
    %v3471 = vsub.s32 0, %v3470
    %v3472 = vrot.slane %v3454, %v3471
    %v3473 = vlaneseq
    %v3474 = vshrl.u32 %v3473, 7
    %v3475 = vsub.s32 0, %v3474
    %v3476 = vrot.slane %v3459, %v3475
    %v3477 = vlaneseq
    %v3478 = vshrl.u32 %v3477, 7
    %v3479 = vsub.s32 0, %v3478
    %v3480 = vrot.slane %v3464, %v3479
    %v3482 = vsel %vm658, %v3440, 0
    %3484 = vmatprep.subr.mxu0 0.0
    %3485 = vmatpush1.msra.mxu0 0.0
    %3486 = vmatprep.subr.mxu0 0.0
    %3487 = vmatpush1.msra.mxu0 0.0
    %3488 = vmatprep.subr.mxu0 0.0
    %3489 = vmatpush1.msra.mxu0 0.0
    %3490 = vmatprep.subr.mxu0 0.0
    %3491 = vmatpush1.msra.mxu0 0.0
    %3492 = vmatprep.subr.mxu0 0.0
    %3493 = vmatpush1.msra.mxu0 0.0
    %3494 = vmatprep.subr.mxu0 0.0
    %3495 = vmatpush1.msra.mxu0 0.0
    %3496 = vmatprep.subr.mxu0 0.0
    %3497 = vmatpush1.msra.mxu0 0.0
    %3498 = vmatprep.subr.mxu0 0.0
    %3499 = vmatpush1.msra.mxu0 0.0
    %3500 = vmatprep.subr.mxu0 0.0
    %3501 = vmatpush1.msra.mxu0 0.0
    %3502 = vmatprep.subr.mxu0 0.0
    %3503 = vmatpush1.msra.mxu0 0.0
    %3504 = vmatprep.subr.mxu0 0.0
    %3505 = vmatpush1.msra.mxu0 0.0
    %3506 = vmatprep.subr.mxu0 0.0
    %3507 = vmatpush1.msra.mxu0 0.0
    %3508 = vmatprep.subr.mxu0 0.0
    %3509 = vmatpush1.msra.mxu0 %v3448
    %3510 = vmatprep.subr.mxu0 0.0
    %3511 = vmatpush1.msra.mxu0 %v3447
    %3512 = vmatprep.subr.mxu0 0.0
    %3513 = vmatpush1.msra.mxu0 %v3446
    %3514 = vmatprep.subr.mxu0 0.0
    %3515 = vmatpush1.msra.mxu0 %v3445
    %3516 = vmatprep.subr.mxu0 0.0
    %3517 = vmatpush2.msra.mxu0 0.0
    %3518 = vmatprep.subr.mxu0 0.0
    %3519 = vmatpush2.msra.mxu0 0.0
    %3520 = vmatprep.subr.mxu0 0.0
    %3521 = vmatpush2.msra.mxu0 0.0
    %3522 = vmatprep.subr.mxu0 0.0
    %3523 = vmatpush2.msra.mxu0 0.0
    %3524 = vmatprep.subr.mxu0 0.0
    %3525 = vmatpush2.msra.mxu0 0.0
    %3526 = vmatprep.subr.mxu0 0.0
    %3527 = vmatpush2.msra.mxu0 0.0
    %3528 = vmatprep.subr.mxu0 0.0
    %3529 = vmatpush2.msra.mxu0 0.0
    %3530 = vmatprep.subr.mxu0 0.0
    %3531 = vmatpush2.msra.mxu0 0.0
    %3532 = vmatprep.subr.mxu0 0.0
    %3533 = vmatpush2.msra.mxu0 0.0
    %3534 = vmatprep.subr.mxu0 0.0
    %3535 = vmatpush2.msra.mxu0 0.0
    %3536 = vmatprep.subr.mxu0 0.0
    %3537 = vmatpush2.msra.mxu0 0.0
    %3538 = vmatprep.subr.mxu0 0.0
    %3539 = vmatpush2.msra.mxu0 0.0
    %3540 = vmatprep.subr.mxu0 0.0
    %3541 = vmatpush2.msra.mxu0 0.0
    %3542 = vmatprep.subr.mxu0 0.0
    %3543 = vmatpush2.msra.mxu0 0.0
    %3544 = vmatprep.subr.mxu0 0.0
    %3545 = vmatpush2.msra.mxu0 0.0
    %3546 = vmatprep.subr.mxu0 0.0
    %3547 = vmatpush2.msra.mxu0 0.0
    %3548 = vmatprep.mubr.f32.mxu0 0.0
    %3549 = vmatmul.mubr.f32.gmra.mxu0 %v3482
    %v3550 = vpop.f32.mrf.mxu0
    %v3551 = vadd.f32 %v3468, %v3550
    %v3552 = vpop.f32.mrf.mxu0
    %3553 = vdwg.mxu0
    %v3555 = vsel %vm658, %v3441, 0
    %3557 = vmatprep.subr.mxu0 0.0
    %3558 = vmatpush1.msra.mxu0 0.0
    %3559 = vmatprep.subr.mxu0 0.0
    %3560 = vmatpush1.msra.mxu0 0.0
    %3561 = vmatprep.subr.mxu0 0.0
    %3562 = vmatpush1.msra.mxu0 0.0
    %3563 = vmatprep.subr.mxu0 0.0
    %3564 = vmatpush1.msra.mxu0 0.0
    %3565 = vmatprep.subr.mxu0 0.0
    %3566 = vmatpush1.msra.mxu0 0.0
    %3567 = vmatprep.subr.mxu0 0.0
    %3568 = vmatpush1.msra.mxu0 0.0
    %3569 = vmatprep.subr.mxu0 0.0
    %3570 = vmatpush1.msra.mxu0 0.0
    %3571 = vmatprep.subr.mxu0 0.0
    %3572 = vmatpush1.msra.mxu0 0.0
    %3573 = vmatprep.subr.mxu0 0.0
    %3574 = vmatpush1.msra.mxu0 0.0
    %3575 = vmatprep.subr.mxu0 0.0
    %3576 = vmatpush1.msra.mxu0 0.0
    %3577 = vmatprep.subr.mxu0 0.0
    %3578 = vmatpush1.msra.mxu0 0.0
    %3579 = vmatprep.subr.mxu0 0.0
    %3580 = vmatpush1.msra.mxu0 0.0
    %3581 = vmatprep.subr.mxu0 0.0
    %3582 = vmatpush1.msra.mxu0 %v3448
    %3583 = vmatprep.subr.mxu0 0.0
    %3584 = vmatpush1.msra.mxu0 %v3447
    %3585 = vmatprep.subr.mxu0 0.0
    %3586 = vmatpush1.msra.mxu0 %v3446
    %3587 = vmatprep.subr.mxu0 0.0
    %3588 = vmatpush1.msra.mxu0 %v3445
    %3589 = vmatprep.subr.mxu0 0.0
    %3590 = vmatpush2.msra.mxu0 0.0
    %3591 = vmatprep.subr.mxu0 0.0
    %3592 = vmatpush2.msra.mxu0 0.0
    %3593 = vmatprep.subr.mxu0 0.0
    %3594 = vmatpush2.msra.mxu0 0.0
    %3595 = vmatprep.subr.mxu0 0.0
    %3596 = vmatpush2.msra.mxu0 0.0
    %3597 = vmatprep.subr.mxu0 0.0
    %3598 = vmatpush2.msra.mxu0 0.0
    %3599 = vmatprep.subr.mxu0 0.0
    %3600 = vmatpush2.msra.mxu0 0.0
    %3601 = vmatprep.subr.mxu0 0.0
    %3602 = vmatpush2.msra.mxu0 0.0
    %3603 = vmatprep.subr.mxu0 0.0
    %3604 = vmatpush2.msra.mxu0 0.0
    %3605 = vmatprep.subr.mxu0 0.0
    %3606 = vmatpush2.msra.mxu0 0.0
    %3607 = vmatprep.subr.mxu0 0.0
    %3608 = vmatpush2.msra.mxu0 0.0
    %3609 = vmatprep.subr.mxu0 0.0
    %3610 = vmatpush2.msra.mxu0 0.0
    %3611 = vmatprep.subr.mxu0 0.0
    %3612 = vmatpush2.msra.mxu0 0.0
    %3613 = vmatprep.subr.mxu0 0.0
    %3614 = vmatpush2.msra.mxu0 0.0
    %3615 = vmatprep.subr.mxu0 0.0
    %3616 = vmatpush2.msra.mxu0 0.0
    %3617 = vmatprep.subr.mxu0 0.0
    %3618 = vmatpush2.msra.mxu0 0.0
    %3619 = vmatprep.subr.mxu0 0.0
    %3620 = vmatpush2.msra.mxu0 0.0
    %3621 = vmatprep.mubr.f32.mxu0 0.0
    %3622 = vmatmul.mubr.f32.gmra.mxu0 %v3555
    %v3623 = vpop.f32.mrf.mxu0
    %v3624 = vadd.f32 %v3468, %v3623
    %v3625 = vpop.f32.mrf.mxu0
    %3626 = vdwg.mxu0
    %3627 = vmatprep.subr.mxu0 0.0
    %3628 = vmatpush1.msra.mxu0 0.0
    %3629 = vmatprep.subr.mxu0 0.0
    %3630 = vmatpush1.msra.mxu0 0.0
    %3631 = vmatprep.subr.mxu0 0.0
    %3632 = vmatpush1.msra.mxu0 0.0
    %3633 = vmatprep.subr.mxu0 0.0
    %3634 = vmatpush1.msra.mxu0 0.0
    %3635 = vmatprep.subr.mxu0 0.0
    %3636 = vmatpush1.msra.mxu0 0.0
    %3637 = vmatprep.subr.mxu0 0.0
    %3638 = vmatpush1.msra.mxu0 0.0
    %3639 = vmatprep.subr.mxu0 0.0
    %3640 = vmatpush1.msra.mxu0 0.0
    %3641 = vmatprep.subr.mxu0 0.0
    %3642 = vmatpush1.msra.mxu0 0.0
    %3643 = vmatprep.subr.mxu0 0.0
    %3644 = vmatpush1.msra.mxu0 0.0
    %3645 = vmatprep.subr.mxu0 0.0
    %3646 = vmatpush1.msra.mxu0 0.0
    %3647 = vmatprep.subr.mxu0 0.0
    %3648 = vmatpush1.msra.mxu0 0.0
    %3649 = vmatprep.subr.mxu0 0.0
    %3650 = vmatpush1.msra.mxu0 0.0
    %3651 = vmatprep.subr.mxu0 0.0
    %3652 = vmatpush1.msra.mxu0 %v3453
    %3653 = vmatprep.subr.mxu0 0.0
    %3654 = vmatpush1.msra.mxu0 %v3452
    %3655 = vmatprep.subr.mxu0 0.0
    %3656 = vmatpush1.msra.mxu0 %v3451
    %3657 = vmatprep.subr.mxu0 0.0
    %3658 = vmatpush1.msra.mxu0 %v3450
    %3659 = vmatprep.subr.mxu0 0.0
    %3660 = vmatpush2.msra.mxu0 0.0
    %3661 = vmatprep.subr.mxu0 0.0
    %3662 = vmatpush2.msra.mxu0 0.0
    %3663 = vmatprep.subr.mxu0 0.0
    %3664 = vmatpush2.msra.mxu0 0.0
    %3665 = vmatprep.subr.mxu0 0.0
    %3666 = vmatpush2.msra.mxu0 0.0
    %3667 = vmatprep.subr.mxu0 0.0
    %3668 = vmatpush2.msra.mxu0 0.0
    %3669 = vmatprep.subr.mxu0 0.0
    %3670 = vmatpush2.msra.mxu0 0.0
    %3671 = vmatprep.subr.mxu0 0.0
    %3672 = vmatpush2.msra.mxu0 0.0
    %3673 = vmatprep.subr.mxu0 0.0
    %3674 = vmatpush2.msra.mxu0 0.0
    %3675 = vmatprep.subr.mxu0 0.0
    %3676 = vmatpush2.msra.mxu0 0.0
    %3677 = vmatprep.subr.mxu0 0.0
    %3678 = vmatpush2.msra.mxu0 0.0
    %3679 = vmatprep.subr.mxu0 0.0
    %3680 = vmatpush2.msra.mxu0 0.0
    %3681 = vmatprep.subr.mxu0 0.0
    %3682 = vmatpush2.msra.mxu0 0.0
    %3683 = vmatprep.subr.mxu0 0.0
    %3684 = vmatpush2.msra.mxu0 0.0
    %3685 = vmatprep.subr.mxu0 0.0
    %3686 = vmatpush2.msra.mxu0 0.0
    %3687 = vmatprep.subr.mxu0 0.0
    %3688 = vmatpush2.msra.mxu0 0.0
    %3689 = vmatprep.subr.mxu0 0.0
    %3690 = vmatpush2.msra.mxu0 0.0
    %3691 = vmatprep.mubr.f32.mxu0 0.0
    %3692 = vmatmul.mubr.f32.gmra.mxu0 %v3482
    %v3693 = vpop.f32.mrf.mxu0
    %v3694 = vadd.f32 %v3472, %v3693
    %v3695 = vpop.f32.mrf.mxu0
    %3696 = vdwg.mxu0
    %3697 = vmatprep.subr.mxu0 0.0
    %3698 = vmatpush1.msra.mxu0 0.0
    %3699 = vmatprep.subr.mxu0 0.0
    %3700 = vmatpush1.msra.mxu0 0.0
    %3701 = vmatprep.subr.mxu0 0.0
    %3702 = vmatpush1.msra.mxu0 0.0
    %3703 = vmatprep.subr.mxu0 0.0
    %3704 = vmatpush1.msra.mxu0 0.0
    %3705 = vmatprep.subr.mxu0 0.0
    %3706 = vmatpush1.msra.mxu0 0.0
    %3707 = vmatprep.subr.mxu0 0.0
    %3708 = vmatpush1.msra.mxu0 0.0
    %3709 = vmatprep.subr.mxu0 0.0
    %3710 = vmatpush1.msra.mxu0 0.0
    %3711 = vmatprep.subr.mxu0 0.0
    %3712 = vmatpush1.msra.mxu0 0.0
    %3713 = vmatprep.subr.mxu0 0.0
    %3714 = vmatpush1.msra.mxu0 0.0
    %3715 = vmatprep.subr.mxu0 0.0
    %3716 = vmatpush1.msra.mxu0 0.0
    %3717 = vmatprep.subr.mxu0 0.0
    %3718 = vmatpush1.msra.mxu0 0.0
    %3719 = vmatprep.subr.mxu0 0.0
    %3720 = vmatpush1.msra.mxu0 0.0
    %3721 = vmatprep.subr.mxu0 0.0
    %3722 = vmatpush1.msra.mxu0 %v3453
    %3723 = vmatprep.subr.mxu0 0.0
    %3724 = vmatpush1.msra.mxu0 %v3452
    %3725 = vmatprep.subr.mxu0 0.0
    %3726 = vmatpush1.msra.mxu0 %v3451
    %3727 = vmatprep.subr.mxu0 0.0
    %3728 = vmatpush1.msra.mxu0 %v3450
    %3729 = vmatprep.subr.mxu0 0.0
    %3730 = vmatpush2.msra.mxu0 0.0
    %3731 = vmatprep.subr.mxu0 0.0
    %3732 = vmatpush2.msra.mxu0 0.0
    %3733 = vmatprep.subr.mxu0 0.0
    %3734 = vmatpush2.msra.mxu0 0.0
    %3735 = vmatprep.subr.mxu0 0.0
    %3736 = vmatpush2.msra.mxu0 0.0
    %3737 = vmatprep.subr.mxu0 0.0
    %3738 = vmatpush2.msra.mxu0 0.0
    %3739 = vmatprep.subr.mxu0 0.0
    %3740 = vmatpush2.msra.mxu0 0.0
    %3741 = vmatprep.subr.mxu0 0.0
    %3742 = vmatpush2.msra.mxu0 0.0
    %3743 = vmatprep.subr.mxu0 0.0
    %3744 = vmatpush2.msra.mxu0 0.0
    %3745 = vmatprep.subr.mxu0 0.0
    %3746 = vmatpush2.msra.mxu0 0.0
    %3747 = vmatprep.subr.mxu0 0.0
    %3748 = vmatpush2.msra.mxu0 0.0
    %3749 = vmatprep.subr.mxu0 0.0
    %3750 = vmatpush2.msra.mxu0 0.0
    %3751 = vmatprep.subr.mxu0 0.0
    %3752 = vmatpush2.msra.mxu0 0.0
    %3753 = vmatprep.subr.mxu0 0.0
    %3754 = vmatpush2.msra.mxu0 0.0
    %3755 = vmatprep.subr.mxu0 0.0
    %3756 = vmatpush2.msra.mxu0 0.0
    %3757 = vmatprep.subr.mxu0 0.0
    %3758 = vmatpush2.msra.mxu0 0.0
    %3759 = vmatprep.subr.mxu0 0.0
    %3760 = vmatpush2.msra.mxu0 0.0
    %3761 = vmatprep.mubr.f32.mxu0 0.0
    %3762 = vmatmul.mubr.f32.gmra.mxu0 %v3555
    %v3763 = vpop.f32.mrf.mxu0
    %v3764 = vadd.f32 %v3472, %v3763
    %v3765 = vpop.f32.mrf.mxu0
    %3766 = vdwg.mxu0
    %3767 = vmatprep.subr.mxu0 0.0
    %3768 = vmatpush1.msra.mxu0 0.0
    %3769 = vmatprep.subr.mxu0 0.0
    %3770 = vmatpush1.msra.mxu0 0.0
    %3771 = vmatprep.subr.mxu0 0.0
    %3772 = vmatpush1.msra.mxu0 0.0
    %3773 = vmatprep.subr.mxu0 0.0
    %3774 = vmatpush1.msra.mxu0 0.0
    %3775 = vmatprep.subr.mxu0 0.0
    %3776 = vmatpush1.msra.mxu0 0.0
    %3777 = vmatprep.subr.mxu0 0.0
    %3778 = vmatpush1.msra.mxu0 0.0
    %3779 = vmatprep.subr.mxu0 0.0
    %3780 = vmatpush1.msra.mxu0 0.0
    %3781 = vmatprep.subr.mxu0 0.0
    %3782 = vmatpush1.msra.mxu0 0.0
    %3783 = vmatprep.subr.mxu0 0.0
    %3784 = vmatpush1.msra.mxu0 0.0
    %3785 = vmatprep.subr.mxu0 0.0
    %3786 = vmatpush1.msra.mxu0 0.0
    %3787 = vmatprep.subr.mxu0 0.0
    %3788 = vmatpush1.msra.mxu0 0.0
    %3789 = vmatprep.subr.mxu0 0.0
    %3790 = vmatpush1.msra.mxu0 0.0
    %3791 = vmatprep.subr.mxu0 0.0
    %3792 = vmatpush1.msra.mxu0 %v3458
    %3793 = vmatprep.subr.mxu0 0.0
    %3794 = vmatpush1.msra.mxu0 %v3457
    %3795 = vmatprep.subr.mxu0 0.0
    %3796 = vmatpush1.msra.mxu0 %v3456
    %3797 = vmatprep.subr.mxu0 0.0
    %3798 = vmatpush1.msra.mxu0 %v3455
    %3799 = vmatprep.subr.mxu0 0.0
    %3800 = vmatpush2.msra.mxu0 0.0
    %3801 = vmatprep.subr.mxu0 0.0
    %3802 = vmatpush2.msra.mxu0 0.0
    %3803 = vmatprep.subr.mxu0 0.0
    %3804 = vmatpush2.msra.mxu0 0.0
    %3805 = vmatprep.subr.mxu0 0.0
    %3806 = vmatpush2.msra.mxu0 0.0
    %3807 = vmatprep.subr.mxu0 0.0
    %3808 = vmatpush2.msra.mxu0 0.0
    %3809 = vmatprep.subr.mxu0 0.0
    %3810 = vmatpush2.msra.mxu0 0.0
    %3811 = vmatprep.subr.mxu0 0.0
    %3812 = vmatpush2.msra.mxu0 0.0
    %3813 = vmatprep.subr.mxu0 0.0
    %3814 = vmatpush2.msra.mxu0 0.0
    %3815 = vmatprep.subr.mxu0 0.0
    %3816 = vmatpush2.msra.mxu0 0.0
    %3817 = vmatprep.subr.mxu0 0.0
    %3818 = vmatpush2.msra.mxu0 0.0
    %3819 = vmatprep.subr.mxu0 0.0
    %3820 = vmatpush2.msra.mxu0 0.0
    %3821 = vmatprep.subr.mxu0 0.0
    %3822 = vmatpush2.msra.mxu0 0.0
    %3823 = vmatprep.subr.mxu0 0.0
    %3824 = vmatpush2.msra.mxu0 0.0
    %3825 = vmatprep.subr.mxu0 0.0
    %3826 = vmatpush2.msra.mxu0 0.0
    %3827 = vmatprep.subr.mxu0 0.0
    %3828 = vmatpush2.msra.mxu0 0.0
    %3829 = vmatprep.subr.mxu0 0.0
    %3830 = vmatpush2.msra.mxu0 0.0
    %3831 = vmatprep.mubr.f32.mxu0 0.0
    %3832 = vmatmul.mubr.f32.gmra.mxu0 %v3482
    %v3833 = vpop.f32.mrf.mxu0
    %v3834 = vadd.f32 %v3476, %v3833
    %v3835 = vpop.f32.mrf.mxu0
    %3836 = vdwg.mxu0
    %3837 = vmatprep.subr.mxu0 0.0
    %3838 = vmatpush1.msra.mxu0 0.0
    %3839 = vmatprep.subr.mxu0 0.0
    %3840 = vmatpush1.msra.mxu0 0.0
    %3841 = vmatprep.subr.mxu0 0.0
    %3842 = vmatpush1.msra.mxu0 0.0
    %3843 = vmatprep.subr.mxu0 0.0
    %3844 = vmatpush1.msra.mxu0 0.0
    %3845 = vmatprep.subr.mxu0 0.0
    %3846 = vmatpush1.msra.mxu0 0.0
    %3847 = vmatprep.subr.mxu0 0.0
    %3848 = vmatpush1.msra.mxu0 0.0
    %3849 = vmatprep.subr.mxu0 0.0
    %3850 = vmatpush1.msra.mxu0 0.0
    %3851 = vmatprep.subr.mxu0 0.0
    %3852 = vmatpush1.msra.mxu0 0.0
    %3853 = vmatprep.subr.mxu0 0.0
    %3854 = vmatpush1.msra.mxu0 0.0
    %3855 = vmatprep.subr.mxu0 0.0
    %3856 = vmatpush1.msra.mxu0 0.0
    %3857 = vmatprep.subr.mxu0 0.0
    %3858 = vmatpush1.msra.mxu0 0.0
    %3859 = vmatprep.subr.mxu0 0.0
    %3860 = vmatpush1.msra.mxu0 0.0
    %3861 = vmatprep.subr.mxu0 0.0
    %3862 = vmatpush1.msra.mxu0 %v3458
    %3863 = vmatprep.subr.mxu0 0.0
    %3864 = vmatpush1.msra.mxu0 %v3457
    %3865 = vmatprep.subr.mxu0 0.0
    %3866 = vmatpush1.msra.mxu0 %v3456
    %3867 = vmatprep.subr.mxu0 0.0
    %3868 = vmatpush1.msra.mxu0 %v3455
    %3869 = vmatprep.subr.mxu0 0.0
    %3870 = vmatpush2.msra.mxu0 0.0
    %3871 = vmatprep.subr.mxu0 0.0
    %3872 = vmatpush2.msra.mxu0 0.0
    %3873 = vmatprep.subr.mxu0 0.0
    %3874 = vmatpush2.msra.mxu0 0.0
    %3875 = vmatprep.subr.mxu0 0.0
    %3876 = vmatpush2.msra.mxu0 0.0
    %3877 = vmatprep.subr.mxu0 0.0
    %3878 = vmatpush2.msra.mxu0 0.0
    %3879 = vmatprep.subr.mxu0 0.0
    %3880 = vmatpush2.msra.mxu0 0.0
    %3881 = vmatprep.subr.mxu0 0.0
    %3882 = vmatpush2.msra.mxu0 0.0
    %3883 = vmatprep.subr.mxu0 0.0
    %3884 = vmatpush2.msra.mxu0 0.0
    %3885 = vmatprep.subr.mxu0 0.0
    %3886 = vmatpush2.msra.mxu0 0.0
    %3887 = vmatprep.subr.mxu0 0.0
    %3888 = vmatpush2.msra.mxu0 0.0
    %3889 = vmatprep.subr.mxu0 0.0
    %3890 = vmatpush2.msra.mxu0 0.0
    %3891 = vmatprep.subr.mxu0 0.0
    %3892 = vmatpush2.msra.mxu0 0.0
    %3893 = vmatprep.subr.mxu0 0.0
    %3894 = vmatpush2.msra.mxu0 0.0
    %3895 = vmatprep.subr.mxu0 0.0
    %3896 = vmatpush2.msra.mxu0 0.0
    %3897 = vmatprep.subr.mxu0 0.0
    %3898 = vmatpush2.msra.mxu0 0.0
    %3899 = vmatprep.subr.mxu0 0.0
    %3900 = vmatpush2.msra.mxu0 0.0
    %3901 = vmatprep.mubr.f32.mxu0 0.0
    %3902 = vmatmul.mubr.f32.gmra.mxu0 %v3555
    %v3903 = vpop.f32.mrf.mxu0
    %v3904 = vadd.f32 %v3476, %v3903
    %v3905 = vpop.f32.mrf.mxu0
    %3906 = vdwg.mxu0
    %3907 = vmatprep.subr.mxu0 0.0
    %3908 = vmatpush1.msra.mxu0 0.0
    %3909 = vmatprep.subr.mxu0 0.0
    %3910 = vmatpush1.msra.mxu0 0.0
    %3911 = vmatprep.subr.mxu0 0.0
    %3912 = vmatpush1.msra.mxu0 0.0
    %3913 = vmatprep.subr.mxu0 0.0
    %3914 = vmatpush1.msra.mxu0 0.0
    %3915 = vmatprep.subr.mxu0 0.0
    %3916 = vmatpush1.msra.mxu0 0.0
    %3917 = vmatprep.subr.mxu0 0.0
    %3918 = vmatpush1.msra.mxu0 0.0
    %3919 = vmatprep.subr.mxu0 0.0
    %3920 = vmatpush1.msra.mxu0 0.0
    %3921 = vmatprep.subr.mxu0 0.0
    %3922 = vmatpush1.msra.mxu0 0.0
    %3923 = vmatprep.subr.mxu0 0.0
    %3924 = vmatpush1.msra.mxu0 0.0
    %3925 = vmatprep.subr.mxu0 0.0
    %3926 = vmatpush1.msra.mxu0 0.0
    %3927 = vmatprep.subr.mxu0 0.0
    %3928 = vmatpush1.msra.mxu0 0.0
    %3929 = vmatprep.subr.mxu0 0.0
    %3930 = vmatpush1.msra.mxu0 0.0
    %3931 = vmatprep.subr.mxu0 0.0
    %3932 = vmatpush1.msra.mxu0 %v3463
    %3933 = vmatprep.subr.mxu0 0.0
    %3934 = vmatpush1.msra.mxu0 %v3462
    %3935 = vmatprep.subr.mxu0 0.0
    %3936 = vmatpush1.msra.mxu0 %v3461
    %3937 = vmatprep.subr.mxu0 0.0
    %3938 = vmatpush1.msra.mxu0 %v3460
    %3939 = vmatprep.subr.mxu0 0.0
    %3940 = vmatpush2.msra.mxu0 0.0
    %3941 = vmatprep.subr.mxu0 0.0
    %3942 = vmatpush2.msra.mxu0 0.0
    %3943 = vmatprep.subr.mxu0 0.0
    %3944 = vmatpush2.msra.mxu0 0.0
    %3945 = vmatprep.subr.mxu0 0.0
    %3946 = vmatpush2.msra.mxu0 0.0
    %3947 = vmatprep.subr.mxu0 0.0
    %3948 = vmatpush2.msra.mxu0 0.0
    %3949 = vmatprep.subr.mxu0 0.0
    %3950 = vmatpush2.msra.mxu0 0.0
    %3951 = vmatprep.subr.mxu0 0.0
    %3952 = vmatpush2.msra.mxu0 0.0
    %3953 = vmatprep.subr.mxu0 0.0
    %3954 = vmatpush2.msra.mxu0 0.0
    %3955 = vmatprep.subr.mxu0 0.0
    %3956 = vmatpush2.msra.mxu0 0.0
    %3957 = vmatprep.subr.mxu0 0.0
    %3958 = vmatpush2.msra.mxu0 0.0
    %3959 = vmatprep.subr.mxu0 0.0
    %3960 = vmatpush2.msra.mxu0 0.0
    %3961 = vmatprep.subr.mxu0 0.0
    %3962 = vmatpush2.msra.mxu0 0.0
    %3963 = vmatprep.subr.mxu0 0.0
    %3964 = vmatpush2.msra.mxu0 0.0
    %3965 = vmatprep.subr.mxu0 0.0
    %3966 = vmatpush2.msra.mxu0 0.0
    %3967 = vmatprep.subr.mxu0 0.0
    %3968 = vmatpush2.msra.mxu0 0.0
    %3969 = vmatprep.subr.mxu0 0.0
    %3970 = vmatpush2.msra.mxu0 0.0
    %3971 = vmatprep.mubr.f32.mxu0 0.0
    %3972 = vmatmul.mubr.f32.gmra.mxu0 %v3482
    %v3973 = vpop.f32.mrf.mxu0
    %v3974 = vadd.f32 %v3480, %v3973
    %v3975 = vpop.f32.mrf.mxu0
    %3976 = vdwg.mxu0
    %3977 = vmatprep.subr.mxu0 0.0
    %3978 = vmatpush1.msra.mxu0 0.0
    %3979 = vmatprep.subr.mxu0 0.0
    %3980 = vmatpush1.msra.mxu0 0.0
    %3981 = vmatprep.subr.mxu0 0.0
    %3982 = vmatpush1.msra.mxu0 0.0
    %3983 = vmatprep.subr.mxu0 0.0
    %3984 = vmatpush1.msra.mxu0 0.0
    %3985 = vmatprep.subr.mxu0 0.0
    %3986 = vmatpush1.msra.mxu0 0.0
    %3987 = vmatprep.subr.mxu0 0.0
    %3988 = vmatpush1.msra.mxu0 0.0
    %3989 = vmatprep.subr.mxu0 0.0
    %3990 = vmatpush1.msra.mxu0 0.0
    %3991 = vmatprep.subr.mxu0 0.0
    %3992 = vmatpush1.msra.mxu0 0.0
    %3993 = vmatprep.subr.mxu0 0.0
    %3994 = vmatpush1.msra.mxu0 0.0
    %3995 = vmatprep.subr.mxu0 0.0
    %3996 = vmatpush1.msra.mxu0 0.0
    %3997 = vmatprep.subr.mxu0 0.0
    %3998 = vmatpush1.msra.mxu0 0.0
    %3999 = vmatprep.subr.mxu0 0.0
    %4000 = vmatpush1.msra.mxu0 0.0
    %4001 = vmatprep.subr.mxu0 0.0
    %4002 = vmatpush1.msra.mxu0 %v3463
    %4003 = vmatprep.subr.mxu0 0.0
    %4004 = vmatpush1.msra.mxu0 %v3462
    %4005 = vmatprep.subr.mxu0 0.0
    %4006 = vmatpush1.msra.mxu0 %v3461
    %4007 = vmatprep.subr.mxu0 0.0
    %4008 = vmatpush1.msra.mxu0 %v3460
    %4009 = vmatprep.subr.mxu0 0.0
    %4010 = vmatpush2.msra.mxu0 0.0
    %4011 = vmatprep.subr.mxu0 0.0
    %4012 = vmatpush2.msra.mxu0 0.0
    %4013 = vmatprep.subr.mxu0 0.0
    %4014 = vmatpush2.msra.mxu0 0.0
    %4015 = vmatprep.subr.mxu0 0.0
    %4016 = vmatpush2.msra.mxu0 0.0
    %4017 = vmatprep.subr.mxu0 0.0
    %4018 = vmatpush2.msra.mxu0 0.0
    %4019 = vmatprep.subr.mxu0 0.0
    %4020 = vmatpush2.msra.mxu0 0.0
    %4021 = vmatprep.subr.mxu0 0.0
    %4022 = vmatpush2.msra.mxu0 0.0
    %4023 = vmatprep.subr.mxu0 0.0
    %4024 = vmatpush2.msra.mxu0 0.0
    %4025 = vmatprep.subr.mxu0 0.0
    %4026 = vmatpush2.msra.mxu0 0.0
    %4027 = vmatprep.subr.mxu0 0.0
    %4028 = vmatpush2.msra.mxu0 0.0
    %4029 = vmatprep.subr.mxu0 0.0
    %4030 = vmatpush2.msra.mxu0 0.0
    %4031 = vmatprep.subr.mxu0 0.0
    %4032 = vmatpush2.msra.mxu0 0.0
    %4033 = vmatprep.subr.mxu0 0.0
    %4034 = vmatpush2.msra.mxu0 0.0
    %4035 = vmatprep.subr.mxu0 0.0
    %4036 = vmatpush2.msra.mxu0 0.0
    %4037 = vmatprep.subr.mxu0 0.0
    %4038 = vmatpush2.msra.mxu0 0.0
    %4039 = vmatprep.subr.mxu0 0.0
    %4040 = vmatpush2.msra.mxu0 0.0
    %4041 = vmatprep.mubr.f32.mxu0 0.0
    %4042 = vmatmul.mubr.f32.gmra.mxu0 %v3555
    %v4043 = vpop.f32.mrf.mxu0
    %v4044 = vadd.f32 %v3480, %v4043
    %v4045 = vpop.f32.mrf.mxu0
    %4046 = vdwg.mxu0
    %4048 = vrot.lane.b32.xlu0 %v3551, 120
    %v4049 = vpop.permute.xlu0 %4048
    %v4050 = vsel %vm1228, %v3551, 0
    %v4052 = vsel %vm1228, %v4049, 0
    %4054 = vmatprep.subr.mxu0 0.0
    %4055 = vmatpush1.xpose.msra.mxu0 0.0
    %4056 = vmatprep.subr.mxu0 0.0
    %4057 = vmatpush1.xpose.msra.mxu0 0.0
    %4058 = vmatprep.subr.mxu0 0.0
    %4059 = vmatpush1.xpose.msra.mxu0 0.0
    %4060 = vmatprep.subr.mxu0 0.0
    %4061 = vmatpush1.xpose.msra.mxu0 0.0
    %4062 = vmatprep.subr.mxu0 0.0
    %4063 = vmatpush1.xpose.msra.mxu0 0.0
    %4064 = vmatprep.subr.mxu0 0.0
    %4065 = vmatpush1.xpose.msra.mxu0 0.0
    %4066 = vmatprep.subr.mxu0 0.0
    %4067 = vmatpush1.xpose.msra.mxu0 0.0
    %4068 = vmatprep.subr.mxu0 0.0
    %4069 = vmatpush1.xpose.msra.mxu0 0.0
    %4070 = vmatprep.subr.mxu0 0.0
    %4071 = vmatpush1.xpose.msra.mxu0 0.0
    %4072 = vmatprep.subr.mxu0 0.0
    %4073 = vmatpush1.xpose.msra.mxu0 0.0
    %4074 = vmatprep.subr.mxu0 0.0
    %4075 = vmatpush1.xpose.msra.mxu0 0.0
    %4076 = vmatprep.subr.mxu0 0.0
    %4077 = vmatpush1.xpose.msra.mxu0 0.0
    %4078 = vmatprep.subr.mxu0 0.0
    %4079 = vmatpush1.xpose.msra.mxu0 0.0
    %4080 = vmatprep.subr.mxu0 0.0
    %4081 = vmatpush1.xpose.msra.mxu0 0.0
    %4082 = vmatprep.subr.mxu0 0.0
    %4083 = vmatpush1.xpose.msra.mxu0 0.0
    %4084 = vmatprep.subr.mxu0 0.0
    %4085 = vmatpush1.xpose.msra.mxu0 %v4052
    %4086 = vmatprep.subr.mxu0 0.0
    %4087 = vmatpush2.xpose.msra.mxu0 0.0
    %4088 = vmatprep.subr.mxu0 0.0
    %4089 = vmatpush2.xpose.msra.mxu0 0.0
    %4090 = vmatprep.subr.mxu0 0.0
    %4091 = vmatpush2.xpose.msra.mxu0 0.0
    %4092 = vmatprep.subr.mxu0 0.0
    %4093 = vmatpush2.xpose.msra.mxu0 0.0
    %4094 = vmatprep.subr.mxu0 0.0
    %4095 = vmatpush2.xpose.msra.mxu0 0.0
    %4096 = vmatprep.subr.mxu0 0.0
    %4097 = vmatpush2.xpose.msra.mxu0 0.0
    %4098 = vmatprep.subr.mxu0 0.0
    %4099 = vmatpush2.xpose.msra.mxu0 0.0
    %4100 = vmatprep.subr.mxu0 0.0
    %4101 = vmatpush2.xpose.msra.mxu0 0.0
    %4102 = vmatprep.subr.mxu0 0.0
    %4103 = vmatpush2.xpose.msra.mxu0 0.0
    %4104 = vmatprep.subr.mxu0 0.0
    %4105 = vmatpush2.xpose.msra.mxu0 0.0
    %4106 = vmatprep.subr.mxu0 0.0
    %4107 = vmatpush2.xpose.msra.mxu0 0.0
    %4108 = vmatprep.subr.mxu0 0.0
    %4109 = vmatpush2.xpose.msra.mxu0 0.0
    %4110 = vmatprep.subr.mxu0 0.0
    %4111 = vmatpush2.xpose.msra.mxu0 0.0
    %4112 = vmatprep.subr.mxu0 0.0
    %4113 = vmatpush2.xpose.msra.mxu0 0.0
    %4114 = vmatprep.subr.mxu0 0.0
    %4115 = vmatpush2.xpose.msra.mxu0 0.0
    %4116 = vmatprep.subr.mxu0 0.0
    %4117 = vmatpush2.xpose.msra.mxu0 0.0
    %4118 = vmatprep.mubr.f32.mxu0 0.0
    %4119 = vmatmul.mubr.f32.gmra.mxu0 %v4050
    %v4120 = vpop.f32.mrf.mxu0
    %v4121 = vadd.f32 0.0, %v4120
    %v4122 = vpop.f32.mrf.mxu0
    %4123 = vdwg.mxu0
    %4125 = vrot.lane.b32.xlu0 %v3624, 120
    %v4126 = vpop.permute.xlu0 %4125
    %v4127 = vsel %vm1228, %v3624, 0
    %v4129 = vsel %vm1228, %v4126, 0
    %4131 = vmatprep.subr.mxu0 0.0
    %4132 = vmatpush1.xpose.msra.mxu0 0.0
    %4133 = vmatprep.subr.mxu0 0.0
    %4134 = vmatpush1.xpose.msra.mxu0 0.0
    %4135 = vmatprep.subr.mxu0 0.0
    %4136 = vmatpush1.xpose.msra.mxu0 0.0
    %4137 = vmatprep.subr.mxu0 0.0
    %4138 = vmatpush1.xpose.msra.mxu0 0.0
    %4139 = vmatprep.subr.mxu0 0.0
    %4140 = vmatpush1.xpose.msra.mxu0 0.0
    %4141 = vmatprep.subr.mxu0 0.0
    %4142 = vmatpush1.xpose.msra.mxu0 0.0
    %4143 = vmatprep.subr.mxu0 0.0
    %4144 = vmatpush1.xpose.msra.mxu0 0.0
    %4145 = vmatprep.subr.mxu0 0.0
    %4146 = vmatpush1.xpose.msra.mxu0 0.0
    %4147 = vmatprep.subr.mxu0 0.0
    %4148 = vmatpush1.xpose.msra.mxu0 0.0
    %4149 = vmatprep.subr.mxu0 0.0
    %4150 = vmatpush1.xpose.msra.mxu0 0.0
    %4151 = vmatprep.subr.mxu0 0.0
    %4152 = vmatpush1.xpose.msra.mxu0 0.0
    %4153 = vmatprep.subr.mxu0 0.0
    %4154 = vmatpush1.xpose.msra.mxu0 0.0
    %4155 = vmatprep.subr.mxu0 0.0
    %4156 = vmatpush1.xpose.msra.mxu0 0.0
    %4157 = vmatprep.subr.mxu0 0.0
    %4158 = vmatpush1.xpose.msra.mxu0 0.0
    %4159 = vmatprep.subr.mxu0 0.0
    %4160 = vmatpush1.xpose.msra.mxu0 0.0
    %4161 = vmatprep.subr.mxu0 0.0
    %4162 = vmatpush1.xpose.msra.mxu0 %v4129
    %4163 = vmatprep.subr.mxu0 0.0
    %4164 = vmatpush2.xpose.msra.mxu0 0.0
    %4165 = vmatprep.subr.mxu0 0.0
    %4166 = vmatpush2.xpose.msra.mxu0 0.0
    %4167 = vmatprep.subr.mxu0 0.0
    %4168 = vmatpush2.xpose.msra.mxu0 0.0
    %4169 = vmatprep.subr.mxu0 0.0
    %4170 = vmatpush2.xpose.msra.mxu0 0.0
    %4171 = vmatprep.subr.mxu0 0.0
    %4172 = vmatpush2.xpose.msra.mxu0 0.0
    %4173 = vmatprep.subr.mxu0 0.0
    %4174 = vmatpush2.xpose.msra.mxu0 0.0
    %4175 = vmatprep.subr.mxu0 0.0
    %4176 = vmatpush2.xpose.msra.mxu0 0.0
    %4177 = vmatprep.subr.mxu0 0.0
    %4178 = vmatpush2.xpose.msra.mxu0 0.0
    %4179 = vmatprep.subr.mxu0 0.0
    %4180 = vmatpush2.xpose.msra.mxu0 0.0
    %4181 = vmatprep.subr.mxu0 0.0
    %4182 = vmatpush2.xpose.msra.mxu0 0.0
    %4183 = vmatprep.subr.mxu0 0.0
    %4184 = vmatpush2.xpose.msra.mxu0 0.0
    %4185 = vmatprep.subr.mxu0 0.0
    %4186 = vmatpush2.xpose.msra.mxu0 0.0
    %4187 = vmatprep.subr.mxu0 0.0
    %4188 = vmatpush2.xpose.msra.mxu0 0.0
    %4189 = vmatprep.subr.mxu0 0.0
    %4190 = vmatpush2.xpose.msra.mxu0 0.0
    %4191 = vmatprep.subr.mxu0 0.0
    %4192 = vmatpush2.xpose.msra.mxu0 0.0
    %4193 = vmatprep.subr.mxu0 0.0
    %4194 = vmatpush2.xpose.msra.mxu0 0.0
    %4195 = vmatprep.mubr.f32.mxu0 0.0
    %4196 = vmatmul.mubr.f32.gmra.mxu0 %v4127
    %v4197 = vpop.f32.mrf.mxu0
    %v4198 = vadd.f32 0.0, %v4197
    %v4199 = vpop.f32.mrf.mxu0
    %4200 = vdwg.mxu0
    %4202 = vrot.lane.b32.xlu0 %v3694, 120
    %v4203 = vpop.permute.xlu0 %4202
    %v4204 = vsel %vm1228, %v3694, 0
    %v4206 = vsel %vm1228, %v4203, 0
    %4208 = vmatprep.subr.mxu0 0.0
    %4209 = vmatpush1.xpose.msra.mxu0 0.0
    %4210 = vmatprep.subr.mxu0 0.0
    %4211 = vmatpush1.xpose.msra.mxu0 0.0
    %4212 = vmatprep.subr.mxu0 0.0
    %4213 = vmatpush1.xpose.msra.mxu0 0.0
    %4214 = vmatprep.subr.mxu0 0.0
    %4215 = vmatpush1.xpose.msra.mxu0 0.0
    %4216 = vmatprep.subr.mxu0 0.0
    %4217 = vmatpush1.xpose.msra.mxu0 0.0
    %4218 = vmatprep.subr.mxu0 0.0
    %4219 = vmatpush1.xpose.msra.mxu0 0.0
    %4220 = vmatprep.subr.mxu0 0.0
    %4221 = vmatpush1.xpose.msra.mxu0 0.0
    %4222 = vmatprep.subr.mxu0 0.0
    %4223 = vmatpush1.xpose.msra.mxu0 0.0
    %4224 = vmatprep.subr.mxu0 0.0
    %4225 = vmatpush1.xpose.msra.mxu0 0.0
    %4226 = vmatprep.subr.mxu0 0.0
    %4227 = vmatpush1.xpose.msra.mxu0 0.0
    %4228 = vmatprep.subr.mxu0 0.0
    %4229 = vmatpush1.xpose.msra.mxu0 0.0
    %4230 = vmatprep.subr.mxu0 0.0
    %4231 = vmatpush1.xpose.msra.mxu0 0.0
    %4232 = vmatprep.subr.mxu0 0.0
    %4233 = vmatpush1.xpose.msra.mxu0 0.0
    %4234 = vmatprep.subr.mxu0 0.0
    %4235 = vmatpush1.xpose.msra.mxu0 0.0
    %4236 = vmatprep.subr.mxu0 0.0
    %4237 = vmatpush1.xpose.msra.mxu0 0.0
    %4238 = vmatprep.subr.mxu0 0.0
    %4239 = vmatpush1.xpose.msra.mxu0 %v4206
    %4240 = vmatprep.subr.mxu0 0.0
    %4241 = vmatpush2.xpose.msra.mxu0 0.0
    %4242 = vmatprep.subr.mxu0 0.0
    %4243 = vmatpush2.xpose.msra.mxu0 0.0
    %4244 = vmatprep.subr.mxu0 0.0
    %4245 = vmatpush2.xpose.msra.mxu0 0.0
    %4246 = vmatprep.subr.mxu0 0.0
    %4247 = vmatpush2.xpose.msra.mxu0 0.0
    %4248 = vmatprep.subr.mxu0 0.0
    %4249 = vmatpush2.xpose.msra.mxu0 0.0
    %4250 = vmatprep.subr.mxu0 0.0
    %4251 = vmatpush2.xpose.msra.mxu0 0.0
    %4252 = vmatprep.subr.mxu0 0.0
    %4253 = vmatpush2.xpose.msra.mxu0 0.0
    %4254 = vmatprep.subr.mxu0 0.0
    %4255 = vmatpush2.xpose.msra.mxu0 0.0
    %4256 = vmatprep.subr.mxu0 0.0
    %4257 = vmatpush2.xpose.msra.mxu0 0.0
    %4258 = vmatprep.subr.mxu0 0.0
    %4259 = vmatpush2.xpose.msra.mxu0 0.0
    %4260 = vmatprep.subr.mxu0 0.0
    %4261 = vmatpush2.xpose.msra.mxu0 0.0
    %4262 = vmatprep.subr.mxu0 0.0
    %4263 = vmatpush2.xpose.msra.mxu0 0.0
    %4264 = vmatprep.subr.mxu0 0.0
    %4265 = vmatpush2.xpose.msra.mxu0 0.0
    %4266 = vmatprep.subr.mxu0 0.0
    %4267 = vmatpush2.xpose.msra.mxu0 0.0
    %4268 = vmatprep.subr.mxu0 0.0
    %4269 = vmatpush2.xpose.msra.mxu0 0.0
    %4270 = vmatprep.subr.mxu0 0.0
    %4271 = vmatpush2.xpose.msra.mxu0 0.0
    %4272 = vmatprep.mubr.f32.mxu0 0.0
    %4273 = vmatmul.mubr.f32.gmra.mxu0 %v4204
    %v4274 = vpop.f32.mrf.mxu0
    %v4275 = vadd.f32 0.0, %v4274
    %v4276 = vpop.f32.mrf.mxu0
    %4277 = vdwg.mxu0
    %4279 = vrot.lane.b32.xlu0 %v3764, 120
    %v4280 = vpop.permute.xlu0 %4279
    %v4281 = vsel %vm1228, %v3764, 0
    %v4283 = vsel %vm1228, %v4280, 0
    %4285 = vmatprep.subr.mxu0 0.0
    %4286 = vmatpush1.xpose.msra.mxu0 0.0
    %4287 = vmatprep.subr.mxu0 0.0
    %4288 = vmatpush1.xpose.msra.mxu0 0.0
    %4289 = vmatprep.subr.mxu0 0.0
    %4290 = vmatpush1.xpose.msra.mxu0 0.0
    %4291 = vmatprep.subr.mxu0 0.0
    %4292 = vmatpush1.xpose.msra.mxu0 0.0
    %4293 = vmatprep.subr.mxu0 0.0
    %4294 = vmatpush1.xpose.msra.mxu0 0.0
    %4295 = vmatprep.subr.mxu0 0.0
    %4296 = vmatpush1.xpose.msra.mxu0 0.0
    %4297 = vmatprep.subr.mxu0 0.0
    %4298 = vmatpush1.xpose.msra.mxu0 0.0
    %4299 = vmatprep.subr.mxu0 0.0
    %4300 = vmatpush1.xpose.msra.mxu0 0.0
    %4301 = vmatprep.subr.mxu0 0.0
    %4302 = vmatpush1.xpose.msra.mxu0 0.0
    %4303 = vmatprep.subr.mxu0 0.0
    %4304 = vmatpush1.xpose.msra.mxu0 0.0
    %4305 = vmatprep.subr.mxu0 0.0
    %4306 = vmatpush1.xpose.msra.mxu0 0.0
    %4307 = vmatprep.subr.mxu0 0.0
    %4308 = vmatpush1.xpose.msra.mxu0 0.0
    %4309 = vmatprep.subr.mxu0 0.0
    %4310 = vmatpush1.xpose.msra.mxu0 0.0
    %4311 = vmatprep.subr.mxu0 0.0
    %4312 = vmatpush1.xpose.msra.mxu0 0.0
    %4313 = vmatprep.subr.mxu0 0.0
    %4314 = vmatpush1.xpose.msra.mxu0 0.0
    %4315 = vmatprep.subr.mxu0 0.0
    %4316 = vmatpush1.xpose.msra.mxu0 %v4283
    %4317 = vmatprep.subr.mxu0 0.0
    %4318 = vmatpush2.xpose.msra.mxu0 0.0
    %4319 = vmatprep.subr.mxu0 0.0
    %4320 = vmatpush2.xpose.msra.mxu0 0.0
    %4321 = vmatprep.subr.mxu0 0.0
    %4322 = vmatpush2.xpose.msra.mxu0 0.0
    %4323 = vmatprep.subr.mxu0 0.0
    %4324 = vmatpush2.xpose.msra.mxu0 0.0
    %4325 = vmatprep.subr.mxu0 0.0
    %4326 = vmatpush2.xpose.msra.mxu0 0.0
    %4327 = vmatprep.subr.mxu0 0.0
    %4328 = vmatpush2.xpose.msra.mxu0 0.0
    %4329 = vmatprep.subr.mxu0 0.0
    %4330 = vmatpush2.xpose.msra.mxu0 0.0
    %4331 = vmatprep.subr.mxu0 0.0
    %4332 = vmatpush2.xpose.msra.mxu0 0.0
    %4333 = vmatprep.subr.mxu0 0.0
    %4334 = vmatpush2.xpose.msra.mxu0 0.0
    %4335 = vmatprep.subr.mxu0 0.0
    %4336 = vmatpush2.xpose.msra.mxu0 0.0
    %4337 = vmatprep.subr.mxu0 0.0
    %4338 = vmatpush2.xpose.msra.mxu0 0.0
    %4339 = vmatprep.subr.mxu0 0.0
    %4340 = vmatpush2.xpose.msra.mxu0 0.0
    %4341 = vmatprep.subr.mxu0 0.0
    %4342 = vmatpush2.xpose.msra.mxu0 0.0
    %4343 = vmatprep.subr.mxu0 0.0
    %4344 = vmatpush2.xpose.msra.mxu0 0.0
    %4345 = vmatprep.subr.mxu0 0.0
    %4346 = vmatpush2.xpose.msra.mxu0 0.0
    %4347 = vmatprep.subr.mxu0 0.0
    %4348 = vmatpush2.xpose.msra.mxu0 0.0
    %4349 = vmatprep.mubr.f32.mxu0 0.0
    %4350 = vmatmul.mubr.f32.gmra.mxu0 %v4281
    %v4351 = vpop.f32.mrf.mxu0
    %v4352 = vadd.f32 0.0, %v4351
    %v4353 = vpop.f32.mrf.mxu0
    %4354 = vdwg.mxu0
    %4356 = vrot.lane.b32.xlu0 %v3834, 120
    %v4357 = vpop.permute.xlu0 %4356
    %v4358 = vsel %vm1228, %v3834, 0
    %v4360 = vsel %vm1228, %v4357, 0
    %4362 = vmatprep.subr.mxu0 0.0
    %4363 = vmatpush1.xpose.msra.mxu0 0.0
    %4364 = vmatprep.subr.mxu0 0.0
    %4365 = vmatpush1.xpose.msra.mxu0 0.0
    %4366 = vmatprep.subr.mxu0 0.0
    %4367 = vmatpush1.xpose.msra.mxu0 0.0
    %4368 = vmatprep.subr.mxu0 0.0
    %4369 = vmatpush1.xpose.msra.mxu0 0.0
    %4370 = vmatprep.subr.mxu0 0.0
    %4371 = vmatpush1.xpose.msra.mxu0 0.0
    %4372 = vmatprep.subr.mxu0 0.0
    %4373 = vmatpush1.xpose.msra.mxu0 0.0
    %4374 = vmatprep.subr.mxu0 0.0
    %4375 = vmatpush1.xpose.msra.mxu0 0.0
    %4376 = vmatprep.subr.mxu0 0.0
    %4377 = vmatpush1.xpose.msra.mxu0 0.0
    %4378 = vmatprep.subr.mxu0 0.0
    %4379 = vmatpush1.xpose.msra.mxu0 0.0
    %4380 = vmatprep.subr.mxu0 0.0
    %4381 = vmatpush1.xpose.msra.mxu0 0.0
    %4382 = vmatprep.subr.mxu0 0.0
    %4383 = vmatpush1.xpose.msra.mxu0 0.0
    %4384 = vmatprep.subr.mxu0 0.0
    %4385 = vmatpush1.xpose.msra.mxu0 0.0
    %4386 = vmatprep.subr.mxu0 0.0
    %4387 = vmatpush1.xpose.msra.mxu0 0.0
    %4388 = vmatprep.subr.mxu0 0.0
    %4389 = vmatpush1.xpose.msra.mxu0 0.0
    %4390 = vmatprep.subr.mxu0 0.0
    %4391 = vmatpush1.xpose.msra.mxu0 0.0
    %4392 = vmatprep.subr.mxu0 0.0
    %4393 = vmatpush1.xpose.msra.mxu0 %v4360
    %4394 = vmatprep.subr.mxu0 0.0
    %4395 = vmatpush2.xpose.msra.mxu0 0.0
    %4396 = vmatprep.subr.mxu0 0.0
    %4397 = vmatpush2.xpose.msra.mxu0 0.0
    %4398 = vmatprep.subr.mxu0 0.0
    %4399 = vmatpush2.xpose.msra.mxu0 0.0
    %4400 = vmatprep.subr.mxu0 0.0
    %4401 = vmatpush2.xpose.msra.mxu0 0.0
    %4402 = vmatprep.subr.mxu0 0.0
    %4403 = vmatpush2.xpose.msra.mxu0 0.0
    %4404 = vmatprep.subr.mxu0 0.0
    %4405 = vmatpush2.xpose.msra.mxu0 0.0
    %4406 = vmatprep.subr.mxu0 0.0
    %4407 = vmatpush2.xpose.msra.mxu0 0.0
    %4408 = vmatprep.subr.mxu0 0.0
    %4409 = vmatpush2.xpose.msra.mxu0 0.0
    %4410 = vmatprep.subr.mxu0 0.0
    %4411 = vmatpush2.xpose.msra.mxu0 0.0
    %4412 = vmatprep.subr.mxu0 0.0
    %4413 = vmatpush2.xpose.msra.mxu0 0.0
    %4414 = vmatprep.subr.mxu0 0.0
    %4415 = vmatpush2.xpose.msra.mxu0 0.0
    %4416 = vmatprep.subr.mxu0 0.0
    %4417 = vmatpush2.xpose.msra.mxu0 0.0
    %4418 = vmatprep.subr.mxu0 0.0
    %4419 = vmatpush2.xpose.msra.mxu0 0.0
    %4420 = vmatprep.subr.mxu0 0.0
    %4421 = vmatpush2.xpose.msra.mxu0 0.0
    %4422 = vmatprep.subr.mxu0 0.0
    %4423 = vmatpush2.xpose.msra.mxu0 0.0
    %4424 = vmatprep.subr.mxu0 0.0
    %4425 = vmatpush2.xpose.msra.mxu0 0.0
    %4426 = vmatprep.mubr.f32.mxu0 0.0
    %4427 = vmatmul.mubr.f32.gmra.mxu0 %v4358
    %v4428 = vpop.f32.mrf.mxu0
    %v4429 = vadd.f32 0.0, %v4428
    %v4430 = vpop.f32.mrf.mxu0
    %4431 = vdwg.mxu0
    %4433 = vrot.lane.b32.xlu0 %v3904, 120
    %v4434 = vpop.permute.xlu0 %4433
    %v4435 = vsel %vm1228, %v3904, 0
    %v4437 = vsel %vm1228, %v4434, 0
    %4439 = vmatprep.subr.mxu0 0.0
    %4440 = vmatpush1.xpose.msra.mxu0 0.0
    %4441 = vmatprep.subr.mxu0 0.0
    %4442 = vmatpush1.xpose.msra.mxu0 0.0
    %4443 = vmatprep.subr.mxu0 0.0
    %4444 = vmatpush1.xpose.msra.mxu0 0.0
    %4445 = vmatprep.subr.mxu0 0.0
    %4446 = vmatpush1.xpose.msra.mxu0 0.0
    %4447 = vmatprep.subr.mxu0 0.0
    %4448 = vmatpush1.xpose.msra.mxu0 0.0
    %4449 = vmatprep.subr.mxu0 0.0
    %4450 = vmatpush1.xpose.msra.mxu0 0.0
    %4451 = vmatprep.subr.mxu0 0.0
    %4452 = vmatpush1.xpose.msra.mxu0 0.0
    %4453 = vmatprep.subr.mxu0 0.0
    %4454 = vmatpush1.xpose.msra.mxu0 0.0
    %4455 = vmatprep.subr.mxu0 0.0
    %4456 = vmatpush1.xpose.msra.mxu0 0.0
    %4457 = vmatprep.subr.mxu0 0.0
    %4458 = vmatpush1.xpose.msra.mxu0 0.0
    %4459 = vmatprep.subr.mxu0 0.0
    %4460 = vmatpush1.xpose.msra.mxu0 0.0
    %4461 = vmatprep.subr.mxu0 0.0
    %4462 = vmatpush1.xpose.msra.mxu0 0.0
    %4463 = vmatprep.subr.mxu0 0.0
    %4464 = vmatpush1.xpose.msra.mxu0 0.0
    %4465 = vmatprep.subr.mxu0 0.0
    %4466 = vmatpush1.xpose.msra.mxu0 0.0
    %4467 = vmatprep.subr.mxu0 0.0
    %4468 = vmatpush1.xpose.msra.mxu0 0.0
    %4469 = vmatprep.subr.mxu0 0.0
    %4470 = vmatpush1.xpose.msra.mxu0 %v4437
    %4471 = vmatprep.subr.mxu0 0.0
    %4472 = vmatpush2.xpose.msra.mxu0 0.0
    %4473 = vmatprep.subr.mxu0 0.0
    %4474 = vmatpush2.xpose.msra.mxu0 0.0
    %4475 = vmatprep.subr.mxu0 0.0
    %4476 = vmatpush2.xpose.msra.mxu0 0.0
    %4477 = vmatprep.subr.mxu0 0.0
    %4478 = vmatpush2.xpose.msra.mxu0 0.0
    %4479 = vmatprep.subr.mxu0 0.0
    %4480 = vmatpush2.xpose.msra.mxu0 0.0
    %4481 = vmatprep.subr.mxu0 0.0
    %4482 = vmatpush2.xpose.msra.mxu0 0.0
    %4483 = vmatprep.subr.mxu0 0.0
    %4484 = vmatpush2.xpose.msra.mxu0 0.0
    %4485 = vmatprep.subr.mxu0 0.0
    %4486 = vmatpush2.xpose.msra.mxu0 0.0
    %4487 = vmatprep.subr.mxu0 0.0
    %4488 = vmatpush2.xpose.msra.mxu0 0.0
    %4489 = vmatprep.subr.mxu0 0.0
    %4490 = vmatpush2.xpose.msra.mxu0 0.0
    %4491 = vmatprep.subr.mxu0 0.0
    %4492 = vmatpush2.xpose.msra.mxu0 0.0
    %4493 = vmatprep.subr.mxu0 0.0
    %4494 = vmatpush2.xpose.msra.mxu0 0.0
    %4495 = vmatprep.subr.mxu0 0.0
    %4496 = vmatpush2.xpose.msra.mxu0 0.0
    %4497 = vmatprep.subr.mxu0 0.0
    %4498 = vmatpush2.xpose.msra.mxu0 0.0
    %4499 = vmatprep.subr.mxu0 0.0
    %4500 = vmatpush2.xpose.msra.mxu0 0.0
    %4501 = vmatprep.subr.mxu0 0.0
    %4502 = vmatpush2.xpose.msra.mxu0 0.0
    %4503 = vmatprep.mubr.f32.mxu0 0.0
    %4504 = vmatmul.mubr.f32.gmra.mxu0 %v4435
    %v4505 = vpop.f32.mrf.mxu0
    %v4506 = vadd.f32 0.0, %v4505
    %v4507 = vpop.f32.mrf.mxu0
    %4508 = vdwg.mxu0
    %4510 = vrot.lane.b32.xlu0 %v3974, 120
    %v4511 = vpop.permute.xlu0 %4510
    %v4512 = vsel %vm1228, %v3974, 0
    %v4514 = vsel %vm1228, %v4511, 0
    %4516 = vmatprep.subr.mxu0 0.0
    %4517 = vmatpush1.xpose.msra.mxu0 0.0
    %4518 = vmatprep.subr.mxu0 0.0
    %4519 = vmatpush1.xpose.msra.mxu0 0.0
    %4520 = vmatprep.subr.mxu0 0.0
    %4521 = vmatpush1.xpose.msra.mxu0 0.0
    %4522 = vmatprep.subr.mxu0 0.0
    %4523 = vmatpush1.xpose.msra.mxu0 0.0
    %4524 = vmatprep.subr.mxu0 0.0
    %4525 = vmatpush1.xpose.msra.mxu0 0.0
    %4526 = vmatprep.subr.mxu0 0.0
    %4527 = vmatpush1.xpose.msra.mxu0 0.0
    %4528 = vmatprep.subr.mxu0 0.0
    %4529 = vmatpush1.xpose.msra.mxu0 0.0
    %4530 = vmatprep.subr.mxu0 0.0
    %4531 = vmatpush1.xpose.msra.mxu0 0.0
    %4532 = vmatprep.subr.mxu0 0.0
    %4533 = vmatpush1.xpose.msra.mxu0 0.0
    %4534 = vmatprep.subr.mxu0 0.0
    %4535 = vmatpush1.xpose.msra.mxu0 0.0
    %4536 = vmatprep.subr.mxu0 0.0
    %4537 = vmatpush1.xpose.msra.mxu0 0.0
    %4538 = vmatprep.subr.mxu0 0.0
    %4539 = vmatpush1.xpose.msra.mxu0 0.0
    %4540 = vmatprep.subr.mxu0 0.0
    %4541 = vmatpush1.xpose.msra.mxu0 0.0
    %4542 = vmatprep.subr.mxu0 0.0
    %4543 = vmatpush1.xpose.msra.mxu0 0.0
    %4544 = vmatprep.subr.mxu0 0.0
    %4545 = vmatpush1.xpose.msra.mxu0 0.0
    %4546 = vmatprep.subr.mxu0 0.0
    %4547 = vmatpush1.xpose.msra.mxu0 %v4514
    %4548 = vmatprep.subr.mxu0 0.0
    %4549 = vmatpush2.xpose.msra.mxu0 0.0
    %4550 = vmatprep.subr.mxu0 0.0
    %4551 = vmatpush2.xpose.msra.mxu0 0.0
    %4552 = vmatprep.subr.mxu0 0.0
    %4553 = vmatpush2.xpose.msra.mxu0 0.0
    %4554 = vmatprep.subr.mxu0 0.0
    %4555 = vmatpush2.xpose.msra.mxu0 0.0
    %4556 = vmatprep.subr.mxu0 0.0
    %4557 = vmatpush2.xpose.msra.mxu0 0.0
    %4558 = vmatprep.subr.mxu0 0.0
    %4559 = vmatpush2.xpose.msra.mxu0 0.0
    %4560 = vmatprep.subr.mxu0 0.0
    %4561 = vmatpush2.xpose.msra.mxu0 0.0
    %4562 = vmatprep.subr.mxu0 0.0
    %4563 = vmatpush2.xpose.msra.mxu0 0.0
    %4564 = vmatprep.subr.mxu0 0.0
    %4565 = vmatpush2.xpose.msra.mxu0 0.0
    %4566 = vmatprep.subr.mxu0 0.0
    %4567 = vmatpush2.xpose.msra.mxu0 0.0
    %4568 = vmatprep.subr.mxu0 0.0
    %4569 = vmatpush2.xpose.msra.mxu0 0.0
    %4570 = vmatprep.subr.mxu0 0.0
    %4571 = vmatpush2.xpose.msra.mxu0 0.0
    %4572 = vmatprep.subr.mxu0 0.0
    %4573 = vmatpush2.xpose.msra.mxu0 0.0
    %4574 = vmatprep.subr.mxu0 0.0
    %4575 = vmatpush2.xpose.msra.mxu0 0.0
    %4576 = vmatprep.subr.mxu0 0.0
    %4577 = vmatpush2.xpose.msra.mxu0 0.0
    %4578 = vmatprep.subr.mxu0 0.0
    %4579 = vmatpush2.xpose.msra.mxu0 0.0
    %4580 = vmatprep.mubr.f32.mxu0 0.0
    %4581 = vmatmul.mubr.f32.gmra.mxu0 %v4512
    %v4582 = vpop.f32.mrf.mxu0
    %v4583 = vadd.f32 0.0, %v4582
    %v4584 = vpop.f32.mrf.mxu0
    %4585 = vdwg.mxu0
    %4587 = vrot.lane.b32.xlu0 %v4044, 120
    %v4588 = vpop.permute.xlu0 %4587
    %v4589 = vsel %vm1228, %v4044, 0
    %v4591 = vsel %vm1228, %v4588, 0
    %4593 = vmatprep.subr.mxu0 0.0
    %4594 = vmatpush1.xpose.msra.mxu0 0.0
    %4595 = vmatprep.subr.mxu0 0.0
    %4596 = vmatpush1.xpose.msra.mxu0 0.0
    %4597 = vmatprep.subr.mxu0 0.0
    %4598 = vmatpush1.xpose.msra.mxu0 0.0
    %4599 = vmatprep.subr.mxu0 0.0
    %4600 = vmatpush1.xpose.msra.mxu0 0.0
    %4601 = vmatprep.subr.mxu0 0.0
    %4602 = vmatpush1.xpose.msra.mxu0 0.0
    %4603 = vmatprep.subr.mxu0 0.0
    %4604 = vmatpush1.xpose.msra.mxu0 0.0
    %4605 = vmatprep.subr.mxu0 0.0
    %4606 = vmatpush1.xpose.msra.mxu0 0.0
    %4607 = vmatprep.subr.mxu0 0.0
    %4608 = vmatpush1.xpose.msra.mxu0 0.0
    %4609 = vmatprep.subr.mxu0 0.0
    %4610 = vmatpush1.xpose.msra.mxu0 0.0
    %4611 = vmatprep.subr.mxu0 0.0
    %4612 = vmatpush1.xpose.msra.mxu0 0.0
    %4613 = vmatprep.subr.mxu0 0.0
    %4614 = vmatpush1.xpose.msra.mxu0 0.0
    %4615 = vmatprep.subr.mxu0 0.0
    %4616 = vmatpush1.xpose.msra.mxu0 0.0
    %4617 = vmatprep.subr.mxu0 0.0
    %4618 = vmatpush1.xpose.msra.mxu0 0.0
    %4619 = vmatprep.subr.mxu0 0.0
    %4620 = vmatpush1.xpose.msra.mxu0 0.0
    %4621 = vmatprep.subr.mxu0 0.0
    %4622 = vmatpush1.xpose.msra.mxu0 0.0
    %4623 = vmatprep.subr.mxu0 0.0
    %4624 = vmatpush1.xpose.msra.mxu0 %v4591
    %4625 = vmatprep.subr.mxu0 0.0
    %4626 = vmatpush2.xpose.msra.mxu0 0.0
    %4627 = vmatprep.subr.mxu0 0.0
    %4628 = vmatpush2.xpose.msra.mxu0 0.0
    %4629 = vmatprep.subr.mxu0 0.0
    %4630 = vmatpush2.xpose.msra.mxu0 0.0
    %4631 = vmatprep.subr.mxu0 0.0
    %4632 = vmatpush2.xpose.msra.mxu0 0.0
    %4633 = vmatprep.subr.mxu0 0.0
    %4634 = vmatpush2.xpose.msra.mxu0 0.0
    %4635 = vmatprep.subr.mxu0 0.0
    %4636 = vmatpush2.xpose.msra.mxu0 0.0
    %4637 = vmatprep.subr.mxu0 0.0
    %4638 = vmatpush2.xpose.msra.mxu0 0.0
    %4639 = vmatprep.subr.mxu0 0.0
    %4640 = vmatpush2.xpose.msra.mxu0 0.0
    %4641 = vmatprep.subr.mxu0 0.0
    %4642 = vmatpush2.xpose.msra.mxu0 0.0
    %4643 = vmatprep.subr.mxu0 0.0
    %4644 = vmatpush2.xpose.msra.mxu0 0.0
    %4645 = vmatprep.subr.mxu0 0.0
    %4646 = vmatpush2.xpose.msra.mxu0 0.0
    %4647 = vmatprep.subr.mxu0 0.0
    %4648 = vmatpush2.xpose.msra.mxu0 0.0
    %4649 = vmatprep.subr.mxu0 0.0
    %4650 = vmatpush2.xpose.msra.mxu0 0.0
    %4651 = vmatprep.subr.mxu0 0.0
    %4652 = vmatpush2.xpose.msra.mxu0 0.0
    %4653 = vmatprep.subr.mxu0 0.0
    %4654 = vmatpush2.xpose.msra.mxu0 0.0
    %4655 = vmatprep.subr.mxu0 0.0
    %4656 = vmatpush2.xpose.msra.mxu0 0.0
    %4657 = vmatprep.mubr.f32.mxu0 0.0
    %4658 = vmatmul.mubr.f32.gmra.mxu0 %v4589
    %v4659 = vpop.f32.mrf.mxu0
    %v4660 = vadd.f32 0.0, %v4659
    %v4661 = vpop.f32.mrf.mxu0
    %4662 = vdwg.mxu0
    %v4663 = vmul.f32 %v4121, 0.35355338
    %v4664 = vmul.f32 %v4198, 0.35355338
    %v4665 = vmul.f32 %v4275, 0.35355338
    %v4666 = vmul.f32 %v4352, 0.35355338
    %v4667 = vmul.f32 %v4429, 0.35355338
    %v4668 = vmul.f32 %v4506, 0.35355338
    %v4669 = vmul.f32 %v4583, 0.35355338
    %v4670 = vmul.f32 %v4660, 0.35355338
    %v4671 = vadd.f32 %v4663, %v1855
    %v4672 = vadd.f32 %v4664, %v1859
    %v4673 = vadd.f32 %v4665, %v1855
    %v4674 = vadd.f32 %v4666, %v1859
    %v4675 = vadd.f32 %v4667, %v1855
    %v4676 = vadd.f32 %v4668, %v1859
    %v4677 = vadd.f32 %v4669, %v1855
    %v4678 = vadd.f32 %v4670, %v1859
    %v4679 = vsel %vm1228, %v4671, -inf
    %4680 = vmax.xlane.f32.xlu0 %v4679
    %v4681 = vpop.xlane.xlu0 %4680
    %v4682 = vsel %vm1228, %v4672, -inf
    %4683 = vmax.xlane.f32.xlu0 %v4682
    %v4684 = vpop.xlane.xlu0 %4683
    %v4685 = vsel %vm1228, %v4673, -inf
    %4686 = vmax.xlane.f32.xlu0 %v4685
    %v4687 = vpop.xlane.xlu0 %4686
    %v4688 = vsel %vm1228, %v4674, -inf
    %4689 = vmax.xlane.f32.xlu0 %v4688
    %v4690 = vpop.xlane.xlu0 %4689
    %v4691 = vsel %vm1228, %v4675, -inf
    %4692 = vmax.xlane.f32.xlu0 %v4691
    %v4693 = vpop.xlane.xlu0 %4692
    %v4694 = vsel %vm1228, %v4676, -inf
    %4695 = vmax.xlane.f32.xlu0 %v4694
    %v4696 = vpop.xlane.xlu0 %4695
    %v4697 = vsel %vm1228, %v4677, -inf
    %4698 = vmax.xlane.f32.xlu0 %v4697
    %v4699 = vpop.xlane.xlu0 %4698
    %v4700 = vsel %vm1228, %v4678, -inf
    %4701 = vmax.xlane.f32.xlu0 %v4700
    %v4702 = vpop.xlane.xlu0 %4701
    %v4703 = vsub.f32 %v4671, %v4681
    %v4704 = vsub.f32 %v4672, %v4684
    %v4705 = vsub.f32 %v4673, %v4687
    %v4706 = vsub.f32 %v4674, %v4690
    %v4707 = vsub.f32 %v4675, %v4693
    %v4708 = vsub.f32 %v4676, %v4696
    %v4709 = vsub.f32 %v4677, %v4699
    %v4710 = vsub.f32 %v4678, %v4702
    %v4711 = vmul.f32 %v4703, 1.442695
    %v4712 = vpow.pop %v4711
    %v4713 = vmul.f32 %v4704, 1.442695
    %v4714 = vpow.pop %v4713
    %v4715 = vmul.f32 %v4705, 1.442695
    %v4716 = vpow.pop %v4715
    %v4717 = vmul.f32 %v4706, 1.442695
    %v4718 = vpow.pop %v4717
    %v4719 = vmul.f32 %v4707, 1.442695
    %v4720 = vpow.pop %v4719
    %v4721 = vmul.f32 %v4708, 1.442695
    %v4722 = vpow.pop %v4721
    %v4723 = vmul.f32 %v4709, 1.442695
    %v4724 = vpow.pop %v4723
    %v4725 = vmul.f32 %v4710, 1.442695
    %v4726 = vpow.pop %v4725
    %v4727 = vsel %vm1228, %v4712, 0.0
    %4728 = vadd.xlane.f32.xlu0 %v4727
    %v4729 = vpop.xlane.xlu0 %4728
    %v4730 = vsel %vm1228, %v4714, 0.0
    %4731 = vadd.xlane.f32.xlu0 %v4730
    %v4732 = vpop.xlane.xlu0 %4731
    %v4733 = vsel %vm1228, %v4716, 0.0
    %4734 = vadd.xlane.f32.xlu0 %v4733
    %v4735 = vpop.xlane.xlu0 %4734
    %v4736 = vsel %vm1228, %v4718, 0.0
    %4737 = vadd.xlane.f32.xlu0 %v4736
    %v4738 = vpop.xlane.xlu0 %4737
    %v4739 = vsel %vm1228, %v4720, 0.0
    %4740 = vadd.xlane.f32.xlu0 %v4739
    %v4741 = vpop.xlane.xlu0 %4740
    %v4742 = vsel %vm1228, %v4722, 0.0
    %4743 = vadd.xlane.f32.xlu0 %v4742
    %v4744 = vpop.xlane.xlu0 %4743
    %v4745 = vsel %vm1228, %v4724, 0.0
    %4746 = vadd.xlane.f32.xlu0 %v4745
    %v4747 = vpop.xlane.xlu0 %4746
    %v4748 = vsel %vm1228, %v4726, 0.0
    %4749 = vadd.xlane.f32.xlu0 %v4748
    %v4750 = vpop.xlane.xlu0 %4749
    %v4751 = vrcp.pop %v4729
    %v4752 = vrcp.pop %v4732
    %v4753 = vrcp.pop %v4735
    %v4754 = vrcp.pop %v4738
    %v4755 = vrcp.pop %v4741
    %v4756 = vrcp.pop %v4744
    %v4757 = vrcp.pop %v4747
    %v4758 = vrcp.pop %v4750
    %v4759 = vmul.f32 %v4712, %v4751
    %v4760 = vmul.f32 %v4714, %v4752
    %v4761 = vmul.f32 %v4716, %v4753
    %v4762 = vmul.f32 %v4718, %v4754
    %v4763 = vmul.f32 %v4720, %v4755
    %v4764 = vmul.f32 %v4722, %v4756
    %v4765 = vmul.f32 %v4724, %v4757
    %v4766 = vmul.f32 %v4726, %v4758
    %4767 = vrot.lane.b32.xlu0 %v3551, 112
    %v4768 = vpop.permute.xlu0 %4767
    %v4771 = vsel %vm1228, %v4759, 0
    %4773 = vmatprep.subr.mxu0 0.0
    %4774 = vmatpush1.msra.mxu0 0.0
    %4775 = vmatprep.subr.mxu0 0.0
    %4776 = vmatpush1.msra.mxu0 0.0
    %4777 = vmatprep.subr.mxu0 0.0
    %4778 = vmatpush1.msra.mxu0 0.0
    %4779 = vmatprep.subr.mxu0 0.0
    %4780 = vmatpush1.msra.mxu0 0.0
    %4781 = vmatprep.subr.mxu0 0.0
    %4782 = vmatpush1.msra.mxu0 0.0
    %4783 = vmatprep.subr.mxu0 0.0
    %4784 = vmatpush1.msra.mxu0 0.0
    %4785 = vmatprep.subr.mxu0 0.0
    %4786 = vmatpush1.msra.mxu0 0.0
    %4787 = vmatprep.subr.mxu0 0.0
    %4788 = vmatpush1.msra.mxu0 0.0
    %4789 = vmatprep.subr.mxu0 0.0
    %4790 = vmatpush1.msra.mxu0 0.0
    %4791 = vmatprep.subr.mxu0 0.0
    %4792 = vmatpush1.msra.mxu0 0.0
    %4793 = vmatprep.subr.mxu0 0.0
    %4794 = vmatpush1.msra.mxu0 0.0
    %4795 = vmatprep.subr.mxu0 0.0
    %4796 = vmatpush1.msra.mxu0 0.0
    %4797 = vmatprep.subr.mxu0 0.0
    %4798 = vmatpush1.msra.mxu0 0.0
    %4799 = vmatprep.subr.mxu0 0.0
    %4800 = vmatpush1.msra.mxu0 0.0
    %4801 = vmatprep.subr.mxu0 0.0
    %4802 = vmatpush1.msra.mxu0 0.0
    %4803 = vmatprep.subr.mxu0 0.0
    %4804 = vmatpush1.msra.mxu0 %v4768
    %4805 = vmatprep.subr.mxu0 0.0
    %4806 = vmatpush2.msra.mxu0 0.0
    %4807 = vmatprep.subr.mxu0 0.0
    %4808 = vmatpush2.msra.mxu0 0.0
    %4809 = vmatprep.subr.mxu0 0.0
    %4810 = vmatpush2.msra.mxu0 0.0
    %4811 = vmatprep.subr.mxu0 0.0
    %4812 = vmatpush2.msra.mxu0 0.0
    %4813 = vmatprep.subr.mxu0 0.0
    %4814 = vmatpush2.msra.mxu0 0.0
    %4815 = vmatprep.subr.mxu0 0.0
    %4816 = vmatpush2.msra.mxu0 0.0
    %4817 = vmatprep.subr.mxu0 0.0
    %4818 = vmatpush2.msra.mxu0 0.0
    %4819 = vmatprep.subr.mxu0 0.0
    %4820 = vmatpush2.msra.mxu0 0.0
    %4821 = vmatprep.subr.mxu0 0.0
    %4822 = vmatpush2.msra.mxu0 0.0
    %4823 = vmatprep.subr.mxu0 0.0
    %4824 = vmatpush2.msra.mxu0 0.0
    %4825 = vmatprep.subr.mxu0 0.0
    %4826 = vmatpush2.msra.mxu0 0.0
    %4827 = vmatprep.subr.mxu0 0.0
    %4828 = vmatpush2.msra.mxu0 0.0
    %4829 = vmatprep.subr.mxu0 0.0
    %4830 = vmatpush2.msra.mxu0 0.0
    %4831 = vmatprep.subr.mxu0 0.0
    %4832 = vmatpush2.msra.mxu0 0.0
    %4833 = vmatprep.subr.mxu0 0.0
    %4834 = vmatpush2.msra.mxu0 0.0
    %4835 = vmatprep.subr.mxu0 0.0
    %4836 = vmatpush2.msra.mxu0 0.0
    %4837 = vmatprep.mubr.f32.mxu0 0.0
    %4838 = vmatmul.mubr.f32.gmra.mxu0 %v4771
    %v4839 = vpop.f32.mrf.mxu0
    %v4840 = vadd.f32 0.0, %v4839
    %v4841 = vpop.f32.mrf.mxu0
    %4842 = vdwg.mxu0
    %4843 = vrot.lane.b32.xlu0 %v3624, 112
    %v4844 = vpop.permute.xlu0 %4843
    %v4847 = vsel %vm1228, %v4760, 0
    %4849 = vmatprep.subr.mxu0 0.0
    %4850 = vmatpush1.msra.mxu0 0.0
    %4851 = vmatprep.subr.mxu0 0.0
    %4852 = vmatpush1.msra.mxu0 0.0
    %4853 = vmatprep.subr.mxu0 0.0
    %4854 = vmatpush1.msra.mxu0 0.0
    %4855 = vmatprep.subr.mxu0 0.0
    %4856 = vmatpush1.msra.mxu0 0.0
    %4857 = vmatprep.subr.mxu0 0.0
    %4858 = vmatpush1.msra.mxu0 0.0
    %4859 = vmatprep.subr.mxu0 0.0
    %4860 = vmatpush1.msra.mxu0 0.0
    %4861 = vmatprep.subr.mxu0 0.0
    %4862 = vmatpush1.msra.mxu0 0.0
    %4863 = vmatprep.subr.mxu0 0.0
    %4864 = vmatpush1.msra.mxu0 0.0
    %4865 = vmatprep.subr.mxu0 0.0
    %4866 = vmatpush1.msra.mxu0 0.0
    %4867 = vmatprep.subr.mxu0 0.0
    %4868 = vmatpush1.msra.mxu0 0.0
    %4869 = vmatprep.subr.mxu0 0.0
    %4870 = vmatpush1.msra.mxu0 0.0
    %4871 = vmatprep.subr.mxu0 0.0
    %4872 = vmatpush1.msra.mxu0 0.0
    %4873 = vmatprep.subr.mxu0 0.0
    %4874 = vmatpush1.msra.mxu0 0.0
    %4875 = vmatprep.subr.mxu0 0.0
    %4876 = vmatpush1.msra.mxu0 0.0
    %4877 = vmatprep.subr.mxu0 0.0
    %4878 = vmatpush1.msra.mxu0 0.0
    %4879 = vmatprep.subr.mxu0 0.0
    %4880 = vmatpush1.msra.mxu0 %v4844
    %4881 = vmatprep.subr.mxu0 0.0
    %4882 = vmatpush2.msra.mxu0 0.0
    %4883 = vmatprep.subr.mxu0 0.0
    %4884 = vmatpush2.msra.mxu0 0.0
    %4885 = vmatprep.subr.mxu0 0.0
    %4886 = vmatpush2.msra.mxu0 0.0
    %4887 = vmatprep.subr.mxu0 0.0
    %4888 = vmatpush2.msra.mxu0 0.0
    %4889 = vmatprep.subr.mxu0 0.0
    %4890 = vmatpush2.msra.mxu0 0.0
    %4891 = vmatprep.subr.mxu0 0.0
    %4892 = vmatpush2.msra.mxu0 0.0
    %4893 = vmatprep.subr.mxu0 0.0
    %4894 = vmatpush2.msra.mxu0 0.0
    %4895 = vmatprep.subr.mxu0 0.0
    %4896 = vmatpush2.msra.mxu0 0.0
    %4897 = vmatprep.subr.mxu0 0.0
    %4898 = vmatpush2.msra.mxu0 0.0
    %4899 = vmatprep.subr.mxu0 0.0
    %4900 = vmatpush2.msra.mxu0 0.0
    %4901 = vmatprep.subr.mxu0 0.0
    %4902 = vmatpush2.msra.mxu0 0.0
    %4903 = vmatprep.subr.mxu0 0.0
    %4904 = vmatpush2.msra.mxu0 0.0
    %4905 = vmatprep.subr.mxu0 0.0
    %4906 = vmatpush2.msra.mxu0 0.0
    %4907 = vmatprep.subr.mxu0 0.0
    %4908 = vmatpush2.msra.mxu0 0.0
    %4909 = vmatprep.subr.mxu0 0.0
    %4910 = vmatpush2.msra.mxu0 0.0
    %4911 = vmatprep.subr.mxu0 0.0
    %4912 = vmatpush2.msra.mxu0 0.0
    %4913 = vmatprep.mubr.f32.mxu0 0.0
    %4914 = vmatmul.mubr.f32.gmra.mxu0 %v4847
    %v4915 = vpop.f32.mrf.mxu0
    %v4916 = vadd.f32 0.0, %v4915
    %v4917 = vpop.f32.mrf.mxu0
    %4918 = vdwg.mxu0
    %4919 = vrot.lane.b32.xlu0 %v3694, 112
    %v4920 = vpop.permute.xlu0 %4919
    %v4923 = vsel %vm1228, %v4761, 0
    %4925 = vmatprep.subr.mxu0 0.0
    %4926 = vmatpush1.msra.mxu0 0.0
    %4927 = vmatprep.subr.mxu0 0.0
    %4928 = vmatpush1.msra.mxu0 0.0
    %4929 = vmatprep.subr.mxu0 0.0
    %4930 = vmatpush1.msra.mxu0 0.0
    %4931 = vmatprep.subr.mxu0 0.0
    %4932 = vmatpush1.msra.mxu0 0.0
    %4933 = vmatprep.subr.mxu0 0.0
    %4934 = vmatpush1.msra.mxu0 0.0
    %4935 = vmatprep.subr.mxu0 0.0
    %4936 = vmatpush1.msra.mxu0 0.0
    %4937 = vmatprep.subr.mxu0 0.0
    %4938 = vmatpush1.msra.mxu0 0.0
    %4939 = vmatprep.subr.mxu0 0.0
    %4940 = vmatpush1.msra.mxu0 0.0
    %4941 = vmatprep.subr.mxu0 0.0
    %4942 = vmatpush1.msra.mxu0 0.0
    %4943 = vmatprep.subr.mxu0 0.0
    %4944 = vmatpush1.msra.mxu0 0.0
    %4945 = vmatprep.subr.mxu0 0.0
    %4946 = vmatpush1.msra.mxu0 0.0
    %4947 = vmatprep.subr.mxu0 0.0
    %4948 = vmatpush1.msra.mxu0 0.0
    %4949 = vmatprep.subr.mxu0 0.0
    %4950 = vmatpush1.msra.mxu0 0.0
    %4951 = vmatprep.subr.mxu0 0.0
    %4952 = vmatpush1.msra.mxu0 0.0
    %4953 = vmatprep.subr.mxu0 0.0
    %4954 = vmatpush1.msra.mxu0 0.0
    %4955 = vmatprep.subr.mxu0 0.0
    %4956 = vmatpush1.msra.mxu0 %v4920
    %4957 = vmatprep.subr.mxu0 0.0
    %4958 = vmatpush2.msra.mxu0 0.0
    %4959 = vmatprep.subr.mxu0 0.0
    %4960 = vmatpush2.msra.mxu0 0.0
    %4961 = vmatprep.subr.mxu0 0.0
    %4962 = vmatpush2.msra.mxu0 0.0
    %4963 = vmatprep.subr.mxu0 0.0
    %4964 = vmatpush2.msra.mxu0 0.0
    %4965 = vmatprep.subr.mxu0 0.0
    %4966 = vmatpush2.msra.mxu0 0.0
    %4967 = vmatprep.subr.mxu0 0.0
    %4968 = vmatpush2.msra.mxu0 0.0
    %4969 = vmatprep.subr.mxu0 0.0
    %4970 = vmatpush2.msra.mxu0 0.0
    %4971 = vmatprep.subr.mxu0 0.0
    %4972 = vmatpush2.msra.mxu0 0.0
    %4973 = vmatprep.subr.mxu0 0.0
    %4974 = vmatpush2.msra.mxu0 0.0
    %4975 = vmatprep.subr.mxu0 0.0
    %4976 = vmatpush2.msra.mxu0 0.0
    %4977 = vmatprep.subr.mxu0 0.0
    %4978 = vmatpush2.msra.mxu0 0.0
    %4979 = vmatprep.subr.mxu0 0.0
    %4980 = vmatpush2.msra.mxu0 0.0
    %4981 = vmatprep.subr.mxu0 0.0
    %4982 = vmatpush2.msra.mxu0 0.0
    %4983 = vmatprep.subr.mxu0 0.0
    %4984 = vmatpush2.msra.mxu0 0.0
    %4985 = vmatprep.subr.mxu0 0.0
    %4986 = vmatpush2.msra.mxu0 0.0
    %4987 = vmatprep.subr.mxu0 0.0
    %4988 = vmatpush2.msra.mxu0 0.0
    %4989 = vmatprep.mubr.f32.mxu0 0.0
    %4990 = vmatmul.mubr.f32.gmra.mxu0 %v4923
    %v4991 = vpop.f32.mrf.mxu0
    %v4992 = vadd.f32 0.0, %v4991
    %v4993 = vpop.f32.mrf.mxu0
    %4994 = vdwg.mxu0
    %4995 = vrot.lane.b32.xlu0 %v3764, 112
    %v4996 = vpop.permute.xlu0 %4995
    %v4999 = vsel %vm1228, %v4762, 0
    %5001 = vmatprep.subr.mxu0 0.0
    %5002 = vmatpush1.msra.mxu0 0.0
    %5003 = vmatprep.subr.mxu0 0.0
    %5004 = vmatpush1.msra.mxu0 0.0
    %5005 = vmatprep.subr.mxu0 0.0
    %5006 = vmatpush1.msra.mxu0 0.0
    %5007 = vmatprep.subr.mxu0 0.0
    %5008 = vmatpush1.msra.mxu0 0.0
    %5009 = vmatprep.subr.mxu0 0.0
    %5010 = vmatpush1.msra.mxu0 0.0
    %5011 = vmatprep.subr.mxu0 0.0
    %5012 = vmatpush1.msra.mxu0 0.0
    %5013 = vmatprep.subr.mxu0 0.0
    %5014 = vmatpush1.msra.mxu0 0.0
    %5015 = vmatprep.subr.mxu0 0.0
    %5016 = vmatpush1.msra.mxu0 0.0
    %5017 = vmatprep.subr.mxu0 0.0
    %5018 = vmatpush1.msra.mxu0 0.0
    %5019 = vmatprep.subr.mxu0 0.0
    %5020 = vmatpush1.msra.mxu0 0.0
    %5021 = vmatprep.subr.mxu0 0.0
    %5022 = vmatpush1.msra.mxu0 0.0
    %5023 = vmatprep.subr.mxu0 0.0
    %5024 = vmatpush1.msra.mxu0 0.0
    %5025 = vmatprep.subr.mxu0 0.0
    %5026 = vmatpush1.msra.mxu0 0.0
    %5027 = vmatprep.subr.mxu0 0.0
    %5028 = vmatpush1.msra.mxu0 0.0
    %5029 = vmatprep.subr.mxu0 0.0
    %5030 = vmatpush1.msra.mxu0 0.0
    %5031 = vmatprep.subr.mxu0 0.0
    %5032 = vmatpush1.msra.mxu0 %v4996
    %5033 = vmatprep.subr.mxu0 0.0
    %5034 = vmatpush2.msra.mxu0 0.0
    %5035 = vmatprep.subr.mxu0 0.0
    %5036 = vmatpush2.msra.mxu0 0.0
    %5037 = vmatprep.subr.mxu0 0.0
    %5038 = vmatpush2.msra.mxu0 0.0
    %5039 = vmatprep.subr.mxu0 0.0
    %5040 = vmatpush2.msra.mxu0 0.0
    %5041 = vmatprep.subr.mxu0 0.0
    %5042 = vmatpush2.msra.mxu0 0.0
    %5043 = vmatprep.subr.mxu0 0.0
    %5044 = vmatpush2.msra.mxu0 0.0
    %5045 = vmatprep.subr.mxu0 0.0
    %5046 = vmatpush2.msra.mxu0 0.0
    %5047 = vmatprep.subr.mxu0 0.0
    %5048 = vmatpush2.msra.mxu0 0.0
    %5049 = vmatprep.subr.mxu0 0.0
    %5050 = vmatpush2.msra.mxu0 0.0
    %5051 = vmatprep.subr.mxu0 0.0
    %5052 = vmatpush2.msra.mxu0 0.0
    %5053 = vmatprep.subr.mxu0 0.0
    %5054 = vmatpush2.msra.mxu0 0.0
    %5055 = vmatprep.subr.mxu0 0.0
    %5056 = vmatpush2.msra.mxu0 0.0
    %5057 = vmatprep.subr.mxu0 0.0
    %5058 = vmatpush2.msra.mxu0 0.0
    %5059 = vmatprep.subr.mxu0 0.0
    %5060 = vmatpush2.msra.mxu0 0.0
    %5061 = vmatprep.subr.mxu0 0.0
    %5062 = vmatpush2.msra.mxu0 0.0
    %5063 = vmatprep.subr.mxu0 0.0
    %5064 = vmatpush2.msra.mxu0 0.0
    %5065 = vmatprep.mubr.f32.mxu0 0.0
    %5066 = vmatmul.mubr.f32.gmra.mxu0 %v4999
    %v5067 = vpop.f32.mrf.mxu0
    %v5068 = vadd.f32 0.0, %v5067
    %v5069 = vpop.f32.mrf.mxu0
    %5070 = vdwg.mxu0
    %5071 = vrot.lane.b32.xlu0 %v3834, 112
    %v5072 = vpop.permute.xlu0 %5071
    %v5075 = vsel %vm1228, %v4763, 0
    %5077 = vmatprep.subr.mxu0 0.0
    %5078 = vmatpush1.msra.mxu0 0.0
    %5079 = vmatprep.subr.mxu0 0.0
    %5080 = vmatpush1.msra.mxu0 0.0
    %5081 = vmatprep.subr.mxu0 0.0
    %5082 = vmatpush1.msra.mxu0 0.0
    %5083 = vmatprep.subr.mxu0 0.0
    %5084 = vmatpush1.msra.mxu0 0.0
    %5085 = vmatprep.subr.mxu0 0.0
    %5086 = vmatpush1.msra.mxu0 0.0
    %5087 = vmatprep.subr.mxu0 0.0
    %5088 = vmatpush1.msra.mxu0 0.0
    %5089 = vmatprep.subr.mxu0 0.0
    %5090 = vmatpush1.msra.mxu0 0.0
    %5091 = vmatprep.subr.mxu0 0.0
    %5092 = vmatpush1.msra.mxu0 0.0
    %5093 = vmatprep.subr.mxu0 0.0
    %5094 = vmatpush1.msra.mxu0 0.0
    %5095 = vmatprep.subr.mxu0 0.0
    %5096 = vmatpush1.msra.mxu0 0.0
    %5097 = vmatprep.subr.mxu0 0.0
    %5098 = vmatpush1.msra.mxu0 0.0
    %5099 = vmatprep.subr.mxu0 0.0
    %5100 = vmatpush1.msra.mxu0 0.0
    %5101 = vmatprep.subr.mxu0 0.0
    %5102 = vmatpush1.msra.mxu0 0.0
    %5103 = vmatprep.subr.mxu0 0.0
    %5104 = vmatpush1.msra.mxu0 0.0
    %5105 = vmatprep.subr.mxu0 0.0
    %5106 = vmatpush1.msra.mxu0 0.0
    %5107 = vmatprep.subr.mxu0 0.0
    %5108 = vmatpush1.msra.mxu0 %v5072
    %5109 = vmatprep.subr.mxu0 0.0
    %5110 = vmatpush2.msra.mxu0 0.0
    %5111 = vmatprep.subr.mxu0 0.0
    %5112 = vmatpush2.msra.mxu0 0.0
    %5113 = vmatprep.subr.mxu0 0.0
    %5114 = vmatpush2.msra.mxu0 0.0
    %5115 = vmatprep.subr.mxu0 0.0
    %5116 = vmatpush2.msra.mxu0 0.0
    %5117 = vmatprep.subr.mxu0 0.0
    %5118 = vmatpush2.msra.mxu0 0.0
    %5119 = vmatprep.subr.mxu0 0.0
    %5120 = vmatpush2.msra.mxu0 0.0
    %5121 = vmatprep.subr.mxu0 0.0
    %5122 = vmatpush2.msra.mxu0 0.0
    %5123 = vmatprep.subr.mxu0 0.0
    %5124 = vmatpush2.msra.mxu0 0.0
    %5125 = vmatprep.subr.mxu0 0.0
    %5126 = vmatpush2.msra.mxu0 0.0
    %5127 = vmatprep.subr.mxu0 0.0
    %5128 = vmatpush2.msra.mxu0 0.0
    %5129 = vmatprep.subr.mxu0 0.0
    %5130 = vmatpush2.msra.mxu0 0.0
    %5131 = vmatprep.subr.mxu0 0.0
    %5132 = vmatpush2.msra.mxu0 0.0
    %5133 = vmatprep.subr.mxu0 0.0
    %5134 = vmatpush2.msra.mxu0 0.0
    %5135 = vmatprep.subr.mxu0 0.0
    %5136 = vmatpush2.msra.mxu0 0.0
    %5137 = vmatprep.subr.mxu0 0.0
    %5138 = vmatpush2.msra.mxu0 0.0
    %5139 = vmatprep.subr.mxu0 0.0
    %5140 = vmatpush2.msra.mxu0 0.0
    %5141 = vmatprep.mubr.f32.mxu0 0.0
    %5142 = vmatmul.mubr.f32.gmra.mxu0 %v5075
    %v5143 = vpop.f32.mrf.mxu0
    %v5144 = vadd.f32 0.0, %v5143
    %v5145 = vpop.f32.mrf.mxu0
    %5146 = vdwg.mxu0
    %5147 = vrot.lane.b32.xlu0 %v3904, 112
    %v5148 = vpop.permute.xlu0 %5147
    %v5151 = vsel %vm1228, %v4764, 0
    %5153 = vmatprep.subr.mxu0 0.0
    %5154 = vmatpush1.msra.mxu0 0.0
    %5155 = vmatprep.subr.mxu0 0.0
    %5156 = vmatpush1.msra.mxu0 0.0
    %5157 = vmatprep.subr.mxu0 0.0
    %5158 = vmatpush1.msra.mxu0 0.0
    %5159 = vmatprep.subr.mxu0 0.0
    %5160 = vmatpush1.msra.mxu0 0.0
    %5161 = vmatprep.subr.mxu0 0.0
    %5162 = vmatpush1.msra.mxu0 0.0
    %5163 = vmatprep.subr.mxu0 0.0
    %5164 = vmatpush1.msra.mxu0 0.0
    %5165 = vmatprep.subr.mxu0 0.0
    %5166 = vmatpush1.msra.mxu0 0.0
    %5167 = vmatprep.subr.mxu0 0.0
    %5168 = vmatpush1.msra.mxu0 0.0
    %5169 = vmatprep.subr.mxu0 0.0
    %5170 = vmatpush1.msra.mxu0 0.0
    %5171 = vmatprep.subr.mxu0 0.0
    %5172 = vmatpush1.msra.mxu0 0.0
    %5173 = vmatprep.subr.mxu0 0.0
    %5174 = vmatpush1.msra.mxu0 0.0
    %5175 = vmatprep.subr.mxu0 0.0
    %5176 = vmatpush1.msra.mxu0 0.0
    %5177 = vmatprep.subr.mxu0 0.0
    %5178 = vmatpush1.msra.mxu0 0.0
    %5179 = vmatprep.subr.mxu0 0.0
    %5180 = vmatpush1.msra.mxu0 0.0
    %5181 = vmatprep.subr.mxu0 0.0
    %5182 = vmatpush1.msra.mxu0 0.0
    %5183 = vmatprep.subr.mxu0 0.0
    %5184 = vmatpush1.msra.mxu0 %v5148
    %5185 = vmatprep.subr.mxu0 0.0
    %5186 = vmatpush2.msra.mxu0 0.0
    %5187 = vmatprep.subr.mxu0 0.0
    %5188 = vmatpush2.msra.mxu0 0.0
    %5189 = vmatprep.subr.mxu0 0.0
    %5190 = vmatpush2.msra.mxu0 0.0
    %5191 = vmatprep.subr.mxu0 0.0
    %5192 = vmatpush2.msra.mxu0 0.0
    %5193 = vmatprep.subr.mxu0 0.0
    %5194 = vmatpush2.msra.mxu0 0.0
    %5195 = vmatprep.subr.mxu0 0.0
    %5196 = vmatpush2.msra.mxu0 0.0
    %5197 = vmatprep.subr.mxu0 0.0
    %5198 = vmatpush2.msra.mxu0 0.0
    %5199 = vmatprep.subr.mxu0 0.0
    %5200 = vmatpush2.msra.mxu0 0.0
    %5201 = vmatprep.subr.mxu0 0.0
    %5202 = vmatpush2.msra.mxu0 0.0
    %5203 = vmatprep.subr.mxu0 0.0
    %5204 = vmatpush2.msra.mxu0 0.0
    %5205 = vmatprep.subr.mxu0 0.0
    %5206 = vmatpush2.msra.mxu0 0.0
    %5207 = vmatprep.subr.mxu0 0.0
    %5208 = vmatpush2.msra.mxu0 0.0
    %5209 = vmatprep.subr.mxu0 0.0
    %5210 = vmatpush2.msra.mxu0 0.0
    %5211 = vmatprep.subr.mxu0 0.0
    %5212 = vmatpush2.msra.mxu0 0.0
    %5213 = vmatprep.subr.mxu0 0.0
    %5214 = vmatpush2.msra.mxu0 0.0
    %5215 = vmatprep.subr.mxu0 0.0
    %5216 = vmatpush2.msra.mxu0 0.0
    %5217 = vmatprep.mubr.f32.mxu0 0.0
    %5218 = vmatmul.mubr.f32.gmra.mxu0 %v5151
    %v5219 = vpop.f32.mrf.mxu0
    %v5220 = vadd.f32 0.0, %v5219
    %v5221 = vpop.f32.mrf.mxu0
    %5222 = vdwg.mxu0
    %5223 = vrot.lane.b32.xlu0 %v3974, 112
    %v5224 = vpop.permute.xlu0 %5223
    %v5227 = vsel %vm1228, %v4765, 0
    %5229 = vmatprep.subr.mxu0 0.0
    %5230 = vmatpush1.msra.mxu0 0.0
    %5231 = vmatprep.subr.mxu0 0.0
    %5232 = vmatpush1.msra.mxu0 0.0
    %5233 = vmatprep.subr.mxu0 0.0
    %5234 = vmatpush1.msra.mxu0 0.0
    %5235 = vmatprep.subr.mxu0 0.0
    %5236 = vmatpush1.msra.mxu0 0.0
    %5237 = vmatprep.subr.mxu0 0.0
    %5238 = vmatpush1.msra.mxu0 0.0
    %5239 = vmatprep.subr.mxu0 0.0
    %5240 = vmatpush1.msra.mxu0 0.0
    %5241 = vmatprep.subr.mxu0 0.0
    %5242 = vmatpush1.msra.mxu0 0.0
    %5243 = vmatprep.subr.mxu0 0.0
    %5244 = vmatpush1.msra.mxu0 0.0
    %5245 = vmatprep.subr.mxu0 0.0
    %5246 = vmatpush1.msra.mxu0 0.0
    %5247 = vmatprep.subr.mxu0 0.0
    %5248 = vmatpush1.msra.mxu0 0.0
    %5249 = vmatprep.subr.mxu0 0.0
    %5250 = vmatpush1.msra.mxu0 0.0
    %5251 = vmatprep.subr.mxu0 0.0
    %5252 = vmatpush1.msra.mxu0 0.0
    %5253 = vmatprep.subr.mxu0 0.0
    %5254 = vmatpush1.msra.mxu0 0.0
    %5255 = vmatprep.subr.mxu0 0.0
    %5256 = vmatpush1.msra.mxu0 0.0
    %5257 = vmatprep.subr.mxu0 0.0
    %5258 = vmatpush1.msra.mxu0 0.0
    %5259 = vmatprep.subr.mxu0 0.0
    %5260 = vmatpush1.msra.mxu0 %v5224
    %5261 = vmatprep.subr.mxu0 0.0
    %5262 = vmatpush2.msra.mxu0 0.0
    %5263 = vmatprep.subr.mxu0 0.0
    %5264 = vmatpush2.msra.mxu0 0.0
    %5265 = vmatprep.subr.mxu0 0.0
    %5266 = vmatpush2.msra.mxu0 0.0
    %5267 = vmatprep.subr.mxu0 0.0
    %5268 = vmatpush2.msra.mxu0 0.0
    %5269 = vmatprep.subr.mxu0 0.0
    %5270 = vmatpush2.msra.mxu0 0.0
    %5271 = vmatprep.subr.mxu0 0.0
    %5272 = vmatpush2.msra.mxu0 0.0
    %5273 = vmatprep.subr.mxu0 0.0
    %5274 = vmatpush2.msra.mxu0 0.0
    %5275 = vmatprep.subr.mxu0 0.0
    %5276 = vmatpush2.msra.mxu0 0.0
    %5277 = vmatprep.subr.mxu0 0.0
    %5278 = vmatpush2.msra.mxu0 0.0
    %5279 = vmatprep.subr.mxu0 0.0
    %5280 = vmatpush2.msra.mxu0 0.0
    %5281 = vmatprep.subr.mxu0 0.0
    %5282 = vmatpush2.msra.mxu0 0.0
    %5283 = vmatprep.subr.mxu0 0.0
    %5284 = vmatpush2.msra.mxu0 0.0
    %5285 = vmatprep.subr.mxu0 0.0
    %5286 = vmatpush2.msra.mxu0 0.0
    %5287 = vmatprep.subr.mxu0 0.0
    %5288 = vmatpush2.msra.mxu0 0.0
    %5289 = vmatprep.subr.mxu0 0.0
    %5290 = vmatpush2.msra.mxu0 0.0
    %5291 = vmatprep.subr.mxu0 0.0
    %5292 = vmatpush2.msra.mxu0 0.0
    %5293 = vmatprep.mubr.f32.mxu0 0.0
    %5294 = vmatmul.mubr.f32.gmra.mxu0 %v5227
    %v5295 = vpop.f32.mrf.mxu0
    %v5296 = vadd.f32 0.0, %v5295
    %v5297 = vpop.f32.mrf.mxu0
    %5298 = vdwg.mxu0
    %5299 = vrot.lane.b32.xlu0 %v4044, 112
    %v5300 = vpop.permute.xlu0 %5299
    %v5303 = vsel %vm1228, %v4766, 0
    %5305 = vmatprep.subr.mxu0 0.0
    %5306 = vmatpush1.msra.mxu0 0.0
    %5307 = vmatprep.subr.mxu0 0.0
    %5308 = vmatpush1.msra.mxu0 0.0
    %5309 = vmatprep.subr.mxu0 0.0
    %5310 = vmatpush1.msra.mxu0 0.0
    %5311 = vmatprep.subr.mxu0 0.0
    %5312 = vmatpush1.msra.mxu0 0.0
    %5313 = vmatprep.subr.mxu0 0.0
    %5314 = vmatpush1.msra.mxu0 0.0
    %5315 = vmatprep.subr.mxu0 0.0
    %5316 = vmatpush1.msra.mxu0 0.0
    %5317 = vmatprep.subr.mxu0 0.0
    %5318 = vmatpush1.msra.mxu0 0.0
    %5319 = vmatprep.subr.mxu0 0.0
    %5320 = vmatpush1.msra.mxu0 0.0
    %5321 = vmatprep.subr.mxu0 0.0
    %5322 = vmatpush1.msra.mxu0 0.0
    %5323 = vmatprep.subr.mxu0 0.0
    %5324 = vmatpush1.msra.mxu0 0.0
    %5325 = vmatprep.subr.mxu0 0.0
    %5326 = vmatpush1.msra.mxu0 0.0
    %5327 = vmatprep.subr.mxu0 0.0
    %5328 = vmatpush1.msra.mxu0 0.0
    %5329 = vmatprep.subr.mxu0 0.0
    %5330 = vmatpush1.msra.mxu0 0.0
    %5331 = vmatprep.subr.mxu0 0.0
    %5332 = vmatpush1.msra.mxu0 0.0
    %5333 = vmatprep.subr.mxu0 0.0
    %5334 = vmatpush1.msra.mxu0 0.0
    %5335 = vmatprep.subr.mxu0 0.0
    %5336 = vmatpush1.msra.mxu0 %v5300
    %5337 = vmatprep.subr.mxu0 0.0
    %5338 = vmatpush2.msra.mxu0 0.0
    %5339 = vmatprep.subr.mxu0 0.0
    %5340 = vmatpush2.msra.mxu0 0.0
    %5341 = vmatprep.subr.mxu0 0.0
    %5342 = vmatpush2.msra.mxu0 0.0
    %5343 = vmatprep.subr.mxu0 0.0
    %5344 = vmatpush2.msra.mxu0 0.0
    %5345 = vmatprep.subr.mxu0 0.0
    %5346 = vmatpush2.msra.mxu0 0.0
    %5347 = vmatprep.subr.mxu0 0.0
    %5348 = vmatpush2.msra.mxu0 0.0
    %5349 = vmatprep.subr.mxu0 0.0
    %5350 = vmatpush2.msra.mxu0 0.0
    %5351 = vmatprep.subr.mxu0 0.0
    %5352 = vmatpush2.msra.mxu0 0.0
    %5353 = vmatprep.subr.mxu0 0.0
    %5354 = vmatpush2.msra.mxu0 0.0
    %5355 = vmatprep.subr.mxu0 0.0
    %5356 = vmatpush2.msra.mxu0 0.0
    %5357 = vmatprep.subr.mxu0 0.0
    %5358 = vmatpush2.msra.mxu0 0.0
    %5359 = vmatprep.subr.mxu0 0.0
    %5360 = vmatpush2.msra.mxu0 0.0
    %5361 = vmatprep.subr.mxu0 0.0
    %5362 = vmatpush2.msra.mxu0 0.0
    %5363 = vmatprep.subr.mxu0 0.0
    %5364 = vmatpush2.msra.mxu0 0.0
    %5365 = vmatprep.subr.mxu0 0.0
    %5366 = vmatpush2.msra.mxu0 0.0
    %5367 = vmatprep.subr.mxu0 0.0
    %5368 = vmatpush2.msra.mxu0 0.0
    %5369 = vmatprep.mubr.f32.mxu0 0.0
    %5370 = vmatmul.mubr.f32.gmra.mxu0 %v5303
    %v5371 = vpop.f32.mrf.mxu0
    %v5372 = vadd.f32 0.0, %v5371
    %v5373 = vpop.f32.mrf.mxu0
    %5374 = vdwg.mxu0
    %s5375 = scalar_lea.vmem %s6, 32
    %v5376 = vld [vmem:[%s5375] sm:$0xff]
    %v5377 = vld [vmem:[%s5375 + $0x8] sm:$0xff]
    %v5378 = vld [vmem:[%s5375 + $0x10] sm:$0xff]
    %v5379 = vld [vmem:[%s5375 + $0x18] sm:$0xff]
    %v5381 = vsel %vm1228, %v4840, 0
    %5383 = vmatprep.subr.mxu0 0.0
    %5384 = vmatpush1.msra.mxu0 0.0
    %5385 = vmatprep.subr.mxu0 0.0
    %5386 = vmatpush1.msra.mxu0 0.0
    %5387 = vmatprep.subr.mxu0 0.0
    %5388 = vmatpush1.msra.mxu0 0.0
    %5389 = vmatprep.subr.mxu0 0.0
    %5390 = vmatpush1.msra.mxu0 0.0
    %5391 = vmatprep.subr.mxu0 0.0
    %5392 = vmatpush1.msra.mxu0 0.0
    %5393 = vmatprep.subr.mxu0 0.0
    %5394 = vmatpush1.msra.mxu0 0.0
    %5395 = vmatprep.subr.mxu0 0.0
    %5396 = vmatpush1.msra.mxu0 0.0
    %5397 = vmatprep.subr.mxu0 0.0
    %5398 = vmatpush1.msra.mxu0 0.0
    %5399 = vmatprep.subr.mxu0 0.0
    %5400 = vmatpush1.msra.mxu0 0.0
    %5401 = vmatprep.subr.mxu0 0.0
    %5402 = vmatpush1.msra.mxu0 0.0
    %5403 = vmatprep.subr.mxu0 0.0
    %5404 = vmatpush1.msra.mxu0 0.0
    %5405 = vmatprep.subr.mxu0 0.0
    %5406 = vmatpush1.msra.mxu0 0.0
    %5407 = vmatprep.subr.mxu0 0.0
    %5408 = vmatpush1.msra.mxu0 0.0
    %5409 = vmatprep.subr.mxu0 0.0
    %5410 = vmatpush1.msra.mxu0 0.0
    %5411 = vmatprep.subr.mxu0 0.0
    %5412 = vmatpush1.msra.mxu0 0.0
    %5413 = vmatprep.subr.mxu0 0.0
    %5414 = vmatpush1.msra.mxu0 %v5376
    %5415 = vmatprep.subr.mxu0 0.0
    %5416 = vmatpush2.msra.mxu0 0.0
    %5417 = vmatprep.subr.mxu0 0.0
    %5418 = vmatpush2.msra.mxu0 0.0
    %5419 = vmatprep.subr.mxu0 0.0
    %5420 = vmatpush2.msra.mxu0 0.0
    %5421 = vmatprep.subr.mxu0 0.0
    %5422 = vmatpush2.msra.mxu0 0.0
    %5423 = vmatprep.subr.mxu0 0.0
    %5424 = vmatpush2.msra.mxu0 0.0
    %5425 = vmatprep.subr.mxu0 0.0
    %5426 = vmatpush2.msra.mxu0 0.0
    %5427 = vmatprep.subr.mxu0 0.0
    %5428 = vmatpush2.msra.mxu0 0.0
    %5429 = vmatprep.subr.mxu0 0.0
    %5430 = vmatpush2.msra.mxu0 0.0
    %5431 = vmatprep.subr.mxu0 0.0
    %5432 = vmatpush2.msra.mxu0 0.0
    %5433 = vmatprep.subr.mxu0 0.0
    %5434 = vmatpush2.msra.mxu0 0.0
    %5435 = vmatprep.subr.mxu0 0.0
    %5436 = vmatpush2.msra.mxu0 0.0
    %5437 = vmatprep.subr.mxu0 0.0
    %5438 = vmatpush2.msra.mxu0 0.0
    %5439 = vmatprep.subr.mxu0 0.0
    %5440 = vmatpush2.msra.mxu0 0.0
    %5441 = vmatprep.subr.mxu0 0.0
    %5442 = vmatpush2.msra.mxu0 0.0
    %5443 = vmatprep.subr.mxu0 0.0
    %5444 = vmatpush2.msra.mxu0 0.0
    %5445 = vmatprep.subr.mxu0 0.0
    %5446 = vmatpush2.msra.mxu0 0.0
    %5447 = vmatprep.mubr.f32.mxu0 0.0
    %5448 = vmatmul.mubr.f32.gmra.mxu0 %v5381
    %v5449 = vpop.f32.mrf.mxu0
    %v5450 = vadd.f32 0.0, %v5449
    %v5451 = vpop.f32.mrf.mxu0
    %5452 = vdwg.mxu0
    %v5454 = vsel %vm1228, %v4916, 0
    %5456 = vmatprep.subr.mxu0 0.0
    %5457 = vmatpush1.msra.mxu0 0.0
    %5458 = vmatprep.subr.mxu0 0.0
    %5459 = vmatpush1.msra.mxu0 0.0
    %5460 = vmatprep.subr.mxu0 0.0
    %5461 = vmatpush1.msra.mxu0 0.0
    %5462 = vmatprep.subr.mxu0 0.0
    %5463 = vmatpush1.msra.mxu0 0.0
    %5464 = vmatprep.subr.mxu0 0.0
    %5465 = vmatpush1.msra.mxu0 0.0
    %5466 = vmatprep.subr.mxu0 0.0
    %5467 = vmatpush1.msra.mxu0 0.0
    %5468 = vmatprep.subr.mxu0 0.0
    %5469 = vmatpush1.msra.mxu0 0.0
    %5470 = vmatprep.subr.mxu0 0.0
    %5471 = vmatpush1.msra.mxu0 0.0
    %5472 = vmatprep.subr.mxu0 0.0
    %5473 = vmatpush1.msra.mxu0 0.0
    %5474 = vmatprep.subr.mxu0 0.0
    %5475 = vmatpush1.msra.mxu0 0.0
    %5476 = vmatprep.subr.mxu0 0.0
    %5477 = vmatpush1.msra.mxu0 0.0
    %5478 = vmatprep.subr.mxu0 0.0
    %5479 = vmatpush1.msra.mxu0 0.0
    %5480 = vmatprep.subr.mxu0 0.0
    %5481 = vmatpush1.msra.mxu0 0.0
    %5482 = vmatprep.subr.mxu0 0.0
    %5483 = vmatpush1.msra.mxu0 0.0
    %5484 = vmatprep.subr.mxu0 0.0
    %5485 = vmatpush1.msra.mxu0 0.0
    %5486 = vmatprep.subr.mxu0 0.0
    %5487 = vmatpush1.msra.mxu0 %v5376
    %5488 = vmatprep.subr.mxu0 0.0
    %5489 = vmatpush2.msra.mxu0 0.0
    %5490 = vmatprep.subr.mxu0 0.0
    %5491 = vmatpush2.msra.mxu0 0.0
    %5492 = vmatprep.subr.mxu0 0.0
    %5493 = vmatpush2.msra.mxu0 0.0
    %5494 = vmatprep.subr.mxu0 0.0
    %5495 = vmatpush2.msra.mxu0 0.0
    %5496 = vmatprep.subr.mxu0 0.0
    %5497 = vmatpush2.msra.mxu0 0.0
    %5498 = vmatprep.subr.mxu0 0.0
    %5499 = vmatpush2.msra.mxu0 0.0
    %5500 = vmatprep.subr.mxu0 0.0
    %5501 = vmatpush2.msra.mxu0 0.0
    %5502 = vmatprep.subr.mxu0 0.0
    %5503 = vmatpush2.msra.mxu0 0.0
    %5504 = vmatprep.subr.mxu0 0.0
    %5505 = vmatpush2.msra.mxu0 0.0
    %5506 = vmatprep.subr.mxu0 0.0
    %5507 = vmatpush2.msra.mxu0 0.0
    %5508 = vmatprep.subr.mxu0 0.0
    %5509 = vmatpush2.msra.mxu0 0.0
    %5510 = vmatprep.subr.mxu0 0.0
    %5511 = vmatpush2.msra.mxu0 0.0
    %5512 = vmatprep.subr.mxu0 0.0
    %5513 = vmatpush2.msra.mxu0 0.0
    %5514 = vmatprep.subr.mxu0 0.0
    %5515 = vmatpush2.msra.mxu0 0.0
    %5516 = vmatprep.subr.mxu0 0.0
    %5517 = vmatpush2.msra.mxu0 0.0
    %5518 = vmatprep.subr.mxu0 0.0
    %5519 = vmatpush2.msra.mxu0 0.0
    %5520 = vmatprep.mubr.f32.mxu0 0.0
    %5521 = vmatmul.mubr.f32.gmra.mxu0 %v5454
    %v5522 = vpop.f32.mrf.mxu0
    %v5523 = vadd.f32 0.0, %v5522
    %v5524 = vpop.f32.mrf.mxu0
    %5525 = vdwg.mxu0
    %v5527 = vsel %vm1228, %v4992, 0
    %5529 = vmatprep.subr.mxu0 0.0
    %5530 = vmatpush1.msra.mxu0 0.0
    %5531 = vmatprep.subr.mxu0 0.0
    %5532 = vmatpush1.msra.mxu0 0.0
    %5533 = vmatprep.subr.mxu0 0.0
    %5534 = vmatpush1.msra.mxu0 0.0
    %5535 = vmatprep.subr.mxu0 0.0
    %5536 = vmatpush1.msra.mxu0 0.0
    %5537 = vmatprep.subr.mxu0 0.0
    %5538 = vmatpush1.msra.mxu0 0.0
    %5539 = vmatprep.subr.mxu0 0.0
    %5540 = vmatpush1.msra.mxu0 0.0
    %5541 = vmatprep.subr.mxu0 0.0
    %5542 = vmatpush1.msra.mxu0 0.0
    %5543 = vmatprep.subr.mxu0 0.0
    %5544 = vmatpush1.msra.mxu0 0.0
    %5545 = vmatprep.subr.mxu0 0.0
    %5546 = vmatpush1.msra.mxu0 0.0
    %5547 = vmatprep.subr.mxu0 0.0
    %5548 = vmatpush1.msra.mxu0 0.0
    %5549 = vmatprep.subr.mxu0 0.0
    %5550 = vmatpush1.msra.mxu0 0.0
    %5551 = vmatprep.subr.mxu0 0.0
    %5552 = vmatpush1.msra.mxu0 0.0
    %5553 = vmatprep.subr.mxu0 0.0
    %5554 = vmatpush1.msra.mxu0 0.0
    %5555 = vmatprep.subr.mxu0 0.0
    %5556 = vmatpush1.msra.mxu0 0.0
    %5557 = vmatprep.subr.mxu0 0.0
    %5558 = vmatpush1.msra.mxu0 0.0
    %5559 = vmatprep.subr.mxu0 0.0
    %5560 = vmatpush1.msra.mxu0 %v5377
    %5561 = vmatprep.subr.mxu0 0.0
    %5562 = vmatpush2.msra.mxu0 0.0
    %5563 = vmatprep.subr.mxu0 0.0
    %5564 = vmatpush2.msra.mxu0 0.0
    %5565 = vmatprep.subr.mxu0 0.0
    %5566 = vmatpush2.msra.mxu0 0.0
    %5567 = vmatprep.subr.mxu0 0.0
    %5568 = vmatpush2.msra.mxu0 0.0
    %5569 = vmatprep.subr.mxu0 0.0
    %5570 = vmatpush2.msra.mxu0 0.0
    %5571 = vmatprep.subr.mxu0 0.0
    %5572 = vmatpush2.msra.mxu0 0.0
    %5573 = vmatprep.subr.mxu0 0.0
    %5574 = vmatpush2.msra.mxu0 0.0
    %5575 = vmatprep.subr.mxu0 0.0
    %5576 = vmatpush2.msra.mxu0 0.0
    %5577 = vmatprep.subr.mxu0 0.0
    %5578 = vmatpush2.msra.mxu0 0.0
    %5579 = vmatprep.subr.mxu0 0.0
    %5580 = vmatpush2.msra.mxu0 0.0
    %5581 = vmatprep.subr.mxu0 0.0
    %5582 = vmatpush2.msra.mxu0 0.0
    %5583 = vmatprep.subr.mxu0 0.0
    %5584 = vmatpush2.msra.mxu0 0.0
    %5585 = vmatprep.subr.mxu0 0.0
    %5586 = vmatpush2.msra.mxu0 0.0
    %5587 = vmatprep.subr.mxu0 0.0
    %5588 = vmatpush2.msra.mxu0 0.0
    %5589 = vmatprep.subr.mxu0 0.0
    %5590 = vmatpush2.msra.mxu0 0.0
    %5591 = vmatprep.subr.mxu0 0.0
    %5592 = vmatpush2.msra.mxu0 0.0
    %5593 = vmatprep.mubr.f32.mxu0 0.0
    %5594 = vmatmul.mubr.f32.gmra.mxu0 %v5527
    %v5595 = vpop.f32.mrf.mxu0
    %v5596 = vadd.f32 0.0, %v5595
    %v5597 = vpop.f32.mrf.mxu0
    %5598 = vdwg.mxu0
    %v5600 = vsel %vm1228, %v5068, 0
    %5602 = vmatprep.subr.mxu0 0.0
    %5603 = vmatpush1.msra.mxu0 0.0
    %5604 = vmatprep.subr.mxu0 0.0
    %5605 = vmatpush1.msra.mxu0 0.0
    %5606 = vmatprep.subr.mxu0 0.0
    %5607 = vmatpush1.msra.mxu0 0.0
    %5608 = vmatprep.subr.mxu0 0.0
    %5609 = vmatpush1.msra.mxu0 0.0
    %5610 = vmatprep.subr.mxu0 0.0
    %5611 = vmatpush1.msra.mxu0 0.0
    %5612 = vmatprep.subr.mxu0 0.0
    %5613 = vmatpush1.msra.mxu0 0.0
    %5614 = vmatprep.subr.mxu0 0.0
    %5615 = vmatpush1.msra.mxu0 0.0
    %5616 = vmatprep.subr.mxu0 0.0
    %5617 = vmatpush1.msra.mxu0 0.0
    %5618 = vmatprep.subr.mxu0 0.0
    %5619 = vmatpush1.msra.mxu0 0.0
    %5620 = vmatprep.subr.mxu0 0.0
    %5621 = vmatpush1.msra.mxu0 0.0
    %5622 = vmatprep.subr.mxu0 0.0
    %5623 = vmatpush1.msra.mxu0 0.0
    %5624 = vmatprep.subr.mxu0 0.0
    %5625 = vmatpush1.msra.mxu0 0.0
    %5626 = vmatprep.subr.mxu0 0.0
    %5627 = vmatpush1.msra.mxu0 0.0
    %5628 = vmatprep.subr.mxu0 0.0
    %5629 = vmatpush1.msra.mxu0 0.0
    %5630 = vmatprep.subr.mxu0 0.0
    %5631 = vmatpush1.msra.mxu0 0.0
    %5632 = vmatprep.subr.mxu0 0.0
    %5633 = vmatpush1.msra.mxu0 %v5377
    %5634 = vmatprep.subr.mxu0 0.0
    %5635 = vmatpush2.msra.mxu0 0.0
    %5636 = vmatprep.subr.mxu0 0.0
    %5637 = vmatpush2.msra.mxu0 0.0
    %5638 = vmatprep.subr.mxu0 0.0
    %5639 = vmatpush2.msra.mxu0 0.0
    %5640 = vmatprep.subr.mxu0 0.0
    %5641 = vmatpush2.msra.mxu0 0.0
    %5642 = vmatprep.subr.mxu0 0.0
    %5643 = vmatpush2.msra.mxu0 0.0
    %5644 = vmatprep.subr.mxu0 0.0
    %5645 = vmatpush2.msra.mxu0 0.0
    %5646 = vmatprep.subr.mxu0 0.0
    %5647 = vmatpush2.msra.mxu0 0.0
    %5648 = vmatprep.subr.mxu0 0.0
    %5649 = vmatpush2.msra.mxu0 0.0
    %5650 = vmatprep.subr.mxu0 0.0
    %5651 = vmatpush2.msra.mxu0 0.0
    %5652 = vmatprep.subr.mxu0 0.0
    %5653 = vmatpush2.msra.mxu0 0.0
    %5654 = vmatprep.subr.mxu0 0.0
    %5655 = vmatpush2.msra.mxu0 0.0
    %5656 = vmatprep.subr.mxu0 0.0
    %5657 = vmatpush2.msra.mxu0 0.0
    %5658 = vmatprep.subr.mxu0 0.0
    %5659 = vmatpush2.msra.mxu0 0.0
    %5660 = vmatprep.subr.mxu0 0.0
    %5661 = vmatpush2.msra.mxu0 0.0
    %5662 = vmatprep.subr.mxu0 0.0
    %5663 = vmatpush2.msra.mxu0 0.0
    %5664 = vmatprep.subr.mxu0 0.0
    %5665 = vmatpush2.msra.mxu0 0.0
    %5666 = vmatprep.mubr.f32.mxu0 0.0
    %5667 = vmatmul.mubr.f32.gmra.mxu0 %v5600
    %v5668 = vpop.f32.mrf.mxu0
    %v5669 = vadd.f32 0.0, %v5668
    %v5670 = vpop.f32.mrf.mxu0
    %5671 = vdwg.mxu0
    %v5673 = vsel %vm1228, %v5144, 0
    %5675 = vmatprep.subr.mxu0 0.0
    %5676 = vmatpush1.msra.mxu0 0.0
    %5677 = vmatprep.subr.mxu0 0.0
    %5678 = vmatpush1.msra.mxu0 0.0
    %5679 = vmatprep.subr.mxu0 0.0
    %5680 = vmatpush1.msra.mxu0 0.0
    %5681 = vmatprep.subr.mxu0 0.0
    %5682 = vmatpush1.msra.mxu0 0.0
    %5683 = vmatprep.subr.mxu0 0.0
    %5684 = vmatpush1.msra.mxu0 0.0
    %5685 = vmatprep.subr.mxu0 0.0
    %5686 = vmatpush1.msra.mxu0 0.0
    %5687 = vmatprep.subr.mxu0 0.0
    %5688 = vmatpush1.msra.mxu0 0.0
    %5689 = vmatprep.subr.mxu0 0.0
    %5690 = vmatpush1.msra.mxu0 0.0
    %5691 = vmatprep.subr.mxu0 0.0
    %5692 = vmatpush1.msra.mxu0 0.0
    %5693 = vmatprep.subr.mxu0 0.0
    %5694 = vmatpush1.msra.mxu0 0.0
    %5695 = vmatprep.subr.mxu0 0.0
    %5696 = vmatpush1.msra.mxu0 0.0
    %5697 = vmatprep.subr.mxu0 0.0
    %5698 = vmatpush1.msra.mxu0 0.0
    %5699 = vmatprep.subr.mxu0 0.0
    %5700 = vmatpush1.msra.mxu0 0.0
    %5701 = vmatprep.subr.mxu0 0.0
    %5702 = vmatpush1.msra.mxu0 0.0
    %5703 = vmatprep.subr.mxu0 0.0
    %5704 = vmatpush1.msra.mxu0 0.0
    %5705 = vmatprep.subr.mxu0 0.0
    %5706 = vmatpush1.msra.mxu0 %v5378
    %5707 = vmatprep.subr.mxu0 0.0
    %5708 = vmatpush2.msra.mxu0 0.0
    %5709 = vmatprep.subr.mxu0 0.0
    %5710 = vmatpush2.msra.mxu0 0.0
    %5711 = vmatprep.subr.mxu0 0.0
    %5712 = vmatpush2.msra.mxu0 0.0
    %5713 = vmatprep.subr.mxu0 0.0
    %5714 = vmatpush2.msra.mxu0 0.0
    %5715 = vmatprep.subr.mxu0 0.0
    %5716 = vmatpush2.msra.mxu0 0.0
    %5717 = vmatprep.subr.mxu0 0.0
    %5718 = vmatpush2.msra.mxu0 0.0
    %5719 = vmatprep.subr.mxu0 0.0
    %5720 = vmatpush2.msra.mxu0 0.0
    %5721 = vmatprep.subr.mxu0 0.0
    %5722 = vmatpush2.msra.mxu0 0.0
    %5723 = vmatprep.subr.mxu0 0.0
    %5724 = vmatpush2.msra.mxu0 0.0
    %5725 = vmatprep.subr.mxu0 0.0
    %5726 = vmatpush2.msra.mxu0 0.0
    %5727 = vmatprep.subr.mxu0 0.0
    %5728 = vmatpush2.msra.mxu0 0.0
    %5729 = vmatprep.subr.mxu0 0.0
    %5730 = vmatpush2.msra.mxu0 0.0
    %5731 = vmatprep.subr.mxu0 0.0
    %5732 = vmatpush2.msra.mxu0 0.0
    %5733 = vmatprep.subr.mxu0 0.0
    %5734 = vmatpush2.msra.mxu0 0.0
    %5735 = vmatprep.subr.mxu0 0.0
    %5736 = vmatpush2.msra.mxu0 0.0
    %5737 = vmatprep.subr.mxu0 0.0
    %5738 = vmatpush2.msra.mxu0 0.0
    %5739 = vmatprep.mubr.f32.mxu0 0.0
    %5740 = vmatmul.mubr.f32.gmra.mxu0 %v5673
    %v5741 = vpop.f32.mrf.mxu0
    %v5742 = vadd.f32 0.0, %v5741
    %v5743 = vpop.f32.mrf.mxu0
    %5744 = vdwg.mxu0
    %v5746 = vsel %vm1228, %v5220, 0
    %5748 = vmatprep.subr.mxu0 0.0
    %5749 = vmatpush1.msra.mxu0 0.0
    %5750 = vmatprep.subr.mxu0 0.0
    %5751 = vmatpush1.msra.mxu0 0.0
    %5752 = vmatprep.subr.mxu0 0.0
    %5753 = vmatpush1.msra.mxu0 0.0
    %5754 = vmatprep.subr.mxu0 0.0
    %5755 = vmatpush1.msra.mxu0 0.0
    %5756 = vmatprep.subr.mxu0 0.0
    %5757 = vmatpush1.msra.mxu0 0.0
    %5758 = vmatprep.subr.mxu0 0.0
    %5759 = vmatpush1.msra.mxu0 0.0
    %5760 = vmatprep.subr.mxu0 0.0
    %5761 = vmatpush1.msra.mxu0 0.0
    %5762 = vmatprep.subr.mxu0 0.0
    %5763 = vmatpush1.msra.mxu0 0.0
    %5764 = vmatprep.subr.mxu0 0.0
    %5765 = vmatpush1.msra.mxu0 0.0
    %5766 = vmatprep.subr.mxu0 0.0
    %5767 = vmatpush1.msra.mxu0 0.0
    %5768 = vmatprep.subr.mxu0 0.0
    %5769 = vmatpush1.msra.mxu0 0.0
    %5770 = vmatprep.subr.mxu0 0.0
    %5771 = vmatpush1.msra.mxu0 0.0
    %5772 = vmatprep.subr.mxu0 0.0
    %5773 = vmatpush1.msra.mxu0 0.0
    %5774 = vmatprep.subr.mxu0 0.0
    %5775 = vmatpush1.msra.mxu0 0.0
    %5776 = vmatprep.subr.mxu0 0.0
    %5777 = vmatpush1.msra.mxu0 0.0
    %5778 = vmatprep.subr.mxu0 0.0
    %5779 = vmatpush1.msra.mxu0 %v5378
    %5780 = vmatprep.subr.mxu0 0.0
    %5781 = vmatpush2.msra.mxu0 0.0
    %5782 = vmatprep.subr.mxu0 0.0
    %5783 = vmatpush2.msra.mxu0 0.0
    %5784 = vmatprep.subr.mxu0 0.0
    %5785 = vmatpush2.msra.mxu0 0.0
    %5786 = vmatprep.subr.mxu0 0.0
    %5787 = vmatpush2.msra.mxu0 0.0
    %5788 = vmatprep.subr.mxu0 0.0
    %5789 = vmatpush2.msra.mxu0 0.0
    %5790 = vmatprep.subr.mxu0 0.0
    %5791 = vmatpush2.msra.mxu0 0.0
    %5792 = vmatprep.subr.mxu0 0.0
    %5793 = vmatpush2.msra.mxu0 0.0
    %5794 = vmatprep.subr.mxu0 0.0
    %5795 = vmatpush2.msra.mxu0 0.0
    %5796 = vmatprep.subr.mxu0 0.0
    %5797 = vmatpush2.msra.mxu0 0.0
    %5798 = vmatprep.subr.mxu0 0.0
    %5799 = vmatpush2.msra.mxu0 0.0
    %5800 = vmatprep.subr.mxu0 0.0
    %5801 = vmatpush2.msra.mxu0 0.0
    %5802 = vmatprep.subr.mxu0 0.0
    %5803 = vmatpush2.msra.mxu0 0.0
    %5804 = vmatprep.subr.mxu0 0.0
    %5805 = vmatpush2.msra.mxu0 0.0
    %5806 = vmatprep.subr.mxu0 0.0
    %5807 = vmatpush2.msra.mxu0 0.0
    %5808 = vmatprep.subr.mxu0 0.0
    %5809 = vmatpush2.msra.mxu0 0.0
    %5810 = vmatprep.subr.mxu0 0.0
    %5811 = vmatpush2.msra.mxu0 0.0
    %5812 = vmatprep.mubr.f32.mxu0 0.0
    %5813 = vmatmul.mubr.f32.gmra.mxu0 %v5746
    %v5814 = vpop.f32.mrf.mxu0
    %v5815 = vadd.f32 0.0, %v5814
    %v5816 = vpop.f32.mrf.mxu0
    %5817 = vdwg.mxu0
    %v5819 = vsel %vm1228, %v5296, 0
    %5821 = vmatprep.subr.mxu0 0.0
    %5822 = vmatpush1.msra.mxu0 0.0
    %5823 = vmatprep.subr.mxu0 0.0
    %5824 = vmatpush1.msra.mxu0 0.0
    %5825 = vmatprep.subr.mxu0 0.0
    %5826 = vmatpush1.msra.mxu0 0.0
    %5827 = vmatprep.subr.mxu0 0.0
    %5828 = vmatpush1.msra.mxu0 0.0
    %5829 = vmatprep.subr.mxu0 0.0
    %5830 = vmatpush1.msra.mxu0 0.0
    %5831 = vmatprep.subr.mxu0 0.0
    %5832 = vmatpush1.msra.mxu0 0.0
    %5833 = vmatprep.subr.mxu0 0.0
    %5834 = vmatpush1.msra.mxu0 0.0
    %5835 = vmatprep.subr.mxu0 0.0
    %5836 = vmatpush1.msra.mxu0 0.0
    %5837 = vmatprep.subr.mxu0 0.0
    %5838 = vmatpush1.msra.mxu0 0.0
    %5839 = vmatprep.subr.mxu0 0.0
    %5840 = vmatpush1.msra.mxu0 0.0
    %5841 = vmatprep.subr.mxu0 0.0
    %5842 = vmatpush1.msra.mxu0 0.0
    %5843 = vmatprep.subr.mxu0 0.0
    %5844 = vmatpush1.msra.mxu0 0.0
    %5845 = vmatprep.subr.mxu0 0.0
    %5846 = vmatpush1.msra.mxu0 0.0
    %5847 = vmatprep.subr.mxu0 0.0
    %5848 = vmatpush1.msra.mxu0 0.0
    %5849 = vmatprep.subr.mxu0 0.0
    %5850 = vmatpush1.msra.mxu0 0.0
    %5851 = vmatprep.subr.mxu0 0.0
    %5852 = vmatpush1.msra.mxu0 %v5379
    %5853 = vmatprep.subr.mxu0 0.0
    %5854 = vmatpush2.msra.mxu0 0.0
    %5855 = vmatprep.subr.mxu0 0.0
    %5856 = vmatpush2.msra.mxu0 0.0
    %5857 = vmatprep.subr.mxu0 0.0
    %5858 = vmatpush2.msra.mxu0 0.0
    %5859 = vmatprep.subr.mxu0 0.0
    %5860 = vmatpush2.msra.mxu0 0.0
    %5861 = vmatprep.subr.mxu0 0.0
    %5862 = vmatpush2.msra.mxu0 0.0
    %5863 = vmatprep.subr.mxu0 0.0
    %5864 = vmatpush2.msra.mxu0 0.0
    %5865 = vmatprep.subr.mxu0 0.0
    %5866 = vmatpush2.msra.mxu0 0.0
    %5867 = vmatprep.subr.mxu0 0.0
    %5868 = vmatpush2.msra.mxu0 0.0
    %5869 = vmatprep.subr.mxu0 0.0
    %5870 = vmatpush2.msra.mxu0 0.0
    %5871 = vmatprep.subr.mxu0 0.0
    %5872 = vmatpush2.msra.mxu0 0.0
    %5873 = vmatprep.subr.mxu0 0.0
    %5874 = vmatpush2.msra.mxu0 0.0
    %5875 = vmatprep.subr.mxu0 0.0
    %5876 = vmatpush2.msra.mxu0 0.0
    %5877 = vmatprep.subr.mxu0 0.0
    %5878 = vmatpush2.msra.mxu0 0.0
    %5879 = vmatprep.subr.mxu0 0.0
    %5880 = vmatpush2.msra.mxu0 0.0
    %5881 = vmatprep.subr.mxu0 0.0
    %5882 = vmatpush2.msra.mxu0 0.0
    %5883 = vmatprep.subr.mxu0 0.0
    %5884 = vmatpush2.msra.mxu0 0.0
    %5885 = vmatprep.mubr.f32.mxu0 0.0
    %5886 = vmatmul.mubr.f32.gmra.mxu0 %v5819
    %v5887 = vpop.f32.mrf.mxu0
    %v5888 = vadd.f32 0.0, %v5887
    %v5889 = vpop.f32.mrf.mxu0
    %5890 = vdwg.mxu0
    %v5892 = vsel %vm1228, %v5372, 0
    %5894 = vmatprep.subr.mxu0 0.0
    %5895 = vmatpush1.msra.mxu0 0.0
    %5896 = vmatprep.subr.mxu0 0.0
    %5897 = vmatpush1.msra.mxu0 0.0
    %5898 = vmatprep.subr.mxu0 0.0
    %5899 = vmatpush1.msra.mxu0 0.0
    %5900 = vmatprep.subr.mxu0 0.0
    %5901 = vmatpush1.msra.mxu0 0.0
    %5902 = vmatprep.subr.mxu0 0.0
    %5903 = vmatpush1.msra.mxu0 0.0
    %5904 = vmatprep.subr.mxu0 0.0
    %5905 = vmatpush1.msra.mxu0 0.0
    %5906 = vmatprep.subr.mxu0 0.0
    %5907 = vmatpush1.msra.mxu0 0.0
    %5908 = vmatprep.subr.mxu0 0.0
    %5909 = vmatpush1.msra.mxu0 0.0
    %5910 = vmatprep.subr.mxu0 0.0
    %5911 = vmatpush1.msra.mxu0 0.0
    %5912 = vmatprep.subr.mxu0 0.0
    %5913 = vmatpush1.msra.mxu0 0.0
    %5914 = vmatprep.subr.mxu0 0.0
    %5915 = vmatpush1.msra.mxu0 0.0
    %5916 = vmatprep.subr.mxu0 0.0
    %5917 = vmatpush1.msra.mxu0 0.0
    %5918 = vmatprep.subr.mxu0 0.0
    %5919 = vmatpush1.msra.mxu0 0.0
    %5920 = vmatprep.subr.mxu0 0.0
    %5921 = vmatpush1.msra.mxu0 0.0
    %5922 = vmatprep.subr.mxu0 0.0
    %5923 = vmatpush1.msra.mxu0 0.0
    %5924 = vmatprep.subr.mxu0 0.0
    %5925 = vmatpush1.msra.mxu0 %v5379
    %5926 = vmatprep.subr.mxu0 0.0
    %5927 = vmatpush2.msra.mxu0 0.0
    %5928 = vmatprep.subr.mxu0 0.0
    %5929 = vmatpush2.msra.mxu0 0.0
    %5930 = vmatprep.subr.mxu0 0.0
    %5931 = vmatpush2.msra.mxu0 0.0
    %5932 = vmatprep.subr.mxu0 0.0
    %5933 = vmatpush2.msra.mxu0 0.0
    %5934 = vmatprep.subr.mxu0 0.0
    %5935 = vmatpush2.msra.mxu0 0.0
    %5936 = vmatprep.subr.mxu0 0.0
    %5937 = vmatpush2.msra.mxu0 0.0
    %5938 = vmatprep.subr.mxu0 0.0
    %5939 = vmatpush2.msra.mxu0 0.0
    %5940 = vmatprep.subr.mxu0 0.0
    %5941 = vmatpush2.msra.mxu0 0.0
    %5942 = vmatprep.subr.mxu0 0.0
    %5943 = vmatpush2.msra.mxu0 0.0
    %5944 = vmatprep.subr.mxu0 0.0
    %5945 = vmatpush2.msra.mxu0 0.0
    %5946 = vmatprep.subr.mxu0 0.0
    %5947 = vmatpush2.msra.mxu0 0.0
    %5948 = vmatprep.subr.mxu0 0.0
    %5949 = vmatpush2.msra.mxu0 0.0
    %5950 = vmatprep.subr.mxu0 0.0
    %5951 = vmatpush2.msra.mxu0 0.0
    %5952 = vmatprep.subr.mxu0 0.0
    %5953 = vmatpush2.msra.mxu0 0.0
    %5954 = vmatprep.subr.mxu0 0.0
    %5955 = vmatpush2.msra.mxu0 0.0
    %5956 = vmatprep.subr.mxu0 0.0
    %5957 = vmatpush2.msra.mxu0 0.0
    %5958 = vmatprep.mubr.f32.mxu0 0.0
    %5959 = vmatmul.mubr.f32.gmra.mxu0 %v5892
    %v5960 = vpop.f32.mrf.mxu0
    %v5961 = vadd.f32 0.0, %v5960
    %v5962 = vpop.f32.mrf.mxu0
    %5963 = vdwg.mxu0
    %v5964 = vsel %vm658, %v5450, 0.0
    %v5965 = vsel %vm658, %v5596, 0.0
    %v5966 = vadd.f32 %v5964, %v5965
    %v5967 = vsel %vm658, %v5742, 0.0
    %v5968 = vadd.f32 %v5966, %v5967
    %v5969 = vsel %vm658, %v5888, 0.0
    %v5970 = vadd.f32 %v5968, %v5969
    %v5971 = vsel %vm658, %v5523, 0.0
    %v5972 = vsel %vm658, %v5669, 0.0
    %v5973 = vadd.f32 %v5971, %v5972
    %v5974 = vsel %vm658, %v5815, 0.0
    %v5975 = vadd.f32 %v5973, %v5974
    %v5976 = vsel %vm658, %v5961, 0.0
    %v5977 = vadd.f32 %v5975, %v5976
    %v5978 = vlaneseq
    %v5979 = vshrl.u32 %v5978, 7
    %v5980 = vsub.s32 0, %v5979
    %v5981 = vrot.slane %v3443, %v5980
    %v5982 = vadd.f32 %v5970, %v5981
    %v5983 = vadd.f32 %v5977, %v5981
    %v5984 = vadd.f32 %v3440, %v5982
    %v5985 = vadd.f32 %v3441, %v5983
    %v5986 = vsel %vm658, %v5984, 0.0
    %5987 = vadd.xlane.f32.xlu0 %v5986
    %v5988 = vpop.xlane.xlu0 %5987
    %v5989 = vsel %vm658, %v5985, 0.0
    %5990 = vadd.xlane.f32.xlu0 %v5989
    %v5991 = vpop.xlane.xlu0 %5990
    %v5992 = vmul.f32 %v5988, %v3182
    %v5993 = vmul.f32 %v5991, %v3182
    %v5994 = vsub.f32 %v5984, %v5992
    %v5995 = vsub.f32 %v5985, %v5993
    %v5996 = vmul.f32 %v5994, %v5994
    %v5997 = vmul.f32 %v5995, %v5995
    %v5998 = vsel %vm658, %v5996, 0.0
    %5999 = vadd.xlane.f32.xlu0 %v5998
    %v6000 = vpop.xlane.xlu0 %5999
    %v6001 = vsel %vm658, %v5997, 0.0
    %6002 = vadd.xlane.f32.xlu0 %v6001
    %v6003 = vpop.xlane.xlu0 %6002
    %v6004 = vmul.f32 %v6000, %v3182
    %v6005 = vmul.f32 %v6003, %v3182
    %v6006 = vadd.f32 %v6004, 1e-05
    %v6007 = vadd.f32 %v6005, 1e-05
    %v6008 = vrsqrt.pop %v6006
    %v6009 = vrsqrt.pop %v6007
    %v6010 = vmul.f32 %v5994, %v6008
    %v6011 = vmul.f32 %v5995, %v6009
    %v6012 = vlaneseq
    %v6013 = vshrl.u32 %v6012, 7
    %v6014 = vsub.s32 2, %v6013
    %v6015 = vrot.slane %v3443, %v6014
    %v6016 = vmul.f32 %v6010, %v6015
    %v6017 = vmul.f32 %v6011, %v6015
    %v6018 = vlaneseq
    %v6019 = vshrl.u32 %v6018, 7
    %v6020 = vsub.s32 3, %v6019
    %v6021 = vrot.slane %v3443, %v6020
    %v6022 = vadd.f32 %v6016, %v6021
    %v6023 = vadd.f32 %v6017, %v6021
    %s6024 = scalar_lea.vmem %s8, 40
    %v6025 = vld [vmem:[%s6024] sm:$0xff]
    %v6026 = vld [vmem:[%s6024 + $0x8] sm:$0xff]
    %v6027 = vld [vmem:[%s6024 + $0x10] sm:$0xff]
    %v6028 = vld [vmem:[%s6024 + $0x18] sm:$0xff]
    %v6029 = vld [vmem:[%s6024 + $0x20] sm:$0x1]
    %v6030 = vlaneseq
    %v6031 = vshrl.u32 %v6030, 7
    %v6032 = vsub.s32 0, %v6031
    %v6033 = vrot.slane %v6029, %v6032
    %v6035 = vsel %vm658, %v6022, 0
    %v6038 = vsel %vm658, %v6023, 0
    %6040 = vmatprep.subr.mxu0 0.0
    %6041 = vmatpush1.msra.mxu0 0.0
    %6042 = vmatprep.subr.mxu0 0.0
    %6043 = vmatpush1.msra.mxu0 0.0
    %6044 = vmatprep.subr.mxu0 0.0
    %6045 = vmatpush1.msra.mxu0 0.0
    %6046 = vmatprep.subr.mxu0 0.0
    %6047 = vmatpush1.msra.mxu0 0.0
    %6048 = vmatprep.subr.mxu0 0.0
    %6049 = vmatpush1.msra.mxu0 0.0
    %6050 = vmatprep.subr.mxu0 0.0
    %6051 = vmatpush1.msra.mxu0 0.0
    %6052 = vmatprep.subr.mxu0 0.0
    %6053 = vmatpush1.msra.mxu0 0.0
    %6054 = vmatprep.subr.mxu0 0.0
    %6055 = vmatpush1.msra.mxu0 0.0
    %6056 = vmatprep.subr.mxu0 0.0
    %6057 = vmatpush1.msra.mxu0 0.0
    %6058 = vmatprep.subr.mxu0 0.0
    %6059 = vmatpush1.msra.mxu0 0.0
    %6060 = vmatprep.subr.mxu0 0.0
    %6061 = vmatpush1.msra.mxu0 0.0
    %6062 = vmatprep.subr.mxu0 0.0
    %6063 = vmatpush1.msra.mxu0 0.0
    %6064 = vmatprep.subr.mxu0 0.0
    %6065 = vmatpush1.msra.mxu0 %v6028
    %6066 = vmatprep.subr.mxu0 0.0
    %6067 = vmatpush1.msra.mxu0 %v6027
    %6068 = vmatprep.subr.mxu0 0.0
    %6069 = vmatpush1.msra.mxu0 %v6026
    %6070 = vmatprep.subr.mxu0 0.0
    %6071 = vmatpush1.msra.mxu0 %v6025
    %6072 = vmatprep.subr.mxu0 0.0
    %6073 = vmatpush2.msra.mxu0 0.0
    %6074 = vmatprep.subr.mxu0 0.0
    %6075 = vmatpush2.msra.mxu0 0.0
    %6076 = vmatprep.subr.mxu0 0.0
    %6077 = vmatpush2.msra.mxu0 0.0
    %6078 = vmatprep.subr.mxu0 0.0
    %6079 = vmatpush2.msra.mxu0 0.0
    %6080 = vmatprep.subr.mxu0 0.0
    %6081 = vmatpush2.msra.mxu0 0.0
    %6082 = vmatprep.subr.mxu0 0.0
    %6083 = vmatpush2.msra.mxu0 0.0
    %6084 = vmatprep.subr.mxu0 0.0
    %6085 = vmatpush2.msra.mxu0 0.0
    %6086 = vmatprep.subr.mxu0 0.0
    %6087 = vmatpush2.msra.mxu0 0.0
    %6088 = vmatprep.subr.mxu0 0.0
    %6089 = vmatpush2.msra.mxu0 0.0
    %6090 = vmatprep.subr.mxu0 0.0
    %6091 = vmatpush2.msra.mxu0 0.0
    %6092 = vmatprep.subr.mxu0 0.0
    %6093 = vmatpush2.msra.mxu0 0.0
    %6094 = vmatprep.subr.mxu0 0.0
    %6095 = vmatpush2.msra.mxu0 0.0
    %6096 = vmatprep.subr.mxu0 0.0
    %6097 = vmatpush2.msra.mxu0 0.0
    %6098 = vmatprep.subr.mxu0 0.0
    %6099 = vmatpush2.msra.mxu0 0.0
    %6100 = vmatprep.subr.mxu0 0.0
    %6101 = vmatpush2.msra.mxu0 0.0
    %6102 = vmatprep.subr.mxu0 0.0
    %6103 = vmatpush2.msra.mxu0 0.0
    %6104 = vmatprep.mubr.f32.mxu0 0.0
    %6105 = vmatmul.mubr.f32.gmra.mxu0 %v6035
    %v6106 = vpop.f32.mrf.mxu0
    %v6107 = vadd.f32 %v6033, %v6106
    %v6108 = vpop.f32.mrf.mxu0
    %6109 = vmatprep.mubr.f32.mxu0 0.0
    %6110 = vmatmul.mubr.f32.gmra.mxu0 %v6038
    %v6111 = vpop.f32.mrf.mxu0
    %v6112 = vadd.f32 %v6033, %v6111
    %v6113 = vpop.f32.mrf.mxu0
    %6114 = vdwg.mxu0
    %v6115 = vmax.f32 %v6107, 0.0
    %v6116 = vmax.f32 %v6112, 0.0
    %s6117 = scalar_lea.vmem %s9, 128
    %v6118 = vld [vmem:[%s6117] sm:$0xff]
    %v6119 = vld [vmem:[%s6117 + $0x8] sm:$0xff]
    %v6120 = vld [vmem:[%s6117 + $0x10] sm:$0xff]
    %v6121 = vld [vmem:[%s6117 + $0x18] sm:$0xff]
    %v6122 = vld [vmem:[%s6117 + $0x20] sm:$0xff]
    %v6123 = vld [vmem:[%s6117 + $0x28] sm:$0xff]
    %v6124 = vld [vmem:[%s6117 + $0x30] sm:$0xff]
    %v6125 = vld [vmem:[%s6117 + $0x38] sm:$0xff]
    %v6126 = vld [vmem:[%s6117 + $0x40] sm:$0xff]
    %v6127 = vld [vmem:[%s6117 + $0x48] sm:$0xff]
    %v6128 = vld [vmem:[%s6117 + $0x50] sm:$0xff]
    %v6129 = vld [vmem:[%s6117 + $0x58] sm:$0xff]
    %v6130 = vld [vmem:[%s6117 + $0x60] sm:$0xff]
    %v6131 = vld [vmem:[%s6117 + $0x68] sm:$0xff]
    %v6132 = vld [vmem:[%s6117 + $0x70] sm:$0xff]
    %v6133 = vld [vmem:[%s6117 + $0x78] sm:$0xff]
    %v6134 = vlaneseq
    %v6135 = vshrl.u32 %v6134, 7
    %v6136 = vsub.s32 1, %v6135
    %v6137 = vrot.slane %v3443, %v6136
    %6138 = vmatprep.subr.mxu0 0.0
    %6139 = vmatpush1.msra.mxu0 %v6133
    %6140 = vmatprep.subr.mxu0 0.0
    %6141 = vmatpush1.msra.mxu0 %v6132
    %6142 = vmatprep.subr.mxu0 0.0
    %6143 = vmatpush1.msra.mxu0 %v6131
    %6144 = vmatprep.subr.mxu0 0.0
    %6145 = vmatpush1.msra.mxu0 %v6130
    %6146 = vmatprep.subr.mxu0 0.0
    %6147 = vmatpush1.msra.mxu0 %v6129
    %6148 = vmatprep.subr.mxu0 0.0
    %6149 = vmatpush1.msra.mxu0 %v6128
    %6150 = vmatprep.subr.mxu0 0.0
    %6151 = vmatpush1.msra.mxu0 %v6127
    %6152 = vmatprep.subr.mxu0 0.0
    %6153 = vmatpush1.msra.mxu0 %v6126
    %6154 = vmatprep.subr.mxu0 0.0
    %6155 = vmatpush1.msra.mxu0 %v6125
    %6156 = vmatprep.subr.mxu0 0.0
    %6157 = vmatpush1.msra.mxu0 %v6124
    %6158 = vmatprep.subr.mxu0 0.0
    %6159 = vmatpush1.msra.mxu0 %v6123
    %6160 = vmatprep.subr.mxu0 0.0
    %6161 = vmatpush1.msra.mxu0 %v6122
    %6162 = vmatprep.subr.mxu0 0.0
    %6163 = vmatpush1.msra.mxu0 %v6121
    %6164 = vmatprep.subr.mxu0 0.0
    %6165 = vmatpush1.msra.mxu0 %v6120
    %6166 = vmatprep.subr.mxu0 0.0
    %6167 = vmatpush1.msra.mxu0 %v6119
    %6168 = vmatprep.subr.mxu0 0.0
    %6169 = vmatpush1.msra.mxu0 %v6118
    %6170 = vmatprep.subr.mxu0 0.0
    %6171 = vmatpush2.msra.mxu0 0.0
    %6172 = vmatprep.subr.mxu0 0.0
    %6173 = vmatpush2.msra.mxu0 0.0
    %6174 = vmatprep.subr.mxu0 0.0
    %6175 = vmatpush2.msra.mxu0 0.0
    %6176 = vmatprep.subr.mxu0 0.0
    %6177 = vmatpush2.msra.mxu0 0.0
    %6178 = vmatprep.subr.mxu0 0.0
    %6179 = vmatpush2.msra.mxu0 0.0
    %6180 = vmatprep.subr.mxu0 0.0
    %6181 = vmatpush2.msra.mxu0 0.0
    %6182 = vmatprep.subr.mxu0 0.0
    %6183 = vmatpush2.msra.mxu0 0.0
    %6184 = vmatprep.subr.mxu0 0.0
    %6185 = vmatpush2.msra.mxu0 0.0
    %6186 = vmatprep.subr.mxu0 0.0
    %6187 = vmatpush2.msra.mxu0 0.0
    %6188 = vmatprep.subr.mxu0 0.0
    %6189 = vmatpush2.msra.mxu0 0.0
    %6190 = vmatprep.subr.mxu0 0.0
    %6191 = vmatpush2.msra.mxu0 0.0
    %6192 = vmatprep.subr.mxu0 0.0
    %6193 = vmatpush2.msra.mxu0 0.0
    %6194 = vmatprep.subr.mxu0 0.0
    %6195 = vmatpush2.msra.mxu0 0.0
    %6196 = vmatprep.subr.mxu0 0.0
    %6197 = vmatpush2.msra.mxu0 0.0
    %6198 = vmatprep.subr.mxu0 0.0
    %6199 = vmatpush2.msra.mxu0 0.0
    %6200 = vmatprep.subr.mxu0 0.0
    %6201 = vmatpush2.msra.mxu0 0.0
    %6202 = vmatprep.mubr.f32.mxu0 0.0
    %6203 = vmatmul.mubr.f32.gmra.mxu0 %v6115
    %v6204 = vpop.f32.mrf.mxu0
    %v6205 = vadd.f32 %v6137, %v6204
    %v6206 = vpop.f32.mrf.mxu0
    %6207 = vmatprep.mubr.f32.mxu0 0.0
    %6208 = vmatmul.mubr.f32.gmra.mxu0 %v6116
    %v6209 = vpop.f32.mrf.mxu0
    %v6210 = vadd.f32 %v6137, %v6209
    %v6211 = vpop.f32.mrf.mxu0
    %6212 = vdwg.mxu0
    %v6213 = vadd.f32 %v6022, %v6205
    %v6214 = vadd.f32 %v6023, %v6210
    %v6215 = vsel %vm658, %v6213, 0.0
    %6216 = vadd.xlane.f32.xlu0 %v6215
    %v6217 = vpop.xlane.xlu0 %6216
    %v6218 = vsel %vm658, %v6214, 0.0
    %6219 = vadd.xlane.f32.xlu0 %v6218
    %v6220 = vpop.xlane.xlu0 %6219
    %v6221 = vmul.f32 %v6217, %v3182
    %v6222 = vmul.f32 %v6220, %v3182
    %v6223 = vsub.f32 %v6213, %v6221
    %v6224 = vsub.f32 %v6214, %v6222
    %v6225 = vmul.f32 %v6223, %v6223
    %v6226 = vmul.f32 %v6224, %v6224
    %v6227 = vsel %vm658, %v6225, 0.0
    %6228 = vadd.xlane.f32.xlu0 %v6227
    %v6229 = vpop.xlane.xlu0 %6228
    %v6230 = vsel %vm658, %v6226, 0.0
    %6231 = vadd.xlane.f32.xlu0 %v6230
    %v6232 = vpop.xlane.xlu0 %6231
    %v6233 = vmul.f32 %v6229, %v3182
    %v6234 = vmul.f32 %v6232, %v3182
    %v6235 = vadd.f32 %v6233, 1e-05
    %v6236 = vadd.f32 %v6234, 1e-05
    %v6237 = vrsqrt.pop %v6235
    %v6238 = vrsqrt.pop %v6236
    %v6239 = vmul.f32 %v6223, %v6237
    %v6240 = vmul.f32 %v6224, %v6238
    %v6241 = vlaneseq
    %v6242 = vshrl.u32 %v6241, 7
    %v6243 = vsub.s32 4, %v6242
    %v6244 = vrot.slane %v3443, %v6243
    %v6245 = vmul.f32 %v6239, %v6244
    %v6246 = vmul.f32 %v6240, %v6244
    %v6247 = vlaneseq
    %v6248 = vshrl.u32 %v6247, 7
    %v6249 = vsub.s32 5, %v6248
    %v6250 = vrot.slane %v3443, %v6249
    %v6251 = vadd.f32 %v6245, %v6250
    %v6252 = vadd.f32 %v6246, %v6250
    %vm6253 = vcmp.eq.f32.partialorder %v36, -1000.0
    %vm6254 = vcmp.eq.f32.partialorder %v37, -1000.0
    %v6255 = vsel %vm6253, 0.0, 1.0
    %v6256 = vsel %vm6254, 0.0, 1.0
    %6258 = vset.pattern.permute.xlu0 0
    %6259 = vperm.xlu0 %6258, %v6255
    %v6260 = vpop.permute.xlu0 %6259
    %6263 = vset.pattern.permute.xlu0 0
    %6264 = vperm.xlu0 %6263, %v6256
    %v6265 = vpop.permute.xlu0 %6264
    %v6267 = vmul.f32 %v6251, %v6260
    %v6268 = vmul.f32 %v6252, %v6265
    %v6269 = vsel %vm658, %v6267, 0.0
    %v6270 = vrot.slane %v6269, 4
    %v6271 = vadd.f32 %v6269, %v6270
    %v6272 = vrot.slane %v6271, 2
    %v6273 = vadd.f32 %v6271, %v6272
    %v6274 = vrot.slane %v6273, 1
    %v6275 = vadd.f32 %v6273, %v6274
    %v6276 = vsel %vm658, %v6268, 0.0
    %v6277 = vrot.slane %v6276, 4
    %v6278 = vadd.f32 %v6276, %v6277
    %v6279 = vrot.slane %v6278, 2
    %v6280 = vadd.f32 %v6278, %v6279
    %v6281 = vrot.slane %v6280, 1
    %v6282 = vadd.f32 %v6280, %v6281
    %vm6283 = vcmask 7168
    %v6284 = vsel %vm6283, %v6255, 0.0
    %v6285 = vrot.slane %v6284, 4
    %v6286 = vadd.f32 %v6284, %v6285
    %v6287 = vrot.slane %v6286, 2
    %v6288 = vadd.f32 %v6286, %v6287
    %v6289 = vrot.slane %v6288, 1
    %v6290 = vadd.f32 %v6288, %v6289
    %v6291 = vsel %vm6283, %v6256, 0.0
    %v6292 = vrot.slane %v6291, 4
    %v6293 = vadd.f32 %v6291, %v6292
    %v6294 = vrot.slane %v6293, 2
    %v6295 = vadd.f32 %v6293, %v6294
    %v6296 = vrot.slane %v6295, 1
    %v6297 = vadd.f32 %v6295, %v6296
    %v6298 = vmax.f32 %v6290, 1.0
    %v6299 = vmax.f32 %v6297, 1.0
    %v6300 = vrcp.pop %v6298
    %v6301 = vrcp.pop %v6299
    %6303 = vset.pattern.permute.xlu0 0
    %6304 = vperm.xlu0 %6303, %v6300
    %v6305 = vpop.permute.xlu0 %6304
    %6308 = vset.pattern.permute.xlu0 0
    %6309 = vperm.xlu0 %6308, %v6301
    %v6310 = vpop.permute.xlu0 %6309
    %v6312 = vmul.f32 %v6275, %v6305
    %v6313 = vmul.f32 %v6282, %v6310
    %v6314 = vld [vmem:[%s4] sm:$0xff]
    %v6315 = vld [vmem:[%s4 + $0x8] sm:$0xff]
    %v6316 = vld [vmem:[%s4 + $0x10] sm:$0xff]
    %v6317 = vld [vmem:[%s4 + $0x18] sm:$0xff]
    %v6318 = vlaneseq
    %v6319 = vshrl.u32 %v6318, 7
    %v6320 = vsub.s32 0, %v6319
    %v6321 = vrot.slane %v40, %v6320
    %vm6324 = vcmask 1041409
    %v6325 = vsel %vm6324, %v6313, %v6312
    %v6326 = vsel %vm658, %v6325, 0
    %6328 = vmatprep.subr.mxu0 0.0
    %6329 = vmatpush1.msra.mxu0 0.0
    %6330 = vmatprep.subr.mxu0 0.0
    %6331 = vmatpush1.msra.mxu0 0.0
    %6332 = vmatprep.subr.mxu0 0.0
    %6333 = vmatpush1.msra.mxu0 0.0
    %6334 = vmatprep.subr.mxu0 0.0
    %6335 = vmatpush1.msra.mxu0 0.0
    %6336 = vmatprep.subr.mxu0 0.0
    %6337 = vmatpush1.msra.mxu0 0.0
    %6338 = vmatprep.subr.mxu0 0.0
    %6339 = vmatpush1.msra.mxu0 0.0
    %6340 = vmatprep.subr.mxu0 0.0
    %6341 = vmatpush1.msra.mxu0 0.0
    %6342 = vmatprep.subr.mxu0 0.0
    %6343 = vmatpush1.msra.mxu0 0.0
    %6344 = vmatprep.subr.mxu0 0.0
    %6345 = vmatpush1.msra.mxu0 0.0
    %6346 = vmatprep.subr.mxu0 0.0
    %6347 = vmatpush1.msra.mxu0 0.0
    %6348 = vmatprep.subr.mxu0 0.0
    %6349 = vmatpush1.msra.mxu0 0.0
    %6350 = vmatprep.subr.mxu0 0.0
    %6351 = vmatpush1.msra.mxu0 0.0
    %6352 = vmatprep.subr.mxu0 0.0
    %6353 = vmatpush1.msra.mxu0 %v6317
    %6354 = vmatprep.subr.mxu0 0.0
    %6355 = vmatpush1.msra.mxu0 %v6316
    %6356 = vmatprep.subr.mxu0 0.0
    %6357 = vmatpush1.msra.mxu0 %v6315
    %6358 = vmatprep.subr.mxu0 0.0
    %6359 = vmatpush1.msra.mxu0 %v6314
    %6360 = vmatprep.subr.mxu0 0.0
    %6361 = vmatpush2.msra.mxu0 0.0
    %6362 = vmatprep.subr.mxu0 0.0
    %6363 = vmatpush2.msra.mxu0 0.0
    %6364 = vmatprep.subr.mxu0 0.0
    %6365 = vmatpush2.msra.mxu0 0.0
    %6366 = vmatprep.subr.mxu0 0.0
    %6367 = vmatpush2.msra.mxu0 0.0
    %6368 = vmatprep.subr.mxu0 0.0
    %6369 = vmatpush2.msra.mxu0 0.0
    %6370 = vmatprep.subr.mxu0 0.0
    %6371 = vmatpush2.msra.mxu0 0.0
    %6372 = vmatprep.subr.mxu0 0.0
    %6373 = vmatpush2.msra.mxu0 0.0
    %6374 = vmatprep.subr.mxu0 0.0
    %6375 = vmatpush2.msra.mxu0 0.0
    %6376 = vmatprep.subr.mxu0 0.0
    %6377 = vmatpush2.msra.mxu0 0.0
    %6378 = vmatprep.subr.mxu0 0.0
    %6379 = vmatpush2.msra.mxu0 0.0
    %6380 = vmatprep.subr.mxu0 0.0
    %6381 = vmatpush2.msra.mxu0 0.0
    %6382 = vmatprep.subr.mxu0 0.0
    %6383 = vmatpush2.msra.mxu0 0.0
    %6384 = vmatprep.subr.mxu0 0.0
    %6385 = vmatpush2.msra.mxu0 0.0
    %6386 = vmatprep.subr.mxu0 0.0
    %6387 = vmatpush2.msra.mxu0 0.0
    %6388 = vmatprep.subr.mxu0 0.0
    %6389 = vmatpush2.msra.mxu0 0.0
    %6390 = vmatprep.subr.mxu0 0.0
    %6391 = vmatpush2.msra.mxu0 0.0
    %6392 = vmatprep.mubr.f32.mxu0 0.0
    %6393 = vmatmul.mubr.f32.gmra.mxu0 %v6326
    %v6394 = vpop.f32.mrf.mxu0
    %v6395 = vadd.f32 %v6321, %v6394
    %v6396 = vpop.f32.mrf.mxu0
    %6397 = vdwg.mxu0
    %v6398 = vmax.f32 %v6395, 0.0
    %v6399 = vlaneseq
    %v6400 = vshrl.u32 %v6399, 7
    %v6401 = vsub.s32 0, %v6400
    %v6402 = vrot.slane %v41, %v6401
    %6407 = vrot.lane.b32.xlu0 %v6314, 96
    %v6408 = vpop.permute.xlu0 %6407
    %6409 = vrot.lane.b32.xlu0 %v6315, 96
    %v6410 = vpop.permute.xlu0 %6409
    %6411 = vrot.lane.b32.xlu0 %v6316, 96
    %v6412 = vpop.permute.xlu0 %6411
    %6413 = vrot.lane.b32.xlu0 %v6317, 96
    %v6414 = vpop.permute.xlu0 %6413
    %v6420 = vsel %vm658, %v6398, 0
    %6422 = vmatprep.subr.mxu0 0.0
    %6423 = vmatpush1.msra.mxu0 0.0
    %6424 = vmatprep.subr.mxu0 0.0
    %6425 = vmatpush1.msra.mxu0 0.0
    %6426 = vmatprep.subr.mxu0 0.0
    %6427 = vmatpush1.msra.mxu0 0.0
    %6428 = vmatprep.subr.mxu0 0.0
    %6429 = vmatpush1.msra.mxu0 0.0
    %6430 = vmatprep.subr.mxu0 0.0
    %6431 = vmatpush1.msra.mxu0 0.0
    %6432 = vmatprep.subr.mxu0 0.0
    %6433 = vmatpush1.msra.mxu0 0.0
    %6434 = vmatprep.subr.mxu0 0.0
    %6435 = vmatpush1.msra.mxu0 0.0
    %6436 = vmatprep.subr.mxu0 0.0
    %6437 = vmatpush1.msra.mxu0 0.0
    %6438 = vmatprep.subr.mxu0 0.0
    %6439 = vmatpush1.msra.mxu0 0.0
    %6440 = vmatprep.subr.mxu0 0.0
    %6441 = vmatpush1.msra.mxu0 0.0
    %6442 = vmatprep.subr.mxu0 0.0
    %6443 = vmatpush1.msra.mxu0 0.0
    %6444 = vmatprep.subr.mxu0 0.0
    %6445 = vmatpush1.msra.mxu0 0.0
    %6446 = vmatprep.subr.mxu0 0.0
    %6447 = vmatpush1.msra.mxu0 %v6414
    %6448 = vmatprep.subr.mxu0 0.0
    %6449 = vmatpush1.msra.mxu0 %v6412
    %6450 = vmatprep.subr.mxu0 0.0
    %6451 = vmatpush1.msra.mxu0 %v6410
    %6452 = vmatprep.subr.mxu0 0.0
    %6453 = vmatpush1.msra.mxu0 %v6408
    %6454 = vmatprep.subr.mxu0 0.0
    %6455 = vmatpush2.msra.mxu0 0.0
    %6456 = vmatprep.subr.mxu0 0.0
    %6457 = vmatpush2.msra.mxu0 0.0
    %6458 = vmatprep.subr.mxu0 0.0
    %6459 = vmatpush2.msra.mxu0 0.0
    %6460 = vmatprep.subr.mxu0 0.0
    %6461 = vmatpush2.msra.mxu0 0.0
    %6462 = vmatprep.subr.mxu0 0.0
    %6463 = vmatpush2.msra.mxu0 0.0
    %6464 = vmatprep.subr.mxu0 0.0
    %6465 = vmatpush2.msra.mxu0 0.0
    %6466 = vmatprep.subr.mxu0 0.0
    %6467 = vmatpush2.msra.mxu0 0.0
    %6468 = vmatprep.subr.mxu0 0.0
    %6469 = vmatpush2.msra.mxu0 0.0
    %6470 = vmatprep.subr.mxu0 0.0
    %6471 = vmatpush2.msra.mxu0 0.0
    %6472 = vmatprep.subr.mxu0 0.0
    %6473 = vmatpush2.msra.mxu0 0.0
    %6474 = vmatprep.subr.mxu0 0.0
    %6475 = vmatpush2.msra.mxu0 0.0
    %6476 = vmatprep.subr.mxu0 0.0
    %6477 = vmatpush2.msra.mxu0 0.0
    %6478 = vmatprep.subr.mxu0 0.0
    %6479 = vmatpush2.msra.mxu0 0.0
    %6480 = vmatprep.subr.mxu0 0.0
    %6481 = vmatpush2.msra.mxu0 0.0
    %6482 = vmatprep.subr.mxu0 0.0
    %6483 = vmatpush2.msra.mxu0 0.0
    %6484 = vmatprep.subr.mxu0 0.0
    %6485 = vmatpush2.msra.mxu0 0.0
    %6486 = vmatprep.mubr.f32.mxu0 0.0
    %6487 = vmatmul.mubr.f32.gmra.mxu0 %v6420
    %v6488 = vpop.f32.mrf.mxu0
    %v6489 = vadd.f32 %v6402, %v6488
    %v6490 = vpop.f32.mrf.mxu0
    %6491 = vdwg.mxu0
    %vm6492 = vcmask 33792
    %6493 = vst.msk [vmem:[#allocation2] sm:$0x3] %vm6492, %v6489
    // Predicated region
    $region42: #{transformer_net_forward.1} parent=1 // pred_check
      _
    $region43: #{transformer_net_forward.1} parent=1 // pred_check_branch
      %6495 = sbr.rel (0) target = $region45
    $region44: #{transformer_net_forward.1} parent=1 // pred_region
      %s6497 = ssub.s32 32, 32
      %6498 = vsyncadd [#allocation3], %s6497
      %s6500 = sshll.u32 [#allocation2], 4
      %s6501 = int_to_ptr.vmem [resolvable:$true] %s6500
      %6503 = dma.vmem_to_hbm [thread:$0]  %s6501, 32, %s10, [#allocation3]
    $region45: #{transformer_net_forward.1} parent=1 // pred_fallthru
      _
    // Predicated region
    $region46: #{transformer_net_forward.1} parent=1 // pred_check
      _
    $region47: #{transformer_net_forward.1} parent=1 // pred_check_branch
      %6505 = sbr.rel (0) target = $region49
    $region48: #{transformer_net_forward.1} parent=1 // pred_region
      %6506 = dma.done [#allocation3], 32
    $region49: #{transformer_net_forward.1} parent=1 // pred_fallthru
      _
    %6507 = vsyncpa [#allocation3], 1

</llo_original>
